<compile_context>
chip_gen: v5e
topology: v5e:2x2
jax: 0.10.0
libtpu: 0.0.40
codegen_flags: <defaults>
</compile_context>

<pallas_src>
import functools

import jax
import jax.numpy as jnp
from jax.experimental import pallas as pl
from jax.experimental.pallas import tpu as pltpu

_OUT_LANES = 128  # final layer N padded 1 -> 128 for unmasked lane-dense stores


def _leaky_relu(h, negative_slope=0.2):
    # max(h, a*h) == LeakyReLU(h) for 0 < a < 1 (2 VALU ops vs cmp/mul/select).
    return jnp.maximum(h, negative_slope * h)


def _disc_kernel(x_ref,
                 w1_ref, b1_ref,
                 w2_ref, b2_ref,
                 w3_ref, b3_ref,
                 w4_ref, b4_ref,
                 o_ref):
    """All four Linear layers + LeakyReLU fused; one batch tile per grid step."""
    # In-kernel bf16 downcast of the f32 input tile (hidden under the x DMA).
    x = x_ref[...].astype(jnp.bfloat16)

    # Layer 1: bf16 MXU matmul, f32 accumulate; bias + activation in f32.
    h = jnp.dot(x, w1_ref[...], preferred_element_type=jnp.float32)
    h = _leaky_relu(h + b1_ref[...])

    # Layer 2
    h = jnp.dot(h.astype(jnp.bfloat16), w2_ref[...], preferred_element_type=jnp.float32)
    h = _leaky_relu(h + b2_ref[...])

    # Layer 3
    h = jnp.dot(h.astype(jnp.bfloat16), w3_ref[...], preferred_element_type=jnp.float32)
    h = _leaky_relu(h + b3_ref[...])

    # Layer 4: Linear(H, 1) with the weight zero-padded to (H, 128) -> one cheap
    # MXU pass and an unmasked lane-dense (tile, 128) store (col 0 holds the logit).
    out = jnp.dot(h.astype(jnp.bfloat16), w4_ref[...], preferred_element_type=jnp.float32)
    o_ref[...] = (out + b4_ref[...]).astype(o_ref.dtype)


@functools.partial(jax.jit, static_argnames=("batch_tile",))
def discriminator_forward(x, params, *, batch_tile=512):
    """x: (B, im_dim) float32. params: w1..w4 stored (in, out), b1..b4 stored (1, out).

    Returns (B, 1) float32.
    """
    B, im_dim = x.shape
    w1, b1 = params["w1"], params["b1"]
    w2, b2 = params["w2"], params["b2"]
    w3, b3 = params["w3"], params["b3"]
    w4, b4 = params["w4"], params["b4"]

    # Weights to bf16 (tiny, ~1.3 MiB total); x stays f32 and untouched in HBM.
    w1_bf = w1.astype(jnp.bfloat16)
    w2_bf = w2.astype(jnp.bfloat16)
    w3_bf = w3.astype(jnp.bfloat16)
    # Final layer: zero-pad N from 1 -> 128 so the output block is lane-dense.
    w4_pad = jnp.pad(w4, ((0, 0), (0, _OUT_LANES - 1))).astype(jnp.bfloat16)
    b4_pad = jnp.pad(b4, ((0, 0), (0, _OUT_LANES - 1)))

    num_tiles = pl.cdiv(B, batch_tile)

    def resident(arr):
        # Whole-array block, constant index map -> DMA'd once, VMEM-resident.
        return pl.BlockSpec(arr.shape, lambda i: (0,) * arr.ndim)

    out_padded = pl.pallas_call(
        _disc_kernel,
        out_shape=jax.ShapeDtypeStruct((num_tiles * batch_tile, _OUT_LANES), jnp.float32),
        grid_spec=pltpu.PrefetchScalarGridSpec(
            num_scalar_prefetch=0,
            grid=(num_tiles,),
            in_specs=[
                # K = im_dim equals the full array dim, so no 128-divisibility
                # requirement; Mosaic pads the ragged lane chunk internally.
                pl.BlockSpec((batch_tile, im_dim), lambda i: (i, 0)),   # x tile (f32)
                resident(w1_bf), resident(b1),
                resident(w2_bf), resident(b2),
                resident(w3_bf), resident(b3),
                resident(w4_pad), resident(b4_pad),
            ],
            out_specs=pl.BlockSpec((batch_tile, _OUT_LANES), lambda i: (i, 0)),
        ),
        compiler_params=pltpu.CompilerParams(
            dimension_semantics=("parallel",),        # megacore-shardable batch axis
            vmem_limit_bytes=32 * 1024 * 1024,        # lift v5e's 16 MiB scoped default
        ),
    )(x, w1_bf, b1, w2_bf, b2, w3_bf, b3, w4_pad, b4_pad)

    # Column 0 is the real logit; rows >= B (ragged final tile) are garbage and dropped.
    return out_padded[:B, :1]


def init_discriminator_params(key, im_dim=784, hidden_dim=128):
    """Deterministic init mimicking nn.Linear's U(-1/sqrt(fan_in), 1/sqrt(fan_in))."""
    dims = [im_dim, hidden_dim * 4, hidden_dim * 2, hidden_dim, 1]
    params = {}
    for li in range(4):
        fan_in, fan_out = dims[li], dims[li + 1]
        key, kw, kb = jax.random.split(key, 3)
        bound = 1.0 / float(fan_in) ** 0.5
        # stored as (in, out) so the kernel does x @ W + b
        params[f"w{li + 1}"] = jax.random.uniform(
            kw, (fan_in, fan_out), jnp.float32, minval=-bound, maxval=bound)
        params[f"b{li + 1}"] = jax.random.uniform(
            kb, (1, fan_out), jnp.float32, minval=-bound, maxval=bound)
    return params


def discriminator_ref(x, params):
    """Pure-JAX reference mirroring the kernel's bf16-matmul / f32-accumulate precision."""
    h = x.astype(jnp.bfloat16)
    for li in (1, 2, 3):
        w = params[f"w{li}"].astype(jnp.bfloat16)
        h = jnp.dot(h, w, preferred_element_type=jnp.float32) + params[f"b{li}"]
        h = jnp.maximum(h, 0.2 * h)
        h = h.astype(jnp.bfloat16)
    return (jnp.dot(h, params["w4"].astype(jnp.bfloat16),
                    preferred_element_type=jnp.float32) + params["b4"])


def discriminator_ref_f32(x, params):
    """Full-f32 reference (numerically matches the PyTorch module)."""
    h = x
    for li in (1, 2, 3):
        h = h @ params[f"w{li}"] + params[f"b{li}"]
        h = jnp.where(h >= 0, h, 0.2 * h)
    return h @ params["w4"] + params["b4"]


if __name__ == "__main__":
    key = jax.random.PRNGKey(0)
    k_params, k_x = jax.random.split(key)

    im_dim, hidden_dim, batch = 784, 128, 8
    params = init_discriminator_params(k_params, im_dim=im_dim, hidden_dim=hidden_dim)
    x = jax.random.normal(k_x, (batch, im_dim), jnp.float32)

    # batch_tile defaults to 512; the small demo batch exercises the ragged-tile path.
    out = discriminator_forward(x, params)
    out = jax.block_until_ready(out)

    ref_bf16 = discriminator_ref(x, params)
    ref_f32 = discriminator_ref_f32(x, params)
    assert out.shape == (batch, 1), out.shape
    assert jnp.allclose(out, ref_bf16, atol=2e-3, rtol=2e-3), "mismatch vs bf16-precision reference"
    assert jnp.allclose(out, ref_f32, atol=5e-2, rtol=5e-2), "mismatch vs f32 reference"

    print("KERNEL_OK")
</pallas_src>

<mosaic_0001>
module attributes {stable_mosaic.version = 11 : i64} {
  func.func @_disc_kernel(%arg0: i32, %arg1: memref<512x784xf32, #tpu.memory_space<vmem>>, %arg2: memref<784x512xbf16, #tpu.memory_space<vmem>>, %arg3: memref<1x512xf32, #tpu.memory_space<vmem>>, %arg4: memref<512x256xbf16, #tpu.memory_space<vmem>>, %arg5: memref<1x256xf32, #tpu.memory_space<vmem>>, %arg6: memref<256x128xbf16, #tpu.memory_space<vmem>>, %arg7: memref<1x128xf32, #tpu.memory_space<vmem>>, %arg8: memref<128x128xbf16, #tpu.memory_space<vmem>>, %arg9: memref<1x128xf32, #tpu.memory_space<vmem>>, %arg10: memref<512x128xf32, #tpu.memory_space<vmem>>) attributes {dimension_semantics = [#tpu.dimension_semantics<parallel>], iteration_bounds = array<i64: 1>, scalar_prefetch = 0 : i64, scratch_operands = 0 : i64, tpu.core_type = #tpu.core_type<tc>, window_params = [{transform_indices = @transform_0, window_bounds = array<i64: 512, 784>}, {pipeline_mode = #tpu.pipeline_mode<synchronous>, transform_indices = @transform_1, window_bounds = array<i64: 784, 512>}, {pipeline_mode = #tpu.pipeline_mode<synchronous>, transform_indices = @transform_2, window_bounds = array<i64: 1, 512>}, {pipeline_mode = #tpu.pipeline_mode<synchronous>, transform_indices = @transform_3, window_bounds = array<i64: 512, 256>}, {pipeline_mode = #tpu.pipeline_mode<synchronous>, transform_indices = @transform_4, window_bounds = array<i64: 1, 256>}, {pipeline_mode = #tpu.pipeline_mode<synchronous>, transform_indices = @transform_5, window_bounds = array<i64: 256, 128>}, {pipeline_mode = #tpu.pipeline_mode<synchronous>, transform_indices = @transform_6, window_bounds = array<i64: 1, 128>}, {pipeline_mode = #tpu.pipeline_mode<synchronous>, transform_indices = @transform_7, window_bounds = array<i64: 128, 128>}, {pipeline_mode = #tpu.pipeline_mode<synchronous>, transform_indices = @transform_8, window_bounds = array<i64: 1, 128>}, {transform_indices = @transform_9, window_bounds = array<i64: 512, 128>}]} {
    %c0 = arith.constant 0 : index
    %c0_0 = arith.constant 0 : index
    %0 = vector.load %arg1[%c0, %c0_0] : memref<512x784xf32, #tpu.memory_space<vmem>>, vector<512x784xf32>
    %1 = arith.truncf %0 : vector<512x784xf32> to vector<512x784xbf16>
    %c0_1 = arith.constant 0 : index
    %c0_2 = arith.constant 0 : index
    %2 = vector.load %arg2[%c0_1, %c0_2] : memref<784x512xbf16, #tpu.memory_space<vmem>>, vector<784x512xbf16>
    %cst = arith.constant dense<0.000000e+00> : vector<512x512xf32>
    %3 = tpu.matmul %1, %2, %cst {dimension_numbers = #tpu.dot_dimension_numbers<[1], [0], [0], [1], [0, 0, 1, 1], [], []>} : vector<512x784xbf16>, vector<784x512xbf16>, vector<512x512xf32> -> vector<512x512xf32>
    %c0_3 = arith.constant 0 : index
    %c0_4 = arith.constant 0 : index
    %4 = vector.load %arg3[%c0_3, %c0_4] : memref<1x512xf32, #tpu.memory_space<vmem>>, vector<1x512xf32>
    %5 = vector.broadcast %4 : vector<1x512xf32> to vector<512x512xf32>
    %6 = arith.addf %3, %5 : vector<512x512xf32>
    %cst_5 = arith.constant 2.000000e-01 : f32
    %7 = vector.broadcast %cst_5 : f32 to vector<512x512xf32>
    %8 = arith.mulf %7, %6 : vector<512x512xf32>
    %9 = arith.maximumf %6, %8 : vector<512x512xf32>
    %10 = arith.truncf %9 : vector<512x512xf32> to vector<512x512xbf16>
    %c0_6 = arith.constant 0 : index
    %c0_7 = arith.constant 0 : index
    %11 = vector.load %arg4[%c0_6, %c0_7] : memref<512x256xbf16, #tpu.memory_space<vmem>>, vector<512x256xbf16>
    %cst_8 = arith.constant dense<0.000000e+00> : vector<512x256xf32>
    %12 = tpu.matmul %10, %11, %cst_8 {dimension_numbers = #tpu.dot_dimension_numbers<[1], [0], [0], [1], [0, 0, 1, 1], [], []>} : vector<512x512xbf16>, vector<512x256xbf16>, vector<512x256xf32> -> vector<512x256xf32>
    %c0_9 = arith.constant 0 : index
    %c0_10 = arith.constant 0 : index
    %13 = vector.load %arg5[%c0_9, %c0_10] : memref<1x256xf32, #tpu.memory_space<vmem>>, vector<1x256xf32>
    %14 = vector.broadcast %13 : vector<1x256xf32> to vector<512x256xf32>
    %15 = arith.addf %12, %14 : vector<512x256xf32>
    %cst_11 = arith.constant 2.000000e-01 : f32
    %16 = vector.broadcast %cst_11 : f32 to vector<512x256xf32>
    %17 = arith.mulf %16, %15 : vector<512x256xf32>
    %18 = arith.maximumf %15, %17 : vector<512x256xf32>
    %19 = arith.truncf %18 : vector<512x256xf32> to vector<512x256xbf16>
    %c0_12 = arith.constant 0 : index
    %c0_13 = arith.constant 0 : index
    %20 = vector.load %arg6[%c0_12, %c0_13] : memref<256x128xbf16, #tpu.memory_space<vmem>>, vector<256x128xbf16>
    %cst_14 = arith.constant dense<0.000000e+00> : vector<512x128xf32>
    %21 = tpu.matmul %19, %20, %cst_14 {dimension_numbers = #tpu.dot_dimension_numbers<[1], [0], [0], [1], [0, 0, 1, 1], [], []>} : vector<512x256xbf16>, vector<256x128xbf16>, vector<512x128xf32> -> vector<512x128xf32>
    %c0_15 = arith.constant 0 : index
    %c0_16 = arith.constant 0 : index
    %22 = vector.load %arg7[%c0_15, %c0_16] : memref<1x128xf32, #tpu.memory_space<vmem>>, vector<1x128xf32>
    %23 = vector.broadcast %22 : vector<1x128xf32> to vector<512x128xf32>
    %24 = arith.addf %21, %23 : vector<512x128xf32>
    %cst_17 = arith.constant 2.000000e-01 : f32
    %25 = vector.broadcast %cst_17 : f32 to vector<512x128xf32>
    %26 = arith.mulf %25, %24 : vector<512x128xf32>
    %27 = arith.maximumf %24, %26 : vector<512x128xf32>
    %28 = arith.truncf %27 : vector<512x128xf32> to vector<512x128xbf16>
    %c0_18 = arith.constant 0 : index
    %c0_19 = arith.constant 0 : index
    %29 = vector.load %arg8[%c0_18, %c0_19] : memref<128x128xbf16, #tpu.memory_space<vmem>>, vector<128x128xbf16>
    %cst_20 = arith.constant dense<0.000000e+00> : vector<512x128xf32>
    %30 = tpu.matmul %28, %29, %cst_20 {dimension_numbers = #tpu.dot_dimension_numbers<[1], [0], [0], [1], [0, 0, 1, 1], [], []>} : vector<512x128xbf16>, vector<128x128xbf16>, vector<512x128xf32> -> vector<512x128xf32>
    %c0_21 = arith.constant 0 : index
    %c0_22 = arith.constant 0 : index
    %31 = vector.load %arg9[%c0_21, %c0_22] : memref<1x128xf32, #tpu.memory_space<vmem>>, vector<1x128xf32>
    %32 = vector.broadcast %31 : vector<1x128xf32> to vector<512x128xf32>
    %33 = arith.addf %30, %32 : vector<512x128xf32>
    %c0_23 = arith.constant 0 : index
    %c0_24 = arith.constant 0 : index
    %34 = vector.load %arg10[%c0_23, %c0_24] : memref<512x128xf32, #tpu.memory_space<vmem>>, vector<512x128xf32>
    tpu.vector_store %arg10[%c0_23, %c0_24], %33 {strides = array<i32>} : memref<512x128xf32, #tpu.memory_space<vmem>>, vector<512x128xf32>,
    return
  }
  func.func @transform_0(%arg0: i32) -> (i32, i32) {
    %c0_i32 = arith.constant 0 : i32
    %c0_i32_0 = arith.constant 0 : i32
    return %arg0, %c0_i32 : i32, i32
  }
  func.func @transform_1(%arg0: i32) -> (i32, i32) {
    %c0_i32 = arith.constant 0 : i32
    %c0_i32_0 = arith.constant 0 : i32
    %c0_i32_1 = arith.constant 0 : i32
    return %c0_i32, %c0_i32_0 : i32, i32
  }
  func.func @transform_2(%arg0: i32) -> (i32, i32) {
    %c0_i32 = arith.constant 0 : i32
    %c0_i32_0 = arith.constant 0 : i32
    %c0_i32_1 = arith.constant 0 : i32
    return %c0_i32, %c0_i32_0 : i32, i32
  }
  func.func @transform_3(%arg0: i32) -> (i32, i32) {
    %c0_i32 = arith.constant 0 : i32
    %c0_i32_0 = arith.constant 0 : i32
    %c0_i32_1 = arith.constant 0 : i32
    return %c0_i32, %c0_i32_0 : i32, i32
  }
  func.func @transform_4(%arg0: i32) -> (i32, i32) {
    %c0_i32 = arith.constant 0 : i32
    %c0_i32_0 = arith.constant 0 : i32
    %c0_i32_1 = arith.constant 0 : i32
    return %c0_i32, %c0_i32_0 : i32, i32
  }
  func.func @transform_5(%arg0: i32) -> (i32, i32) {
    %c0_i32 = arith.constant 0 : i32
    %c0_i32_0 = arith.constant 0 : i32
    %c0_i32_1 = arith.constant 0 : i32
    return %c0_i32, %c0_i32_0 : i32, i32
  }
  func.func @transform_6(%arg0: i32) -> (i32, i32) {
    %c0_i32 = arith.constant 0 : i32
    %c0_i32_0 = arith.constant 0 : i32
    %c0_i32_1 = arith.constant 0 : i32
    return %c0_i32, %c0_i32_0 : i32, i32
  }
  func.func @transform_7(%arg0: i32) -> (i32, i32) {
    %c0_i32 = arith.constant 0 : i32
    %c0_i32_0 = arith.constant 0 : i32
    %c0_i32_1 = arith.constant 0 : i32
    return %c0_i32, %c0_i32_0 : i32, i32
  }
  func.func @transform_8(%arg0: i32) -> (i32, i32) {
    %c0_i32 = arith.constant 0 : i32
    %c0_i32_0 = arith.constant 0 : i32
    %c0_i32_1 = arith.constant 0 : i32
    return %c0_i32, %c0_i32_0 : i32, i32
  }
  func.func @transform_9(%arg0: i32) -> (i32, i32) {
    %c0_i32 = arith.constant 0 : i32
    %c0_i32_0 = arith.constant 0 : i32
    return %arg0, %c0_i32 : i32, i32
  }
}

</mosaic_0001>

<llo_original>
// kernel: discriminator_forward.1
$region0: #{discriminator_forward.1}
  #allocation0 [shape = 'u32[]', space=smem, size = 0x4, offset = 0x4, fixed_abs, tag = 'smem constant byte address 0x4 - core index']
  #allocation1 [shape = 'u32[72,128]{1,0:T(1,128)}', space=vmem, size = 0x9000, scoped, tag = 'internal scratch']
  %s0 = inlined_call_operand.vmem [shape: f32[8,784], index: 0, kind: input, shape index: {}]
  %s1 = inlined_call_operand.vmem [shape: bf16[784,512], index: 1, kind: input, shape index: {}]
  %s2 = inlined_call_operand.vmem [shape: f32[1,512], index: 2, kind: input, shape index: {}]
  %s3 = inlined_call_operand.vmem [shape: bf16[512,256], index: 3, kind: input, shape index: {}]
  %s4 = inlined_call_operand.vmem [shape: f32[1,256], index: 4, kind: input, shape index: {}]
  %s5 = inlined_call_operand.vmem [shape: bf16[256,128], index: 5, kind: input, shape index: {}]
  %s6 = inlined_call_operand.vmem [shape: f32[1,128], index: 6, kind: input, shape index: {}]
  %s7 = inlined_call_operand.vmem [shape: bf16[128,128], index: 7, kind: input, shape index: {}]
  %s8 = inlined_call_operand.vmem [shape: f32[1,128], index: 8, kind: input, shape index: {}]
  %s9 = inlined_call_operand.vmem [shape: f32[512,128], index: 9, kind: output, shape index: {}]
  %s10 = sld [smem:[#allocation0]]
  $region46: #{discriminator_forward.1} parent=0
    _
  %s12 = ssub.s32 1, %s10
  %s13 = scalar_select 0, %s12, %s10
  // Predicated region
  $region2: #{discriminator_forward.1} parent=0 // pred_check
    _
  $region3: #{discriminator_forward.1} parent=0 // pred_check_branch
    %15 = sbr.rel (0) target = $region5
  $region4: #{discriminator_forward.1} parent=0 // pred_region
    _
  $region5: #{discriminator_forward.1} parent=0 // pred_fallthru
    _
  // Predicated region
  $region6: #{discriminator_forward.1} parent=0 // pred_check
    _
  $region7: #{discriminator_forward.1} parent=0 // pred_check_branch
    %17 = sbr.rel (0) target = $region9
  $region8: #{discriminator_forward.1} parent=0 // pred_region
    _
  $region9: #{discriminator_forward.1} parent=0 // pred_fallthru
    _
  // Predicated region
  $region10: #{discriminator_forward.1} parent=0 // pred_check
    _
  $region11: #{discriminator_forward.1} parent=0 // pred_check_branch
    %19 = sbr.rel (0) target = $region13
  $region12: #{discriminator_forward.1} parent=0 // pred_region
    _
  $region13: #{discriminator_forward.1} parent=0 // pred_fallthru
    _
  // Predicated region
  $region14: #{discriminator_forward.1} parent=0 // pred_check
    _
  $region15: #{discriminator_forward.1} parent=0 // pred_check_branch
    %21 = sbr.rel (0) target = $region17
  $region16: #{discriminator_forward.1} parent=0 // pred_region
    _
  $region17: #{discriminator_forward.1} parent=0 // pred_fallthru
    _
  // Predicated region
  $region18: #{discriminator_forward.1} parent=0 // pred_check
    _
  $region19: #{discriminator_forward.1} parent=0 // pred_check_branch
    %23 = sbr.rel (0) target = $region21
  $region20: #{discriminator_forward.1} parent=0 // pred_region
    _
  $region21: #{discriminator_forward.1} parent=0 // pred_fallthru
    _
  // Predicated region
  $region22: #{discriminator_forward.1} parent=0 // pred_check
    _
  $region23: #{discriminator_forward.1} parent=0 // pred_check_branch
    %25 = sbr.rel (0) target = $region25
  $region24: #{discriminator_forward.1} parent=0 // pred_region
    _
  $region25: #{discriminator_forward.1} parent=0 // pred_fallthru
    _
  // Predicated region
  $region26: #{discriminator_forward.1} parent=0 // pred_check
    _
  $region27: #{discriminator_forward.1} parent=0 // pred_check_branch
    %27 = sbr.rel (0) target = $region29
  $region28: #{discriminator_forward.1} parent=0 // pred_region
    _
  $region29: #{discriminator_forward.1} parent=0 // pred_fallthru
    _
  // Predicated region
  $region30: #{discriminator_forward.1} parent=0 // pred_check
    _
  $region31: #{discriminator_forward.1} parent=0 // pred_check_branch
    %29 = sbr.rel (0) target = $region33
  $region32: #{discriminator_forward.1} parent=0 // pred_region
    _
  $region33: #{discriminator_forward.1} parent=0 // pred_fallthru
    _
  // Predicated region
  $region34: #{discriminator_forward.1} parent=0 // pred_check
    _
  $region35: #{discriminator_forward.1} parent=0 // pred_check_branch
    %31 = sbr.rel (0) target = $region37
  $region36: #{discriminator_forward.1} parent=0 // pred_region
    _
  $region37: #{discriminator_forward.1} parent=0 // pred_fallthru
    _
  %v33 = vld [vmem:[%s0] sm:$0xff]
  %v34 = vld [vmem:[%s0 + $0x8] sm:$0xff]
  %v35 = vld [vmem:[%s0 + $0x10] sm:$0xff]
  %v36 = vld [vmem:[%s0 + $0x18] sm:$0xff]
  %v37 = vld [vmem:[%s0 + $0x20] sm:$0xff]
  %v38 = vld [vmem:[%s0 + $0x28] sm:$0xff]
  %v39 = vld [vmem:[%s0 + $0x30] sm:$0xff]
  %v40 = vld [vmem:[%s0 + $0x38] sm:$0xff]
  %v41 = vld [vmem:[%s0 + $0x40] sm:$0xff]
  %v42 = vld [vmem:[%s0 + $0x48] sm:$0xff]
  %v43 = vld [vmem:[%s0 + $0x50] sm:$0xff]
  %v44 = vld [vmem:[%s0 + $0x58] sm:$0xff]
  %v45 = vld [vmem:[%s0 + $0x60] sm:$0xff]
  %v46 = vld [vmem:[%s0 + $0x68] sm:$0xff]
  %v47 = vld [vmem:[%s0 + $0x70] sm:$0xff]
  %v48 = vld [vmem:[%s0 + $0x78] sm:$0xff]
  %v49 = vld [vmem:[%s0 + $0x80] sm:$0xff]
  %v50 = vld [vmem:[%s0 + $0x88] sm:$0xff]
  %v51 = vld [vmem:[%s0 + $0x90] sm:$0xff]
  %v52 = vld [vmem:[%s0 + $0x98] sm:$0xff]
  %v53 = vld [vmem:[%s0 + $0xa0] sm:$0xff]
  %v54 = vld [vmem:[%s0 + $0xa8] sm:$0xff]
  %v55 = vld [vmem:[%s0 + $0xb0] sm:$0xff]
  %v56 = vld [vmem:[%s0 + $0xb8] sm:$0xff]
  %v57 = vld [vmem:[%s0 + $0xc0] sm:$0xff]
  %v58 = vld [vmem:[%s0 + $0xc8] sm:$0xff]
  %v59 = vld [vmem:[%s0 + $0xd0] sm:$0xff]
  %v60 = vld [vmem:[%s0 + $0xd8] sm:$0xff]
  %v61 = vld [vmem:[%s0 + $0xe0] sm:$0xff]
  %v62 = vld [vmem:[%s0 + $0xe8] sm:$0xff]
  %v63 = vld [vmem:[%s0 + $0xf0] sm:$0xff]
  %v64 = vld [vmem:[%s0 + $0xf8] sm:$0xff]
  %v65 = vld [vmem:[%s0 + $0x100] sm:$0xff]
  %v66 = vld [vmem:[%s0 + $0x108] sm:$0xff]
  %v67 = vld [vmem:[%s0 + $0x110] sm:$0xff]
  %v68 = vld [vmem:[%s0 + $0x118] sm:$0xff]
  %v69 = vld [vmem:[%s0 + $0x120] sm:$0xff]
  %v70 = vld [vmem:[%s0 + $0x128] sm:$0xff]
  %v71 = vld [vmem:[%s0 + $0x130] sm:$0xff]
  %v72 = vld [vmem:[%s0 + $0x138] sm:$0xff]
  %v73 = vld [vmem:[%s0 + $0x140] sm:$0xff]
  %v74 = vld [vmem:[%s0 + $0x148] sm:$0xff]
  %v75 = vld [vmem:[%s0 + $0x150] sm:$0xff]
  %v76 = vld [vmem:[%s0 + $0x158] sm:$0xff]
  %v77 = vld [vmem:[%s0 + $0x160] sm:$0xff]
  %v78 = vld [vmem:[%s0 + $0x168] sm:$0xff]
  %v79 = vld [vmem:[%s0 + $0x170] sm:$0xff]
  %v80 = vld [vmem:[%s0 + $0x178] sm:$0xff]
  %v81 = vld [vmem:[%s0 + $0x180] sm:$0xff]
  %v82 = vld [vmem:[%s0 + $0x188] sm:$0xff]
  %v83 = vld [vmem:[%s0 + $0x190] sm:$0xff]
  %v84 = vld [vmem:[%s0 + $0x198] sm:$0xff]
  %v85 = vld [vmem:[%s0 + $0x1a0] sm:$0xff]
  %v86 = vld [vmem:[%s0 + $0x1a8] sm:$0xff]
  %v87 = vld [vmem:[%s0 + $0x1b0] sm:$0xff]
  %v88 = vld [vmem:[%s0 + $0x1b8] sm:$0xff]
  %v89 = vld [vmem:[%s0 + $0x1c0] sm:$0xff]
  %v90 = vld [vmem:[%s0 + $0x1c8] sm:$0xff]
  %v91 = vld [vmem:[%s0 + $0x1d0] sm:$0xff]
  %v92 = vld [vmem:[%s0 + $0x1d8] sm:$0xff]
  %v93 = vld [vmem:[%s0 + $0x1e0] sm:$0xff]
  %v94 = vld [vmem:[%s0 + $0x1e8] sm:$0xff]
  %v95 = vld [vmem:[%s0 + $0x1f0] sm:$0xff]
  %v96 = vld [vmem:[%s0 + $0x1f8] sm:$0xff]
  %v97 = vld [vmem:[%s0 + $0x200] sm:$0xff]
  %v98 = vld [vmem:[%s0 + $0x208] sm:$0xff]
  %v99 = vld [vmem:[%s0 + $0x210] sm:$0xff]
  %v100 = vld [vmem:[%s0 + $0x218] sm:$0xff]
  %v101 = vld [vmem:[%s0 + $0x220] sm:$0xff]
  %v102 = vld [vmem:[%s0 + $0x228] sm:$0xff]
  %v103 = vld [vmem:[%s0 + $0x230] sm:$0xff]
  %v104 = vld [vmem:[%s0 + $0x238] sm:$0xff]
  %v105 = vld [vmem:[%s0 + $0x240] sm:$0xff]
  %v106 = vld [vmem:[%s0 + $0x248] sm:$0xff]
  %v107 = vld [vmem:[%s0 + $0x250] sm:$0xff]
  %v108 = vld [vmem:[%s0 + $0x258] sm:$0xff]
  %v109 = vld [vmem:[%s0 + $0x260] sm:$0xff]
  %v110 = vld [vmem:[%s0 + $0x268] sm:$0xff]
  %v111 = vld [vmem:[%s0 + $0x270] sm:$0xff]
  %v112 = vld [vmem:[%s0 + $0x278] sm:$0xff]
  %v113 = vld [vmem:[%s0 + $0x280] sm:$0xff]
  %v114 = vld [vmem:[%s0 + $0x288] sm:$0xff]
  %v115 = vld [vmem:[%s0 + $0x290] sm:$0xff]
  %v116 = vld [vmem:[%s0 + $0x298] sm:$0xff]
  %v117 = vld [vmem:[%s0 + $0x2a0] sm:$0xff]
  %v118 = vld [vmem:[%s0 + $0x2a8] sm:$0xff]
  %v119 = vld [vmem:[%s0 + $0x2b0] sm:$0xff]
  %v120 = vld [vmem:[%s0 + $0x2b8] sm:$0xff]
  %v121 = vld [vmem:[%s0 + $0x2c0] sm:$0xff]
  %v122 = vld [vmem:[%s0 + $0x2c8] sm:$0xff]
  %v123 = vld [vmem:[%s0 + $0x2d0] sm:$0xff]
  %v124 = vld [vmem:[%s0 + $0x2d8] sm:$0xff]
  %v125 = vld [vmem:[%s0 + $0x2e0] sm:$0xff]
  %v126 = vld [vmem:[%s0 + $0x2e8] sm:$0xff]
  %v127 = vld [vmem:[%s0 + $0x2f0] sm:$0xff]
  %v128 = vld [vmem:[%s0 + $0x2f8] sm:$0xff]
  %v129 = vld [vmem:[%s0 + $0x300] sm:$0xff]
  %v130 = vld [vmem:[%s0 + $0x308] sm:$0xff]
  %v131 = vld [vmem:[%s0 + $0x310] sm:$0xff]
  %v132 = vld [vmem:[%s0 + $0x318] sm:$0xff]
  %v133 = vld [vmem:[%s0 + $0x320] sm:$0xff]
  %v134 = vld [vmem:[%s0 + $0x328] sm:$0xff]
  %v135 = vld [vmem:[%s0 + $0x330] sm:$0xff]
  %v136 = vld [vmem:[%s0 + $0x338] sm:$0xff]
  %v137 = vld [vmem:[%s0 + $0x340] sm:$0xff]
  %v138 = vld [vmem:[%s0 + $0x348] sm:$0xff]
  %v139 = vld [vmem:[%s0 + $0x350] sm:$0xff]
  %v140 = vld [vmem:[%s0 + $0x358] sm:$0xff]
  %v141 = vld [vmem:[%s0 + $0x360] sm:$0xff]
  %v142 = vld [vmem:[%s0 + $0x368] sm:$0xff]
  %v143 = vld [vmem:[%s0 + $0x370] sm:$0xff]
  %v144 = vld [vmem:[%s0 + $0x378] sm:$0xff]
  %v145 = vld [vmem:[%s0 + $0x380] sm:$0xff]
  %v146 = vld [vmem:[%s0 + $0x388] sm:$0xff]
  %v147 = vld [vmem:[%s0 + $0x390] sm:$0xff]
  %v148 = vld [vmem:[%s0 + $0x398] sm:$0xff]
  %v149 = vld [vmem:[%s0 + $0x3a0] sm:$0xff]
  %v150 = vld [vmem:[%s0 + $0x3a8] sm:$0xff]
  %v151 = vld [vmem:[%s0 + $0x3b0] sm:$0xff]
  %v152 = vld [vmem:[%s0 + $0x3b8] sm:$0xff]
  %v153 = vld [vmem:[%s0 + $0x3c0] sm:$0xff]
  %v154 = vld [vmem:[%s0 + $0x3c8] sm:$0xff]
  %v155 = vld [vmem:[%s0 + $0x3d0] sm:$0xff]
  %v156 = vld [vmem:[%s0 + $0x3d8] sm:$0xff]
  %v157 = vld [vmem:[%s0 + $0x3e0] sm:$0xff]
  %v158 = vld [vmem:[%s0 + $0x3e8] sm:$0xff]
  %v159 = vld [vmem:[%s0 + $0x3f0] sm:$0xff]
  %v160 = vld [vmem:[%s0 + $0x3f8] sm:$0xff]
  %v161 = vld [vmem:[%s0 + $0x400] sm:$0xff]
  %v162 = vld [vmem:[%s0 + $0x408] sm:$0xff]
  %v163 = vld [vmem:[%s0 + $0x410] sm:$0xff]
  %v164 = vld [vmem:[%s0 + $0x418] sm:$0xff]
  %v165 = vld [vmem:[%s0 + $0x420] sm:$0xff]
  %v166 = vld [vmem:[%s0 + $0x428] sm:$0xff]
  %v167 = vld [vmem:[%s0 + $0x430] sm:$0xff]
  %v168 = vld [vmem:[%s0 + $0x438] sm:$0xff]
  %v169 = vld [vmem:[%s0 + $0x440] sm:$0xff]
  %v170 = vld [vmem:[%s0 + $0x448] sm:$0xff]
  %v171 = vld [vmem:[%s0 + $0x450] sm:$0xff]
  %v172 = vld [vmem:[%s0 + $0x458] sm:$0xff]
  %v173 = vld [vmem:[%s0 + $0x460] sm:$0xff]
  %v174 = vld [vmem:[%s0 + $0x468] sm:$0xff]
  %v175 = vld [vmem:[%s0 + $0x470] sm:$0xff]
  %v176 = vld [vmem:[%s0 + $0x478] sm:$0xff]
  %v177 = vld [vmem:[%s0 + $0x480] sm:$0xff]
  %v178 = vld [vmem:[%s0 + $0x488] sm:$0xff]
  %v179 = vld [vmem:[%s0 + $0x490] sm:$0xff]
  %v180 = vld [vmem:[%s0 + $0x498] sm:$0xff]
  %v181 = vld [vmem:[%s0 + $0x4a0] sm:$0xff]
  %v182 = vld [vmem:[%s0 + $0x4a8] sm:$0xff]
  %v183 = vld [vmem:[%s0 + $0x4b0] sm:$0xff]
  %v184 = vld [vmem:[%s0 + $0x4b8] sm:$0xff]
  %v185 = vld [vmem:[%s0 + $0x4c0] sm:$0xff]
  %v186 = vld [vmem:[%s0 + $0x4c8] sm:$0xff]
  %v187 = vld [vmem:[%s0 + $0x4d0] sm:$0xff]
  %v188 = vld [vmem:[%s0 + $0x4d8] sm:$0xff]
  %v189 = vld [vmem:[%s0 + $0x4e0] sm:$0xff]
  %v190 = vld [vmem:[%s0 + $0x4e8] sm:$0xff]
  %v191 = vld [vmem:[%s0 + $0x4f0] sm:$0xff]
  %v192 = vld [vmem:[%s0 + $0x4f8] sm:$0xff]
  %v193 = vld [vmem:[%s0 + $0x500] sm:$0xff]
  %v194 = vld [vmem:[%s0 + $0x508] sm:$0xff]
  %v195 = vld [vmem:[%s0 + $0x510] sm:$0xff]
  %v196 = vld [vmem:[%s0 + $0x518] sm:$0xff]
  %v197 = vld [vmem:[%s0 + $0x520] sm:$0xff]
  %v198 = vld [vmem:[%s0 + $0x528] sm:$0xff]
  %v199 = vld [vmem:[%s0 + $0x530] sm:$0xff]
  %v200 = vld [vmem:[%s0 + $0x538] sm:$0xff]
  %v201 = vld [vmem:[%s0 + $0x540] sm:$0xff]
  %v202 = vld [vmem:[%s0 + $0x548] sm:$0xff]
  %v203 = vld [vmem:[%s0 + $0x550] sm:$0xff]
  %v204 = vld [vmem:[%s0 + $0x558] sm:$0xff]
  %v205 = vld [vmem:[%s0 + $0x560] sm:$0xff]
  %v206 = vld [vmem:[%s0 + $0x568] sm:$0xff]
  %v207 = vld [vmem:[%s0 + $0x570] sm:$0xff]
  %v208 = vld [vmem:[%s0 + $0x578] sm:$0xff]
  %v209 = vld [vmem:[%s0 + $0x580] sm:$0xff]
  %v210 = vld [vmem:[%s0 + $0x588] sm:$0xff]
  %v211 = vld [vmem:[%s0 + $0x590] sm:$0xff]
  %v212 = vld [vmem:[%s0 + $0x598] sm:$0xff]
  %v213 = vld [vmem:[%s0 + $0x5a0] sm:$0xff]
  %v214 = vld [vmem:[%s0 + $0x5a8] sm:$0xff]
  %v215 = vld [vmem:[%s0 + $0x5b0] sm:$0xff]
  %v216 = vld [vmem:[%s0 + $0x5b8] sm:$0xff]
  %v217 = vld [vmem:[%s0 + $0x5c0] sm:$0xff]
  %v218 = vld [vmem:[%s0 + $0x5c8] sm:$0xff]
  %v219 = vld [vmem:[%s0 + $0x5d0] sm:$0xff]
  %v220 = vld [vmem:[%s0 + $0x5d8] sm:$0xff]
  %v221 = vld [vmem:[%s0 + $0x5e0] sm:$0xff]
  %v222 = vld [vmem:[%s0 + $0x5e8] sm:$0xff]
  %v223 = vld [vmem:[%s0 + $0x5f0] sm:$0xff]
  %v224 = vld [vmem:[%s0 + $0x5f8] sm:$0xff]
  %v225 = vld [vmem:[%s0 + $0x600] sm:$0xff]
  %v226 = vld [vmem:[%s0 + $0x608] sm:$0xff]
  %v227 = vld [vmem:[%s0 + $0x610] sm:$0xff]
  %v228 = vld [vmem:[%s0 + $0x618] sm:$0xff]
  %v229 = vld [vmem:[%s0 + $0x620] sm:$0xff]
  %v230 = vld [vmem:[%s0 + $0x628] sm:$0xff]
  %v231 = vld [vmem:[%s0 + $0x630] sm:$0xff]
  %v232 = vld [vmem:[%s0 + $0x638] sm:$0xff]
  %v233 = vld [vmem:[%s0 + $0x640] sm:$0xff]
  %v234 = vld [vmem:[%s0 + $0x648] sm:$0xff]
  %v235 = vld [vmem:[%s0 + $0x650] sm:$0xff]
  %v236 = vld [vmem:[%s0 + $0x658] sm:$0xff]
  %v237 = vld [vmem:[%s0 + $0x660] sm:$0xff]
  %v238 = vld [vmem:[%s0 + $0x668] sm:$0xff]
  %v239 = vld [vmem:[%s0 + $0x670] sm:$0xff]
  %v240 = vld [vmem:[%s0 + $0x678] sm:$0xff]
  %v241 = vld [vmem:[%s0 + $0x680] sm:$0xff]
  %v242 = vld [vmem:[%s0 + $0x688] sm:$0xff]
  %v243 = vld [vmem:[%s0 + $0x690] sm:$0xff]
  %v244 = vld [vmem:[%s0 + $0x698] sm:$0xff]
  %v245 = vld [vmem:[%s0 + $0x6a0] sm:$0xff]
  %v246 = vld [vmem:[%s0 + $0x6a8] sm:$0xff]
  %v247 = vld [vmem:[%s0 + $0x6b0] sm:$0xff]
  %v248 = vld [vmem:[%s0 + $0x6b8] sm:$0xff]
  %v249 = vld [vmem:[%s0 + $0x6c0] sm:$0xff]
  %v250 = vld [vmem:[%s0 + $0x6c8] sm:$0xff]
  %v251 = vld [vmem:[%s0 + $0x6d0] sm:$0xff]
  %v252 = vld [vmem:[%s0 + $0x6d8] sm:$0xff]
  %v253 = vld [vmem:[%s0 + $0x6e0] sm:$0xff]
  %v254 = vld [vmem:[%s0 + $0x6e8] sm:$0xff]
  %v255 = vld [vmem:[%s0 + $0x6f0] sm:$0xff]
  %v256 = vld [vmem:[%s0 + $0x6f8] sm:$0xff]
  %v257 = vld [vmem:[%s0 + $0x700] sm:$0xff]
  %v258 = vld [vmem:[%s0 + $0x708] sm:$0xff]
  %v259 = vld [vmem:[%s0 + $0x710] sm:$0xff]
  %v260 = vld [vmem:[%s0 + $0x718] sm:$0xff]
  %v261 = vld [vmem:[%s0 + $0x720] sm:$0xff]
  %v262 = vld [vmem:[%s0 + $0x728] sm:$0xff]
  %v263 = vld [vmem:[%s0 + $0x730] sm:$0xff]
  %v264 = vld [vmem:[%s0 + $0x738] sm:$0xff]
  %v265 = vld [vmem:[%s0 + $0x740] sm:$0xff]
  %v266 = vld [vmem:[%s0 + $0x748] sm:$0xff]
  %v267 = vld [vmem:[%s0 + $0x750] sm:$0xff]
  %v268 = vld [vmem:[%s0 + $0x758] sm:$0xff]
  %v269 = vld [vmem:[%s0 + $0x760] sm:$0xff]
  %v270 = vld [vmem:[%s0 + $0x768] sm:$0xff]
  %v271 = vld [vmem:[%s0 + $0x770] sm:$0xff]
  %v272 = vld [vmem:[%s0 + $0x778] sm:$0xff]
  %v273 = vld [vmem:[%s0 + $0x780] sm:$0xff]
  %v274 = vld [vmem:[%s0 + $0x788] sm:$0xff]
  %v275 = vld [vmem:[%s0 + $0x790] sm:$0xff]
  %v276 = vld [vmem:[%s0 + $0x798] sm:$0xff]
  %v277 = vld [vmem:[%s0 + $0x7a0] sm:$0xff]
  %v278 = vld [vmem:[%s0 + $0x7a8] sm:$0xff]
  %v279 = vld [vmem:[%s0 + $0x7b0] sm:$0xff]
  %v280 = vld [vmem:[%s0 + $0x7b8] sm:$0xff]
  %v281 = vld [vmem:[%s0 + $0x7c0] sm:$0xff]
  %v282 = vld [vmem:[%s0 + $0x7c8] sm:$0xff]
  %v283 = vld [vmem:[%s0 + $0x7d0] sm:$0xff]
  %v284 = vld [vmem:[%s0 + $0x7d8] sm:$0xff]
  %v285 = vld [vmem:[%s0 + $0x7e0] sm:$0xff]
  %v286 = vld [vmem:[%s0 + $0x7e8] sm:$0xff]
  %v287 = vld [vmem:[%s0 + $0x7f0] sm:$0xff]
  %v288 = vld [vmem:[%s0 + $0x7f8] sm:$0xff]
  %v289 = vld [vmem:[%s0 + $0x800] sm:$0xff]
  %v290 = vld [vmem:[%s0 + $0x808] sm:$0xff]
  %v291 = vld [vmem:[%s0 + $0x810] sm:$0xff]
  %v292 = vld [vmem:[%s0 + $0x818] sm:$0xff]
  %v293 = vld [vmem:[%s0 + $0x820] sm:$0xff]
  %v294 = vld [vmem:[%s0 + $0x828] sm:$0xff]
  %v295 = vld [vmem:[%s0 + $0x830] sm:$0xff]
  %v296 = vld [vmem:[%s0 + $0x838] sm:$0xff]
  %v297 = vld [vmem:[%s0 + $0x840] sm:$0xff]
  %v298 = vld [vmem:[%s0 + $0x848] sm:$0xff]
  %v299 = vld [vmem:[%s0 + $0x850] sm:$0xff]
  %v300 = vld [vmem:[%s0 + $0x858] sm:$0xff]
  %v301 = vld [vmem:[%s0 + $0x860] sm:$0xff]
  %v302 = vld [vmem:[%s0 + $0x868] sm:$0xff]
  %v303 = vld [vmem:[%s0 + $0x870] sm:$0xff]
  %v304 = vld [vmem:[%s0 + $0x878] sm:$0xff]
  %v305 = vld [vmem:[%s0 + $0x880] sm:$0xff]
  %v306 = vld [vmem:[%s0 + $0x888] sm:$0xff]
  %v307 = vld [vmem:[%s0 + $0x890] sm:$0xff]
  %v308 = vld [vmem:[%s0 + $0x898] sm:$0xff]
  %v309 = vld [vmem:[%s0 + $0x8a0] sm:$0xff]
  %v310 = vld [vmem:[%s0 + $0x8a8] sm:$0xff]
  %v311 = vld [vmem:[%s0 + $0x8b0] sm:$0xff]
  %v312 = vld [vmem:[%s0 + $0x8b8] sm:$0xff]
  %v313 = vld [vmem:[%s0 + $0x8c0] sm:$0xff]
  %v314 = vld [vmem:[%s0 + $0x8c8] sm:$0xff]
  %v315 = vld [vmem:[%s0 + $0x8d0] sm:$0xff]
  %v316 = vld [vmem:[%s0 + $0x8d8] sm:$0xff]
  %v317 = vld [vmem:[%s0 + $0x8e0] sm:$0xff]
  %v318 = vld [vmem:[%s0 + $0x8e8] sm:$0xff]
  %v319 = vld [vmem:[%s0 + $0x8f0] sm:$0xff]
  %v320 = vld [vmem:[%s0 + $0x8f8] sm:$0xff]
  %v321 = vld [vmem:[%s0 + $0x900] sm:$0xff]
  %v322 = vld [vmem:[%s0 + $0x908] sm:$0xff]
  %v323 = vld [vmem:[%s0 + $0x910] sm:$0xff]
  %v324 = vld [vmem:[%s0 + $0x918] sm:$0xff]
  %v325 = vld [vmem:[%s0 + $0x920] sm:$0xff]
  %v326 = vld [vmem:[%s0 + $0x928] sm:$0xff]
  %v327 = vld [vmem:[%s0 + $0x930] sm:$0xff]
  %v328 = vld [vmem:[%s0 + $0x938] sm:$0xff]
  %v329 = vld [vmem:[%s0 + $0x940] sm:$0xff]
  %v330 = vld [vmem:[%s0 + $0x948] sm:$0xff]
  %v331 = vld [vmem:[%s0 + $0x950] sm:$0xff]
  %v332 = vld [vmem:[%s0 + $0x958] sm:$0xff]
  %v333 = vld [vmem:[%s0 + $0x960] sm:$0xff]
  %v334 = vld [vmem:[%s0 + $0x968] sm:$0xff]
  %v335 = vld [vmem:[%s0 + $0x970] sm:$0xff]
  %v336 = vld [vmem:[%s0 + $0x978] sm:$0xff]
  %v337 = vld [vmem:[%s0 + $0x980] sm:$0xff]
  %v338 = vld [vmem:[%s0 + $0x988] sm:$0xff]
  %v339 = vld [vmem:[%s0 + $0x990] sm:$0xff]
  %v340 = vld [vmem:[%s0 + $0x998] sm:$0xff]
  %v341 = vld [vmem:[%s0 + $0x9a0] sm:$0xff]
  %v342 = vld [vmem:[%s0 + $0x9a8] sm:$0xff]
  %v343 = vld [vmem:[%s0 + $0x9b0] sm:$0xff]
  %v344 = vld [vmem:[%s0 + $0x9b8] sm:$0xff]
  %v345 = vld [vmem:[%s0 + $0x9c0] sm:$0xff]
  %v346 = vld [vmem:[%s0 + $0x9c8] sm:$0xff]
  %v347 = vld [vmem:[%s0 + $0x9d0] sm:$0xff]
  %v348 = vld [vmem:[%s0 + $0x9d8] sm:$0xff]
  %v349 = vld [vmem:[%s0 + $0x9e0] sm:$0xff]
  %v350 = vld [vmem:[%s0 + $0x9e8] sm:$0xff]
  %v351 = vld [vmem:[%s0 + $0x9f0] sm:$0xff]
  %v352 = vld [vmem:[%s0 + $0x9f8] sm:$0xff]
  %v353 = vld [vmem:[%s0 + $0xa00] sm:$0xff]
  %v354 = vld [vmem:[%s0 + $0xa08] sm:$0xff]
  %v355 = vld [vmem:[%s0 + $0xa10] sm:$0xff]
  %v356 = vld [vmem:[%s0 + $0xa18] sm:$0xff]
  %v357 = vld [vmem:[%s0 + $0xa20] sm:$0xff]
  %v358 = vld [vmem:[%s0 + $0xa28] sm:$0xff]
  %v359 = vld [vmem:[%s0 + $0xa30] sm:$0xff]
  %v360 = vld [vmem:[%s0 + $0xa38] sm:$0xff]
  %v361 = vld [vmem:[%s0 + $0xa40] sm:$0xff]
  %v362 = vld [vmem:[%s0 + $0xa48] sm:$0xff]
  %v363 = vld [vmem:[%s0 + $0xa50] sm:$0xff]
  %v364 = vld [vmem:[%s0 + $0xa58] sm:$0xff]
  %v365 = vld [vmem:[%s0 + $0xa60] sm:$0xff]
  %v366 = vld [vmem:[%s0 + $0xa68] sm:$0xff]
  %v367 = vld [vmem:[%s0 + $0xa70] sm:$0xff]
  %v368 = vld [vmem:[%s0 + $0xa78] sm:$0xff]
  %v369 = vld [vmem:[%s0 + $0xa80] sm:$0xff]
  %v370 = vld [vmem:[%s0 + $0xa88] sm:$0xff]
  %v371 = vld [vmem:[%s0 + $0xa90] sm:$0xff]
  %v372 = vld [vmem:[%s0 + $0xa98] sm:$0xff]
  %v373 = vld [vmem:[%s0 + $0xaa0] sm:$0xff]
  %v374 = vld [vmem:[%s0 + $0xaa8] sm:$0xff]
  %v375 = vld [vmem:[%s0 + $0xab0] sm:$0xff]
  %v376 = vld [vmem:[%s0 + $0xab8] sm:$0xff]
  %v377 = vld [vmem:[%s0 + $0xac0] sm:$0xff]
  %v378 = vld [vmem:[%s0 + $0xac8] sm:$0xff]
  %v379 = vld [vmem:[%s0 + $0xad0] sm:$0xff]
  %v380 = vld [vmem:[%s0 + $0xad8] sm:$0xff]
  %v381 = vld [vmem:[%s0 + $0xae0] sm:$0xff]
  %v382 = vld [vmem:[%s0 + $0xae8] sm:$0xff]
  %v383 = vld [vmem:[%s0 + $0xaf0] sm:$0xff]
  %v384 = vld [vmem:[%s0 + $0xaf8] sm:$0xff]
  %v385 = vld [vmem:[%s0 + $0xb00] sm:$0xff]
  %v386 = vld [vmem:[%s0 + $0xb08] sm:$0xff]
  %v387 = vld [vmem:[%s0 + $0xb10] sm:$0xff]
  %v388 = vld [vmem:[%s0 + $0xb18] sm:$0xff]
  %v389 = vld [vmem:[%s0 + $0xb20] sm:$0xff]
  %v390 = vld [vmem:[%s0 + $0xb28] sm:$0xff]
  %v391 = vld [vmem:[%s0 + $0xb30] sm:$0xff]
  %v392 = vld [vmem:[%s0 + $0xb38] sm:$0xff]
  %v393 = vld [vmem:[%s0 + $0xb40] sm:$0xff]
  %v394 = vld [vmem:[%s0 + $0xb48] sm:$0xff]
  %v395 = vld [vmem:[%s0 + $0xb50] sm:$0xff]
  %v396 = vld [vmem:[%s0 + $0xb58] sm:$0xff]
  %v397 = vld [vmem:[%s0 + $0xb60] sm:$0xff]
  %v398 = vld [vmem:[%s0 + $0xb68] sm:$0xff]
  %v399 = vld [vmem:[%s0 + $0xb70] sm:$0xff]
  %v400 = vld [vmem:[%s0 + $0xb78] sm:$0xff]
  %v401 = vld [vmem:[%s0 + $0xb80] sm:$0xff]
  %v402 = vld [vmem:[%s0 + $0xb88] sm:$0xff]
  %v403 = vld [vmem:[%s0 + $0xb90] sm:$0xff]
  %v404 = vld [vmem:[%s0 + $0xb98] sm:$0xff]
  %v405 = vld [vmem:[%s0 + $0xba0] sm:$0xff]
  %v406 = vld [vmem:[%s0 + $0xba8] sm:$0xff]
  %v407 = vld [vmem:[%s0 + $0xbb0] sm:$0xff]
  %v408 = vld [vmem:[%s0 + $0xbb8] sm:$0xff]
  %v409 = vld [vmem:[%s0 + $0xbc0] sm:$0xff]
  %v410 = vld [vmem:[%s0 + $0xbc8] sm:$0xff]
  %v411 = vld [vmem:[%s0 + $0xbd0] sm:$0xff]
  %v412 = vld [vmem:[%s0 + $0xbd8] sm:$0xff]
  %v413 = vld [vmem:[%s0 + $0xbe0] sm:$0xff]
  %v414 = vld [vmem:[%s0 + $0xbe8] sm:$0xff]
  %v415 = vld [vmem:[%s0 + $0xbf0] sm:$0xff]
  %v416 = vld [vmem:[%s0 + $0xbf8] sm:$0xff]
  %v417 = vld [vmem:[%s0 + $0xc00] sm:$0xff]
  %v418 = vld [vmem:[%s0 + $0xc08] sm:$0xff]
  %v419 = vld [vmem:[%s0 + $0xc10] sm:$0xff]
  %v420 = vld [vmem:[%s0 + $0xc18] sm:$0xff]
  %v421 = vld [vmem:[%s0 + $0xc20] sm:$0xff]
  %v422 = vld [vmem:[%s0 + $0xc28] sm:$0xff]
  %v423 = vld [vmem:[%s0 + $0xc30] sm:$0xff]
  %v424 = vld [vmem:[%s0 + $0xc38] sm:$0xff]
  %v425 = vld [vmem:[%s0 + $0xc40] sm:$0xff]
  %v426 = vld [vmem:[%s0 + $0xc48] sm:$0xff]
  %v427 = vld [vmem:[%s0 + $0xc50] sm:$0xff]
  %v428 = vld [vmem:[%s0 + $0xc58] sm:$0xff]
  %v429 = vld [vmem:[%s0 + $0xc60] sm:$0xff]
  %v430 = vld [vmem:[%s0 + $0xc68] sm:$0xff]
  %v431 = vld [vmem:[%s0 + $0xc70] sm:$0xff]
  %v432 = vld [vmem:[%s0 + $0xc78] sm:$0xff]
  %v433 = vld [vmem:[%s0 + $0xc80] sm:$0xff]
  %v434 = vld [vmem:[%s0 + $0xc88] sm:$0xff]
  %v435 = vld [vmem:[%s0 + $0xc90] sm:$0xff]
  %v436 = vld [vmem:[%s0 + $0xc98] sm:$0xff]
  %v437 = vld [vmem:[%s0 + $0xca0] sm:$0xff]
  %v438 = vld [vmem:[%s0 + $0xca8] sm:$0xff]
  %v439 = vld [vmem:[%s0 + $0xcb0] sm:$0xff]
  %v440 = vld [vmem:[%s0 + $0xcb8] sm:$0xff]
  %v441 = vld [vmem:[%s0 + $0xcc0] sm:$0xff]
  %v442 = vld [vmem:[%s0 + $0xcc8] sm:$0xff]
  %v443 = vld [vmem:[%s0 + $0xcd0] sm:$0xff]
  %v444 = vld [vmem:[%s0 + $0xcd8] sm:$0xff]
  %v445 = vld [vmem:[%s0 + $0xce0] sm:$0xff]
  %v446 = vld [vmem:[%s0 + $0xce8] sm:$0xff]
  %v447 = vld [vmem:[%s0 + $0xcf0] sm:$0xff]
  %v448 = vld [vmem:[%s0 + $0xcf8] sm:$0xff]
  %v449 = vld [vmem:[%s0 + $0xd00] sm:$0xff]
  %v450 = vld [vmem:[%s0 + $0xd08] sm:$0xff]
  %v451 = vld [vmem:[%s0 + $0xd10] sm:$0xff]
  %v452 = vld [vmem:[%s0 + $0xd18] sm:$0xff]
  %v453 = vld [vmem:[%s0 + $0xd20] sm:$0xff]
  %v454 = vld [vmem:[%s0 + $0xd28] sm:$0xff]
  %v455 = vld [vmem:[%s0 + $0xd30] sm:$0xff]
  %v456 = vld [vmem:[%s0 + $0xd38] sm:$0xff]
  %v457 = vld [vmem:[%s0 + $0xd40] sm:$0xff]
  %v458 = vld [vmem:[%s0 + $0xd48] sm:$0xff]
  %v459 = vld [vmem:[%s0 + $0xd50] sm:$0xff]
  %v460 = vld [vmem:[%s0 + $0xd58] sm:$0xff]
  %v461 = vld [vmem:[%s0 + $0xd60] sm:$0xff]
  %v462 = vld [vmem:[%s0 + $0xd68] sm:$0xff]
  %v463 = vld [vmem:[%s0 + $0xd70] sm:$0xff]
  %v464 = vld [vmem:[%s0 + $0xd78] sm:$0xff]
  %v465 = vld [vmem:[%s0 + $0xd80] sm:$0xff]
  %v466 = vld [vmem:[%s0 + $0xd88] sm:$0xff]
  %v467 = vld [vmem:[%s0 + $0xd90] sm:$0xff]
  %v468 = vld [vmem:[%s0 + $0xd98] sm:$0xff]
  %v469 = vld [vmem:[%s0 + $0xda0] sm:$0xff]
  %v470 = vld [vmem:[%s0 + $0xda8] sm:$0xff]
  %v471 = vld [vmem:[%s0 + $0xdb0] sm:$0xff]
  %v472 = vld [vmem:[%s0 + $0xdb8] sm:$0xff]
  %v473 = vld [vmem:[%s0 + $0xdc0] sm:$0xff]
  %v474 = vld [vmem:[%s0 + $0xdc8] sm:$0xff]
  %v475 = vld [vmem:[%s0 + $0xdd0] sm:$0xff]
  %v476 = vld [vmem:[%s0 + $0xdd8] sm:$0xff]
  %v477 = vld [vmem:[%s0 + $0xde0] sm:$0xff]
  %v478 = vld [vmem:[%s0 + $0xde8] sm:$0xff]
  %v479 = vld [vmem:[%s0 + $0xdf0] sm:$0xff]
  %v480 = vld [vmem:[%s0 + $0xdf8] sm:$0xff]
  %v481 = vpack.c.bf16 %v40, %v33
  %v482 = vpack.c.bf16 %v41, %v34
  %v483 = vpack.c.bf16 %v42, %v35
  %v484 = vpack.c.bf16 %v43, %v36
  %v485 = vpack.c.bf16 %v44, %v37
  %v486 = vpack.c.bf16 %v45, %v38
  %v487 = vpack.c.bf16 %v46, %v39
  %v488 = vpack.c.bf16 %v54, %v47
  %v489 = vpack.c.bf16 %v55, %v48
  %v490 = vpack.c.bf16 %v56, %v49
  %v491 = vpack.c.bf16 %v57, %v50
  %v492 = vpack.c.bf16 %v58, %v51
  %v493 = vpack.c.bf16 %v59, %v52
  %v494 = vpack.c.bf16 %v60, %v53
  %v495 = vpack.c.bf16 %v68, %v61
  %v496 = vpack.c.bf16 %v69, %v62
  %v497 = vpack.c.bf16 %v70, %v63
  %v498 = vpack.c.bf16 %v71, %v64
  %v499 = vpack.c.bf16 %v72, %v65
  %v500 = vpack.c.bf16 %v73, %v66
  %v501 = vpack.c.bf16 %v74, %v67
  %v502 = vpack.c.bf16 %v82, %v75
  %v503 = vpack.c.bf16 %v83, %v76
  %v504 = vpack.c.bf16 %v84, %v77
  %v505 = vpack.c.bf16 %v85, %v78
  %v506 = vpack.c.bf16 %v86, %v79
  %v507 = vpack.c.bf16 %v87, %v80
  %v508 = vpack.c.bf16 %v88, %v81
  %v509 = vpack.c.bf16 %v96, %v89
  %v510 = vpack.c.bf16 %v97, %v90
  %v511 = vpack.c.bf16 %v98, %v91
  %v512 = vpack.c.bf16 %v99, %v92
  %v513 = vpack.c.bf16 %v100, %v93
  %v514 = vpack.c.bf16 %v101, %v94
  %v515 = vpack.c.bf16 %v102, %v95
  %v516 = vpack.c.bf16 %v110, %v103
  %v517 = vpack.c.bf16 %v111, %v104
  %v518 = vpack.c.bf16 %v112, %v105
  %v519 = vpack.c.bf16 %v113, %v106
  %v520 = vpack.c.bf16 %v114, %v107
  %v521 = vpack.c.bf16 %v115, %v108
  %v522 = vpack.c.bf16 %v116, %v109
  %v523 = vpack.c.bf16 %v124, %v117
  %v524 = vpack.c.bf16 %v125, %v118
  %v525 = vpack.c.bf16 %v126, %v119
  %v526 = vpack.c.bf16 %v127, %v120
  %v527 = vpack.c.bf16 %v128, %v121
  %v528 = vpack.c.bf16 %v129, %v122
  %v529 = vpack.c.bf16 %v130, %v123
  %v530 = vpack.c.bf16 %v138, %v131
  %v531 = vpack.c.bf16 %v139, %v132
  %v532 = vpack.c.bf16 %v140, %v133
  %v533 = vpack.c.bf16 %v141, %v134
  %v534 = vpack.c.bf16 %v142, %v135
  %v535 = vpack.c.bf16 %v143, %v136
  %v536 = vpack.c.bf16 %v144, %v137
  %v537 = vpack.c.bf16 %v152, %v145
  %v538 = vpack.c.bf16 %v153, %v146
  %v539 = vpack.c.bf16 %v154, %v147
  %v540 = vpack.c.bf16 %v155, %v148
  %v541 = vpack.c.bf16 %v156, %v149
  %v542 = vpack.c.bf16 %v157, %v150
  %v543 = vpack.c.bf16 %v158, %v151
  %v544 = vpack.c.bf16 %v166, %v159
  %v545 = vpack.c.bf16 %v167, %v160
  %v546 = vpack.c.bf16 %v168, %v161
  %v547 = vpack.c.bf16 %v169, %v162
  %v548 = vpack.c.bf16 %v170, %v163
  %v549 = vpack.c.bf16 %v171, %v164
  %v550 = vpack.c.bf16 %v172, %v165
  %v551 = vpack.c.bf16 %v180, %v173
  %v552 = vpack.c.bf16 %v181, %v174
  %v553 = vpack.c.bf16 %v182, %v175
  %v554 = vpack.c.bf16 %v183, %v176
  %v555 = vpack.c.bf16 %v184, %v177
  %v556 = vpack.c.bf16 %v185, %v178
  %v557 = vpack.c.bf16 %v186, %v179
  %v558 = vpack.c.bf16 %v194, %v187
  %v559 = vpack.c.bf16 %v195, %v188
  %v560 = vpack.c.bf16 %v196, %v189
  %v561 = vpack.c.bf16 %v197, %v190
  %v562 = vpack.c.bf16 %v198, %v191
  %v563 = vpack.c.bf16 %v199, %v192
  %v564 = vpack.c.bf16 %v200, %v193
  %v565 = vpack.c.bf16 %v208, %v201
  %v566 = vpack.c.bf16 %v209, %v202
  %v567 = vpack.c.bf16 %v210, %v203
  %v568 = vpack.c.bf16 %v211, %v204
  %v569 = vpack.c.bf16 %v212, %v205
  %v570 = vpack.c.bf16 %v213, %v206
  %v571 = vpack.c.bf16 %v214, %v207
  %v572 = vpack.c.bf16 %v222, %v215
  %v573 = vpack.c.bf16 %v223, %v216
  %v574 = vpack.c.bf16 %v224, %v217
  %v575 = vpack.c.bf16 %v225, %v218
  %v576 = vpack.c.bf16 %v226, %v219
  %v577 = vpack.c.bf16 %v227, %v220
  %v578 = vpack.c.bf16 %v228, %v221
  %v579 = vpack.c.bf16 %v236, %v229
  %v580 = vpack.c.bf16 %v237, %v230
  %v581 = vpack.c.bf16 %v238, %v231
  %v582 = vpack.c.bf16 %v239, %v232
  %v583 = vpack.c.bf16 %v240, %v233
  %v584 = vpack.c.bf16 %v241, %v234
  %v585 = vpack.c.bf16 %v242, %v235
  %v586 = vpack.c.bf16 %v250, %v243
  %v587 = vpack.c.bf16 %v251, %v244
  %v588 = vpack.c.bf16 %v252, %v245
  %v589 = vpack.c.bf16 %v253, %v246
  %v590 = vpack.c.bf16 %v254, %v247
  %v591 = vpack.c.bf16 %v255, %v248
  %v592 = vpack.c.bf16 %v256, %v249
  %v593 = vpack.c.bf16 %v264, %v257
  %v594 = vpack.c.bf16 %v265, %v258
  %v595 = vpack.c.bf16 %v266, %v259
  %v596 = vpack.c.bf16 %v267, %v260
  %v597 = vpack.c.bf16 %v268, %v261
  %v598 = vpack.c.bf16 %v269, %v262
  %v599 = vpack.c.bf16 %v270, %v263
  %v600 = vpack.c.bf16 %v278, %v271
  %v601 = vpack.c.bf16 %v279, %v272
  %v602 = vpack.c.bf16 %v280, %v273
  %v603 = vpack.c.bf16 %v281, %v274
  %v604 = vpack.c.bf16 %v282, %v275
  %v605 = vpack.c.bf16 %v283, %v276
  %v606 = vpack.c.bf16 %v284, %v277
  %v607 = vpack.c.bf16 %v292, %v285
  %v608 = vpack.c.bf16 %v293, %v286
  %v609 = vpack.c.bf16 %v294, %v287
  %v610 = vpack.c.bf16 %v295, %v288
  %v611 = vpack.c.bf16 %v296, %v289
  %v612 = vpack.c.bf16 %v297, %v290
  %v613 = vpack.c.bf16 %v298, %v291
  %v614 = vpack.c.bf16 %v306, %v299
  %v615 = vpack.c.bf16 %v307, %v300
  %v616 = vpack.c.bf16 %v308, %v301
  %v617 = vpack.c.bf16 %v309, %v302
  %v618 = vpack.c.bf16 %v310, %v303
  %v619 = vpack.c.bf16 %v311, %v304
  %v620 = vpack.c.bf16 %v312, %v305
  %v621 = vpack.c.bf16 %v320, %v313
  %v622 = vpack.c.bf16 %v321, %v314
  %v623 = vpack.c.bf16 %v322, %v315
  %v624 = vpack.c.bf16 %v323, %v316
  %v625 = vpack.c.bf16 %v324, %v317
  %v626 = vpack.c.bf16 %v325, %v318
  %v627 = vpack.c.bf16 %v326, %v319
  %v628 = vpack.c.bf16 %v334, %v327
  %v629 = vpack.c.bf16 %v335, %v328
  %v630 = vpack.c.bf16 %v336, %v329
  %v631 = vpack.c.bf16 %v337, %v330
  %v632 = vpack.c.bf16 %v338, %v331
  %v633 = vpack.c.bf16 %v339, %v332
  %v634 = vpack.c.bf16 %v340, %v333
  %v635 = vpack.c.bf16 %v348, %v341
  %v636 = vpack.c.bf16 %v349, %v342
  %v637 = vpack.c.bf16 %v350, %v343
  %v638 = vpack.c.bf16 %v351, %v344
  %v639 = vpack.c.bf16 %v352, %v345
  %v640 = vpack.c.bf16 %v353, %v346
  %v641 = vpack.c.bf16 %v354, %v347
  %v642 = vpack.c.bf16 %v362, %v355
  %v643 = vpack.c.bf16 %v363, %v356
  %v644 = vpack.c.bf16 %v364, %v357
  %v645 = vpack.c.bf16 %v365, %v358
  %v646 = vpack.c.bf16 %v366, %v359
  %v647 = vpack.c.bf16 %v367, %v360
  %v648 = vpack.c.bf16 %v368, %v361
  %v649 = vpack.c.bf16 %v376, %v369
  %v650 = vpack.c.bf16 %v377, %v370
  %v651 = vpack.c.bf16 %v378, %v371
  %v652 = vpack.c.bf16 %v379, %v372
  %v653 = vpack.c.bf16 %v380, %v373
  %v654 = vpack.c.bf16 %v381, %v374
  %v655 = vpack.c.bf16 %v382, %v375
  %v656 = vpack.c.bf16 %v390, %v383
  %v657 = vpack.c.bf16 %v391, %v384
  %v658 = vpack.c.bf16 %v392, %v385
  %v659 = vpack.c.bf16 %v393, %v386
  %v660 = vpack.c.bf16 %v394, %v387
  %v661 = vpack.c.bf16 %v395, %v388
  %v662 = vpack.c.bf16 %v396, %v389
  %v663 = vpack.c.bf16 %v404, %v397
  %v664 = vpack.c.bf16 %v405, %v398
  %v665 = vpack.c.bf16 %v406, %v399
  %v666 = vpack.c.bf16 %v407, %v400
  %v667 = vpack.c.bf16 %v408, %v401
  %v668 = vpack.c.bf16 %v409, %v402
  %v669 = vpack.c.bf16 %v410, %v403
  %v670 = vpack.c.bf16 %v418, %v411
  %v671 = vpack.c.bf16 %v419, %v412
  %v672 = vpack.c.bf16 %v420, %v413
  %v673 = vpack.c.bf16 %v421, %v414
  %v674 = vpack.c.bf16 %v422, %v415
  %v675 = vpack.c.bf16 %v423, %v416
  %v676 = vpack.c.bf16 %v424, %v417
  %v677 = vpack.c.bf16 %v432, %v425
  %v678 = vpack.c.bf16 %v433, %v426
  %v679 = vpack.c.bf16 %v434, %v427
  %v680 = vpack.c.bf16 %v435, %v428
  %v681 = vpack.c.bf16 %v436, %v429
  %v682 = vpack.c.bf16 %v437, %v430
  %v683 = vpack.c.bf16 %v438, %v431
  %v684 = vpack.c.bf16 %v446, %v439
  %v685 = vpack.c.bf16 %v447, %v440
  %v686 = vpack.c.bf16 %v448, %v441
  %v687 = vpack.c.bf16 %v449, %v442
  %v688 = vpack.c.bf16 %v450, %v443
  %v689 = vpack.c.bf16 %v451, %v444
  %v690 = vpack.c.bf16 %v452, %v445
  %v691 = vpack.c.bf16 %v460, %v453
  %v692 = vpack.c.bf16 %v461, %v454
  %v693 = vpack.c.bf16 %v462, %v455
  %v694 = vpack.c.bf16 %v463, %v456
  %v695 = vpack.c.bf16 %v464, %v457
  %v696 = vpack.c.bf16 %v465, %v458
  %v697 = vpack.c.bf16 %v466, %v459
  %v698 = vpack.c.bf16 %v474, %v467
  %v699 = vpack.c.bf16 %v475, %v468
  %v700 = vpack.c.bf16 %v476, %v469
  %v701 = vpack.c.bf16 %v477, %v470
  %v702 = vpack.c.bf16 %v478, %v471
  %v703 = vpack.c.bf16 %v479, %v472
  %v704 = vpack.c.bf16 %v480, %v473
  %v705 = vld [vmem:[%s1] sm:$0xff]
  %v706 = vld [vmem:[%s1 + $0x8] sm:$0xff]
  %v707 = vld [vmem:[%s1 + $0x10] sm:$0xff]
  %v708 = vld [vmem:[%s1 + $0x18] sm:$0xff]
  %v709 = vld [vmem:[%s1 + $0x20] sm:$0xff]
  %v710 = vld [vmem:[%s1 + $0x28] sm:$0xff]
  %v711 = vld [vmem:[%s1 + $0x30] sm:$0xff]
  %v712 = vld [vmem:[%s1 + $0x38] sm:$0xff]
  %v713 = vld [vmem:[%s1 + $0x40] sm:$0xff]
  %v714 = vld [vmem:[%s1 + $0x48] sm:$0xff]
  %v715 = vld [vmem:[%s1 + $0x50] sm:$0xff]
  %v716 = vld [vmem:[%s1 + $0x58] sm:$0xff]
  %v717 = vld [vmem:[%s1 + $0x60] sm:$0xff]
  %v718 = vld [vmem:[%s1 + $0x68] sm:$0xff]
  %v719 = vld [vmem:[%s1 + $0x70] sm:$0xff]
  %v720 = vld [vmem:[%s1 + $0x78] sm:$0xff]
  %v721 = vld [vmem:[%s1 + $0x80] sm:$0xff]
  %v722 = vld [vmem:[%s1 + $0x88] sm:$0xff]
  %v723 = vld [vmem:[%s1 + $0x90] sm:$0xff]
  %v724 = vld [vmem:[%s1 + $0x98] sm:$0xff]
  %v725 = vld [vmem:[%s1 + $0xa0] sm:$0xff]
  %v726 = vld [vmem:[%s1 + $0xa8] sm:$0xff]
  %v727 = vld [vmem:[%s1 + $0xb0] sm:$0xff]
  %v728 = vld [vmem:[%s1 + $0xb8] sm:$0xff]
  %v729 = vld [vmem:[%s1 + $0xc0] sm:$0xff]
  %v730 = vld [vmem:[%s1 + $0xc8] sm:$0xff]
  %v731 = vld [vmem:[%s1 + $0xd0] sm:$0xff]
  %v732 = vld [vmem:[%s1 + $0xd8] sm:$0xff]
  %v733 = vld [vmem:[%s1 + $0xe0] sm:$0xff]
  %v734 = vld [vmem:[%s1 + $0xe8] sm:$0xff]
  %v735 = vld [vmem:[%s1 + $0xf0] sm:$0xff]
  %v736 = vld [vmem:[%s1 + $0xf8] sm:$0xff]
  %v737 = vld [vmem:[%s1 + $0x100] sm:$0xff]
  %v738 = vld [vmem:[%s1 + $0x108] sm:$0xff]
  %v739 = vld [vmem:[%s1 + $0x110] sm:$0xff]
  %v740 = vld [vmem:[%s1 + $0x118] sm:$0xff]
  %v741 = vld [vmem:[%s1 + $0x120] sm:$0xff]
  %v742 = vld [vmem:[%s1 + $0x128] sm:$0xff]
  %v743 = vld [vmem:[%s1 + $0x130] sm:$0xff]
  %v744 = vld [vmem:[%s1 + $0x138] sm:$0xff]
  %v745 = vld [vmem:[%s1 + $0x140] sm:$0xff]
  %v746 = vld [vmem:[%s1 + $0x148] sm:$0xff]
  %v747 = vld [vmem:[%s1 + $0x150] sm:$0xff]
  %v748 = vld [vmem:[%s1 + $0x158] sm:$0xff]
  %v749 = vld [vmem:[%s1 + $0x160] sm:$0xff]
  %v750 = vld [vmem:[%s1 + $0x168] sm:$0xff]
  %v751 = vld [vmem:[%s1 + $0x170] sm:$0xff]
  %v752 = vld [vmem:[%s1 + $0x178] sm:$0xff]
  %v753 = vld [vmem:[%s1 + $0x180] sm:$0xff]
  %v754 = vld [vmem:[%s1 + $0x188] sm:$0xff]
  %v755 = vld [vmem:[%s1 + $0x190] sm:$0xff]
  %v756 = vld [vmem:[%s1 + $0x198] sm:$0xff]
  %v757 = vld [vmem:[%s1 + $0x1a0] sm:$0xff]
  %v758 = vld [vmem:[%s1 + $0x1a8] sm:$0xff]
  %v759 = vld [vmem:[%s1 + $0x1b0] sm:$0xff]
  %v760 = vld [vmem:[%s1 + $0x1b8] sm:$0xff]
  %v761 = vld [vmem:[%s1 + $0x1c0] sm:$0xff]
  %v762 = vld [vmem:[%s1 + $0x1c8] sm:$0xff]
  %v763 = vld [vmem:[%s1 + $0x1d0] sm:$0xff]
  %v764 = vld [vmem:[%s1 + $0x1d8] sm:$0xff]
  %v765 = vld [vmem:[%s1 + $0x1e0] sm:$0xff]
  %v766 = vld [vmem:[%s1 + $0x1e8] sm:$0xff]
  %v767 = vld [vmem:[%s1 + $0x1f0] sm:$0xff]
  %v768 = vld [vmem:[%s1 + $0x1f8] sm:$0xff]
  %v769 = vld [vmem:[%s1 + $0x200] sm:$0xff]
  %v770 = vld [vmem:[%s1 + $0x208] sm:$0xff]
  %v771 = vld [vmem:[%s1 + $0x210] sm:$0xff]
  %v772 = vld [vmem:[%s1 + $0x218] sm:$0xff]
  %v773 = vld [vmem:[%s1 + $0x220] sm:$0xff]
  %v774 = vld [vmem:[%s1 + $0x228] sm:$0xff]
  %v775 = vld [vmem:[%s1 + $0x230] sm:$0xff]
  %v776 = vld [vmem:[%s1 + $0x238] sm:$0xff]
  %v777 = vld [vmem:[%s1 + $0x240] sm:$0xff]
  %v778 = vld [vmem:[%s1 + $0x248] sm:$0xff]
  %v779 = vld [vmem:[%s1 + $0x250] sm:$0xff]
  %v780 = vld [vmem:[%s1 + $0x258] sm:$0xff]
  %v781 = vld [vmem:[%s1 + $0x260] sm:$0xff]
  %v782 = vld [vmem:[%s1 + $0x268] sm:$0xff]
  %v783 = vld [vmem:[%s1 + $0x270] sm:$0xff]
  %v784 = vld [vmem:[%s1 + $0x278] sm:$0xff]
  %v785 = vld [vmem:[%s1 + $0x280] sm:$0xff]
  %v786 = vld [vmem:[%s1 + $0x288] sm:$0xff]
  %v787 = vld [vmem:[%s1 + $0x290] sm:$0xff]
  %v788 = vld [vmem:[%s1 + $0x298] sm:$0xff]
  %v789 = vld [vmem:[%s1 + $0x2a0] sm:$0xff]
  %v790 = vld [vmem:[%s1 + $0x2a8] sm:$0xff]
  %v791 = vld [vmem:[%s1 + $0x2b0] sm:$0xff]
  %v792 = vld [vmem:[%s1 + $0x2b8] sm:$0xff]
  %v793 = vld [vmem:[%s1 + $0x2c0] sm:$0xff]
  %v794 = vld [vmem:[%s1 + $0x2c8] sm:$0xff]
  %v795 = vld [vmem:[%s1 + $0x2d0] sm:$0xff]
  %v796 = vld [vmem:[%s1 + $0x2d8] sm:$0xff]
  %v797 = vld [vmem:[%s1 + $0x2e0] sm:$0xff]
  %v798 = vld [vmem:[%s1 + $0x2e8] sm:$0xff]
  %v799 = vld [vmem:[%s1 + $0x2f0] sm:$0xff]
  %v800 = vld [vmem:[%s1 + $0x2f8] sm:$0xff]
  %v801 = vld [vmem:[%s1 + $0x300] sm:$0xff]
  %v802 = vld [vmem:[%s1 + $0x308] sm:$0xff]
  %v803 = vld [vmem:[%s1 + $0x310] sm:$0xff]
  %v804 = vld [vmem:[%s1 + $0x318] sm:$0xff]
  %v805 = vld [vmem:[%s1 + $0x320] sm:$0xff]
  %v806 = vld [vmem:[%s1 + $0x328] sm:$0xff]
  %v807 = vld [vmem:[%s1 + $0x330] sm:$0xff]
  %v808 = vld [vmem:[%s1 + $0x338] sm:$0xff]
  %v809 = vld [vmem:[%s1 + $0x340] sm:$0xff]
  %v810 = vld [vmem:[%s1 + $0x348] sm:$0xff]
  %v811 = vld [vmem:[%s1 + $0x350] sm:$0xff]
  %v812 = vld [vmem:[%s1 + $0x358] sm:$0xff]
  %v813 = vld [vmem:[%s1 + $0x360] sm:$0xff]
  %v814 = vld [vmem:[%s1 + $0x368] sm:$0xff]
  %v815 = vld [vmem:[%s1 + $0x370] sm:$0xff]
  %v816 = vld [vmem:[%s1 + $0x378] sm:$0xff]
  %v817 = vld [vmem:[%s1 + $0x380] sm:$0xff]
  %v818 = vld [vmem:[%s1 + $0x388] sm:$0xff]
  %v819 = vld [vmem:[%s1 + $0x390] sm:$0xff]
  %v820 = vld [vmem:[%s1 + $0x398] sm:$0xff]
  %v821 = vld [vmem:[%s1 + $0x3a0] sm:$0xff]
  %v822 = vld [vmem:[%s1 + $0x3a8] sm:$0xff]
  %v823 = vld [vmem:[%s1 + $0x3b0] sm:$0xff]
  %v824 = vld [vmem:[%s1 + $0x3b8] sm:$0xff]
  %v825 = vld [vmem:[%s1 + $0x3c0] sm:$0xff]
  %v826 = vld [vmem:[%s1 + $0x3c8] sm:$0xff]
  %v827 = vld [vmem:[%s1 + $0x3d0] sm:$0xff]
  %v828 = vld [vmem:[%s1 + $0x3d8] sm:$0xff]
  %v829 = vld [vmem:[%s1 + $0x3e0] sm:$0xff]
  %v830 = vld [vmem:[%s1 + $0x3e8] sm:$0xff]
  %v831 = vld [vmem:[%s1 + $0x3f0] sm:$0xff]
  %v832 = vld [vmem:[%s1 + $0x3f8] sm:$0xff]
  %v833 = vld [vmem:[%s1 + $0x400] sm:$0xff]
  %v834 = vld [vmem:[%s1 + $0x408] sm:$0xff]
  %v835 = vld [vmem:[%s1 + $0x410] sm:$0xff]
  %v836 = vld [vmem:[%s1 + $0x418] sm:$0xff]
  %v837 = vld [vmem:[%s1 + $0x420] sm:$0xff]
  %v838 = vld [vmem:[%s1 + $0x428] sm:$0xff]
  %v839 = vld [vmem:[%s1 + $0x430] sm:$0xff]
  %v840 = vld [vmem:[%s1 + $0x438] sm:$0xff]
  %v841 = vld [vmem:[%s1 + $0x440] sm:$0xff]
  %v842 = vld [vmem:[%s1 + $0x448] sm:$0xff]
  %v843 = vld [vmem:[%s1 + $0x450] sm:$0xff]
  %v844 = vld [vmem:[%s1 + $0x458] sm:$0xff]
  %v845 = vld [vmem:[%s1 + $0x460] sm:$0xff]
  %v846 = vld [vmem:[%s1 + $0x468] sm:$0xff]
  %v847 = vld [vmem:[%s1 + $0x470] sm:$0xff]
  %v848 = vld [vmem:[%s1 + $0x478] sm:$0xff]
  %v849 = vld [vmem:[%s1 + $0x480] sm:$0xff]
  %v850 = vld [vmem:[%s1 + $0x488] sm:$0xff]
  %v851 = vld [vmem:[%s1 + $0x490] sm:$0xff]
  %v852 = vld [vmem:[%s1 + $0x498] sm:$0xff]
  %v853 = vld [vmem:[%s1 + $0x4a0] sm:$0xff]
  %v854 = vld [vmem:[%s1 + $0x4a8] sm:$0xff]
  %v855 = vld [vmem:[%s1 + $0x4b0] sm:$0xff]
  %v856 = vld [vmem:[%s1 + $0x4b8] sm:$0xff]
  %v857 = vld [vmem:[%s1 + $0x4c0] sm:$0xff]
  %v858 = vld [vmem:[%s1 + $0x4c8] sm:$0xff]
  %v859 = vld [vmem:[%s1 + $0x4d0] sm:$0xff]
  %v860 = vld [vmem:[%s1 + $0x4d8] sm:$0xff]
  %v861 = vld [vmem:[%s1 + $0x4e0] sm:$0xff]
  %v862 = vld [vmem:[%s1 + $0x4e8] sm:$0xff]
  %v863 = vld [vmem:[%s1 + $0x4f0] sm:$0xff]
  %v864 = vld [vmem:[%s1 + $0x4f8] sm:$0xff]
  %v865 = vld [vmem:[%s1 + $0x500] sm:$0xff]
  %v866 = vld [vmem:[%s1 + $0x508] sm:$0xff]
  %v867 = vld [vmem:[%s1 + $0x510] sm:$0xff]
  %v868 = vld [vmem:[%s1 + $0x518] sm:$0xff]
  %v869 = vld [vmem:[%s1 + $0x520] sm:$0xff]
  %v870 = vld [vmem:[%s1 + $0x528] sm:$0xff]
  %v871 = vld [vmem:[%s1 + $0x530] sm:$0xff]
  %v872 = vld [vmem:[%s1 + $0x538] sm:$0xff]
  %v873 = vld [vmem:[%s1 + $0x540] sm:$0xff]
  %v874 = vld [vmem:[%s1 + $0x548] sm:$0xff]
  %v875 = vld [vmem:[%s1 + $0x550] sm:$0xff]
  %v876 = vld [vmem:[%s1 + $0x558] sm:$0xff]
  %v877 = vld [vmem:[%s1 + $0x560] sm:$0xff]
  %v878 = vld [vmem:[%s1 + $0x568] sm:$0xff]
  %v879 = vld [vmem:[%s1 + $0x570] sm:$0xff]
  %v880 = vld [vmem:[%s1 + $0x578] sm:$0xff]
  %v881 = vld [vmem:[%s1 + $0x580] sm:$0xff]
  %v882 = vld [vmem:[%s1 + $0x588] sm:$0xff]
  %v883 = vld [vmem:[%s1 + $0x590] sm:$0xff]
  %v884 = vld [vmem:[%s1 + $0x598] sm:$0xff]
  %v885 = vld [vmem:[%s1 + $0x5a0] sm:$0xff]
  %v886 = vld [vmem:[%s1 + $0x5a8] sm:$0xff]
  %v887 = vld [vmem:[%s1 + $0x5b0] sm:$0xff]
  %v888 = vld [vmem:[%s1 + $0x5b8] sm:$0xff]
  %v889 = vld [vmem:[%s1 + $0x5c0] sm:$0xff]
  %v890 = vld [vmem:[%s1 + $0x5c8] sm:$0xff]
  %v891 = vld [vmem:[%s1 + $0x5d0] sm:$0xff]
  %v892 = vld [vmem:[%s1 + $0x5d8] sm:$0xff]
  %v893 = vld [vmem:[%s1 + $0x5e0] sm:$0xff]
  %v894 = vld [vmem:[%s1 + $0x5e8] sm:$0xff]
  %v895 = vld [vmem:[%s1 + $0x5f0] sm:$0xff]
  %v896 = vld [vmem:[%s1 + $0x5f8] sm:$0xff]
  %v897 = vld [vmem:[%s1 + $0x600] sm:$0xff]
  %v898 = vld [vmem:[%s1 + $0x608] sm:$0xff]
  %v899 = vld [vmem:[%s1 + $0x610] sm:$0xff]
  %v900 = vld [vmem:[%s1 + $0x618] sm:$0xff]
  %v901 = vld [vmem:[%s2] sm:$0xf]
  %v903 = vperm.slane %v901, 0
  %v904 = vperm.slane %v901, 1
  %v905 = vperm.slane %v901, 2
  %v906 = vperm.slane %v901, 3
  %v1107 = vunpack.c.l.b16 %v705
  %v1108 = vunpack.c.h.b16 %v705
  %v1109 = vunpack.c.l.b16 %v706
  %v1110 = vunpack.c.h.b16 %v706
  %v1111 = vunpack.c.l.b16 %v707
  %v1112 = vunpack.c.h.b16 %v707
  %v1113 = vunpack.c.l.b16 %v708
  %v1114 = vunpack.c.h.b16 %v708
  %v1115 = vunpack.c.l.b16 %v709
  %v1116 = vunpack.c.h.b16 %v709
  %v1117 = vunpack.c.l.b16 %v710
  %v1118 = vunpack.c.h.b16 %v710
  %v1119 = vunpack.c.l.b16 %v711
  %v1120 = vunpack.c.h.b16 %v711
  %v1121 = vunpack.c.l.b16 %v712
  %v1122 = vunpack.c.h.b16 %v712
  %v1123 = vunpack.c.l.b16 %v713
  %v1124 = vunpack.c.h.b16 %v713
  %v1125 = vunpack.c.l.b16 %v714
  %v1126 = vunpack.c.h.b16 %v714
  %v1127 = vunpack.c.l.b16 %v715
  %v1128 = vunpack.c.h.b16 %v715
  %v1129 = vunpack.c.l.b16 %v716
  %v1130 = vunpack.c.h.b16 %v716
  %v1131 = vunpack.c.l.b16 %v717
  %v1132 = vunpack.c.h.b16 %v717
  %v1133 = vunpack.c.l.b16 %v718
  %v1134 = vunpack.c.h.b16 %v718
  %v1135 = vunpack.c.l.b16 %v719
  %v1136 = vunpack.c.h.b16 %v719
  %v1137 = vunpack.c.l.b16 %v720
  %v1138 = vunpack.c.h.b16 %v720
  %v1139 = vunpack.c.l.b16 %v721
  %v1140 = vunpack.c.h.b16 %v721
  %v1141 = vunpack.c.l.b16 %v722
  %v1142 = vunpack.c.h.b16 %v722
  %v1143 = vunpack.c.l.b16 %v723
  %v1144 = vunpack.c.h.b16 %v723
  %v1145 = vunpack.c.l.b16 %v724
  %v1146 = vunpack.c.h.b16 %v724
  %v1147 = vunpack.c.l.b16 %v725
  %v1148 = vunpack.c.h.b16 %v725
  %v1149 = vunpack.c.l.b16 %v726
  %v1150 = vunpack.c.h.b16 %v726
  %v1151 = vunpack.c.l.b16 %v727
  %v1152 = vunpack.c.h.b16 %v727
  %v1153 = vunpack.c.l.b16 %v728
  %v1154 = vunpack.c.h.b16 %v728
  %v1155 = vunpack.c.l.b16 %v729
  %v1156 = vunpack.c.h.b16 %v729
  %v1157 = vunpack.c.l.b16 %v730
  %v1158 = vunpack.c.h.b16 %v730
  %v1159 = vunpack.c.l.b16 %v731
  %v1160 = vunpack.c.h.b16 %v731
  %v1161 = vunpack.c.l.b16 %v732
  %v1162 = vunpack.c.h.b16 %v732
  %v1163 = vunpack.c.l.b16 %v733
  %v1164 = vunpack.c.h.b16 %v733
  %v1165 = vunpack.c.l.b16 %v734
  %v1166 = vunpack.c.h.b16 %v734
  %v1167 = vunpack.c.l.b16 %v735
  %v1168 = vunpack.c.h.b16 %v735
  %v1169 = vunpack.c.l.b16 %v736
  %v1170 = vunpack.c.h.b16 %v736
  %v1171 = vunpack.c.l.b16 %v737
  %v1172 = vunpack.c.h.b16 %v737
  %v1173 = vunpack.c.l.b16 %v738
  %v1174 = vunpack.c.h.b16 %v738
  %v1175 = vunpack.c.l.b16 %v739
  %v1176 = vunpack.c.h.b16 %v739
  %v1177 = vunpack.c.l.b16 %v740
  %v1178 = vunpack.c.h.b16 %v740
  %v1179 = vunpack.c.l.b16 %v741
  %v1180 = vunpack.c.h.b16 %v741
  %v1181 = vunpack.c.l.b16 %v742
  %v1182 = vunpack.c.h.b16 %v742
  %v1183 = vunpack.c.l.b16 %v743
  %v1184 = vunpack.c.h.b16 %v743
  %v1185 = vunpack.c.l.b16 %v744
  %v1186 = vunpack.c.h.b16 %v744
  %v1187 = vunpack.c.l.b16 %v745
  %v1188 = vunpack.c.h.b16 %v745
  %v1189 = vunpack.c.l.b16 %v746
  %v1190 = vunpack.c.h.b16 %v746
  %v1191 = vunpack.c.l.b16 %v747
  %v1192 = vunpack.c.h.b16 %v747
  %v1193 = vunpack.c.l.b16 %v748
  %v1194 = vunpack.c.h.b16 %v748
  %v1195 = vunpack.c.l.b16 %v749
  %v1196 = vunpack.c.h.b16 %v749
  %v1197 = vunpack.c.l.b16 %v750
  %v1198 = vunpack.c.h.b16 %v750
  %v1199 = vunpack.c.l.b16 %v751
  %v1200 = vunpack.c.h.b16 %v751
  %v1201 = vunpack.c.l.b16 %v752
  %v1202 = vunpack.c.h.b16 %v752
  %v1203 = vunpack.c.l.b16 %v753
  %v1204 = vunpack.c.h.b16 %v753
  %v1205 = vunpack.c.l.b16 %v754
  %v1206 = vunpack.c.h.b16 %v754
  %v1207 = vunpack.c.l.b16 %v755
  %v1208 = vunpack.c.h.b16 %v755
  %v1209 = vunpack.c.l.b16 %v756
  %v1210 = vunpack.c.h.b16 %v756
  %v1211 = vunpack.c.l.b16 %v757
  %v1212 = vunpack.c.h.b16 %v757
  %v1213 = vunpack.c.l.b16 %v758
  %v1214 = vunpack.c.h.b16 %v758
  %v1215 = vunpack.c.l.b16 %v759
  %v1216 = vunpack.c.h.b16 %v759
  %v1217 = vunpack.c.l.b16 %v760
  %v1218 = vunpack.c.h.b16 %v760
  %v1219 = vunpack.c.l.b16 %v761
  %v1220 = vunpack.c.h.b16 %v761
  %v1221 = vunpack.c.l.b16 %v762
  %v1222 = vunpack.c.h.b16 %v762
  %v1223 = vunpack.c.l.b16 %v763
  %v1224 = vunpack.c.h.b16 %v763
  %v1225 = vunpack.c.l.b16 %v764
  %v1226 = vunpack.c.h.b16 %v764
  %v1227 = vunpack.c.l.b16 %v765
  %v1228 = vunpack.c.h.b16 %v765
  %v1229 = vunpack.c.l.b16 %v766
  %v1230 = vunpack.c.h.b16 %v766
  %v1231 = vunpack.c.l.b16 %v767
  %v1232 = vunpack.c.h.b16 %v767
  %v1233 = vunpack.c.l.b16 %v768
  %v1234 = vunpack.c.h.b16 %v768
  %v1235 = vunpack.c.l.b16 %v769
  %v1236 = vunpack.c.h.b16 %v769
  %v1237 = vunpack.c.l.b16 %v770
  %v1238 = vunpack.c.h.b16 %v770
  %v1239 = vunpack.c.l.b16 %v771
  %v1240 = vunpack.c.h.b16 %v771
  %v1241 = vunpack.c.l.b16 %v772
  %v1242 = vunpack.c.h.b16 %v772
  %v1243 = vunpack.c.l.b16 %v773
  %v1244 = vunpack.c.h.b16 %v773
  %v1245 = vunpack.c.l.b16 %v774
  %v1246 = vunpack.c.h.b16 %v774
  %v1247 = vunpack.c.l.b16 %v775
  %v1248 = vunpack.c.h.b16 %v775
  %v1249 = vunpack.c.l.b16 %v776
  %v1250 = vunpack.c.h.b16 %v776
  %v1251 = vunpack.c.l.b16 %v777
  %v1252 = vunpack.c.h.b16 %v777
  %v1253 = vunpack.c.l.b16 %v778
  %v1254 = vunpack.c.h.b16 %v778
  %v1255 = vunpack.c.l.b16 %v779
  %v1256 = vunpack.c.h.b16 %v779
  %v1257 = vunpack.c.l.b16 %v780
  %v1258 = vunpack.c.h.b16 %v780
  %v1259 = vunpack.c.l.b16 %v781
  %v1260 = vunpack.c.h.b16 %v781
  %v1261 = vunpack.c.l.b16 %v782
  %v1262 = vunpack.c.h.b16 %v782
  %v1263 = vunpack.c.l.b16 %v783
  %v1264 = vunpack.c.h.b16 %v783
  %v1265 = vunpack.c.l.b16 %v784
  %v1266 = vunpack.c.h.b16 %v784
  %v1267 = vunpack.c.l.b16 %v785
  %v1268 = vunpack.c.h.b16 %v785
  %v1269 = vunpack.c.l.b16 %v786
  %v1270 = vunpack.c.h.b16 %v786
  %v1271 = vunpack.c.l.b16 %v787
  %v1272 = vunpack.c.h.b16 %v787
  %v1273 = vunpack.c.l.b16 %v788
  %v1274 = vunpack.c.h.b16 %v788
  %v1275 = vunpack.c.l.b16 %v789
  %v1276 = vunpack.c.h.b16 %v789
  %v1277 = vunpack.c.l.b16 %v790
  %v1278 = vunpack.c.h.b16 %v790
  %v1279 = vunpack.c.l.b16 %v791
  %v1280 = vunpack.c.h.b16 %v791
  %v1281 = vunpack.c.l.b16 %v792
  %v1282 = vunpack.c.h.b16 %v792
  %v1283 = vunpack.c.l.b16 %v793
  %v1284 = vunpack.c.h.b16 %v793
  %v1285 = vunpack.c.l.b16 %v794
  %v1286 = vunpack.c.h.b16 %v794
  %v1287 = vunpack.c.l.b16 %v795
  %v1288 = vunpack.c.h.b16 %v795
  %v1289 = vunpack.c.l.b16 %v796
  %v1290 = vunpack.c.h.b16 %v796
  %v1291 = vunpack.c.l.b16 %v797
  %v1292 = vunpack.c.h.b16 %v797
  %v1293 = vunpack.c.l.b16 %v798
  %v1294 = vunpack.c.h.b16 %v798
  %v1295 = vunpack.c.l.b16 %v799
  %v1296 = vunpack.c.h.b16 %v799
  %v1297 = vunpack.c.l.b16 %v800
  %v1298 = vunpack.c.h.b16 %v800
  %v1299 = vunpack.c.l.b16 %v801
  %v1300 = vunpack.c.h.b16 %v801
  %v1301 = vunpack.c.l.b16 %v802
  %v1302 = vunpack.c.h.b16 %v802
  %v1303 = vunpack.c.l.b16 %v803
  %v1304 = vunpack.c.h.b16 %v803
  %v1305 = vunpack.c.l.b16 %v804
  %v1306 = vunpack.c.h.b16 %v804
  %v1307 = vunpack.c.l.b16 %v805
  %v1308 = vunpack.c.h.b16 %v805
  %v1309 = vunpack.c.l.b16 %v806
  %v1310 = vunpack.c.h.b16 %v806
  %v1311 = vunpack.c.l.b16 %v807
  %v1312 = vunpack.c.h.b16 %v807
  %v1313 = vunpack.c.l.b16 %v808
  %v1314 = vunpack.c.h.b16 %v808
  %v1315 = vunpack.c.l.b16 %v809
  %v1316 = vunpack.c.h.b16 %v809
  %v1317 = vunpack.c.l.b16 %v810
  %v1318 = vunpack.c.h.b16 %v810
  %v1319 = vunpack.c.l.b16 %v811
  %v1320 = vunpack.c.h.b16 %v811
  %v1321 = vunpack.c.l.b16 %v812
  %v1322 = vunpack.c.h.b16 %v812
  %v1323 = vunpack.c.l.b16 %v813
  %v1324 = vunpack.c.h.b16 %v813
  %v1325 = vunpack.c.l.b16 %v814
  %v1326 = vunpack.c.h.b16 %v814
  %v1327 = vunpack.c.l.b16 %v815
  %v1328 = vunpack.c.h.b16 %v815
  %v1329 = vunpack.c.l.b16 %v816
  %v1330 = vunpack.c.h.b16 %v816
  %v1331 = vunpack.c.l.b16 %v817
  %v1332 = vunpack.c.h.b16 %v817
  %v1333 = vunpack.c.l.b16 %v818
  %v1334 = vunpack.c.h.b16 %v818
  %v1335 = vunpack.c.l.b16 %v819
  %v1336 = vunpack.c.h.b16 %v819
  %v1337 = vunpack.c.l.b16 %v820
  %v1338 = vunpack.c.h.b16 %v820
  %v1339 = vunpack.c.l.b16 %v821
  %v1340 = vunpack.c.h.b16 %v821
  %v1341 = vunpack.c.l.b16 %v822
  %v1342 = vunpack.c.h.b16 %v822
  %v1343 = vunpack.c.l.b16 %v823
  %v1344 = vunpack.c.h.b16 %v823
  %v1345 = vunpack.c.l.b16 %v824
  %v1346 = vunpack.c.h.b16 %v824
  %v1347 = vunpack.c.l.b16 %v825
  %v1348 = vunpack.c.h.b16 %v825
  %v1349 = vunpack.c.l.b16 %v826
  %v1350 = vunpack.c.h.b16 %v826
  %v1351 = vunpack.c.l.b16 %v827
  %v1352 = vunpack.c.h.b16 %v827
  %v1353 = vunpack.c.l.b16 %v828
  %v1354 = vunpack.c.h.b16 %v828
  %v1355 = vunpack.c.l.b16 %v829
  %v1356 = vunpack.c.h.b16 %v829
  %v1357 = vunpack.c.l.b16 %v830
  %v1358 = vunpack.c.h.b16 %v830
  %v1359 = vunpack.c.l.b16 %v831
  %v1360 = vunpack.c.h.b16 %v831
  %v1361 = vunpack.c.l.b16 %v832
  %v1362 = vunpack.c.h.b16 %v832
  %v1363 = vunpack.c.l.b16 %v833
  %v1364 = vunpack.c.h.b16 %v833
  %v1365 = vunpack.c.l.b16 %v834
  %v1366 = vunpack.c.h.b16 %v834
  %v1367 = vunpack.c.l.b16 %v835
  %v1368 = vunpack.c.h.b16 %v835
  %v1369 = vunpack.c.l.b16 %v836
  %v1370 = vunpack.c.h.b16 %v836
  %v1371 = vunpack.c.l.b16 %v837
  %v1372 = vunpack.c.h.b16 %v837
  %v1373 = vunpack.c.l.b16 %v838
  %v1374 = vunpack.c.h.b16 %v838
  %v1375 = vunpack.c.l.b16 %v839
  %v1376 = vunpack.c.h.b16 %v839
  %v1377 = vunpack.c.l.b16 %v840
  %v1378 = vunpack.c.h.b16 %v840
  %v1379 = vunpack.c.l.b16 %v841
  %v1380 = vunpack.c.h.b16 %v841
  %v1381 = vunpack.c.l.b16 %v842
  %v1382 = vunpack.c.h.b16 %v842
  %v1383 = vunpack.c.l.b16 %v843
  %v1384 = vunpack.c.h.b16 %v843
  %v1385 = vunpack.c.l.b16 %v844
  %v1386 = vunpack.c.h.b16 %v844
  %v1387 = vunpack.c.l.b16 %v845
  %v1388 = vunpack.c.h.b16 %v845
  %v1389 = vunpack.c.l.b16 %v846
  %v1390 = vunpack.c.h.b16 %v846
  %v1391 = vunpack.c.l.b16 %v847
  %v1392 = vunpack.c.h.b16 %v847
  %v1393 = vunpack.c.l.b16 %v848
  %v1394 = vunpack.c.h.b16 %v848
  %v1395 = vunpack.c.l.b16 %v849
  %v1396 = vunpack.c.h.b16 %v849
  %v1397 = vunpack.c.l.b16 %v850
  %v1398 = vunpack.c.h.b16 %v850
  %v1399 = vunpack.c.l.b16 %v851
  %v1400 = vunpack.c.h.b16 %v851
  %v1401 = vunpack.c.l.b16 %v852
  %v1402 = vunpack.c.h.b16 %v852
  %v1403 = vunpack.c.l.b16 %v853
  %v1404 = vunpack.c.h.b16 %v853
  %v1405 = vunpack.c.l.b16 %v854
  %v1406 = vunpack.c.h.b16 %v854
  %v1407 = vunpack.c.l.b16 %v855
  %v1408 = vunpack.c.h.b16 %v855
  %v1409 = vunpack.c.l.b16 %v856
  %v1410 = vunpack.c.h.b16 %v856
  %v1411 = vunpack.c.l.b16 %v857
  %v1412 = vunpack.c.h.b16 %v857
  %v1413 = vunpack.c.l.b16 %v858
  %v1414 = vunpack.c.h.b16 %v858
  %v1415 = vunpack.c.l.b16 %v859
  %v1416 = vunpack.c.h.b16 %v859
  %v1417 = vunpack.c.l.b16 %v860
  %v1418 = vunpack.c.h.b16 %v860
  %v1419 = vunpack.c.l.b16 %v861
  %v1420 = vunpack.c.h.b16 %v861
  %v1421 = vunpack.c.l.b16 %v862
  %v1422 = vunpack.c.h.b16 %v862
  %v1423 = vunpack.c.l.b16 %v863
  %v1424 = vunpack.c.h.b16 %v863
  %v1425 = vunpack.c.l.b16 %v864
  %v1426 = vunpack.c.h.b16 %v864
  %v1427 = vunpack.c.l.b16 %v865
  %v1428 = vunpack.c.h.b16 %v865
  %v1429 = vunpack.c.l.b16 %v866
  %v1430 = vunpack.c.h.b16 %v866
  %v1431 = vunpack.c.l.b16 %v867
  %v1432 = vunpack.c.h.b16 %v867
  %v1433 = vunpack.c.l.b16 %v868
  %v1434 = vunpack.c.h.b16 %v868
  %v1435 = vunpack.c.l.b16 %v869
  %v1436 = vunpack.c.h.b16 %v869
  %v1437 = vunpack.c.l.b16 %v870
  %v1438 = vunpack.c.h.b16 %v870
  %v1439 = vunpack.c.l.b16 %v871
  %v1440 = vunpack.c.h.b16 %v871
  %v1441 = vunpack.c.l.b16 %v872
  %v1442 = vunpack.c.h.b16 %v872
  %v1443 = vunpack.c.l.b16 %v873
  %v1444 = vunpack.c.h.b16 %v873
  %v1445 = vunpack.c.l.b16 %v874
  %v1446 = vunpack.c.h.b16 %v874
  %v1447 = vunpack.c.l.b16 %v875
  %v1448 = vunpack.c.h.b16 %v875
  %v1449 = vunpack.c.l.b16 %v876
  %v1450 = vunpack.c.h.b16 %v876
  %v1451 = vunpack.c.l.b16 %v877
  %v1452 = vunpack.c.h.b16 %v877
  %v1453 = vunpack.c.l.b16 %v878
  %v1454 = vunpack.c.h.b16 %v878
  %v1455 = vunpack.c.l.b16 %v879
  %v1456 = vunpack.c.h.b16 %v879
  %v1457 = vunpack.c.l.b16 %v880
  %v1458 = vunpack.c.h.b16 %v880
  %v1459 = vunpack.c.l.b16 %v881
  %v1460 = vunpack.c.h.b16 %v881
  %v1461 = vunpack.c.l.b16 %v882
  %v1462 = vunpack.c.h.b16 %v882
  %v1463 = vunpack.c.l.b16 %v883
  %v1464 = vunpack.c.h.b16 %v883
  %v1465 = vunpack.c.l.b16 %v884
  %v1466 = vunpack.c.h.b16 %v884
  %v1467 = vunpack.c.l.b16 %v885
  %v1468 = vunpack.c.h.b16 %v885
  %v1469 = vunpack.c.l.b16 %v886
  %v1470 = vunpack.c.h.b16 %v886
  %v1471 = vunpack.c.l.b16 %v887
  %v1472 = vunpack.c.h.b16 %v887
  %v1473 = vunpack.c.l.b16 %v888
  %v1474 = vunpack.c.h.b16 %v888
  %v1475 = vunpack.c.l.b16 %v889
  %v1476 = vunpack.c.h.b16 %v889
  %v1477 = vunpack.c.l.b16 %v890
  %v1478 = vunpack.c.h.b16 %v890
  %v1479 = vunpack.c.l.b16 %v891
  %v1480 = vunpack.c.h.b16 %v891
  %v1481 = vunpack.c.l.b16 %v892
  %v1482 = vunpack.c.h.b16 %v892
  %v1483 = vunpack.c.l.b16 %v893
  %v1484 = vunpack.c.h.b16 %v893
  %v1485 = vunpack.c.l.b16 %v894
  %v1486 = vunpack.c.h.b16 %v894
  %v1487 = vunpack.c.l.b16 %v895
  %v1488 = vunpack.c.h.b16 %v895
  %v1489 = vunpack.c.l.b16 %v896
  %v1490 = vunpack.c.h.b16 %v896
  %v1491 = vunpack.c.l.b16 %v897
  %v1492 = vunpack.c.h.b16 %v897
  %v1493 = vunpack.c.l.b16 %v898
  %v1494 = vunpack.c.h.b16 %v898
  %v1495 = vunpack.c.l.b16 %v899
  %v1496 = vunpack.c.h.b16 %v899
  %v1497 = vunpack.c.l.b16 %v900
  %v1498 = vunpack.c.h.b16 %v900
  %v1499 = vpack.c.b16 %v1111, %v1107
  %v1500 = vpack.c.b16 %v1112, %v1108
  %v1501 = vpack.c.b16 %v1113, %v1109
  %v1502 = vpack.c.b16 %v1114, %v1110
  %v1503 = vpack.c.b16 %v1119, %v1115
  %v1504 = vpack.c.b16 %v1120, %v1116
  %v1505 = vpack.c.b16 %v1121, %v1117
  %v1506 = vpack.c.b16 %v1122, %v1118
  %v1507 = vpack.c.b16 %v1127, %v1123
  %v1508 = vpack.c.b16 %v1128, %v1124
  %v1509 = vpack.c.b16 %v1129, %v1125
  %v1510 = vpack.c.b16 %v1130, %v1126
  %v1511 = vpack.c.b16 %v1135, %v1131
  %v1512 = vpack.c.b16 %v1136, %v1132
  %v1513 = vpack.c.b16 %v1137, %v1133
  %v1514 = vpack.c.b16 %v1138, %v1134
  %v1515 = vpack.c.b16 %v1143, %v1139
  %v1516 = vpack.c.b16 %v1144, %v1140
  %v1517 = vpack.c.b16 %v1145, %v1141
  %v1518 = vpack.c.b16 %v1146, %v1142
  %v1519 = vpack.c.b16 %v1151, %v1147
  %v1520 = vpack.c.b16 %v1152, %v1148
  %v1521 = vpack.c.b16 %v1153, %v1149
  %v1522 = vpack.c.b16 %v1154, %v1150
  %v1523 = vpack.c.b16 %v1159, %v1155
  %v1524 = vpack.c.b16 %v1160, %v1156
  %v1525 = vpack.c.b16 %v1161, %v1157
  %v1526 = vpack.c.b16 %v1162, %v1158
  %v1527 = vpack.c.b16 %v1167, %v1163
  %v1528 = vpack.c.b16 %v1168, %v1164
  %v1529 = vpack.c.b16 %v1169, %v1165
  %v1530 = vpack.c.b16 %v1170, %v1166
  %v1531 = vpack.c.b16 %v1175, %v1171
  %v1532 = vpack.c.b16 %v1176, %v1172
  %v1533 = vpack.c.b16 %v1177, %v1173
  %v1534 = vpack.c.b16 %v1178, %v1174
  %v1535 = vpack.c.b16 %v1183, %v1179
  %v1536 = vpack.c.b16 %v1184, %v1180
  %v1537 = vpack.c.b16 %v1185, %v1181
  %v1538 = vpack.c.b16 %v1186, %v1182
  %v1539 = vpack.c.b16 %v1191, %v1187
  %v1540 = vpack.c.b16 %v1192, %v1188
  %v1541 = vpack.c.b16 %v1193, %v1189
  %v1542 = vpack.c.b16 %v1194, %v1190
  %v1543 = vpack.c.b16 %v1199, %v1195
  %v1544 = vpack.c.b16 %v1200, %v1196
  %v1545 = vpack.c.b16 %v1201, %v1197
  %v1546 = vpack.c.b16 %v1202, %v1198
  %v1547 = vpack.c.b16 %v1207, %v1203
  %v1548 = vpack.c.b16 %v1208, %v1204
  %v1549 = vpack.c.b16 %v1209, %v1205
  %v1550 = vpack.c.b16 %v1210, %v1206
  %v1551 = vpack.c.b16 %v1215, %v1211
  %v1552 = vpack.c.b16 %v1216, %v1212
  %v1553 = vpack.c.b16 %v1217, %v1213
  %v1554 = vpack.c.b16 %v1218, %v1214
  %v1555 = vpack.c.b16 %v1223, %v1219
  %v1556 = vpack.c.b16 %v1224, %v1220
  %v1557 = vpack.c.b16 %v1225, %v1221
  %v1558 = vpack.c.b16 %v1226, %v1222
  %v1559 = vpack.c.b16 %v1231, %v1227
  %v1560 = vpack.c.b16 %v1232, %v1228
  %v1561 = vpack.c.b16 %v1233, %v1229
  %v1562 = vpack.c.b16 %v1234, %v1230
  %v1563 = vpack.c.b16 %v1239, %v1235
  %v1564 = vpack.c.b16 %v1240, %v1236
  %v1565 = vpack.c.b16 %v1241, %v1237
  %v1566 = vpack.c.b16 %v1242, %v1238
  %v1567 = vpack.c.b16 %v1247, %v1243
  %v1568 = vpack.c.b16 %v1248, %v1244
  %v1569 = vpack.c.b16 %v1249, %v1245
  %v1570 = vpack.c.b16 %v1250, %v1246
  %v1571 = vpack.c.b16 %v1255, %v1251
  %v1572 = vpack.c.b16 %v1256, %v1252
  %v1573 = vpack.c.b16 %v1257, %v1253
  %v1574 = vpack.c.b16 %v1258, %v1254
  %v1575 = vpack.c.b16 %v1263, %v1259
  %v1576 = vpack.c.b16 %v1264, %v1260
  %v1577 = vpack.c.b16 %v1265, %v1261
  %v1578 = vpack.c.b16 %v1266, %v1262
  %v1579 = vpack.c.b16 %v1271, %v1267
  %v1580 = vpack.c.b16 %v1272, %v1268
  %v1581 = vpack.c.b16 %v1273, %v1269
  %v1582 = vpack.c.b16 %v1274, %v1270
  %v1583 = vpack.c.b16 %v1279, %v1275
  %v1584 = vpack.c.b16 %v1280, %v1276
  %v1585 = vpack.c.b16 %v1281, %v1277
  %v1586 = vpack.c.b16 %v1282, %v1278
  %v1587 = vpack.c.b16 %v1287, %v1283
  %v1588 = vpack.c.b16 %v1288, %v1284
  %v1589 = vpack.c.b16 %v1289, %v1285
  %v1590 = vpack.c.b16 %v1290, %v1286
  %v1591 = vpack.c.b16 %v1295, %v1291
  %v1592 = vpack.c.b16 %v1296, %v1292
  %v1593 = vpack.c.b16 %v1297, %v1293
  %v1594 = vpack.c.b16 %v1298, %v1294
  %v1595 = vpack.c.b16 %v1303, %v1299
  %v1596 = vpack.c.b16 %v1304, %v1300
  %v1597 = vpack.c.b16 %v1305, %v1301
  %v1598 = vpack.c.b16 %v1306, %v1302
  %v1599 = vpack.c.b16 %v1311, %v1307
  %v1600 = vpack.c.b16 %v1312, %v1308
  %v1601 = vpack.c.b16 %v1313, %v1309
  %v1602 = vpack.c.b16 %v1314, %v1310
  %v1603 = vpack.c.b16 %v1319, %v1315
  %v1604 = vpack.c.b16 %v1320, %v1316
  %v1605 = vpack.c.b16 %v1321, %v1317
  %v1606 = vpack.c.b16 %v1322, %v1318
  %v1607 = vpack.c.b16 %v1327, %v1323
  %v1608 = vpack.c.b16 %v1328, %v1324
  %v1609 = vpack.c.b16 %v1329, %v1325
  %v1610 = vpack.c.b16 %v1330, %v1326
  %v1611 = vpack.c.b16 %v1335, %v1331
  %v1612 = vpack.c.b16 %v1336, %v1332
  %v1613 = vpack.c.b16 %v1337, %v1333
  %v1614 = vpack.c.b16 %v1338, %v1334
  %v1615 = vpack.c.b16 %v1343, %v1339
  %v1616 = vpack.c.b16 %v1344, %v1340
  %v1617 = vpack.c.b16 %v1345, %v1341
  %v1618 = vpack.c.b16 %v1346, %v1342
  %v1619 = vpack.c.b16 %v1351, %v1347
  %v1620 = vpack.c.b16 %v1352, %v1348
  %v1621 = vpack.c.b16 %v1353, %v1349
  %v1622 = vpack.c.b16 %v1354, %v1350
  %v1623 = vpack.c.b16 %v1359, %v1355
  %v1624 = vpack.c.b16 %v1360, %v1356
  %v1625 = vpack.c.b16 %v1361, %v1357
  %v1626 = vpack.c.b16 %v1362, %v1358
  %v1627 = vpack.c.b16 %v1367, %v1363
  %v1628 = vpack.c.b16 %v1368, %v1364
  %v1629 = vpack.c.b16 %v1369, %v1365
  %v1630 = vpack.c.b16 %v1370, %v1366
  %v1631 = vpack.c.b16 %v1375, %v1371
  %v1632 = vpack.c.b16 %v1376, %v1372
  %v1633 = vpack.c.b16 %v1377, %v1373
  %v1634 = vpack.c.b16 %v1378, %v1374
  %v1635 = vpack.c.b16 %v1383, %v1379
  %v1636 = vpack.c.b16 %v1384, %v1380
  %v1637 = vpack.c.b16 %v1385, %v1381
  %v1638 = vpack.c.b16 %v1386, %v1382
  %v1639 = vpack.c.b16 %v1391, %v1387
  %v1640 = vpack.c.b16 %v1392, %v1388
  %v1641 = vpack.c.b16 %v1393, %v1389
  %v1642 = vpack.c.b16 %v1394, %v1390
  %v1643 = vpack.c.b16 %v1399, %v1395
  %v1644 = vpack.c.b16 %v1400, %v1396
  %v1645 = vpack.c.b16 %v1401, %v1397
  %v1646 = vpack.c.b16 %v1402, %v1398
  %v1647 = vpack.c.b16 %v1407, %v1403
  %v1648 = vpack.c.b16 %v1408, %v1404
  %v1649 = vpack.c.b16 %v1409, %v1405
  %v1650 = vpack.c.b16 %v1410, %v1406
  %v1651 = vpack.c.b16 %v1415, %v1411
  %v1652 = vpack.c.b16 %v1416, %v1412
  %v1653 = vpack.c.b16 %v1417, %v1413
  %v1654 = vpack.c.b16 %v1418, %v1414
  %v1655 = vpack.c.b16 %v1423, %v1419
  %v1656 = vpack.c.b16 %v1424, %v1420
  %v1657 = vpack.c.b16 %v1425, %v1421
  %v1658 = vpack.c.b16 %v1426, %v1422
  %v1659 = vpack.c.b16 %v1431, %v1427
  %v1660 = vpack.c.b16 %v1432, %v1428
  %v1661 = vpack.c.b16 %v1433, %v1429
  %v1662 = vpack.c.b16 %v1434, %v1430
  %v1663 = vpack.c.b16 %v1439, %v1435
  %v1664 = vpack.c.b16 %v1440, %v1436
  %v1665 = vpack.c.b16 %v1441, %v1437
  %v1666 = vpack.c.b16 %v1442, %v1438
  %v1667 = vpack.c.b16 %v1447, %v1443
  %v1668 = vpack.c.b16 %v1448, %v1444
  %v1669 = vpack.c.b16 %v1449, %v1445
  %v1670 = vpack.c.b16 %v1450, %v1446
  %v1671 = vpack.c.b16 %v1455, %v1451
  %v1672 = vpack.c.b16 %v1456, %v1452
  %v1673 = vpack.c.b16 %v1457, %v1453
  %v1674 = vpack.c.b16 %v1458, %v1454
  %v1675 = vpack.c.b16 %v1463, %v1459
  %v1676 = vpack.c.b16 %v1464, %v1460
  %v1677 = vpack.c.b16 %v1465, %v1461
  %v1678 = vpack.c.b16 %v1466, %v1462
  %v1679 = vpack.c.b16 %v1471, %v1467
  %v1680 = vpack.c.b16 %v1472, %v1468
  %v1681 = vpack.c.b16 %v1473, %v1469
  %v1682 = vpack.c.b16 %v1474, %v1470
  %v1683 = vpack.c.b16 %v1479, %v1475
  %v1684 = vpack.c.b16 %v1480, %v1476
  %v1685 = vpack.c.b16 %v1481, %v1477
  %v1686 = vpack.c.b16 %v1482, %v1478
  %v1687 = vpack.c.b16 %v1487, %v1483
  %v1688 = vpack.c.b16 %v1488, %v1484
  %v1689 = vpack.c.b16 %v1489, %v1485
  %v1690 = vpack.c.b16 %v1490, %v1486
  %v1691 = vpack.c.b16 %v1495, %v1491
  %v1692 = vpack.c.b16 %v1496, %v1492
  %v1693 = vpack.c.b16 %v1497, %v1493
  %v1694 = vpack.c.b16 %v1498, %v1494
  %vm1891 = vcmask 130048
  %v1893 = vsel %vm1891, %v487, 0
  %v1896 = vsel %vm1891, %v494, 0
  %v1899 = vsel %vm1891, %v501, 0
  %v1902 = vsel %vm1891, %v508, 0
  %v1905 = vsel %vm1891, %v515, 0
  %v1908 = vsel %vm1891, %v522, 0
  %v1911 = vsel %vm1891, %v529, 0
  %v1914 = vsel %vm1891, %v536, 0
  %v1917 = vsel %vm1891, %v543, 0
  %v1920 = vsel %vm1891, %v550, 0
  %v1923 = vsel %vm1891, %v557, 0
  %v1926 = vsel %vm1891, %v564, 0
  %v1929 = vsel %vm1891, %v571, 0
  %v1932 = vsel %vm1891, %v578, 0
  %v1935 = vsel %vm1891, %v585, 0
  %v1938 = vsel %vm1891, %v592, 0
  %v1941 = vsel %vm1891, %v599, 0
  %v1944 = vsel %vm1891, %v606, 0
  %v1947 = vsel %vm1891, %v613, 0
  %v1950 = vsel %vm1891, %v620, 0
  %v1953 = vsel %vm1891, %v627, 0
  %v1956 = vsel %vm1891, %v634, 0
  %v1959 = vsel %vm1891, %v641, 0
  %v1962 = vsel %vm1891, %v648, 0
  %v1965 = vsel %vm1891, %v655, 0
  %v1968 = vsel %vm1891, %v662, 0
  %v1971 = vsel %vm1891, %v669, 0
  %v1974 = vsel %vm1891, %v676, 0
  %v1977 = vsel %vm1891, %v683, 0
  %v1980 = vsel %vm1891, %v690, 0
  %v1983 = vsel %vm1891, %v697, 0
  %v1986 = vsel %vm1891, %v704, 0
  %1988 = vmatpush.bf16.msra.mxu0 %v1527
  %1989 = vmatpush.bf16.msra.mxu0 %v1523
  %1990 = vmatpush.bf16.msra.mxu0 %v1519
  %1991 = vmatpush.bf16.msra.mxu0 %v1515
  %1992 = vmatpush.bf16.msra.mxu0 %v1511
  %1993 = vmatpush.bf16.msra.mxu0 %v1507
  %1994 = vmatpush.bf16.msra.mxu0 %v1503
  %1995 = vmatpush.bf16.msra.mxu0 %v1499
  %1996 = vmatmul.bf16.gmra.mxu0 %v481
  %v1997 = vpop.f32.mrf.mxu0
  %v1998 = vadd.f32 %v903, %v1997
  %v1999 = vpop.f32.mrf.mxu0
  %v2000 = vadd.f32 %v903, %v1999
  %2001 = vmatmul.bf16.gmra.mxu0 %v488
  %v2002 = vpop.f32.mrf.mxu0
  %v2003 = vadd.f32 %v903, %v2002
  %v2004 = vpop.f32.mrf.mxu0
  %v2005 = vadd.f32 %v903, %v2004
  %2006 = vmatmul.bf16.gmra.mxu0 %v495
  %v2007 = vpop.f32.mrf.mxu0
  %v2008 = vadd.f32 %v903, %v2007
  %v2009 = vpop.f32.mrf.mxu0
  %v2010 = vadd.f32 %v903, %v2009
  %2011 = vmatmul.bf16.gmra.mxu0 %v502
  %v2012 = vpop.f32.mrf.mxu0
  %v2013 = vadd.f32 %v903, %v2012
  %v2014 = vpop.f32.mrf.mxu0
  %v2015 = vadd.f32 %v903, %v2014
  %2016 = vmatmul.bf16.gmra.mxu0 %v509
  %v2017 = vpop.f32.mrf.mxu0
  %v2018 = vadd.f32 %v903, %v2017
  %v2019 = vpop.f32.mrf.mxu0
  %v2020 = vadd.f32 %v903, %v2019
  %2021 = vmatmul.bf16.gmra.mxu0 %v516
  %v2022 = vpop.f32.mrf.mxu0
  %v2023 = vadd.f32 %v903, %v2022
  %v2024 = vpop.f32.mrf.mxu0
  %v2025 = vadd.f32 %v903, %v2024
  %2026 = vmatmul.bf16.gmra.mxu0 %v523
  %v2027 = vpop.f32.mrf.mxu0
  %v2028 = vadd.f32 %v903, %v2027
  %v2029 = vpop.f32.mrf.mxu0
  %v2030 = vadd.f32 %v903, %v2029
  %2031 = vmatmul.bf16.gmra.mxu0 %v530
  %v2032 = vpop.f32.mrf.mxu0
  %v2033 = vadd.f32 %v903, %v2032
  %v2034 = vpop.f32.mrf.mxu0
  %v2035 = vadd.f32 %v903, %v2034
  %2036 = vmatmul.bf16.gmra.mxu0 %v537
  %v2037 = vpop.f32.mrf.mxu0
  %v2038 = vadd.f32 %v903, %v2037
  %v2039 = vpop.f32.mrf.mxu0
  %v2040 = vadd.f32 %v903, %v2039
  %2041 = vmatmul.bf16.gmra.mxu0 %v544
  %v2042 = vpop.f32.mrf.mxu0
  %v2043 = vadd.f32 %v903, %v2042
  %v2044 = vpop.f32.mrf.mxu0
  %v2045 = vadd.f32 %v903, %v2044
  %2046 = vmatmul.bf16.gmra.mxu0 %v551
  %v2047 = vpop.f32.mrf.mxu0
  %v2048 = vadd.f32 %v903, %v2047
  %v2049 = vpop.f32.mrf.mxu0
  %v2050 = vadd.f32 %v903, %v2049
  %2051 = vmatmul.bf16.gmra.mxu0 %v558
  %v2052 = vpop.f32.mrf.mxu0
  %v2053 = vadd.f32 %v903, %v2052
  %v2054 = vpop.f32.mrf.mxu0
  %v2055 = vadd.f32 %v903, %v2054
  %2056 = vmatmul.bf16.gmra.mxu0 %v565
  %v2057 = vpop.f32.mrf.mxu0
  %v2058 = vadd.f32 %v903, %v2057
  %v2059 = vpop.f32.mrf.mxu0
  %v2060 = vadd.f32 %v903, %v2059
  %2061 = vmatmul.bf16.gmra.mxu0 %v572
  %v2062 = vpop.f32.mrf.mxu0
  %v2063 = vadd.f32 %v903, %v2062
  %v2064 = vpop.f32.mrf.mxu0
  %v2065 = vadd.f32 %v903, %v2064
  %2066 = vmatmul.bf16.gmra.mxu0 %v579
  %v2067 = vpop.f32.mrf.mxu0
  %v2068 = vadd.f32 %v903, %v2067
  %v2069 = vpop.f32.mrf.mxu0
  %v2070 = vadd.f32 %v903, %v2069
  %2071 = vmatmul.bf16.gmra.mxu0 %v586
  %v2072 = vpop.f32.mrf.mxu0
  %v2073 = vadd.f32 %v903, %v2072
  %v2074 = vpop.f32.mrf.mxu0
  %v2075 = vadd.f32 %v903, %v2074
  %2076 = vmatmul.bf16.gmra.mxu0 %v593
  %v2077 = vpop.f32.mrf.mxu0
  %v2078 = vadd.f32 %v903, %v2077
  %v2079 = vpop.f32.mrf.mxu0
  %v2080 = vadd.f32 %v903, %v2079
  %2081 = vmatmul.bf16.gmra.mxu0 %v600
  %v2082 = vpop.f32.mrf.mxu0
  %v2083 = vadd.f32 %v903, %v2082
  %v2084 = vpop.f32.mrf.mxu0
  %v2085 = vadd.f32 %v903, %v2084
  %2086 = vmatmul.bf16.gmra.mxu0 %v607
  %v2087 = vpop.f32.mrf.mxu0
  %v2088 = vadd.f32 %v903, %v2087
  %v2089 = vpop.f32.mrf.mxu0
  %v2090 = vadd.f32 %v903, %v2089
  %2091 = vmatmul.bf16.gmra.mxu0 %v614
  %v2092 = vpop.f32.mrf.mxu0
  %v2093 = vadd.f32 %v903, %v2092
  %v2094 = vpop.f32.mrf.mxu0
  %v2095 = vadd.f32 %v903, %v2094
  %2096 = vmatmul.bf16.gmra.mxu0 %v621
  %v2097 = vpop.f32.mrf.mxu0
  %v2098 = vadd.f32 %v903, %v2097
  %v2099 = vpop.f32.mrf.mxu0
  %v2100 = vadd.f32 %v903, %v2099
  %2101 = vmatmul.bf16.gmra.mxu0 %v628
  %v2102 = vpop.f32.mrf.mxu0
  %v2103 = vadd.f32 %v903, %v2102
  %v2104 = vpop.f32.mrf.mxu0
  %v2105 = vadd.f32 %v903, %v2104
  %2106 = vmatmul.bf16.gmra.mxu0 %v635
  %v2107 = vpop.f32.mrf.mxu0
  %v2108 = vadd.f32 %v903, %v2107
  %v2109 = vpop.f32.mrf.mxu0
  %v2110 = vadd.f32 %v903, %v2109
  %2111 = vmatmul.bf16.gmra.mxu0 %v642
  %v2112 = vpop.f32.mrf.mxu0
  %v2113 = vadd.f32 %v903, %v2112
  %v2114 = vpop.f32.mrf.mxu0
  %v2115 = vadd.f32 %v903, %v2114
  %2116 = vmatmul.bf16.gmra.mxu0 %v649
  %v2117 = vpop.f32.mrf.mxu0
  %v2118 = vadd.f32 %v903, %v2117
  %v2119 = vpop.f32.mrf.mxu0
  %v2120 = vadd.f32 %v903, %v2119
  %2121 = vmatmul.bf16.gmra.mxu0 %v656
  %v2122 = vpop.f32.mrf.mxu0
  %v2123 = vadd.f32 %v903, %v2122
  %v2124 = vpop.f32.mrf.mxu0
  %v2125 = vadd.f32 %v903, %v2124
  %2126 = vmatmul.bf16.gmra.mxu0 %v663
  %v2127 = vpop.f32.mrf.mxu0
  %v2128 = vadd.f32 %v903, %v2127
  %v2129 = vpop.f32.mrf.mxu0
  %v2130 = vadd.f32 %v903, %v2129
  %2131 = vmatmul.bf16.gmra.mxu0 %v670
  %v2132 = vpop.f32.mrf.mxu0
  %v2133 = vadd.f32 %v903, %v2132
  %v2134 = vpop.f32.mrf.mxu0
  %v2135 = vadd.f32 %v903, %v2134
  %2136 = vmatmul.bf16.gmra.mxu0 %v677
  %v2137 = vpop.f32.mrf.mxu0
  %v2138 = vadd.f32 %v903, %v2137
  %v2139 = vpop.f32.mrf.mxu0
  %v2140 = vadd.f32 %v903, %v2139
  %2141 = vmatmul.bf16.gmra.mxu0 %v684
  %v2142 = vpop.f32.mrf.mxu0
  %v2143 = vadd.f32 %v903, %v2142
  %v2144 = vpop.f32.mrf.mxu0
  %v2145 = vadd.f32 %v903, %v2144
  %2146 = vmatmul.bf16.gmra.mxu0 %v691
  %v2147 = vpop.f32.mrf.mxu0
  %v2148 = vadd.f32 %v903, %v2147
  %v2149 = vpop.f32.mrf.mxu0
  %v2150 = vadd.f32 %v903, %v2149
  %2151 = vmatmul.bf16.gmra.mxu0 %v698
  %v2152 = vpop.f32.mrf.mxu0
  %v2153 = vadd.f32 %v903, %v2152
  %v2154 = vpop.f32.mrf.mxu0
  %v2155 = vadd.f32 %v903, %v2154
  %2156 = vdwg.mxu0
  %2157 = vmatpush.bf16.msra.mxu0 %v1559
  %2158 = vmatpush.bf16.msra.mxu0 %v1555
  %2159 = vmatpush.bf16.msra.mxu0 %v1551
  %2160 = vmatpush.bf16.msra.mxu0 %v1547
  %2161 = vmatpush.bf16.msra.mxu0 %v1543
  %2162 = vmatpush.bf16.msra.mxu0 %v1539
  %2163 = vmatpush.bf16.msra.mxu0 %v1535
  %2164 = vmatpush.bf16.msra.mxu0 %v1531
  %2165 = vmatmul.bf16.gmra.mxu0 %v482
  %v2166 = vpop.f32.mrf.mxu0
  %v2167 = vadd.f32 %v1998, %v2166
  %v2168 = vpop.f32.mrf.mxu0
  %v2169 = vadd.f32 %v2000, %v2168
  %2170 = vmatmul.bf16.gmra.mxu0 %v489
  %v2171 = vpop.f32.mrf.mxu0
  %v2172 = vadd.f32 %v2003, %v2171
  %v2173 = vpop.f32.mrf.mxu0
  %v2174 = vadd.f32 %v2005, %v2173
  %2175 = vmatmul.bf16.gmra.mxu0 %v496
  %v2176 = vpop.f32.mrf.mxu0
  %v2177 = vadd.f32 %v2008, %v2176
  %v2178 = vpop.f32.mrf.mxu0
  %v2179 = vadd.f32 %v2010, %v2178
  %2180 = vmatmul.bf16.gmra.mxu0 %v503
  %v2181 = vpop.f32.mrf.mxu0
  %v2182 = vadd.f32 %v2013, %v2181
  %v2183 = vpop.f32.mrf.mxu0
  %v2184 = vadd.f32 %v2015, %v2183
  %2185 = vmatmul.bf16.gmra.mxu0 %v510
  %v2186 = vpop.f32.mrf.mxu0
  %v2187 = vadd.f32 %v2018, %v2186
  %v2188 = vpop.f32.mrf.mxu0
  %v2189 = vadd.f32 %v2020, %v2188
  %2190 = vmatmul.bf16.gmra.mxu0 %v517
  %v2191 = vpop.f32.mrf.mxu0
  %v2192 = vadd.f32 %v2023, %v2191
  %v2193 = vpop.f32.mrf.mxu0
  %v2194 = vadd.f32 %v2025, %v2193
  %2195 = vmatmul.bf16.gmra.mxu0 %v524
  %v2196 = vpop.f32.mrf.mxu0
  %v2197 = vadd.f32 %v2028, %v2196
  %v2198 = vpop.f32.mrf.mxu0
  %v2199 = vadd.f32 %v2030, %v2198
  %2200 = vmatmul.bf16.gmra.mxu0 %v531
  %v2201 = vpop.f32.mrf.mxu0
  %v2202 = vadd.f32 %v2033, %v2201
  %v2203 = vpop.f32.mrf.mxu0
  %v2204 = vadd.f32 %v2035, %v2203
  %2205 = vmatmul.bf16.gmra.mxu0 %v538
  %v2206 = vpop.f32.mrf.mxu0
  %v2207 = vadd.f32 %v2038, %v2206
  %v2208 = vpop.f32.mrf.mxu0
  %v2209 = vadd.f32 %v2040, %v2208
  %2210 = vmatmul.bf16.gmra.mxu0 %v545
  %v2211 = vpop.f32.mrf.mxu0
  %v2212 = vadd.f32 %v2043, %v2211
  %v2213 = vpop.f32.mrf.mxu0
  %v2214 = vadd.f32 %v2045, %v2213
  %2215 = vmatmul.bf16.gmra.mxu0 %v552
  %v2216 = vpop.f32.mrf.mxu0
  %v2217 = vadd.f32 %v2048, %v2216
  %v2218 = vpop.f32.mrf.mxu0
  %v2219 = vadd.f32 %v2050, %v2218
  %2220 = vmatmul.bf16.gmra.mxu0 %v559
  %v2221 = vpop.f32.mrf.mxu0
  %v2222 = vadd.f32 %v2053, %v2221
  %v2223 = vpop.f32.mrf.mxu0
  %v2224 = vadd.f32 %v2055, %v2223
  %2225 = vmatmul.bf16.gmra.mxu0 %v566
  %v2226 = vpop.f32.mrf.mxu0
  %v2227 = vadd.f32 %v2058, %v2226
  %v2228 = vpop.f32.mrf.mxu0
  %v2229 = vadd.f32 %v2060, %v2228
  %2230 = vmatmul.bf16.gmra.mxu0 %v573
  %v2231 = vpop.f32.mrf.mxu0
  %v2232 = vadd.f32 %v2063, %v2231
  %v2233 = vpop.f32.mrf.mxu0
  %v2234 = vadd.f32 %v2065, %v2233
  %2235 = vmatmul.bf16.gmra.mxu0 %v580
  %v2236 = vpop.f32.mrf.mxu0
  %v2237 = vadd.f32 %v2068, %v2236
  %v2238 = vpop.f32.mrf.mxu0
  %v2239 = vadd.f32 %v2070, %v2238
  %2240 = vmatmul.bf16.gmra.mxu0 %v587
  %v2241 = vpop.f32.mrf.mxu0
  %v2242 = vadd.f32 %v2073, %v2241
  %v2243 = vpop.f32.mrf.mxu0
  %v2244 = vadd.f32 %v2075, %v2243
  %2245 = vmatmul.bf16.gmra.mxu0 %v594
  %v2246 = vpop.f32.mrf.mxu0
  %v2247 = vadd.f32 %v2078, %v2246
  %v2248 = vpop.f32.mrf.mxu0
  %v2249 = vadd.f32 %v2080, %v2248
  %2250 = vmatmul.bf16.gmra.mxu0 %v601
  %v2251 = vpop.f32.mrf.mxu0
  %v2252 = vadd.f32 %v2083, %v2251
  %v2253 = vpop.f32.mrf.mxu0
  %v2254 = vadd.f32 %v2085, %v2253
  %2255 = vmatmul.bf16.gmra.mxu0 %v608
  %v2256 = vpop.f32.mrf.mxu0
  %v2257 = vadd.f32 %v2088, %v2256
  %v2258 = vpop.f32.mrf.mxu0
  %v2259 = vadd.f32 %v2090, %v2258
  %2260 = vmatmul.bf16.gmra.mxu0 %v615
  %v2261 = vpop.f32.mrf.mxu0
  %v2262 = vadd.f32 %v2093, %v2261
  %v2263 = vpop.f32.mrf.mxu0
  %v2264 = vadd.f32 %v2095, %v2263
  %2265 = vmatmul.bf16.gmra.mxu0 %v622
  %v2266 = vpop.f32.mrf.mxu0
  %v2267 = vadd.f32 %v2098, %v2266
  %v2268 = vpop.f32.mrf.mxu0
  %v2269 = vadd.f32 %v2100, %v2268
  %2270 = vmatmul.bf16.gmra.mxu0 %v629
  %v2271 = vpop.f32.mrf.mxu0
  %v2272 = vadd.f32 %v2103, %v2271
  %v2273 = vpop.f32.mrf.mxu0
  %v2274 = vadd.f32 %v2105, %v2273
  %2275 = vmatmul.bf16.gmra.mxu0 %v636
  %v2276 = vpop.f32.mrf.mxu0
  %v2277 = vadd.f32 %v2108, %v2276
  %v2278 = vpop.f32.mrf.mxu0
  %v2279 = vadd.f32 %v2110, %v2278
  %2280 = vmatmul.bf16.gmra.mxu0 %v643
  %v2281 = vpop.f32.mrf.mxu0
  %v2282 = vadd.f32 %v2113, %v2281
  %v2283 = vpop.f32.mrf.mxu0
  %v2284 = vadd.f32 %v2115, %v2283
  %2285 = vmatmul.bf16.gmra.mxu0 %v650
  %v2286 = vpop.f32.mrf.mxu0
  %v2287 = vadd.f32 %v2118, %v2286
  %v2288 = vpop.f32.mrf.mxu0
  %v2289 = vadd.f32 %v2120, %v2288
  %2290 = vmatmul.bf16.gmra.mxu0 %v657
  %v2291 = vpop.f32.mrf.mxu0
  %v2292 = vadd.f32 %v2123, %v2291
  %v2293 = vpop.f32.mrf.mxu0
  %v2294 = vadd.f32 %v2125, %v2293
  %2295 = vmatmul.bf16.gmra.mxu0 %v664
  %v2296 = vpop.f32.mrf.mxu0
  %v2297 = vadd.f32 %v2128, %v2296
  %v2298 = vpop.f32.mrf.mxu0
  %v2299 = vadd.f32 %v2130, %v2298
  %2300 = vmatmul.bf16.gmra.mxu0 %v671
  %v2301 = vpop.f32.mrf.mxu0
  %v2302 = vadd.f32 %v2133, %v2301
  %v2303 = vpop.f32.mrf.mxu0
  %v2304 = vadd.f32 %v2135, %v2303
  %2305 = vmatmul.bf16.gmra.mxu0 %v678
  %v2306 = vpop.f32.mrf.mxu0
  %v2307 = vadd.f32 %v2138, %v2306
  %v2308 = vpop.f32.mrf.mxu0
  %v2309 = vadd.f32 %v2140, %v2308
  %2310 = vmatmul.bf16.gmra.mxu0 %v685
  %v2311 = vpop.f32.mrf.mxu0
  %v2312 = vadd.f32 %v2143, %v2311
  %v2313 = vpop.f32.mrf.mxu0
  %v2314 = vadd.f32 %v2145, %v2313
  %2315 = vmatmul.bf16.gmra.mxu0 %v692
  %v2316 = vpop.f32.mrf.mxu0
  %v2317 = vadd.f32 %v2148, %v2316
  %v2318 = vpop.f32.mrf.mxu0
  %v2319 = vadd.f32 %v2150, %v2318
  %2320 = vmatmul.bf16.gmra.mxu0 %v699
  %v2321 = vpop.f32.mrf.mxu0
  %v2322 = vadd.f32 %v2153, %v2321
  %v2323 = vpop.f32.mrf.mxu0
  %v2324 = vadd.f32 %v2155, %v2323
  %2325 = vdwg.mxu0
  %2326 = vmatpush.bf16.msra.mxu0 %v1591
  %2327 = vmatpush.bf16.msra.mxu0 %v1587
  %2328 = vmatpush.bf16.msra.mxu0 %v1583
  %2329 = vmatpush.bf16.msra.mxu0 %v1579
  %2330 = vmatpush.bf16.msra.mxu0 %v1575
  %2331 = vmatpush.bf16.msra.mxu0 %v1571
  %2332 = vmatpush.bf16.msra.mxu0 %v1567
  %2333 = vmatpush.bf16.msra.mxu0 %v1563
  %2334 = vmatmul.bf16.gmra.mxu0 %v483
  %v2335 = vpop.f32.mrf.mxu0
  %v2336 = vadd.f32 %v2167, %v2335
  %v2337 = vpop.f32.mrf.mxu0
  %v2338 = vadd.f32 %v2169, %v2337
  %2339 = vmatmul.bf16.gmra.mxu0 %v490
  %v2340 = vpop.f32.mrf.mxu0
  %v2341 = vadd.f32 %v2172, %v2340
  %v2342 = vpop.f32.mrf.mxu0
  %v2343 = vadd.f32 %v2174, %v2342
  %2344 = vmatmul.bf16.gmra.mxu0 %v497
  %v2345 = vpop.f32.mrf.mxu0
  %v2346 = vadd.f32 %v2177, %v2345
  %v2347 = vpop.f32.mrf.mxu0
  %v2348 = vadd.f32 %v2179, %v2347
  %2349 = vmatmul.bf16.gmra.mxu0 %v504
  %v2350 = vpop.f32.mrf.mxu0
  %v2351 = vadd.f32 %v2182, %v2350
  %v2352 = vpop.f32.mrf.mxu0
  %v2353 = vadd.f32 %v2184, %v2352
  %2354 = vmatmul.bf16.gmra.mxu0 %v511
  %v2355 = vpop.f32.mrf.mxu0
  %v2356 = vadd.f32 %v2187, %v2355
  %v2357 = vpop.f32.mrf.mxu0
  %v2358 = vadd.f32 %v2189, %v2357
  %2359 = vmatmul.bf16.gmra.mxu0 %v518
  %v2360 = vpop.f32.mrf.mxu0
  %v2361 = vadd.f32 %v2192, %v2360
  %v2362 = vpop.f32.mrf.mxu0
  %v2363 = vadd.f32 %v2194, %v2362
  %2364 = vmatmul.bf16.gmra.mxu0 %v525
  %v2365 = vpop.f32.mrf.mxu0
  %v2366 = vadd.f32 %v2197, %v2365
  %v2367 = vpop.f32.mrf.mxu0
  %v2368 = vadd.f32 %v2199, %v2367
  %2369 = vmatmul.bf16.gmra.mxu0 %v532
  %v2370 = vpop.f32.mrf.mxu0
  %v2371 = vadd.f32 %v2202, %v2370
  %v2372 = vpop.f32.mrf.mxu0
  %v2373 = vadd.f32 %v2204, %v2372
  %2374 = vmatmul.bf16.gmra.mxu0 %v539
  %v2375 = vpop.f32.mrf.mxu0
  %v2376 = vadd.f32 %v2207, %v2375
  %v2377 = vpop.f32.mrf.mxu0
  %v2378 = vadd.f32 %v2209, %v2377
  %2379 = vmatmul.bf16.gmra.mxu0 %v546
  %v2380 = vpop.f32.mrf.mxu0
  %v2381 = vadd.f32 %v2212, %v2380
  %v2382 = vpop.f32.mrf.mxu0
  %v2383 = vadd.f32 %v2214, %v2382
  %2384 = vmatmul.bf16.gmra.mxu0 %v553
  %v2385 = vpop.f32.mrf.mxu0
  %v2386 = vadd.f32 %v2217, %v2385
  %v2387 = vpop.f32.mrf.mxu0
  %v2388 = vadd.f32 %v2219, %v2387
  %2389 = vmatmul.bf16.gmra.mxu0 %v560
  %v2390 = vpop.f32.mrf.mxu0
  %v2391 = vadd.f32 %v2222, %v2390
  %v2392 = vpop.f32.mrf.mxu0
  %v2393 = vadd.f32 %v2224, %v2392
  %2394 = vmatmul.bf16.gmra.mxu0 %v567
  %v2395 = vpop.f32.mrf.mxu0
  %v2396 = vadd.f32 %v2227, %v2395
  %v2397 = vpop.f32.mrf.mxu0
  %v2398 = vadd.f32 %v2229, %v2397
  %2399 = vmatmul.bf16.gmra.mxu0 %v574
  %v2400 = vpop.f32.mrf.mxu0
  %v2401 = vadd.f32 %v2232, %v2400
  %v2402 = vpop.f32.mrf.mxu0
  %v2403 = vadd.f32 %v2234, %v2402
  %2404 = vmatmul.bf16.gmra.mxu0 %v581
  %v2405 = vpop.f32.mrf.mxu0
  %v2406 = vadd.f32 %v2237, %v2405
  %v2407 = vpop.f32.mrf.mxu0
  %v2408 = vadd.f32 %v2239, %v2407
  %2409 = vmatmul.bf16.gmra.mxu0 %v588
  %v2410 = vpop.f32.mrf.mxu0
  %v2411 = vadd.f32 %v2242, %v2410
  %v2412 = vpop.f32.mrf.mxu0
  %v2413 = vadd.f32 %v2244, %v2412
  %2414 = vmatmul.bf16.gmra.mxu0 %v595
  %v2415 = vpop.f32.mrf.mxu0
  %v2416 = vadd.f32 %v2247, %v2415
  %v2417 = vpop.f32.mrf.mxu0
  %v2418 = vadd.f32 %v2249, %v2417
  %2419 = vmatmul.bf16.gmra.mxu0 %v602
  %v2420 = vpop.f32.mrf.mxu0
  %v2421 = vadd.f32 %v2252, %v2420
  %v2422 = vpop.f32.mrf.mxu0
  %v2423 = vadd.f32 %v2254, %v2422
  %2424 = vmatmul.bf16.gmra.mxu0 %v609
  %v2425 = vpop.f32.mrf.mxu0
  %v2426 = vadd.f32 %v2257, %v2425
  %v2427 = vpop.f32.mrf.mxu0
  %v2428 = vadd.f32 %v2259, %v2427
  %2429 = vmatmul.bf16.gmra.mxu0 %v616
  %v2430 = vpop.f32.mrf.mxu0
  %v2431 = vadd.f32 %v2262, %v2430
  %v2432 = vpop.f32.mrf.mxu0
  %v2433 = vadd.f32 %v2264, %v2432
  %2434 = vmatmul.bf16.gmra.mxu0 %v623
  %v2435 = vpop.f32.mrf.mxu0
  %v2436 = vadd.f32 %v2267, %v2435
  %v2437 = vpop.f32.mrf.mxu0
  %v2438 = vadd.f32 %v2269, %v2437
  %2439 = vmatmul.bf16.gmra.mxu0 %v630
  %v2440 = vpop.f32.mrf.mxu0
  %v2441 = vadd.f32 %v2272, %v2440
  %v2442 = vpop.f32.mrf.mxu0
  %v2443 = vadd.f32 %v2274, %v2442
  %2444 = vmatmul.bf16.gmra.mxu0 %v637
  %v2445 = vpop.f32.mrf.mxu0
  %v2446 = vadd.f32 %v2277, %v2445
  %v2447 = vpop.f32.mrf.mxu0
  %v2448 = vadd.f32 %v2279, %v2447
  %2449 = vmatmul.bf16.gmra.mxu0 %v644
  %v2450 = vpop.f32.mrf.mxu0
  %v2451 = vadd.f32 %v2282, %v2450
  %v2452 = vpop.f32.mrf.mxu0
  %v2453 = vadd.f32 %v2284, %v2452
  %2454 = vmatmul.bf16.gmra.mxu0 %v651
  %v2455 = vpop.f32.mrf.mxu0
  %v2456 = vadd.f32 %v2287, %v2455
  %v2457 = vpop.f32.mrf.mxu0
  %v2458 = vadd.f32 %v2289, %v2457
  %2459 = vmatmul.bf16.gmra.mxu0 %v658
  %v2460 = vpop.f32.mrf.mxu0
  %v2461 = vadd.f32 %v2292, %v2460
  %v2462 = vpop.f32.mrf.mxu0
  %v2463 = vadd.f32 %v2294, %v2462
  %2464 = vmatmul.bf16.gmra.mxu0 %v665
  %v2465 = vpop.f32.mrf.mxu0
  %v2466 = vadd.f32 %v2297, %v2465
  %v2467 = vpop.f32.mrf.mxu0
  %v2468 = vadd.f32 %v2299, %v2467
  %2469 = vmatmul.bf16.gmra.mxu0 %v672
  %v2470 = vpop.f32.mrf.mxu0
  %v2471 = vadd.f32 %v2302, %v2470
  %v2472 = vpop.f32.mrf.mxu0
  %v2473 = vadd.f32 %v2304, %v2472
  %2474 = vmatmul.bf16.gmra.mxu0 %v679
  %v2475 = vpop.f32.mrf.mxu0
  %v2476 = vadd.f32 %v2307, %v2475
  %v2477 = vpop.f32.mrf.mxu0
  %v2478 = vadd.f32 %v2309, %v2477
  %2479 = vmatmul.bf16.gmra.mxu0 %v686
  %v2480 = vpop.f32.mrf.mxu0
  %v2481 = vadd.f32 %v2312, %v2480
  %v2482 = vpop.f32.mrf.mxu0
  %v2483 = vadd.f32 %v2314, %v2482
  %2484 = vmatmul.bf16.gmra.mxu0 %v693
  %v2485 = vpop.f32.mrf.mxu0
  %v2486 = vadd.f32 %v2317, %v2485
  %v2487 = vpop.f32.mrf.mxu0
  %v2488 = vadd.f32 %v2319, %v2487
  %2489 = vmatmul.bf16.gmra.mxu0 %v700
  %v2490 = vpop.f32.mrf.mxu0
  %v2491 = vadd.f32 %v2322, %v2490
  %v2492 = vpop.f32.mrf.mxu0
  %v2493 = vadd.f32 %v2324, %v2492
  %2494 = vdwg.mxu0
  %2495 = vmatpush.bf16.msra.mxu0 %v1623
  %2496 = vmatpush.bf16.msra.mxu0 %v1619
  %2497 = vmatpush.bf16.msra.mxu0 %v1615
  %2498 = vmatpush.bf16.msra.mxu0 %v1611
  %2499 = vmatpush.bf16.msra.mxu0 %v1607
  %2500 = vmatpush.bf16.msra.mxu0 %v1603
  %2501 = vmatpush.bf16.msra.mxu0 %v1599
  %2502 = vmatpush.bf16.msra.mxu0 %v1595
  %2503 = vmatmul.bf16.gmra.mxu0 %v484
  %v2504 = vpop.f32.mrf.mxu0
  %v2505 = vadd.f32 %v2336, %v2504
  %v2506 = vpop.f32.mrf.mxu0
  %v2507 = vadd.f32 %v2338, %v2506
  %2508 = vmatmul.bf16.gmra.mxu0 %v491
  %v2509 = vpop.f32.mrf.mxu0
  %v2510 = vadd.f32 %v2341, %v2509
  %v2511 = vpop.f32.mrf.mxu0
  %v2512 = vadd.f32 %v2343, %v2511
  %2513 = vmatmul.bf16.gmra.mxu0 %v498
  %v2514 = vpop.f32.mrf.mxu0
  %v2515 = vadd.f32 %v2346, %v2514
  %v2516 = vpop.f32.mrf.mxu0
  %v2517 = vadd.f32 %v2348, %v2516
  %2518 = vmatmul.bf16.gmra.mxu0 %v505
  %v2519 = vpop.f32.mrf.mxu0
  %v2520 = vadd.f32 %v2351, %v2519
  %v2521 = vpop.f32.mrf.mxu0
  %v2522 = vadd.f32 %v2353, %v2521
  %2523 = vmatmul.bf16.gmra.mxu0 %v512
  %v2524 = vpop.f32.mrf.mxu0
  %v2525 = vadd.f32 %v2356, %v2524
  %v2526 = vpop.f32.mrf.mxu0
  %v2527 = vadd.f32 %v2358, %v2526
  %2528 = vmatmul.bf16.gmra.mxu0 %v519
  %v2529 = vpop.f32.mrf.mxu0
  %v2530 = vadd.f32 %v2361, %v2529
  %v2531 = vpop.f32.mrf.mxu0
  %v2532 = vadd.f32 %v2363, %v2531
  %2533 = vmatmul.bf16.gmra.mxu0 %v526
  %v2534 = vpop.f32.mrf.mxu0
  %v2535 = vadd.f32 %v2366, %v2534
  %v2536 = vpop.f32.mrf.mxu0
  %v2537 = vadd.f32 %v2368, %v2536
  %2538 = vmatmul.bf16.gmra.mxu0 %v533
  %v2539 = vpop.f32.mrf.mxu0
  %v2540 = vadd.f32 %v2371, %v2539
  %v2541 = vpop.f32.mrf.mxu0
  %v2542 = vadd.f32 %v2373, %v2541
  %2543 = vmatmul.bf16.gmra.mxu0 %v540
  %v2544 = vpop.f32.mrf.mxu0
  %v2545 = vadd.f32 %v2376, %v2544
  %v2546 = vpop.f32.mrf.mxu0
  %v2547 = vadd.f32 %v2378, %v2546
  %2548 = vmatmul.bf16.gmra.mxu0 %v547
  %v2549 = vpop.f32.mrf.mxu0
  %v2550 = vadd.f32 %v2381, %v2549
  %v2551 = vpop.f32.mrf.mxu0
  %v2552 = vadd.f32 %v2383, %v2551
  %2553 = vmatmul.bf16.gmra.mxu0 %v554
  %v2554 = vpop.f32.mrf.mxu0
  %v2555 = vadd.f32 %v2386, %v2554
  %v2556 = vpop.f32.mrf.mxu0
  %v2557 = vadd.f32 %v2388, %v2556
  %2558 = vmatmul.bf16.gmra.mxu0 %v561
  %v2559 = vpop.f32.mrf.mxu0
  %v2560 = vadd.f32 %v2391, %v2559
  %v2561 = vpop.f32.mrf.mxu0
  %v2562 = vadd.f32 %v2393, %v2561
  %2563 = vmatmul.bf16.gmra.mxu0 %v568
  %v2564 = vpop.f32.mrf.mxu0
  %v2565 = vadd.f32 %v2396, %v2564
  %v2566 = vpop.f32.mrf.mxu0
  %v2567 = vadd.f32 %v2398, %v2566
  %2568 = vmatmul.bf16.gmra.mxu0 %v575
  %v2569 = vpop.f32.mrf.mxu0
  %v2570 = vadd.f32 %v2401, %v2569
  %v2571 = vpop.f32.mrf.mxu0
  %v2572 = vadd.f32 %v2403, %v2571
  %2573 = vmatmul.bf16.gmra.mxu0 %v582
  %v2574 = vpop.f32.mrf.mxu0
  %v2575 = vadd.f32 %v2406, %v2574
  %v2576 = vpop.f32.mrf.mxu0
  %v2577 = vadd.f32 %v2408, %v2576
  %2578 = vmatmul.bf16.gmra.mxu0 %v589
  %v2579 = vpop.f32.mrf.mxu0
  %v2580 = vadd.f32 %v2411, %v2579
  %v2581 = vpop.f32.mrf.mxu0
  %v2582 = vadd.f32 %v2413, %v2581
  %2583 = vmatmul.bf16.gmra.mxu0 %v596
  %v2584 = vpop.f32.mrf.mxu0
  %v2585 = vadd.f32 %v2416, %v2584
  %v2586 = vpop.f32.mrf.mxu0
  %v2587 = vadd.f32 %v2418, %v2586
  %2588 = vmatmul.bf16.gmra.mxu0 %v603
  %v2589 = vpop.f32.mrf.mxu0
  %v2590 = vadd.f32 %v2421, %v2589
  %v2591 = vpop.f32.mrf.mxu0
  %v2592 = vadd.f32 %v2423, %v2591
  %2593 = vmatmul.bf16.gmra.mxu0 %v610
  %v2594 = vpop.f32.mrf.mxu0
  %v2595 = vadd.f32 %v2426, %v2594
  %v2596 = vpop.f32.mrf.mxu0
  %v2597 = vadd.f32 %v2428, %v2596
  %2598 = vmatmul.bf16.gmra.mxu0 %v617
  %v2599 = vpop.f32.mrf.mxu0
  %v2600 = vadd.f32 %v2431, %v2599
  %v2601 = vpop.f32.mrf.mxu0
  %v2602 = vadd.f32 %v2433, %v2601
  %2603 = vmatmul.bf16.gmra.mxu0 %v624
  %v2604 = vpop.f32.mrf.mxu0
  %v2605 = vadd.f32 %v2436, %v2604
  %v2606 = vpop.f32.mrf.mxu0
  %v2607 = vadd.f32 %v2438, %v2606
  %2608 = vmatmul.bf16.gmra.mxu0 %v631
  %v2609 = vpop.f32.mrf.mxu0
  %v2610 = vadd.f32 %v2441, %v2609
  %v2611 = vpop.f32.mrf.mxu0
  %v2612 = vadd.f32 %v2443, %v2611
  %2613 = vmatmul.bf16.gmra.mxu0 %v638
  %v2614 = vpop.f32.mrf.mxu0
  %v2615 = vadd.f32 %v2446, %v2614
  %v2616 = vpop.f32.mrf.mxu0
  %v2617 = vadd.f32 %v2448, %v2616
  %2618 = vmatmul.bf16.gmra.mxu0 %v645
  %v2619 = vpop.f32.mrf.mxu0
  %v2620 = vadd.f32 %v2451, %v2619
  %v2621 = vpop.f32.mrf.mxu0
  %v2622 = vadd.f32 %v2453, %v2621
  %2623 = vmatmul.bf16.gmra.mxu0 %v652
  %v2624 = vpop.f32.mrf.mxu0
  %v2625 = vadd.f32 %v2456, %v2624
  %v2626 = vpop.f32.mrf.mxu0
  %v2627 = vadd.f32 %v2458, %v2626
  %2628 = vmatmul.bf16.gmra.mxu0 %v659
  %v2629 = vpop.f32.mrf.mxu0
  %v2630 = vadd.f32 %v2461, %v2629
  %v2631 = vpop.f32.mrf.mxu0
  %v2632 = vadd.f32 %v2463, %v2631
  %2633 = vmatmul.bf16.gmra.mxu0 %v666
  %v2634 = vpop.f32.mrf.mxu0
  %v2635 = vadd.f32 %v2466, %v2634
  %v2636 = vpop.f32.mrf.mxu0
  %v2637 = vadd.f32 %v2468, %v2636
  %2638 = vmatmul.bf16.gmra.mxu0 %v673
  %v2639 = vpop.f32.mrf.mxu0
  %v2640 = vadd.f32 %v2471, %v2639
  %v2641 = vpop.f32.mrf.mxu0
  %v2642 = vadd.f32 %v2473, %v2641
  %2643 = vmatmul.bf16.gmra.mxu0 %v680
  %v2644 = vpop.f32.mrf.mxu0
  %v2645 = vadd.f32 %v2476, %v2644
  %v2646 = vpop.f32.mrf.mxu0
  %v2647 = vadd.f32 %v2478, %v2646
  %2648 = vmatmul.bf16.gmra.mxu0 %v687
  %v2649 = vpop.f32.mrf.mxu0
  %v2650 = vadd.f32 %v2481, %v2649
  %v2651 = vpop.f32.mrf.mxu0
  %v2652 = vadd.f32 %v2483, %v2651
  %2653 = vmatmul.bf16.gmra.mxu0 %v694
  %v2654 = vpop.f32.mrf.mxu0
  %v2655 = vadd.f32 %v2486, %v2654
  %v2656 = vpop.f32.mrf.mxu0
  %v2657 = vadd.f32 %v2488, %v2656
  %2658 = vmatmul.bf16.gmra.mxu0 %v701
  %v2659 = vpop.f32.mrf.mxu0
  %v2660 = vadd.f32 %v2491, %v2659
  %v2661 = vpop.f32.mrf.mxu0
  %v2662 = vadd.f32 %v2493, %v2661
  %2663 = vdwg.mxu0
  %2664 = vmatpush.bf16.msra.mxu0 %v1655
  %2665 = vmatpush.bf16.msra.mxu0 %v1651
  %2666 = vmatpush.bf16.msra.mxu0 %v1647
  %2667 = vmatpush.bf16.msra.mxu0 %v1643
  %2668 = vmatpush.bf16.msra.mxu0 %v1639
  %2669 = vmatpush.bf16.msra.mxu0 %v1635
  %2670 = vmatpush.bf16.msra.mxu0 %v1631
  %2671 = vmatpush.bf16.msra.mxu0 %v1627
  %2672 = vmatmul.bf16.gmra.mxu0 %v485
  %v2673 = vpop.f32.mrf.mxu0
  %v2674 = vadd.f32 %v2505, %v2673
  %v2675 = vpop.f32.mrf.mxu0
  %v2676 = vadd.f32 %v2507, %v2675
  %2677 = vmatmul.bf16.gmra.mxu0 %v492
  %v2678 = vpop.f32.mrf.mxu0
  %v2679 = vadd.f32 %v2510, %v2678
  %v2680 = vpop.f32.mrf.mxu0
  %v2681 = vadd.f32 %v2512, %v2680
  %2682 = vmatmul.bf16.gmra.mxu0 %v499
  %v2683 = vpop.f32.mrf.mxu0
  %v2684 = vadd.f32 %v2515, %v2683
  %v2685 = vpop.f32.mrf.mxu0
  %v2686 = vadd.f32 %v2517, %v2685
  %2687 = vmatmul.bf16.gmra.mxu0 %v506
  %v2688 = vpop.f32.mrf.mxu0
  %v2689 = vadd.f32 %v2520, %v2688
  %v2690 = vpop.f32.mrf.mxu0
  %v2691 = vadd.f32 %v2522, %v2690
  %2692 = vmatmul.bf16.gmra.mxu0 %v513
  %v2693 = vpop.f32.mrf.mxu0
  %v2694 = vadd.f32 %v2525, %v2693
  %v2695 = vpop.f32.mrf.mxu0
  %v2696 = vadd.f32 %v2527, %v2695
  %2697 = vmatmul.bf16.gmra.mxu0 %v520
  %v2698 = vpop.f32.mrf.mxu0
  %v2699 = vadd.f32 %v2530, %v2698
  %v2700 = vpop.f32.mrf.mxu0
  %v2701 = vadd.f32 %v2532, %v2700
  %2702 = vmatmul.bf16.gmra.mxu0 %v527
  %v2703 = vpop.f32.mrf.mxu0
  %v2704 = vadd.f32 %v2535, %v2703
  %v2705 = vpop.f32.mrf.mxu0
  %v2706 = vadd.f32 %v2537, %v2705
  %2707 = vmatmul.bf16.gmra.mxu0 %v534
  %v2708 = vpop.f32.mrf.mxu0
  %v2709 = vadd.f32 %v2540, %v2708
  %v2710 = vpop.f32.mrf.mxu0
  %v2711 = vadd.f32 %v2542, %v2710
  %2712 = vmatmul.bf16.gmra.mxu0 %v541
  %v2713 = vpop.f32.mrf.mxu0
  %v2714 = vadd.f32 %v2545, %v2713
  %v2715 = vpop.f32.mrf.mxu0
  %v2716 = vadd.f32 %v2547, %v2715
  %2717 = vmatmul.bf16.gmra.mxu0 %v548
  %v2718 = vpop.f32.mrf.mxu0
  %v2719 = vadd.f32 %v2550, %v2718
  %v2720 = vpop.f32.mrf.mxu0
  %v2721 = vadd.f32 %v2552, %v2720
  %2722 = vmatmul.bf16.gmra.mxu0 %v555
  %v2723 = vpop.f32.mrf.mxu0
  %v2724 = vadd.f32 %v2555, %v2723
  %v2725 = vpop.f32.mrf.mxu0
  %v2726 = vadd.f32 %v2557, %v2725
  %2727 = vmatmul.bf16.gmra.mxu0 %v562
  %v2728 = vpop.f32.mrf.mxu0
  %v2729 = vadd.f32 %v2560, %v2728
  %v2730 = vpop.f32.mrf.mxu0
  %v2731 = vadd.f32 %v2562, %v2730
  %2732 = vmatmul.bf16.gmra.mxu0 %v569
  %v2733 = vpop.f32.mrf.mxu0
  %v2734 = vadd.f32 %v2565, %v2733
  %v2735 = vpop.f32.mrf.mxu0
  %v2736 = vadd.f32 %v2567, %v2735
  %2737 = vmatmul.bf16.gmra.mxu0 %v576
  %v2738 = vpop.f32.mrf.mxu0
  %v2739 = vadd.f32 %v2570, %v2738
  %v2740 = vpop.f32.mrf.mxu0
  %v2741 = vadd.f32 %v2572, %v2740
  %2742 = vmatmul.bf16.gmra.mxu0 %v583
  %v2743 = vpop.f32.mrf.mxu0
  %v2744 = vadd.f32 %v2575, %v2743
  %v2745 = vpop.f32.mrf.mxu0
  %v2746 = vadd.f32 %v2577, %v2745
  %2747 = vmatmul.bf16.gmra.mxu0 %v590
  %v2748 = vpop.f32.mrf.mxu0
  %v2749 = vadd.f32 %v2580, %v2748
  %v2750 = vpop.f32.mrf.mxu0
  %v2751 = vadd.f32 %v2582, %v2750
  %2752 = vmatmul.bf16.gmra.mxu0 %v597
  %v2753 = vpop.f32.mrf.mxu0
  %v2754 = vadd.f32 %v2585, %v2753
  %v2755 = vpop.f32.mrf.mxu0
  %v2756 = vadd.f32 %v2587, %v2755
  %2757 = vmatmul.bf16.gmra.mxu0 %v604
  %v2758 = vpop.f32.mrf.mxu0
  %v2759 = vadd.f32 %v2590, %v2758
  %v2760 = vpop.f32.mrf.mxu0
  %v2761 = vadd.f32 %v2592, %v2760
  %2762 = vmatmul.bf16.gmra.mxu0 %v611
  %v2763 = vpop.f32.mrf.mxu0
  %v2764 = vadd.f32 %v2595, %v2763
  %v2765 = vpop.f32.mrf.mxu0
  %v2766 = vadd.f32 %v2597, %v2765
  %2767 = vmatmul.bf16.gmra.mxu0 %v618
  %v2768 = vpop.f32.mrf.mxu0
  %v2769 = vadd.f32 %v2600, %v2768
  %v2770 = vpop.f32.mrf.mxu0
  %v2771 = vadd.f32 %v2602, %v2770
  %2772 = vmatmul.bf16.gmra.mxu0 %v625
  %v2773 = vpop.f32.mrf.mxu0
  %v2774 = vadd.f32 %v2605, %v2773
  %v2775 = vpop.f32.mrf.mxu0
  %v2776 = vadd.f32 %v2607, %v2775
  %2777 = vmatmul.bf16.gmra.mxu0 %v632
  %v2778 = vpop.f32.mrf.mxu0
  %v2779 = vadd.f32 %v2610, %v2778
  %v2780 = vpop.f32.mrf.mxu0
  %v2781 = vadd.f32 %v2612, %v2780
  %2782 = vmatmul.bf16.gmra.mxu0 %v639
  %v2783 = vpop.f32.mrf.mxu0
  %v2784 = vadd.f32 %v2615, %v2783
  %v2785 = vpop.f32.mrf.mxu0
  %v2786 = vadd.f32 %v2617, %v2785
  %2787 = vmatmul.bf16.gmra.mxu0 %v646
  %v2788 = vpop.f32.mrf.mxu0
  %v2789 = vadd.f32 %v2620, %v2788
  %v2790 = vpop.f32.mrf.mxu0
  %v2791 = vadd.f32 %v2622, %v2790
  %2792 = vmatmul.bf16.gmra.mxu0 %v653
  %v2793 = vpop.f32.mrf.mxu0
  %v2794 = vadd.f32 %v2625, %v2793
  %v2795 = vpop.f32.mrf.mxu0
  %v2796 = vadd.f32 %v2627, %v2795
  %2797 = vmatmul.bf16.gmra.mxu0 %v660
  %v2798 = vpop.f32.mrf.mxu0
  %v2799 = vadd.f32 %v2630, %v2798
  %v2800 = vpop.f32.mrf.mxu0
  %v2801 = vadd.f32 %v2632, %v2800
  %2802 = vmatmul.bf16.gmra.mxu0 %v667
  %v2803 = vpop.f32.mrf.mxu0
  %v2804 = vadd.f32 %v2635, %v2803
  %v2805 = vpop.f32.mrf.mxu0
  %v2806 = vadd.f32 %v2637, %v2805
  %2807 = vmatmul.bf16.gmra.mxu0 %v674
  %v2808 = vpop.f32.mrf.mxu0
  %v2809 = vadd.f32 %v2640, %v2808
  %v2810 = vpop.f32.mrf.mxu0
  %v2811 = vadd.f32 %v2642, %v2810
  %2812 = vmatmul.bf16.gmra.mxu0 %v681
  %v2813 = vpop.f32.mrf.mxu0
  %v2814 = vadd.f32 %v2645, %v2813
  %v2815 = vpop.f32.mrf.mxu0
  %v2816 = vadd.f32 %v2647, %v2815
  %2817 = vmatmul.bf16.gmra.mxu0 %v688
  %v2818 = vpop.f32.mrf.mxu0
  %v2819 = vadd.f32 %v2650, %v2818
  %v2820 = vpop.f32.mrf.mxu0
  %v2821 = vadd.f32 %v2652, %v2820
  %2822 = vmatmul.bf16.gmra.mxu0 %v695
  %v2823 = vpop.f32.mrf.mxu0
  %v2824 = vadd.f32 %v2655, %v2823
  %v2825 = vpop.f32.mrf.mxu0
  %v2826 = vadd.f32 %v2657, %v2825
  %2827 = vmatmul.bf16.gmra.mxu0 %v702
  %v2828 = vpop.f32.mrf.mxu0
  %v2829 = vadd.f32 %v2660, %v2828
  %v2830 = vpop.f32.mrf.mxu0
  %v2831 = vadd.f32 %v2662, %v2830
  %2832 = vdwg.mxu0
  %2833 = vmatpush.bf16.msra.mxu0 %v1687
  %2834 = vmatpush.bf16.msra.mxu0 %v1683
  %2835 = vmatpush.bf16.msra.mxu0 %v1679
  %2836 = vmatpush.bf16.msra.mxu0 %v1675
  %2837 = vmatpush.bf16.msra.mxu0 %v1671
  %2838 = vmatpush.bf16.msra.mxu0 %v1667
  %2839 = vmatpush.bf16.msra.mxu0 %v1663
  %2840 = vmatpush.bf16.msra.mxu0 %v1659
  %2841 = vmatmul.bf16.gmra.mxu0 %v486
  %v2842 = vpop.f32.mrf.mxu0
  %v2843 = vadd.f32 %v2674, %v2842
  %v2844 = vpop.f32.mrf.mxu0
  %v2845 = vadd.f32 %v2676, %v2844
  %2846 = vmatmul.bf16.gmra.mxu0 %v493
  %v2847 = vpop.f32.mrf.mxu0
  %v2848 = vadd.f32 %v2679, %v2847
  %v2849 = vpop.f32.mrf.mxu0
  %v2850 = vadd.f32 %v2681, %v2849
  %2851 = vmatmul.bf16.gmra.mxu0 %v500
  %v2852 = vpop.f32.mrf.mxu0
  %v2853 = vadd.f32 %v2684, %v2852
  %v2854 = vpop.f32.mrf.mxu0
  %v2855 = vadd.f32 %v2686, %v2854
  %2856 = vmatmul.bf16.gmra.mxu0 %v507
  %v2857 = vpop.f32.mrf.mxu0
  %v2858 = vadd.f32 %v2689, %v2857
  %v2859 = vpop.f32.mrf.mxu0
  %v2860 = vadd.f32 %v2691, %v2859
  %2861 = vmatmul.bf16.gmra.mxu0 %v514
  %v2862 = vpop.f32.mrf.mxu0
  %v2863 = vadd.f32 %v2694, %v2862
  %v2864 = vpop.f32.mrf.mxu0
  %v2865 = vadd.f32 %v2696, %v2864
  %2866 = vmatmul.bf16.gmra.mxu0 %v521
  %v2867 = vpop.f32.mrf.mxu0
  %v2868 = vadd.f32 %v2699, %v2867
  %v2869 = vpop.f32.mrf.mxu0
  %v2870 = vadd.f32 %v2701, %v2869
  %2871 = vmatmul.bf16.gmra.mxu0 %v528
  %v2872 = vpop.f32.mrf.mxu0
  %v2873 = vadd.f32 %v2704, %v2872
  %v2874 = vpop.f32.mrf.mxu0
  %v2875 = vadd.f32 %v2706, %v2874
  %2876 = vmatmul.bf16.gmra.mxu0 %v535
  %v2877 = vpop.f32.mrf.mxu0
  %v2878 = vadd.f32 %v2709, %v2877
  %v2879 = vpop.f32.mrf.mxu0
  %v2880 = vadd.f32 %v2711, %v2879
  %2881 = vmatmul.bf16.gmra.mxu0 %v542
  %v2882 = vpop.f32.mrf.mxu0
  %v2883 = vadd.f32 %v2714, %v2882
  %v2884 = vpop.f32.mrf.mxu0
  %v2885 = vadd.f32 %v2716, %v2884
  %2886 = vmatmul.bf16.gmra.mxu0 %v549
  %v2887 = vpop.f32.mrf.mxu0
  %v2888 = vadd.f32 %v2719, %v2887
  %v2889 = vpop.f32.mrf.mxu0
  %v2890 = vadd.f32 %v2721, %v2889
  %2891 = vmatmul.bf16.gmra.mxu0 %v556
  %v2892 = vpop.f32.mrf.mxu0
  %v2893 = vadd.f32 %v2724, %v2892
  %v2894 = vpop.f32.mrf.mxu0
  %v2895 = vadd.f32 %v2726, %v2894
  %2896 = vmatmul.bf16.gmra.mxu0 %v563
  %v2897 = vpop.f32.mrf.mxu0
  %v2898 = vadd.f32 %v2729, %v2897
  %v2899 = vpop.f32.mrf.mxu0
  %v2900 = vadd.f32 %v2731, %v2899
  %2901 = vmatmul.bf16.gmra.mxu0 %v570
  %v2902 = vpop.f32.mrf.mxu0
  %v2903 = vadd.f32 %v2734, %v2902
  %v2904 = vpop.f32.mrf.mxu0
  %v2905 = vadd.f32 %v2736, %v2904
  %2906 = vmatmul.bf16.gmra.mxu0 %v577
  %v2907 = vpop.f32.mrf.mxu0
  %v2908 = vadd.f32 %v2739, %v2907
  %v2909 = vpop.f32.mrf.mxu0
  %v2910 = vadd.f32 %v2741, %v2909
  %2911 = vmatmul.bf16.gmra.mxu0 %v584
  %v2912 = vpop.f32.mrf.mxu0
  %v2913 = vadd.f32 %v2744, %v2912
  %v2914 = vpop.f32.mrf.mxu0
  %v2915 = vadd.f32 %v2746, %v2914
  %2916 = vmatmul.bf16.gmra.mxu0 %v591
  %v2917 = vpop.f32.mrf.mxu0
  %v2918 = vadd.f32 %v2749, %v2917
  %v2919 = vpop.f32.mrf.mxu0
  %v2920 = vadd.f32 %v2751, %v2919
  %2921 = vmatmul.bf16.gmra.mxu0 %v598
  %v2922 = vpop.f32.mrf.mxu0
  %v2923 = vadd.f32 %v2754, %v2922
  %v2924 = vpop.f32.mrf.mxu0
  %v2925 = vadd.f32 %v2756, %v2924
  %2926 = vmatmul.bf16.gmra.mxu0 %v605
  %v2927 = vpop.f32.mrf.mxu0
  %v2928 = vadd.f32 %v2759, %v2927
  %v2929 = vpop.f32.mrf.mxu0
  %v2930 = vadd.f32 %v2761, %v2929
  %2931 = vmatmul.bf16.gmra.mxu0 %v612
  %v2932 = vpop.f32.mrf.mxu0
  %v2933 = vadd.f32 %v2764, %v2932
  %v2934 = vpop.f32.mrf.mxu0
  %v2935 = vadd.f32 %v2766, %v2934
  %2936 = vmatmul.bf16.gmra.mxu0 %v619
  %v2937 = vpop.f32.mrf.mxu0
  %v2938 = vadd.f32 %v2769, %v2937
  %v2939 = vpop.f32.mrf.mxu0
  %v2940 = vadd.f32 %v2771, %v2939
  %2941 = vmatmul.bf16.gmra.mxu0 %v626
  %v2942 = vpop.f32.mrf.mxu0
  %v2943 = vadd.f32 %v2774, %v2942
  %v2944 = vpop.f32.mrf.mxu0
  %v2945 = vadd.f32 %v2776, %v2944
  %2946 = vmatmul.bf16.gmra.mxu0 %v633
  %v2947 = vpop.f32.mrf.mxu0
  %v2948 = vadd.f32 %v2779, %v2947
  %v2949 = vpop.f32.mrf.mxu0
  %v2950 = vadd.f32 %v2781, %v2949
  %2951 = vmatmul.bf16.gmra.mxu0 %v640
  %v2952 = vpop.f32.mrf.mxu0
  %v2953 = vadd.f32 %v2784, %v2952
  %v2954 = vpop.f32.mrf.mxu0
  %v2955 = vadd.f32 %v2786, %v2954
  %2956 = vmatmul.bf16.gmra.mxu0 %v647
  %v2957 = vpop.f32.mrf.mxu0
  %v2958 = vadd.f32 %v2789, %v2957
  %v2959 = vpop.f32.mrf.mxu0
  %v2960 = vadd.f32 %v2791, %v2959
  %2961 = vmatmul.bf16.gmra.mxu0 %v654
  %v2962 = vpop.f32.mrf.mxu0
  %v2963 = vadd.f32 %v2794, %v2962
  %v2964 = vpop.f32.mrf.mxu0
  %v2965 = vadd.f32 %v2796, %v2964
  %2966 = vmatmul.bf16.gmra.mxu0 %v661
  %v2967 = vpop.f32.mrf.mxu0
  %v2968 = vadd.f32 %v2799, %v2967
  %v2969 = vpop.f32.mrf.mxu0
  %v2970 = vadd.f32 %v2801, %v2969
  %2971 = vmatmul.bf16.gmra.mxu0 %v668
  %v2972 = vpop.f32.mrf.mxu0
  %v2973 = vadd.f32 %v2804, %v2972
  %v2974 = vpop.f32.mrf.mxu0
  %v2975 = vadd.f32 %v2806, %v2974
  %2976 = vmatmul.bf16.gmra.mxu0 %v675
  %v2977 = vpop.f32.mrf.mxu0
  %v2978 = vadd.f32 %v2809, %v2977
  %v2979 = vpop.f32.mrf.mxu0
  %v2980 = vadd.f32 %v2811, %v2979
  %2981 = vmatmul.bf16.gmra.mxu0 %v682
  %v2982 = vpop.f32.mrf.mxu0
  %v2983 = vadd.f32 %v2814, %v2982
  %v2984 = vpop.f32.mrf.mxu0
  %v2985 = vadd.f32 %v2816, %v2984
  %2986 = vmatmul.bf16.gmra.mxu0 %v689
  %v2987 = vpop.f32.mrf.mxu0
  %v2988 = vadd.f32 %v2819, %v2987
  %v2989 = vpop.f32.mrf.mxu0
  %v2990 = vadd.f32 %v2821, %v2989
  %2991 = vmatmul.bf16.gmra.mxu0 %v696
  %v2992 = vpop.f32.mrf.mxu0
  %v2993 = vadd.f32 %v2824, %v2992
  %v2994 = vpop.f32.mrf.mxu0
  %v2995 = vadd.f32 %v2826, %v2994
  %2996 = vmatmul.bf16.gmra.mxu0 %v703
  %v2997 = vpop.f32.mrf.mxu0
  %v2998 = vadd.f32 %v2829, %v2997
  %v2999 = vpop.f32.mrf.mxu0
  %v3000 = vadd.f32 %v2831, %v2999
  %3001 = vdwg.mxu0
  %3002 = vmatpush.bf16.msra.mxu0 0
  %3003 = vmatpush.bf16.msra.mxu0 0
  %3004 = vmatpush.bf16.msra.mxu0 0
  %3005 = vmatpush.bf16.msra.mxu0 0
  %3006 = vmatpush.bf16.msra.mxu0 0
  %3007 = vmatpush.bf16.msra.mxu0 0
  %3008 = vmatpush.bf16.msra.mxu0 0
  %3009 = vmatpush.bf16.msra.mxu0 %v1691
  %3010 = vmatmul.bf16.gmra.mxu0 %v1893
  %v3011 = vpop.f32.mrf.mxu0
  %v3012 = vadd.f32 %v2843, %v3011
  %v3013 = vpop.f32.mrf.mxu0
  %v3014 = vadd.f32 %v2845, %v3013
  %3015 = vmatmul.bf16.gmra.mxu0 %v1896
  %v3016 = vpop.f32.mrf.mxu0
  %v3017 = vadd.f32 %v2848, %v3016
  %v3018 = vpop.f32.mrf.mxu0
  %v3019 = vadd.f32 %v2850, %v3018
  %3020 = vmatmul.bf16.gmra.mxu0 %v1899
  %v3021 = vpop.f32.mrf.mxu0
  %v3022 = vadd.f32 %v2853, %v3021
  %v3023 = vpop.f32.mrf.mxu0
  %v3024 = vadd.f32 %v2855, %v3023
  %3025 = vmatmul.bf16.gmra.mxu0 %v1902
  %v3026 = vpop.f32.mrf.mxu0
  %v3027 = vadd.f32 %v2858, %v3026
  %v3028 = vpop.f32.mrf.mxu0
  %v3029 = vadd.f32 %v2860, %v3028
  %3030 = vmatmul.bf16.gmra.mxu0 %v1905
  %v3031 = vpop.f32.mrf.mxu0
  %v3032 = vadd.f32 %v2863, %v3031
  %v3033 = vpop.f32.mrf.mxu0
  %v3034 = vadd.f32 %v2865, %v3033
  %3035 = vmatmul.bf16.gmra.mxu0 %v1908
  %v3036 = vpop.f32.mrf.mxu0
  %v3037 = vadd.f32 %v2868, %v3036
  %v3038 = vpop.f32.mrf.mxu0
  %v3039 = vadd.f32 %v2870, %v3038
  %3040 = vmatmul.bf16.gmra.mxu0 %v1911
  %v3041 = vpop.f32.mrf.mxu0
  %v3042 = vadd.f32 %v2873, %v3041
  %v3043 = vpop.f32.mrf.mxu0
  %v3044 = vadd.f32 %v2875, %v3043
  %3045 = vmatmul.bf16.gmra.mxu0 %v1914
  %v3046 = vpop.f32.mrf.mxu0
  %v3047 = vadd.f32 %v2878, %v3046
  %v3048 = vpop.f32.mrf.mxu0
  %v3049 = vadd.f32 %v2880, %v3048
  %3050 = vmatmul.bf16.gmra.mxu0 %v1917
  %v3051 = vpop.f32.mrf.mxu0
  %v3052 = vadd.f32 %v2883, %v3051
  %v3053 = vpop.f32.mrf.mxu0
  %v3054 = vadd.f32 %v2885, %v3053
  %3055 = vmatmul.bf16.gmra.mxu0 %v1920
  %v3056 = vpop.f32.mrf.mxu0
  %v3057 = vadd.f32 %v2888, %v3056
  %v3058 = vpop.f32.mrf.mxu0
  %v3059 = vadd.f32 %v2890, %v3058
  %3060 = vmatmul.bf16.gmra.mxu0 %v1923
  %v3061 = vpop.f32.mrf.mxu0
  %v3062 = vadd.f32 %v2893, %v3061
  %v3063 = vpop.f32.mrf.mxu0
  %v3064 = vadd.f32 %v2895, %v3063
  %3065 = vmatmul.bf16.gmra.mxu0 %v1926
  %v3066 = vpop.f32.mrf.mxu0
  %v3067 = vadd.f32 %v2898, %v3066
  %v3068 = vpop.f32.mrf.mxu0
  %v3069 = vadd.f32 %v2900, %v3068
  %3070 = vmatmul.bf16.gmra.mxu0 %v1929
  %v3071 = vpop.f32.mrf.mxu0
  %v3072 = vadd.f32 %v2903, %v3071
  %v3073 = vpop.f32.mrf.mxu0
  %v3074 = vadd.f32 %v2905, %v3073
  %3075 = vmatmul.bf16.gmra.mxu0 %v1932
  %v3076 = vpop.f32.mrf.mxu0
  %v3077 = vadd.f32 %v2908, %v3076
  %v3078 = vpop.f32.mrf.mxu0
  %v3079 = vadd.f32 %v2910, %v3078
  %3080 = vmatmul.bf16.gmra.mxu0 %v1935
  %v3081 = vpop.f32.mrf.mxu0
  %v3082 = vadd.f32 %v2913, %v3081
  %v3083 = vpop.f32.mrf.mxu0
  %v3084 = vadd.f32 %v2915, %v3083
  %3085 = vmatmul.bf16.gmra.mxu0 %v1938
  %v3086 = vpop.f32.mrf.mxu0
  %v3087 = vadd.f32 %v2918, %v3086
  %v3088 = vpop.f32.mrf.mxu0
  %v3089 = vadd.f32 %v2920, %v3088
  %3090 = vmatmul.bf16.gmra.mxu0 %v1941
  %v3091 = vpop.f32.mrf.mxu0
  %v3092 = vadd.f32 %v2923, %v3091
  %v3093 = vpop.f32.mrf.mxu0
  %v3094 = vadd.f32 %v2925, %v3093
  %3095 = vmatmul.bf16.gmra.mxu0 %v1944
  %v3096 = vpop.f32.mrf.mxu0
  %v3097 = vadd.f32 %v2928, %v3096
  %v3098 = vpop.f32.mrf.mxu0
  %v3099 = vadd.f32 %v2930, %v3098
  %3100 = vmatmul.bf16.gmra.mxu0 %v1947
  %v3101 = vpop.f32.mrf.mxu0
  %v3102 = vadd.f32 %v2933, %v3101
  %v3103 = vpop.f32.mrf.mxu0
  %v3104 = vadd.f32 %v2935, %v3103
  %3105 = vmatmul.bf16.gmra.mxu0 %v1950
  %v3106 = vpop.f32.mrf.mxu0
  %v3107 = vadd.f32 %v2938, %v3106
  %v3108 = vpop.f32.mrf.mxu0
  %v3109 = vadd.f32 %v2940, %v3108
  %3110 = vmatmul.bf16.gmra.mxu0 %v1953
  %v3111 = vpop.f32.mrf.mxu0
  %v3112 = vadd.f32 %v2943, %v3111
  %v3113 = vpop.f32.mrf.mxu0
  %v3114 = vadd.f32 %v2945, %v3113
  %3115 = vmatmul.bf16.gmra.mxu0 %v1956
  %v3116 = vpop.f32.mrf.mxu0
  %v3117 = vadd.f32 %v2948, %v3116
  %v3118 = vpop.f32.mrf.mxu0
  %v3119 = vadd.f32 %v2950, %v3118
  %3120 = vmatmul.bf16.gmra.mxu0 %v1959
  %v3121 = vpop.f32.mrf.mxu0
  %v3122 = vadd.f32 %v2953, %v3121
  %v3123 = vpop.f32.mrf.mxu0
  %v3124 = vadd.f32 %v2955, %v3123
  %3125 = vmatmul.bf16.gmra.mxu0 %v1962
  %v3126 = vpop.f32.mrf.mxu0
  %v3127 = vadd.f32 %v2958, %v3126
  %v3128 = vpop.f32.mrf.mxu0
  %v3129 = vadd.f32 %v2960, %v3128
  %3130 = vmatmul.bf16.gmra.mxu0 %v1965
  %v3131 = vpop.f32.mrf.mxu0
  %v3132 = vadd.f32 %v2963, %v3131
  %v3133 = vpop.f32.mrf.mxu0
  %v3134 = vadd.f32 %v2965, %v3133
  %3135 = vmatmul.bf16.gmra.mxu0 %v1968
  %v3136 = vpop.f32.mrf.mxu0
  %v3137 = vadd.f32 %v2968, %v3136
  %v3138 = vpop.f32.mrf.mxu0
  %v3139 = vadd.f32 %v2970, %v3138
  %3140 = vmatmul.bf16.gmra.mxu0 %v1971
  %v3141 = vpop.f32.mrf.mxu0
  %v3142 = vadd.f32 %v2973, %v3141
  %v3143 = vpop.f32.mrf.mxu0
  %v3144 = vadd.f32 %v2975, %v3143
  %3145 = vmatmul.bf16.gmra.mxu0 %v1974
  %v3146 = vpop.f32.mrf.mxu0
  %v3147 = vadd.f32 %v2978, %v3146
  %v3148 = vpop.f32.mrf.mxu0
  %v3149 = vadd.f32 %v2980, %v3148
  %3150 = vmatmul.bf16.gmra.mxu0 %v1977
  %v3151 = vpop.f32.mrf.mxu0
  %v3152 = vadd.f32 %v2983, %v3151
  %v3153 = vpop.f32.mrf.mxu0
  %v3154 = vadd.f32 %v2985, %v3153
  %3155 = vmatmul.bf16.gmra.mxu0 %v1980
  %v3156 = vpop.f32.mrf.mxu0
  %v3157 = vadd.f32 %v2988, %v3156
  %v3158 = vpop.f32.mrf.mxu0
  %v3159 = vadd.f32 %v2990, %v3158
  %3160 = vmatmul.bf16.gmra.mxu0 %v1983
  %v3161 = vpop.f32.mrf.mxu0
  %v3162 = vadd.f32 %v2993, %v3161
  %v3163 = vpop.f32.mrf.mxu0
  %v3164 = vadd.f32 %v2995, %v3163
  %3165 = vmatmul.bf16.gmra.mxu0 %v1986
  %v3166 = vpop.f32.mrf.mxu0
  %v3167 = vadd.f32 %v2998, %v3166
  %v3168 = vpop.f32.mrf.mxu0
  %v3169 = vadd.f32 %v3000, %v3168
  %3170 = vdwg.mxu0
  %3171 = vmatpush.bf16.msra.mxu0 %v1528
  %3172 = vmatpush.bf16.msra.mxu0 %v1524
  %3173 = vmatpush.bf16.msra.mxu0 %v1520
  %3174 = vmatpush.bf16.msra.mxu0 %v1516
  %3175 = vmatpush.bf16.msra.mxu0 %v1512
  %3176 = vmatpush.bf16.msra.mxu0 %v1508
  %3177 = vmatpush.bf16.msra.mxu0 %v1504
  %3178 = vmatpush.bf16.msra.mxu0 %v1500
  %3179 = vmatmul.bf16.gmra.mxu0 %v481
  %v3180 = vpop.f32.mrf.mxu0
  %v3181 = vadd.f32 %v904, %v3180
  %v3182 = vpop.f32.mrf.mxu0
  %v3183 = vadd.f32 %v904, %v3182
  %3184 = vmatmul.bf16.gmra.mxu0 %v488
  %v3185 = vpop.f32.mrf.mxu0
  %v3186 = vadd.f32 %v904, %v3185
  %v3187 = vpop.f32.mrf.mxu0
  %v3188 = vadd.f32 %v904, %v3187
  %3189 = vmatmul.bf16.gmra.mxu0 %v495
  %v3190 = vpop.f32.mrf.mxu0
  %v3191 = vadd.f32 %v904, %v3190
  %v3192 = vpop.f32.mrf.mxu0
  %v3193 = vadd.f32 %v904, %v3192
  %3194 = vmatmul.bf16.gmra.mxu0 %v502
  %v3195 = vpop.f32.mrf.mxu0
  %v3196 = vadd.f32 %v904, %v3195
  %v3197 = vpop.f32.mrf.mxu0
  %v3198 = vadd.f32 %v904, %v3197
  %3199 = vmatmul.bf16.gmra.mxu0 %v509
  %v3200 = vpop.f32.mrf.mxu0
  %v3201 = vadd.f32 %v904, %v3200
  %v3202 = vpop.f32.mrf.mxu0
  %v3203 = vadd.f32 %v904, %v3202
  %3204 = vmatmul.bf16.gmra.mxu0 %v516
  %v3205 = vpop.f32.mrf.mxu0
  %v3206 = vadd.f32 %v904, %v3205
  %v3207 = vpop.f32.mrf.mxu0
  %v3208 = vadd.f32 %v904, %v3207
  %3209 = vmatmul.bf16.gmra.mxu0 %v523
  %v3210 = vpop.f32.mrf.mxu0
  %v3211 = vadd.f32 %v904, %v3210
  %v3212 = vpop.f32.mrf.mxu0
  %v3213 = vadd.f32 %v904, %v3212
  %3214 = vmatmul.bf16.gmra.mxu0 %v530
  %v3215 = vpop.f32.mrf.mxu0
  %v3216 = vadd.f32 %v904, %v3215
  %v3217 = vpop.f32.mrf.mxu0
  %v3218 = vadd.f32 %v904, %v3217
  %3219 = vmatmul.bf16.gmra.mxu0 %v537
  %v3220 = vpop.f32.mrf.mxu0
  %v3221 = vadd.f32 %v904, %v3220
  %v3222 = vpop.f32.mrf.mxu0
  %v3223 = vadd.f32 %v904, %v3222
  %3224 = vmatmul.bf16.gmra.mxu0 %v544
  %v3225 = vpop.f32.mrf.mxu0
  %v3226 = vadd.f32 %v904, %v3225
  %v3227 = vpop.f32.mrf.mxu0
  %v3228 = vadd.f32 %v904, %v3227
  %3229 = vmatmul.bf16.gmra.mxu0 %v551
  %v3230 = vpop.f32.mrf.mxu0
  %v3231 = vadd.f32 %v904, %v3230
  %v3232 = vpop.f32.mrf.mxu0
  %v3233 = vadd.f32 %v904, %v3232
  %3234 = vmatmul.bf16.gmra.mxu0 %v558
  %v3235 = vpop.f32.mrf.mxu0
  %v3236 = vadd.f32 %v904, %v3235
  %v3237 = vpop.f32.mrf.mxu0
  %v3238 = vadd.f32 %v904, %v3237
  %3239 = vmatmul.bf16.gmra.mxu0 %v565
  %v3240 = vpop.f32.mrf.mxu0
  %v3241 = vadd.f32 %v904, %v3240
  %v3242 = vpop.f32.mrf.mxu0
  %v3243 = vadd.f32 %v904, %v3242
  %3244 = vmatmul.bf16.gmra.mxu0 %v572
  %v3245 = vpop.f32.mrf.mxu0
  %v3246 = vadd.f32 %v904, %v3245
  %v3247 = vpop.f32.mrf.mxu0
  %v3248 = vadd.f32 %v904, %v3247
  %3249 = vmatmul.bf16.gmra.mxu0 %v579
  %v3250 = vpop.f32.mrf.mxu0
  %v3251 = vadd.f32 %v904, %v3250
  %v3252 = vpop.f32.mrf.mxu0
  %v3253 = vadd.f32 %v904, %v3252
  %3254 = vmatmul.bf16.gmra.mxu0 %v586
  %v3255 = vpop.f32.mrf.mxu0
  %v3256 = vadd.f32 %v904, %v3255
  %v3257 = vpop.f32.mrf.mxu0
  %v3258 = vadd.f32 %v904, %v3257
  %3259 = vmatmul.bf16.gmra.mxu0 %v593
  %v3260 = vpop.f32.mrf.mxu0
  %v3261 = vadd.f32 %v904, %v3260
  %v3262 = vpop.f32.mrf.mxu0
  %v3263 = vadd.f32 %v904, %v3262
  %3264 = vmatmul.bf16.gmra.mxu0 %v600
  %v3265 = vpop.f32.mrf.mxu0
  %v3266 = vadd.f32 %v904, %v3265
  %v3267 = vpop.f32.mrf.mxu0
  %v3268 = vadd.f32 %v904, %v3267
  %3269 = vmatmul.bf16.gmra.mxu0 %v607
  %v3270 = vpop.f32.mrf.mxu0
  %v3271 = vadd.f32 %v904, %v3270
  %v3272 = vpop.f32.mrf.mxu0
  %v3273 = vadd.f32 %v904, %v3272
  %3274 = vmatmul.bf16.gmra.mxu0 %v614
  %v3275 = vpop.f32.mrf.mxu0
  %v3276 = vadd.f32 %v904, %v3275
  %v3277 = vpop.f32.mrf.mxu0
  %v3278 = vadd.f32 %v904, %v3277
  %3279 = vmatmul.bf16.gmra.mxu0 %v621
  %v3280 = vpop.f32.mrf.mxu0
  %v3281 = vadd.f32 %v904, %v3280
  %v3282 = vpop.f32.mrf.mxu0
  %v3283 = vadd.f32 %v904, %v3282
  %3284 = vmatmul.bf16.gmra.mxu0 %v628
  %v3285 = vpop.f32.mrf.mxu0
  %v3286 = vadd.f32 %v904, %v3285
  %v3287 = vpop.f32.mrf.mxu0
  %v3288 = vadd.f32 %v904, %v3287
  %3289 = vmatmul.bf16.gmra.mxu0 %v635
  %v3290 = vpop.f32.mrf.mxu0
  %v3291 = vadd.f32 %v904, %v3290
  %v3292 = vpop.f32.mrf.mxu0
  %v3293 = vadd.f32 %v904, %v3292
  %3294 = vmatmul.bf16.gmra.mxu0 %v642
  %v3295 = vpop.f32.mrf.mxu0
  %v3296 = vadd.f32 %v904, %v3295
  %v3297 = vpop.f32.mrf.mxu0
  %v3298 = vadd.f32 %v904, %v3297
  %3299 = vmatmul.bf16.gmra.mxu0 %v649
  %v3300 = vpop.f32.mrf.mxu0
  %v3301 = vadd.f32 %v904, %v3300
  %v3302 = vpop.f32.mrf.mxu0
  %v3303 = vadd.f32 %v904, %v3302
  %3304 = vmatmul.bf16.gmra.mxu0 %v656
  %v3305 = vpop.f32.mrf.mxu0
  %v3306 = vadd.f32 %v904, %v3305
  %v3307 = vpop.f32.mrf.mxu0
  %v3308 = vadd.f32 %v904, %v3307
  %3309 = vmatmul.bf16.gmra.mxu0 %v663
  %v3310 = vpop.f32.mrf.mxu0
  %v3311 = vadd.f32 %v904, %v3310
  %v3312 = vpop.f32.mrf.mxu0
  %v3313 = vadd.f32 %v904, %v3312
  %3314 = vmatmul.bf16.gmra.mxu0 %v670
  %v3315 = vpop.f32.mrf.mxu0
  %v3316 = vadd.f32 %v904, %v3315
  %v3317 = vpop.f32.mrf.mxu0
  %v3318 = vadd.f32 %v904, %v3317
  %3319 = vmatmul.bf16.gmra.mxu0 %v677
  %v3320 = vpop.f32.mrf.mxu0
  %v3321 = vadd.f32 %v904, %v3320
  %v3322 = vpop.f32.mrf.mxu0
  %v3323 = vadd.f32 %v904, %v3322
  %3324 = vmatmul.bf16.gmra.mxu0 %v684
  %v3325 = vpop.f32.mrf.mxu0
  %v3326 = vadd.f32 %v904, %v3325
  %v3327 = vpop.f32.mrf.mxu0
  %v3328 = vadd.f32 %v904, %v3327
  %3329 = vmatmul.bf16.gmra.mxu0 %v691
  %v3330 = vpop.f32.mrf.mxu0
  %v3331 = vadd.f32 %v904, %v3330
  %v3332 = vpop.f32.mrf.mxu0
  %v3333 = vadd.f32 %v904, %v3332
  %3334 = vmatmul.bf16.gmra.mxu0 %v698
  %v3335 = vpop.f32.mrf.mxu0
  %v3336 = vadd.f32 %v904, %v3335
  %v3337 = vpop.f32.mrf.mxu0
  %v3338 = vadd.f32 %v904, %v3337
  %3339 = vdwg.mxu0
  %3340 = vmatpush.bf16.msra.mxu0 %v1560
  %3341 = vmatpush.bf16.msra.mxu0 %v1556
  %3342 = vmatpush.bf16.msra.mxu0 %v1552
  %3343 = vmatpush.bf16.msra.mxu0 %v1548
  %3344 = vmatpush.bf16.msra.mxu0 %v1544
  %3345 = vmatpush.bf16.msra.mxu0 %v1540
  %3346 = vmatpush.bf16.msra.mxu0 %v1536
  %3347 = vmatpush.bf16.msra.mxu0 %v1532
  %3348 = vmatmul.bf16.gmra.mxu0 %v482
  %v3349 = vpop.f32.mrf.mxu0
  %v3350 = vadd.f32 %v3181, %v3349
  %v3351 = vpop.f32.mrf.mxu0
  %v3352 = vadd.f32 %v3183, %v3351
  %3353 = vmatmul.bf16.gmra.mxu0 %v489
  %v3354 = vpop.f32.mrf.mxu0
  %v3355 = vadd.f32 %v3186, %v3354
  %v3356 = vpop.f32.mrf.mxu0
  %v3357 = vadd.f32 %v3188, %v3356
  %3358 = vmatmul.bf16.gmra.mxu0 %v496
  %v3359 = vpop.f32.mrf.mxu0
  %v3360 = vadd.f32 %v3191, %v3359
  %v3361 = vpop.f32.mrf.mxu0
  %v3362 = vadd.f32 %v3193, %v3361
  %3363 = vmatmul.bf16.gmra.mxu0 %v503
  %v3364 = vpop.f32.mrf.mxu0
  %v3365 = vadd.f32 %v3196, %v3364
  %v3366 = vpop.f32.mrf.mxu0
  %v3367 = vadd.f32 %v3198, %v3366
  %3368 = vmatmul.bf16.gmra.mxu0 %v510
  %v3369 = vpop.f32.mrf.mxu0
  %v3370 = vadd.f32 %v3201, %v3369
  %v3371 = vpop.f32.mrf.mxu0
  %v3372 = vadd.f32 %v3203, %v3371
  %3373 = vmatmul.bf16.gmra.mxu0 %v517
  %v3374 = vpop.f32.mrf.mxu0
  %v3375 = vadd.f32 %v3206, %v3374
  %v3376 = vpop.f32.mrf.mxu0
  %v3377 = vadd.f32 %v3208, %v3376
  %3378 = vmatmul.bf16.gmra.mxu0 %v524
  %v3379 = vpop.f32.mrf.mxu0
  %v3380 = vadd.f32 %v3211, %v3379
  %v3381 = vpop.f32.mrf.mxu0
  %v3382 = vadd.f32 %v3213, %v3381
  %3383 = vmatmul.bf16.gmra.mxu0 %v531
  %v3384 = vpop.f32.mrf.mxu0
  %v3385 = vadd.f32 %v3216, %v3384
  %v3386 = vpop.f32.mrf.mxu0
  %v3387 = vadd.f32 %v3218, %v3386
  %3388 = vmatmul.bf16.gmra.mxu0 %v538
  %v3389 = vpop.f32.mrf.mxu0
  %v3390 = vadd.f32 %v3221, %v3389
  %v3391 = vpop.f32.mrf.mxu0
  %v3392 = vadd.f32 %v3223, %v3391
  %3393 = vmatmul.bf16.gmra.mxu0 %v545
  %v3394 = vpop.f32.mrf.mxu0
  %v3395 = vadd.f32 %v3226, %v3394
  %v3396 = vpop.f32.mrf.mxu0
  %v3397 = vadd.f32 %v3228, %v3396
  %3398 = vmatmul.bf16.gmra.mxu0 %v552
  %v3399 = vpop.f32.mrf.mxu0
  %v3400 = vadd.f32 %v3231, %v3399
  %v3401 = vpop.f32.mrf.mxu0
  %v3402 = vadd.f32 %v3233, %v3401
  %3403 = vmatmul.bf16.gmra.mxu0 %v559
  %v3404 = vpop.f32.mrf.mxu0
  %v3405 = vadd.f32 %v3236, %v3404
  %v3406 = vpop.f32.mrf.mxu0
  %v3407 = vadd.f32 %v3238, %v3406
  %3408 = vmatmul.bf16.gmra.mxu0 %v566
  %v3409 = vpop.f32.mrf.mxu0
  %v3410 = vadd.f32 %v3241, %v3409
  %v3411 = vpop.f32.mrf.mxu0
  %v3412 = vadd.f32 %v3243, %v3411
  %3413 = vmatmul.bf16.gmra.mxu0 %v573
  %v3414 = vpop.f32.mrf.mxu0
  %v3415 = vadd.f32 %v3246, %v3414
  %v3416 = vpop.f32.mrf.mxu0
  %v3417 = vadd.f32 %v3248, %v3416
  %3418 = vmatmul.bf16.gmra.mxu0 %v580
  %v3419 = vpop.f32.mrf.mxu0
  %v3420 = vadd.f32 %v3251, %v3419
  %v3421 = vpop.f32.mrf.mxu0
  %v3422 = vadd.f32 %v3253, %v3421
  %3423 = vmatmul.bf16.gmra.mxu0 %v587
  %v3424 = vpop.f32.mrf.mxu0
  %v3425 = vadd.f32 %v3256, %v3424
  %v3426 = vpop.f32.mrf.mxu0
  %v3427 = vadd.f32 %v3258, %v3426
  %3428 = vmatmul.bf16.gmra.mxu0 %v594
  %v3429 = vpop.f32.mrf.mxu0
  %v3430 = vadd.f32 %v3261, %v3429
  %v3431 = vpop.f32.mrf.mxu0
  %v3432 = vadd.f32 %v3263, %v3431
  %3433 = vmatmul.bf16.gmra.mxu0 %v601
  %v3434 = vpop.f32.mrf.mxu0
  %v3435 = vadd.f32 %v3266, %v3434
  %v3436 = vpop.f32.mrf.mxu0
  %v3437 = vadd.f32 %v3268, %v3436
  %3438 = vmatmul.bf16.gmra.mxu0 %v608
  %v3439 = vpop.f32.mrf.mxu0
  %v3440 = vadd.f32 %v3271, %v3439
  %v3441 = vpop.f32.mrf.mxu0
  %v3442 = vadd.f32 %v3273, %v3441
  %3443 = vmatmul.bf16.gmra.mxu0 %v615
  %v3444 = vpop.f32.mrf.mxu0
  %v3445 = vadd.f32 %v3276, %v3444
  %v3446 = vpop.f32.mrf.mxu0
  %v3447 = vadd.f32 %v3278, %v3446
  %3448 = vmatmul.bf16.gmra.mxu0 %v622
  %v3449 = vpop.f32.mrf.mxu0
  %v3450 = vadd.f32 %v3281, %v3449
  %v3451 = vpop.f32.mrf.mxu0
  %v3452 = vadd.f32 %v3283, %v3451
  %3453 = vmatmul.bf16.gmra.mxu0 %v629
  %v3454 = vpop.f32.mrf.mxu0
  %v3455 = vadd.f32 %v3286, %v3454
  %v3456 = vpop.f32.mrf.mxu0
  %v3457 = vadd.f32 %v3288, %v3456
  %3458 = vmatmul.bf16.gmra.mxu0 %v636
  %v3459 = vpop.f32.mrf.mxu0
  %v3460 = vadd.f32 %v3291, %v3459
  %v3461 = vpop.f32.mrf.mxu0
  %v3462 = vadd.f32 %v3293, %v3461
  %3463 = vmatmul.bf16.gmra.mxu0 %v643
  %v3464 = vpop.f32.mrf.mxu0
  %v3465 = vadd.f32 %v3296, %v3464
  %v3466 = vpop.f32.mrf.mxu0
  %v3467 = vadd.f32 %v3298, %v3466
  %3468 = vmatmul.bf16.gmra.mxu0 %v650
  %v3469 = vpop.f32.mrf.mxu0
  %v3470 = vadd.f32 %v3301, %v3469
  %v3471 = vpop.f32.mrf.mxu0
  %v3472 = vadd.f32 %v3303, %v3471
  %3473 = vmatmul.bf16.gmra.mxu0 %v657
  %v3474 = vpop.f32.mrf.mxu0
  %v3475 = vadd.f32 %v3306, %v3474
  %v3476 = vpop.f32.mrf.mxu0
  %v3477 = vadd.f32 %v3308, %v3476
  %3478 = vmatmul.bf16.gmra.mxu0 %v664
  %v3479 = vpop.f32.mrf.mxu0
  %v3480 = vadd.f32 %v3311, %v3479
  %v3481 = vpop.f32.mrf.mxu0
  %v3482 = vadd.f32 %v3313, %v3481
  %3483 = vmatmul.bf16.gmra.mxu0 %v671
  %v3484 = vpop.f32.mrf.mxu0
  %v3485 = vadd.f32 %v3316, %v3484
  %v3486 = vpop.f32.mrf.mxu0
  %v3487 = vadd.f32 %v3318, %v3486
  %3488 = vmatmul.bf16.gmra.mxu0 %v678
  %v3489 = vpop.f32.mrf.mxu0
  %v3490 = vadd.f32 %v3321, %v3489
  %v3491 = vpop.f32.mrf.mxu0
  %v3492 = vadd.f32 %v3323, %v3491
  %3493 = vmatmul.bf16.gmra.mxu0 %v685
  %v3494 = vpop.f32.mrf.mxu0
  %v3495 = vadd.f32 %v3326, %v3494
  %v3496 = vpop.f32.mrf.mxu0
  %v3497 = vadd.f32 %v3328, %v3496
  %3498 = vmatmul.bf16.gmra.mxu0 %v692
  %v3499 = vpop.f32.mrf.mxu0
  %v3500 = vadd.f32 %v3331, %v3499
  %v3501 = vpop.f32.mrf.mxu0
  %v3502 = vadd.f32 %v3333, %v3501
  %3503 = vmatmul.bf16.gmra.mxu0 %v699
  %v3504 = vpop.f32.mrf.mxu0
  %v3505 = vadd.f32 %v3336, %v3504
  %v3506 = vpop.f32.mrf.mxu0
  %v3507 = vadd.f32 %v3338, %v3506
  %3508 = vdwg.mxu0
  %3509 = vmatpush.bf16.msra.mxu0 %v1592
  %3510 = vmatpush.bf16.msra.mxu0 %v1588
  %3511 = vmatpush.bf16.msra.mxu0 %v1584
  %3512 = vmatpush.bf16.msra.mxu0 %v1580
  %3513 = vmatpush.bf16.msra.mxu0 %v1576
  %3514 = vmatpush.bf16.msra.mxu0 %v1572
  %3515 = vmatpush.bf16.msra.mxu0 %v1568
  %3516 = vmatpush.bf16.msra.mxu0 %v1564
  %3517 = vmatmul.bf16.gmra.mxu0 %v483
  %v3518 = vpop.f32.mrf.mxu0
  %v3519 = vadd.f32 %v3350, %v3518
  %v3520 = vpop.f32.mrf.mxu0
  %v3521 = vadd.f32 %v3352, %v3520
  %3522 = vmatmul.bf16.gmra.mxu0 %v490
  %v3523 = vpop.f32.mrf.mxu0
  %v3524 = vadd.f32 %v3355, %v3523
  %v3525 = vpop.f32.mrf.mxu0
  %v3526 = vadd.f32 %v3357, %v3525
  %3527 = vmatmul.bf16.gmra.mxu0 %v497
  %v3528 = vpop.f32.mrf.mxu0
  %v3529 = vadd.f32 %v3360, %v3528
  %v3530 = vpop.f32.mrf.mxu0
  %v3531 = vadd.f32 %v3362, %v3530
  %3532 = vmatmul.bf16.gmra.mxu0 %v504
  %v3533 = vpop.f32.mrf.mxu0
  %v3534 = vadd.f32 %v3365, %v3533
  %v3535 = vpop.f32.mrf.mxu0
  %v3536 = vadd.f32 %v3367, %v3535
  %3537 = vmatmul.bf16.gmra.mxu0 %v511
  %v3538 = vpop.f32.mrf.mxu0
  %v3539 = vadd.f32 %v3370, %v3538
  %v3540 = vpop.f32.mrf.mxu0
  %v3541 = vadd.f32 %v3372, %v3540
  %3542 = vmatmul.bf16.gmra.mxu0 %v518
  %v3543 = vpop.f32.mrf.mxu0
  %v3544 = vadd.f32 %v3375, %v3543
  %v3545 = vpop.f32.mrf.mxu0
  %v3546 = vadd.f32 %v3377, %v3545
  %3547 = vmatmul.bf16.gmra.mxu0 %v525
  %v3548 = vpop.f32.mrf.mxu0
  %v3549 = vadd.f32 %v3380, %v3548
  %v3550 = vpop.f32.mrf.mxu0
  %v3551 = vadd.f32 %v3382, %v3550
  %3552 = vmatmul.bf16.gmra.mxu0 %v532
  %v3553 = vpop.f32.mrf.mxu0
  %v3554 = vadd.f32 %v3385, %v3553
  %v3555 = vpop.f32.mrf.mxu0
  %v3556 = vadd.f32 %v3387, %v3555
  %3557 = vmatmul.bf16.gmra.mxu0 %v539
  %v3558 = vpop.f32.mrf.mxu0
  %v3559 = vadd.f32 %v3390, %v3558
  %v3560 = vpop.f32.mrf.mxu0
  %v3561 = vadd.f32 %v3392, %v3560
  %3562 = vmatmul.bf16.gmra.mxu0 %v546
  %v3563 = vpop.f32.mrf.mxu0
  %v3564 = vadd.f32 %v3395, %v3563
  %v3565 = vpop.f32.mrf.mxu0
  %v3566 = vadd.f32 %v3397, %v3565
  %3567 = vmatmul.bf16.gmra.mxu0 %v553
  %v3568 = vpop.f32.mrf.mxu0
  %v3569 = vadd.f32 %v3400, %v3568
  %v3570 = vpop.f32.mrf.mxu0
  %v3571 = vadd.f32 %v3402, %v3570
  %3572 = vmatmul.bf16.gmra.mxu0 %v560
  %v3573 = vpop.f32.mrf.mxu0
  %v3574 = vadd.f32 %v3405, %v3573
  %v3575 = vpop.f32.mrf.mxu0
  %v3576 = vadd.f32 %v3407, %v3575
  %3577 = vmatmul.bf16.gmra.mxu0 %v567
  %v3578 = vpop.f32.mrf.mxu0
  %v3579 = vadd.f32 %v3410, %v3578
  %v3580 = vpop.f32.mrf.mxu0
  %v3581 = vadd.f32 %v3412, %v3580
  %3582 = vmatmul.bf16.gmra.mxu0 %v574
  %v3583 = vpop.f32.mrf.mxu0
  %v3584 = vadd.f32 %v3415, %v3583
  %v3585 = vpop.f32.mrf.mxu0
  %v3586 = vadd.f32 %v3417, %v3585
  %3587 = vmatmul.bf16.gmra.mxu0 %v581
  %v3588 = vpop.f32.mrf.mxu0
  %v3589 = vadd.f32 %v3420, %v3588
  %v3590 = vpop.f32.mrf.mxu0
  %v3591 = vadd.f32 %v3422, %v3590
  %3592 = vmatmul.bf16.gmra.mxu0 %v588
  %v3593 = vpop.f32.mrf.mxu0
  %v3594 = vadd.f32 %v3425, %v3593
  %v3595 = vpop.f32.mrf.mxu0
  %v3596 = vadd.f32 %v3427, %v3595
  %3597 = vmatmul.bf16.gmra.mxu0 %v595
  %v3598 = vpop.f32.mrf.mxu0
  %v3599 = vadd.f32 %v3430, %v3598
  %v3600 = vpop.f32.mrf.mxu0
  %v3601 = vadd.f32 %v3432, %v3600
  %3602 = vmatmul.bf16.gmra.mxu0 %v602
  %v3603 = vpop.f32.mrf.mxu0
  %v3604 = vadd.f32 %v3435, %v3603
  %v3605 = vpop.f32.mrf.mxu0
  %v3606 = vadd.f32 %v3437, %v3605
  %3607 = vmatmul.bf16.gmra.mxu0 %v609
  %v3608 = vpop.f32.mrf.mxu0
  %v3609 = vadd.f32 %v3440, %v3608
  %v3610 = vpop.f32.mrf.mxu0
  %v3611 = vadd.f32 %v3442, %v3610
  %3612 = vmatmul.bf16.gmra.mxu0 %v616
  %v3613 = vpop.f32.mrf.mxu0
  %v3614 = vadd.f32 %v3445, %v3613
  %v3615 = vpop.f32.mrf.mxu0
  %v3616 = vadd.f32 %v3447, %v3615
  %3617 = vmatmul.bf16.gmra.mxu0 %v623
  %v3618 = vpop.f32.mrf.mxu0
  %v3619 = vadd.f32 %v3450, %v3618
  %v3620 = vpop.f32.mrf.mxu0
  %v3621 = vadd.f32 %v3452, %v3620
  %3622 = vmatmul.bf16.gmra.mxu0 %v630
  %v3623 = vpop.f32.mrf.mxu0
  %v3624 = vadd.f32 %v3455, %v3623
  %v3625 = vpop.f32.mrf.mxu0
  %v3626 = vadd.f32 %v3457, %v3625
  %3627 = vmatmul.bf16.gmra.mxu0 %v637
  %v3628 = vpop.f32.mrf.mxu0
  %v3629 = vadd.f32 %v3460, %v3628
  %v3630 = vpop.f32.mrf.mxu0
  %v3631 = vadd.f32 %v3462, %v3630
  %3632 = vmatmul.bf16.gmra.mxu0 %v644
  %v3633 = vpop.f32.mrf.mxu0
  %v3634 = vadd.f32 %v3465, %v3633
  %v3635 = vpop.f32.mrf.mxu0
  %v3636 = vadd.f32 %v3467, %v3635
  %3637 = vmatmul.bf16.gmra.mxu0 %v651
  %v3638 = vpop.f32.mrf.mxu0
  %v3639 = vadd.f32 %v3470, %v3638
  %v3640 = vpop.f32.mrf.mxu0
  %v3641 = vadd.f32 %v3472, %v3640
  %3642 = vmatmul.bf16.gmra.mxu0 %v658
  %v3643 = vpop.f32.mrf.mxu0
  %v3644 = vadd.f32 %v3475, %v3643
  %v3645 = vpop.f32.mrf.mxu0
  %v3646 = vadd.f32 %v3477, %v3645
  %3647 = vmatmul.bf16.gmra.mxu0 %v665
  %v3648 = vpop.f32.mrf.mxu0
  %v3649 = vadd.f32 %v3480, %v3648
  %v3650 = vpop.f32.mrf.mxu0
  %v3651 = vadd.f32 %v3482, %v3650
  %3652 = vmatmul.bf16.gmra.mxu0 %v672
  %v3653 = vpop.f32.mrf.mxu0
  %v3654 = vadd.f32 %v3485, %v3653
  %v3655 = vpop.f32.mrf.mxu0
  %v3656 = vadd.f32 %v3487, %v3655
  %3657 = vmatmul.bf16.gmra.mxu0 %v679
  %v3658 = vpop.f32.mrf.mxu0
  %v3659 = vadd.f32 %v3490, %v3658
  %v3660 = vpop.f32.mrf.mxu0
  %v3661 = vadd.f32 %v3492, %v3660
  %3662 = vmatmul.bf16.gmra.mxu0 %v686
  %v3663 = vpop.f32.mrf.mxu0
  %v3664 = vadd.f32 %v3495, %v3663
  %v3665 = vpop.f32.mrf.mxu0
  %v3666 = vadd.f32 %v3497, %v3665
  %3667 = vmatmul.bf16.gmra.mxu0 %v693
  %v3668 = vpop.f32.mrf.mxu0
  %v3669 = vadd.f32 %v3500, %v3668
  %v3670 = vpop.f32.mrf.mxu0
  %v3671 = vadd.f32 %v3502, %v3670
  %3672 = vmatmul.bf16.gmra.mxu0 %v700
  %v3673 = vpop.f32.mrf.mxu0
  %v3674 = vadd.f32 %v3505, %v3673
  %v3675 = vpop.f32.mrf.mxu0
  %v3676 = vadd.f32 %v3507, %v3675
  %3677 = vdwg.mxu0
  %3678 = vmatpush.bf16.msra.mxu0 %v1624
  %3679 = vmatpush.bf16.msra.mxu0 %v1620
  %3680 = vmatpush.bf16.msra.mxu0 %v1616
  %3681 = vmatpush.bf16.msra.mxu0 %v1612
  %3682 = vmatpush.bf16.msra.mxu0 %v1608
  %3683 = vmatpush.bf16.msra.mxu0 %v1604
  %3684 = vmatpush.bf16.msra.mxu0 %v1600
  %3685 = vmatpush.bf16.msra.mxu0 %v1596
  %3686 = vmatmul.bf16.gmra.mxu0 %v484
  %v3687 = vpop.f32.mrf.mxu0
  %v3688 = vadd.f32 %v3519, %v3687
  %v3689 = vpop.f32.mrf.mxu0
  %v3690 = vadd.f32 %v3521, %v3689
  %3691 = vmatmul.bf16.gmra.mxu0 %v491
  %v3692 = vpop.f32.mrf.mxu0
  %v3693 = vadd.f32 %v3524, %v3692
  %v3694 = vpop.f32.mrf.mxu0
  %v3695 = vadd.f32 %v3526, %v3694
  %3696 = vmatmul.bf16.gmra.mxu0 %v498
  %v3697 = vpop.f32.mrf.mxu0
  %v3698 = vadd.f32 %v3529, %v3697
  %v3699 = vpop.f32.mrf.mxu0
  %v3700 = vadd.f32 %v3531, %v3699
  %3701 = vmatmul.bf16.gmra.mxu0 %v505
  %v3702 = vpop.f32.mrf.mxu0
  %v3703 = vadd.f32 %v3534, %v3702
  %v3704 = vpop.f32.mrf.mxu0
  %v3705 = vadd.f32 %v3536, %v3704
  %3706 = vmatmul.bf16.gmra.mxu0 %v512
  %v3707 = vpop.f32.mrf.mxu0
  %v3708 = vadd.f32 %v3539, %v3707
  %v3709 = vpop.f32.mrf.mxu0
  %v3710 = vadd.f32 %v3541, %v3709
  %3711 = vmatmul.bf16.gmra.mxu0 %v519
  %v3712 = vpop.f32.mrf.mxu0
  %v3713 = vadd.f32 %v3544, %v3712
  %v3714 = vpop.f32.mrf.mxu0
  %v3715 = vadd.f32 %v3546, %v3714
  %3716 = vmatmul.bf16.gmra.mxu0 %v526
  %v3717 = vpop.f32.mrf.mxu0
  %v3718 = vadd.f32 %v3549, %v3717
  %v3719 = vpop.f32.mrf.mxu0
  %v3720 = vadd.f32 %v3551, %v3719
  %3721 = vmatmul.bf16.gmra.mxu0 %v533
  %v3722 = vpop.f32.mrf.mxu0
  %v3723 = vadd.f32 %v3554, %v3722
  %v3724 = vpop.f32.mrf.mxu0
  %v3725 = vadd.f32 %v3556, %v3724
  %3726 = vmatmul.bf16.gmra.mxu0 %v540
  %v3727 = vpop.f32.mrf.mxu0
  %v3728 = vadd.f32 %v3559, %v3727
  %v3729 = vpop.f32.mrf.mxu0
  %v3730 = vadd.f32 %v3561, %v3729
  %3731 = vmatmul.bf16.gmra.mxu0 %v547
  %v3732 = vpop.f32.mrf.mxu0
  %v3733 = vadd.f32 %v3564, %v3732
  %v3734 = vpop.f32.mrf.mxu0
  %v3735 = vadd.f32 %v3566, %v3734
  %3736 = vmatmul.bf16.gmra.mxu0 %v554
  %v3737 = vpop.f32.mrf.mxu0
  %v3738 = vadd.f32 %v3569, %v3737
  %v3739 = vpop.f32.mrf.mxu0
  %v3740 = vadd.f32 %v3571, %v3739
  %3741 = vmatmul.bf16.gmra.mxu0 %v561
  %v3742 = vpop.f32.mrf.mxu0
  %v3743 = vadd.f32 %v3574, %v3742
  %v3744 = vpop.f32.mrf.mxu0
  %v3745 = vadd.f32 %v3576, %v3744
  %3746 = vmatmul.bf16.gmra.mxu0 %v568
  %v3747 = vpop.f32.mrf.mxu0
  %v3748 = vadd.f32 %v3579, %v3747
  %v3749 = vpop.f32.mrf.mxu0
  %v3750 = vadd.f32 %v3581, %v3749
  %3751 = vmatmul.bf16.gmra.mxu0 %v575
  %v3752 = vpop.f32.mrf.mxu0
  %v3753 = vadd.f32 %v3584, %v3752
  %v3754 = vpop.f32.mrf.mxu0
  %v3755 = vadd.f32 %v3586, %v3754
  %3756 = vmatmul.bf16.gmra.mxu0 %v582
  %v3757 = vpop.f32.mrf.mxu0
  %v3758 = vadd.f32 %v3589, %v3757
  %v3759 = vpop.f32.mrf.mxu0
  %v3760 = vadd.f32 %v3591, %v3759
  %3761 = vmatmul.bf16.gmra.mxu0 %v589
  %v3762 = vpop.f32.mrf.mxu0
  %v3763 = vadd.f32 %v3594, %v3762
  %v3764 = vpop.f32.mrf.mxu0
  %v3765 = vadd.f32 %v3596, %v3764
  %3766 = vmatmul.bf16.gmra.mxu0 %v596
  %v3767 = vpop.f32.mrf.mxu0
  %v3768 = vadd.f32 %v3599, %v3767
  %v3769 = vpop.f32.mrf.mxu0
  %v3770 = vadd.f32 %v3601, %v3769
  %3771 = vmatmul.bf16.gmra.mxu0 %v603
  %v3772 = vpop.f32.mrf.mxu0
  %v3773 = vadd.f32 %v3604, %v3772
  %v3774 = vpop.f32.mrf.mxu0
  %v3775 = vadd.f32 %v3606, %v3774
  %3776 = vmatmul.bf16.gmra.mxu0 %v610
  %v3777 = vpop.f32.mrf.mxu0
  %v3778 = vadd.f32 %v3609, %v3777
  %v3779 = vpop.f32.mrf.mxu0
  %v3780 = vadd.f32 %v3611, %v3779
  %3781 = vmatmul.bf16.gmra.mxu0 %v617
  %v3782 = vpop.f32.mrf.mxu0
  %v3783 = vadd.f32 %v3614, %v3782
  %v3784 = vpop.f32.mrf.mxu0
  %v3785 = vadd.f32 %v3616, %v3784
  %3786 = vmatmul.bf16.gmra.mxu0 %v624
  %v3787 = vpop.f32.mrf.mxu0
  %v3788 = vadd.f32 %v3619, %v3787
  %v3789 = vpop.f32.mrf.mxu0
  %v3790 = vadd.f32 %v3621, %v3789
  %3791 = vmatmul.bf16.gmra.mxu0 %v631
  %v3792 = vpop.f32.mrf.mxu0
  %v3793 = vadd.f32 %v3624, %v3792
  %v3794 = vpop.f32.mrf.mxu0
  %v3795 = vadd.f32 %v3626, %v3794
  %3796 = vmatmul.bf16.gmra.mxu0 %v638
  %v3797 = vpop.f32.mrf.mxu0
  %v3798 = vadd.f32 %v3629, %v3797
  %v3799 = vpop.f32.mrf.mxu0
  %v3800 = vadd.f32 %v3631, %v3799
  %3801 = vmatmul.bf16.gmra.mxu0 %v645
  %v3802 = vpop.f32.mrf.mxu0
  %v3803 = vadd.f32 %v3634, %v3802
  %v3804 = vpop.f32.mrf.mxu0
  %v3805 = vadd.f32 %v3636, %v3804
  %3806 = vmatmul.bf16.gmra.mxu0 %v652
  %v3807 = vpop.f32.mrf.mxu0
  %v3808 = vadd.f32 %v3639, %v3807
  %v3809 = vpop.f32.mrf.mxu0
  %v3810 = vadd.f32 %v3641, %v3809
  %3811 = vmatmul.bf16.gmra.mxu0 %v659
  %v3812 = vpop.f32.mrf.mxu0
  %v3813 = vadd.f32 %v3644, %v3812
  %v3814 = vpop.f32.mrf.mxu0
  %v3815 = vadd.f32 %v3646, %v3814
  %3816 = vmatmul.bf16.gmra.mxu0 %v666
  %v3817 = vpop.f32.mrf.mxu0
  %v3818 = vadd.f32 %v3649, %v3817
  %v3819 = vpop.f32.mrf.mxu0
  %v3820 = vadd.f32 %v3651, %v3819
  %3821 = vmatmul.bf16.gmra.mxu0 %v673
  %v3822 = vpop.f32.mrf.mxu0
  %v3823 = vadd.f32 %v3654, %v3822
  %v3824 = vpop.f32.mrf.mxu0
  %v3825 = vadd.f32 %v3656, %v3824
  %3826 = vmatmul.bf16.gmra.mxu0 %v680
  %v3827 = vpop.f32.mrf.mxu0
  %v3828 = vadd.f32 %v3659, %v3827
  %v3829 = vpop.f32.mrf.mxu0
  %v3830 = vadd.f32 %v3661, %v3829
  %3831 = vmatmul.bf16.gmra.mxu0 %v687
  %v3832 = vpop.f32.mrf.mxu0
  %v3833 = vadd.f32 %v3664, %v3832
  %v3834 = vpop.f32.mrf.mxu0
  %v3835 = vadd.f32 %v3666, %v3834
  %3836 = vmatmul.bf16.gmra.mxu0 %v694
  %v3837 = vpop.f32.mrf.mxu0
  %v3838 = vadd.f32 %v3669, %v3837
  %v3839 = vpop.f32.mrf.mxu0
  %v3840 = vadd.f32 %v3671, %v3839
  %3841 = vmatmul.bf16.gmra.mxu0 %v701
  %v3842 = vpop.f32.mrf.mxu0
  %v3843 = vadd.f32 %v3674, %v3842
  %v3844 = vpop.f32.mrf.mxu0
  %v3845 = vadd.f32 %v3676, %v3844
  %3846 = vdwg.mxu0
  %3847 = vmatpush.bf16.msra.mxu0 %v1656
  %3848 = vmatpush.bf16.msra.mxu0 %v1652
  %3849 = vmatpush.bf16.msra.mxu0 %v1648
  %3850 = vmatpush.bf16.msra.mxu0 %v1644
  %3851 = vmatpush.bf16.msra.mxu0 %v1640
  %3852 = vmatpush.bf16.msra.mxu0 %v1636
  %3853 = vmatpush.bf16.msra.mxu0 %v1632
  %3854 = vmatpush.bf16.msra.mxu0 %v1628
  %3855 = vmatmul.bf16.gmra.mxu0 %v485
  %v3856 = vpop.f32.mrf.mxu0
  %v3857 = vadd.f32 %v3688, %v3856
  %v3858 = vpop.f32.mrf.mxu0
  %v3859 = vadd.f32 %v3690, %v3858
  %3860 = vmatmul.bf16.gmra.mxu0 %v492
  %v3861 = vpop.f32.mrf.mxu0
  %v3862 = vadd.f32 %v3693, %v3861
  %v3863 = vpop.f32.mrf.mxu0
  %v3864 = vadd.f32 %v3695, %v3863
  %3865 = vmatmul.bf16.gmra.mxu0 %v499
  %v3866 = vpop.f32.mrf.mxu0
  %v3867 = vadd.f32 %v3698, %v3866
  %v3868 = vpop.f32.mrf.mxu0
  %v3869 = vadd.f32 %v3700, %v3868
  %3870 = vmatmul.bf16.gmra.mxu0 %v506
  %v3871 = vpop.f32.mrf.mxu0
  %v3872 = vadd.f32 %v3703, %v3871
  %v3873 = vpop.f32.mrf.mxu0
  %v3874 = vadd.f32 %v3705, %v3873
  %3875 = vmatmul.bf16.gmra.mxu0 %v513
  %v3876 = vpop.f32.mrf.mxu0
  %v3877 = vadd.f32 %v3708, %v3876
  %v3878 = vpop.f32.mrf.mxu0
  %v3879 = vadd.f32 %v3710, %v3878
  %3880 = vmatmul.bf16.gmra.mxu0 %v520
  %v3881 = vpop.f32.mrf.mxu0
  %v3882 = vadd.f32 %v3713, %v3881
  %v3883 = vpop.f32.mrf.mxu0
  %v3884 = vadd.f32 %v3715, %v3883
  %3885 = vmatmul.bf16.gmra.mxu0 %v527
  %v3886 = vpop.f32.mrf.mxu0
  %v3887 = vadd.f32 %v3718, %v3886
  %v3888 = vpop.f32.mrf.mxu0
  %v3889 = vadd.f32 %v3720, %v3888
  %3890 = vmatmul.bf16.gmra.mxu0 %v534
  %v3891 = vpop.f32.mrf.mxu0
  %v3892 = vadd.f32 %v3723, %v3891
  %v3893 = vpop.f32.mrf.mxu0
  %v3894 = vadd.f32 %v3725, %v3893
  %3895 = vmatmul.bf16.gmra.mxu0 %v541
  %v3896 = vpop.f32.mrf.mxu0
  %v3897 = vadd.f32 %v3728, %v3896
  %v3898 = vpop.f32.mrf.mxu0
  %v3899 = vadd.f32 %v3730, %v3898
  %3900 = vmatmul.bf16.gmra.mxu0 %v548
  %v3901 = vpop.f32.mrf.mxu0
  %v3902 = vadd.f32 %v3733, %v3901
  %v3903 = vpop.f32.mrf.mxu0
  %v3904 = vadd.f32 %v3735, %v3903
  %3905 = vmatmul.bf16.gmra.mxu0 %v555
  %v3906 = vpop.f32.mrf.mxu0
  %v3907 = vadd.f32 %v3738, %v3906
  %v3908 = vpop.f32.mrf.mxu0
  %v3909 = vadd.f32 %v3740, %v3908
  %3910 = vmatmul.bf16.gmra.mxu0 %v562
  %v3911 = vpop.f32.mrf.mxu0
  %v3912 = vadd.f32 %v3743, %v3911
  %v3913 = vpop.f32.mrf.mxu0
  %v3914 = vadd.f32 %v3745, %v3913
  %3915 = vmatmul.bf16.gmra.mxu0 %v569
  %v3916 = vpop.f32.mrf.mxu0
  %v3917 = vadd.f32 %v3748, %v3916
  %v3918 = vpop.f32.mrf.mxu0
  %v3919 = vadd.f32 %v3750, %v3918
  %3920 = vmatmul.bf16.gmra.mxu0 %v576
  %v3921 = vpop.f32.mrf.mxu0
  %v3922 = vadd.f32 %v3753, %v3921
  %v3923 = vpop.f32.mrf.mxu0
  %v3924 = vadd.f32 %v3755, %v3923
  %3925 = vmatmul.bf16.gmra.mxu0 %v583
  %v3926 = vpop.f32.mrf.mxu0
  %v3927 = vadd.f32 %v3758, %v3926
  %v3928 = vpop.f32.mrf.mxu0
  %v3929 = vadd.f32 %v3760, %v3928
  %3930 = vmatmul.bf16.gmra.mxu0 %v590
  %v3931 = vpop.f32.mrf.mxu0
  %v3932 = vadd.f32 %v3763, %v3931
  %v3933 = vpop.f32.mrf.mxu0
  %v3934 = vadd.f32 %v3765, %v3933
  %3935 = vmatmul.bf16.gmra.mxu0 %v597
  %v3936 = vpop.f32.mrf.mxu0
  %v3937 = vadd.f32 %v3768, %v3936
  %v3938 = vpop.f32.mrf.mxu0
  %v3939 = vadd.f32 %v3770, %v3938
  %3940 = vmatmul.bf16.gmra.mxu0 %v604
  %v3941 = vpop.f32.mrf.mxu0
  %v3942 = vadd.f32 %v3773, %v3941
  %v3943 = vpop.f32.mrf.mxu0
  %v3944 = vadd.f32 %v3775, %v3943
  %3945 = vmatmul.bf16.gmra.mxu0 %v611
  %v3946 = vpop.f32.mrf.mxu0
  %v3947 = vadd.f32 %v3778, %v3946
  %v3948 = vpop.f32.mrf.mxu0
  %v3949 = vadd.f32 %v3780, %v3948
  %3950 = vmatmul.bf16.gmra.mxu0 %v618
  %v3951 = vpop.f32.mrf.mxu0
  %v3952 = vadd.f32 %v3783, %v3951
  %v3953 = vpop.f32.mrf.mxu0
  %v3954 = vadd.f32 %v3785, %v3953
  %3955 = vmatmul.bf16.gmra.mxu0 %v625
  %v3956 = vpop.f32.mrf.mxu0
  %v3957 = vadd.f32 %v3788, %v3956
  %v3958 = vpop.f32.mrf.mxu0
  %v3959 = vadd.f32 %v3790, %v3958
  %3960 = vmatmul.bf16.gmra.mxu0 %v632
  %v3961 = vpop.f32.mrf.mxu0
  %v3962 = vadd.f32 %v3793, %v3961
  %v3963 = vpop.f32.mrf.mxu0
  %v3964 = vadd.f32 %v3795, %v3963
  %3965 = vmatmul.bf16.gmra.mxu0 %v639
  %v3966 = vpop.f32.mrf.mxu0
  %v3967 = vadd.f32 %v3798, %v3966
  %v3968 = vpop.f32.mrf.mxu0
  %v3969 = vadd.f32 %v3800, %v3968
  %3970 = vmatmul.bf16.gmra.mxu0 %v646
  %v3971 = vpop.f32.mrf.mxu0
  %v3972 = vadd.f32 %v3803, %v3971
  %v3973 = vpop.f32.mrf.mxu0
  %v3974 = vadd.f32 %v3805, %v3973
  %3975 = vmatmul.bf16.gmra.mxu0 %v653
  %v3976 = vpop.f32.mrf.mxu0
  %v3977 = vadd.f32 %v3808, %v3976
  %v3978 = vpop.f32.mrf.mxu0
  %v3979 = vadd.f32 %v3810, %v3978
  %3980 = vmatmul.bf16.gmra.mxu0 %v660
  %v3981 = vpop.f32.mrf.mxu0
  %v3982 = vadd.f32 %v3813, %v3981
  %v3983 = vpop.f32.mrf.mxu0
  %v3984 = vadd.f32 %v3815, %v3983
  %3985 = vmatmul.bf16.gmra.mxu0 %v667
  %v3986 = vpop.f32.mrf.mxu0
  %v3987 = vadd.f32 %v3818, %v3986
  %v3988 = vpop.f32.mrf.mxu0
  %v3989 = vadd.f32 %v3820, %v3988
  %3990 = vmatmul.bf16.gmra.mxu0 %v674
  %v3991 = vpop.f32.mrf.mxu0
  %v3992 = vadd.f32 %v3823, %v3991
  %v3993 = vpop.f32.mrf.mxu0
  %v3994 = vadd.f32 %v3825, %v3993
  %3995 = vmatmul.bf16.gmra.mxu0 %v681
  %v3996 = vpop.f32.mrf.mxu0
  %v3997 = vadd.f32 %v3828, %v3996
  %v3998 = vpop.f32.mrf.mxu0
  %v3999 = vadd.f32 %v3830, %v3998
  %4000 = vmatmul.bf16.gmra.mxu0 %v688
  %v4001 = vpop.f32.mrf.mxu0
  %v4002 = vadd.f32 %v3833, %v4001
  %v4003 = vpop.f32.mrf.mxu0
  %v4004 = vadd.f32 %v3835, %v4003
  %4005 = vmatmul.bf16.gmra.mxu0 %v695
  %v4006 = vpop.f32.mrf.mxu0
  %v4007 = vadd.f32 %v3838, %v4006
  %v4008 = vpop.f32.mrf.mxu0
  %v4009 = vadd.f32 %v3840, %v4008
  %4010 = vmatmul.bf16.gmra.mxu0 %v702
  %v4011 = vpop.f32.mrf.mxu0
  %v4012 = vadd.f32 %v3843, %v4011
  %v4013 = vpop.f32.mrf.mxu0
  %v4014 = vadd.f32 %v3845, %v4013
  %4015 = vdwg.mxu0
  %4016 = vmatpush.bf16.msra.mxu0 %v1688
  %4017 = vmatpush.bf16.msra.mxu0 %v1684
  %4018 = vmatpush.bf16.msra.mxu0 %v1680
  %4019 = vmatpush.bf16.msra.mxu0 %v1676
  %4020 = vmatpush.bf16.msra.mxu0 %v1672
  %4021 = vmatpush.bf16.msra.mxu0 %v1668
  %4022 = vmatpush.bf16.msra.mxu0 %v1664
  %4023 = vmatpush.bf16.msra.mxu0 %v1660
  %4024 = vmatmul.bf16.gmra.mxu0 %v486
  %v4025 = vpop.f32.mrf.mxu0
  %v4026 = vadd.f32 %v3857, %v4025
  %v4027 = vpop.f32.mrf.mxu0
  %v4028 = vadd.f32 %v3859, %v4027
  %4029 = vmatmul.bf16.gmra.mxu0 %v493
  %v4030 = vpop.f32.mrf.mxu0
  %v4031 = vadd.f32 %v3862, %v4030
  %v4032 = vpop.f32.mrf.mxu0
  %v4033 = vadd.f32 %v3864, %v4032
  %4034 = vmatmul.bf16.gmra.mxu0 %v500
  %v4035 = vpop.f32.mrf.mxu0
  %v4036 = vadd.f32 %v3867, %v4035
  %v4037 = vpop.f32.mrf.mxu0
  %v4038 = vadd.f32 %v3869, %v4037
  %4039 = vmatmul.bf16.gmra.mxu0 %v507
  %v4040 = vpop.f32.mrf.mxu0
  %v4041 = vadd.f32 %v3872, %v4040
  %v4042 = vpop.f32.mrf.mxu0
  %v4043 = vadd.f32 %v3874, %v4042
  %4044 = vmatmul.bf16.gmra.mxu0 %v514
  %v4045 = vpop.f32.mrf.mxu0
  %v4046 = vadd.f32 %v3877, %v4045
  %v4047 = vpop.f32.mrf.mxu0
  %v4048 = vadd.f32 %v3879, %v4047
  %4049 = vmatmul.bf16.gmra.mxu0 %v521
  %v4050 = vpop.f32.mrf.mxu0
  %v4051 = vadd.f32 %v3882, %v4050
  %v4052 = vpop.f32.mrf.mxu0
  %v4053 = vadd.f32 %v3884, %v4052
  %4054 = vmatmul.bf16.gmra.mxu0 %v528
  %v4055 = vpop.f32.mrf.mxu0
  %v4056 = vadd.f32 %v3887, %v4055
  %v4057 = vpop.f32.mrf.mxu0
  %v4058 = vadd.f32 %v3889, %v4057
  %4059 = vmatmul.bf16.gmra.mxu0 %v535
  %v4060 = vpop.f32.mrf.mxu0
  %v4061 = vadd.f32 %v3892, %v4060
  %v4062 = vpop.f32.mrf.mxu0
  %v4063 = vadd.f32 %v3894, %v4062
  %4064 = vmatmul.bf16.gmra.mxu0 %v542
  %v4065 = vpop.f32.mrf.mxu0
  %v4066 = vadd.f32 %v3897, %v4065
  %v4067 = vpop.f32.mrf.mxu0
  %v4068 = vadd.f32 %v3899, %v4067
  %4069 = vmatmul.bf16.gmra.mxu0 %v549
  %v4070 = vpop.f32.mrf.mxu0
  %v4071 = vadd.f32 %v3902, %v4070
  %v4072 = vpop.f32.mrf.mxu0
  %v4073 = vadd.f32 %v3904, %v4072
  %4074 = vmatmul.bf16.gmra.mxu0 %v556
  %v4075 = vpop.f32.mrf.mxu0
  %v4076 = vadd.f32 %v3907, %v4075
  %v4077 = vpop.f32.mrf.mxu0
  %v4078 = vadd.f32 %v3909, %v4077
  %4079 = vmatmul.bf16.gmra.mxu0 %v563
  %v4080 = vpop.f32.mrf.mxu0
  %v4081 = vadd.f32 %v3912, %v4080
  %v4082 = vpop.f32.mrf.mxu0
  %v4083 = vadd.f32 %v3914, %v4082
  %4084 = vmatmul.bf16.gmra.mxu0 %v570
  %v4085 = vpop.f32.mrf.mxu0
  %v4086 = vadd.f32 %v3917, %v4085
  %v4087 = vpop.f32.mrf.mxu0
  %v4088 = vadd.f32 %v3919, %v4087
  %4089 = vmatmul.bf16.gmra.mxu0 %v577
  %v4090 = vpop.f32.mrf.mxu0
  %v4091 = vadd.f32 %v3922, %v4090
  %v4092 = vpop.f32.mrf.mxu0
  %v4093 = vadd.f32 %v3924, %v4092
  %4094 = vmatmul.bf16.gmra.mxu0 %v584
  %v4095 = vpop.f32.mrf.mxu0
  %v4096 = vadd.f32 %v3927, %v4095
  %v4097 = vpop.f32.mrf.mxu0
  %v4098 = vadd.f32 %v3929, %v4097
  %4099 = vmatmul.bf16.gmra.mxu0 %v591
  %v4100 = vpop.f32.mrf.mxu0
  %v4101 = vadd.f32 %v3932, %v4100
  %v4102 = vpop.f32.mrf.mxu0
  %v4103 = vadd.f32 %v3934, %v4102
  %4104 = vmatmul.bf16.gmra.mxu0 %v598
  %v4105 = vpop.f32.mrf.mxu0
  %v4106 = vadd.f32 %v3937, %v4105
  %v4107 = vpop.f32.mrf.mxu0
  %v4108 = vadd.f32 %v3939, %v4107
  %4109 = vmatmul.bf16.gmra.mxu0 %v605
  %v4110 = vpop.f32.mrf.mxu0
  %v4111 = vadd.f32 %v3942, %v4110
  %v4112 = vpop.f32.mrf.mxu0
  %v4113 = vadd.f32 %v3944, %v4112
  %4114 = vmatmul.bf16.gmra.mxu0 %v612
  %v4115 = vpop.f32.mrf.mxu0
  %v4116 = vadd.f32 %v3947, %v4115
  %v4117 = vpop.f32.mrf.mxu0
  %v4118 = vadd.f32 %v3949, %v4117
  %4119 = vmatmul.bf16.gmra.mxu0 %v619
  %v4120 = vpop.f32.mrf.mxu0
  %v4121 = vadd.f32 %v3952, %v4120
  %v4122 = vpop.f32.mrf.mxu0
  %v4123 = vadd.f32 %v3954, %v4122
  %4124 = vmatmul.bf16.gmra.mxu0 %v626
  %v4125 = vpop.f32.mrf.mxu0
  %v4126 = vadd.f32 %v3957, %v4125
  %v4127 = vpop.f32.mrf.mxu0
  %v4128 = vadd.f32 %v3959, %v4127
  %4129 = vmatmul.bf16.gmra.mxu0 %v633
  %v4130 = vpop.f32.mrf.mxu0
  %v4131 = vadd.f32 %v3962, %v4130
  %v4132 = vpop.f32.mrf.mxu0
  %v4133 = vadd.f32 %v3964, %v4132
  %4134 = vmatmul.bf16.gmra.mxu0 %v640
  %v4135 = vpop.f32.mrf.mxu0
  %v4136 = vadd.f32 %v3967, %v4135
  %v4137 = vpop.f32.mrf.mxu0
  %v4138 = vadd.f32 %v3969, %v4137
  %4139 = vmatmul.bf16.gmra.mxu0 %v647
  %v4140 = vpop.f32.mrf.mxu0
  %v4141 = vadd.f32 %v3972, %v4140
  %v4142 = vpop.f32.mrf.mxu0
  %v4143 = vadd.f32 %v3974, %v4142
  %4144 = vmatmul.bf16.gmra.mxu0 %v654
  %v4145 = vpop.f32.mrf.mxu0
  %v4146 = vadd.f32 %v3977, %v4145
  %v4147 = vpop.f32.mrf.mxu0
  %v4148 = vadd.f32 %v3979, %v4147
  %4149 = vmatmul.bf16.gmra.mxu0 %v661
  %v4150 = vpop.f32.mrf.mxu0
  %v4151 = vadd.f32 %v3982, %v4150
  %v4152 = vpop.f32.mrf.mxu0
  %v4153 = vadd.f32 %v3984, %v4152
  %4154 = vmatmul.bf16.gmra.mxu0 %v668
  %v4155 = vpop.f32.mrf.mxu0
  %v4156 = vadd.f32 %v3987, %v4155
  %v4157 = vpop.f32.mrf.mxu0
  %v4158 = vadd.f32 %v3989, %v4157
  %4159 = vmatmul.bf16.gmra.mxu0 %v675
  %v4160 = vpop.f32.mrf.mxu0
  %v4161 = vadd.f32 %v3992, %v4160
  %v4162 = vpop.f32.mrf.mxu0
  %v4163 = vadd.f32 %v3994, %v4162
  %4164 = vmatmul.bf16.gmra.mxu0 %v682
  %v4165 = vpop.f32.mrf.mxu0
  %v4166 = vadd.f32 %v3997, %v4165
  %v4167 = vpop.f32.mrf.mxu0
  %v4168 = vadd.f32 %v3999, %v4167
  %4169 = vmatmul.bf16.gmra.mxu0 %v689
  %v4170 = vpop.f32.mrf.mxu0
  %v4171 = vadd.f32 %v4002, %v4170
  %v4172 = vpop.f32.mrf.mxu0
  %v4173 = vadd.f32 %v4004, %v4172
  %4174 = vmatmul.bf16.gmra.mxu0 %v696
  %v4175 = vpop.f32.mrf.mxu0
  %v4176 = vadd.f32 %v4007, %v4175
  %v4177 = vpop.f32.mrf.mxu0
  %v4178 = vadd.f32 %v4009, %v4177
  %4179 = vmatmul.bf16.gmra.mxu0 %v703
  %v4180 = vpop.f32.mrf.mxu0
  %v4181 = vadd.f32 %v4012, %v4180
  %v4182 = vpop.f32.mrf.mxu0
  %v4183 = vadd.f32 %v4014, %v4182
  %4184 = vdwg.mxu0
  %4185 = vmatpush.bf16.msra.mxu0 0
  %4186 = vmatpush.bf16.msra.mxu0 0
  %4187 = vmatpush.bf16.msra.mxu0 0
  %4188 = vmatpush.bf16.msra.mxu0 0
  %4189 = vmatpush.bf16.msra.mxu0 0
  %4190 = vmatpush.bf16.msra.mxu0 0
  %4191 = vmatpush.bf16.msra.mxu0 0
  %4192 = vmatpush.bf16.msra.mxu0 %v1692
  %4193 = vmatmul.bf16.gmra.mxu0 %v1893
  %v4194 = vpop.f32.mrf.mxu0
  %v4195 = vadd.f32 %v4026, %v4194
  %v4196 = vpop.f32.mrf.mxu0
  %v4197 = vadd.f32 %v4028, %v4196
  %4198 = vmatmul.bf16.gmra.mxu0 %v1896
  %v4199 = vpop.f32.mrf.mxu0
  %v4200 = vadd.f32 %v4031, %v4199
  %v4201 = vpop.f32.mrf.mxu0
  %v4202 = vadd.f32 %v4033, %v4201
  %4203 = vmatmul.bf16.gmra.mxu0 %v1899
  %v4204 = vpop.f32.mrf.mxu0
  %v4205 = vadd.f32 %v4036, %v4204
  %v4206 = vpop.f32.mrf.mxu0
  %v4207 = vadd.f32 %v4038, %v4206
  %4208 = vmatmul.bf16.gmra.mxu0 %v1902
  %v4209 = vpop.f32.mrf.mxu0
  %v4210 = vadd.f32 %v4041, %v4209
  %v4211 = vpop.f32.mrf.mxu0
  %v4212 = vadd.f32 %v4043, %v4211
  %4213 = vmatmul.bf16.gmra.mxu0 %v1905
  %v4214 = vpop.f32.mrf.mxu0
  %v4215 = vadd.f32 %v4046, %v4214
  %v4216 = vpop.f32.mrf.mxu0
  %v4217 = vadd.f32 %v4048, %v4216
  %4218 = vmatmul.bf16.gmra.mxu0 %v1908
  %v4219 = vpop.f32.mrf.mxu0
  %v4220 = vadd.f32 %v4051, %v4219
  %v4221 = vpop.f32.mrf.mxu0
  %v4222 = vadd.f32 %v4053, %v4221
  %4223 = vmatmul.bf16.gmra.mxu0 %v1911
  %v4224 = vpop.f32.mrf.mxu0
  %v4225 = vadd.f32 %v4056, %v4224
  %v4226 = vpop.f32.mrf.mxu0
  %v4227 = vadd.f32 %v4058, %v4226
  %4228 = vmatmul.bf16.gmra.mxu0 %v1914
  %v4229 = vpop.f32.mrf.mxu0
  %v4230 = vadd.f32 %v4061, %v4229
  %v4231 = vpop.f32.mrf.mxu0
  %v4232 = vadd.f32 %v4063, %v4231
  %4233 = vmatmul.bf16.gmra.mxu0 %v1917
  %v4234 = vpop.f32.mrf.mxu0
  %v4235 = vadd.f32 %v4066, %v4234
  %v4236 = vpop.f32.mrf.mxu0
  %v4237 = vadd.f32 %v4068, %v4236
  %4238 = vmatmul.bf16.gmra.mxu0 %v1920
  %v4239 = vpop.f32.mrf.mxu0
  %v4240 = vadd.f32 %v4071, %v4239
  %v4241 = vpop.f32.mrf.mxu0
  %v4242 = vadd.f32 %v4073, %v4241
  %4243 = vmatmul.bf16.gmra.mxu0 %v1923
  %v4244 = vpop.f32.mrf.mxu0
  %v4245 = vadd.f32 %v4076, %v4244
  %v4246 = vpop.f32.mrf.mxu0
  %v4247 = vadd.f32 %v4078, %v4246
  %4248 = vmatmul.bf16.gmra.mxu0 %v1926
  %v4249 = vpop.f32.mrf.mxu0
  %v4250 = vadd.f32 %v4081, %v4249
  %v4251 = vpop.f32.mrf.mxu0
  %v4252 = vadd.f32 %v4083, %v4251
  %4253 = vmatmul.bf16.gmra.mxu0 %v1929
  %v4254 = vpop.f32.mrf.mxu0
  %v4255 = vadd.f32 %v4086, %v4254
  %v4256 = vpop.f32.mrf.mxu0
  %v4257 = vadd.f32 %v4088, %v4256
  %4258 = vmatmul.bf16.gmra.mxu0 %v1932
  %v4259 = vpop.f32.mrf.mxu0
  %v4260 = vadd.f32 %v4091, %v4259
  %v4261 = vpop.f32.mrf.mxu0
  %v4262 = vadd.f32 %v4093, %v4261
  %4263 = vmatmul.bf16.gmra.mxu0 %v1935
  %v4264 = vpop.f32.mrf.mxu0
  %v4265 = vadd.f32 %v4096, %v4264
  %v4266 = vpop.f32.mrf.mxu0
  %v4267 = vadd.f32 %v4098, %v4266
  %4268 = vmatmul.bf16.gmra.mxu0 %v1938
  %v4269 = vpop.f32.mrf.mxu0
  %v4270 = vadd.f32 %v4101, %v4269
  %v4271 = vpop.f32.mrf.mxu0
  %v4272 = vadd.f32 %v4103, %v4271
  %4273 = vmatmul.bf16.gmra.mxu0 %v1941
  %v4274 = vpop.f32.mrf.mxu0
  %v4275 = vadd.f32 %v4106, %v4274
  %v4276 = vpop.f32.mrf.mxu0
  %v4277 = vadd.f32 %v4108, %v4276
  %4278 = vmatmul.bf16.gmra.mxu0 %v1944
  %v4279 = vpop.f32.mrf.mxu0
  %v4280 = vadd.f32 %v4111, %v4279
  %v4281 = vpop.f32.mrf.mxu0
  %v4282 = vadd.f32 %v4113, %v4281
  %4283 = vmatmul.bf16.gmra.mxu0 %v1947
  %v4284 = vpop.f32.mrf.mxu0
  %v4285 = vadd.f32 %v4116, %v4284
  %v4286 = vpop.f32.mrf.mxu0
  %v4287 = vadd.f32 %v4118, %v4286
  %4288 = vmatmul.bf16.gmra.mxu0 %v1950
  %v4289 = vpop.f32.mrf.mxu0
  %v4290 = vadd.f32 %v4121, %v4289
  %v4291 = vpop.f32.mrf.mxu0
  %v4292 = vadd.f32 %v4123, %v4291
  %4293 = vmatmul.bf16.gmra.mxu0 %v1953
  %v4294 = vpop.f32.mrf.mxu0
  %v4295 = vadd.f32 %v4126, %v4294
  %v4296 = vpop.f32.mrf.mxu0
  %v4297 = vadd.f32 %v4128, %v4296
  %4298 = vmatmul.bf16.gmra.mxu0 %v1956
  %v4299 = vpop.f32.mrf.mxu0
  %v4300 = vadd.f32 %v4131, %v4299
  %v4301 = vpop.f32.mrf.mxu0
  %v4302 = vadd.f32 %v4133, %v4301
  %4303 = vmatmul.bf16.gmra.mxu0 %v1959
  %v4304 = vpop.f32.mrf.mxu0
  %v4305 = vadd.f32 %v4136, %v4304
  %v4306 = vpop.f32.mrf.mxu0
  %v4307 = vadd.f32 %v4138, %v4306
  %4308 = vmatmul.bf16.gmra.mxu0 %v1962
  %v4309 = vpop.f32.mrf.mxu0
  %v4310 = vadd.f32 %v4141, %v4309
  %v4311 = vpop.f32.mrf.mxu0
  %v4312 = vadd.f32 %v4143, %v4311
  %4313 = vmatmul.bf16.gmra.mxu0 %v1965
  %v4314 = vpop.f32.mrf.mxu0
  %v4315 = vadd.f32 %v4146, %v4314
  %v4316 = vpop.f32.mrf.mxu0
  %v4317 = vadd.f32 %v4148, %v4316
  %4318 = vmatmul.bf16.gmra.mxu0 %v1968
  %v4319 = vpop.f32.mrf.mxu0
  %v4320 = vadd.f32 %v4151, %v4319
  %v4321 = vpop.f32.mrf.mxu0
  %v4322 = vadd.f32 %v4153, %v4321
  %4323 = vmatmul.bf16.gmra.mxu0 %v1971
  %v4324 = vpop.f32.mrf.mxu0
  %v4325 = vadd.f32 %v4156, %v4324
  %v4326 = vpop.f32.mrf.mxu0
  %v4327 = vadd.f32 %v4158, %v4326
  %4328 = vmatmul.bf16.gmra.mxu0 %v1974
  %v4329 = vpop.f32.mrf.mxu0
  %v4330 = vadd.f32 %v4161, %v4329
  %v4331 = vpop.f32.mrf.mxu0
  %v4332 = vadd.f32 %v4163, %v4331
  %4333 = vmatmul.bf16.gmra.mxu0 %v1977
  %v4334 = vpop.f32.mrf.mxu0
  %v4335 = vadd.f32 %v4166, %v4334
  %v4336 = vpop.f32.mrf.mxu0
  %v4337 = vadd.f32 %v4168, %v4336
  %4338 = vmatmul.bf16.gmra.mxu0 %v1980
  %v4339 = vpop.f32.mrf.mxu0
  %v4340 = vadd.f32 %v4171, %v4339
  %v4341 = vpop.f32.mrf.mxu0
  %v4342 = vadd.f32 %v4173, %v4341
  %4343 = vmatmul.bf16.gmra.mxu0 %v1983
  %v4344 = vpop.f32.mrf.mxu0
  %v4345 = vadd.f32 %v4176, %v4344
  %v4346 = vpop.f32.mrf.mxu0
  %v4347 = vadd.f32 %v4178, %v4346
  %4348 = vmatmul.bf16.gmra.mxu0 %v1986
  %v4349 = vpop.f32.mrf.mxu0
  %v4350 = vadd.f32 %v4181, %v4349
  %v4351 = vpop.f32.mrf.mxu0
  %v4352 = vadd.f32 %v4183, %v4351
  %4353 = vdwg.mxu0
  %4354 = vmatpush.bf16.msra.mxu0 %v1529
  %4355 = vmatpush.bf16.msra.mxu0 %v1525
  %4356 = vmatpush.bf16.msra.mxu0 %v1521
  %4357 = vmatpush.bf16.msra.mxu0 %v1517
  %4358 = vmatpush.bf16.msra.mxu0 %v1513
  %4359 = vmatpush.bf16.msra.mxu0 %v1509
  %4360 = vmatpush.bf16.msra.mxu0 %v1505
  %4361 = vmatpush.bf16.msra.mxu0 %v1501
  %4362 = vmatmul.bf16.gmra.mxu0 %v481
  %v4363 = vpop.f32.mrf.mxu0
  %v4364 = vadd.f32 %v905, %v4363
  %v4365 = vpop.f32.mrf.mxu0
  %v4366 = vadd.f32 %v905, %v4365
  %4367 = vmatmul.bf16.gmra.mxu0 %v488
  %v4368 = vpop.f32.mrf.mxu0
  %v4369 = vadd.f32 %v905, %v4368
  %v4370 = vpop.f32.mrf.mxu0
  %v4371 = vadd.f32 %v905, %v4370
  %4372 = vmatmul.bf16.gmra.mxu0 %v495
  %v4373 = vpop.f32.mrf.mxu0
  %v4374 = vadd.f32 %v905, %v4373
  %v4375 = vpop.f32.mrf.mxu0
  %v4376 = vadd.f32 %v905, %v4375
  %4377 = vmatmul.bf16.gmra.mxu0 %v502
  %v4378 = vpop.f32.mrf.mxu0
  %v4379 = vadd.f32 %v905, %v4378
  %v4380 = vpop.f32.mrf.mxu0
  %v4381 = vadd.f32 %v905, %v4380
  %4382 = vmatmul.bf16.gmra.mxu0 %v509
  %v4383 = vpop.f32.mrf.mxu0
  %v4384 = vadd.f32 %v905, %v4383
  %v4385 = vpop.f32.mrf.mxu0
  %v4386 = vadd.f32 %v905, %v4385
  %4387 = vmatmul.bf16.gmra.mxu0 %v516
  %v4388 = vpop.f32.mrf.mxu0
  %v4389 = vadd.f32 %v905, %v4388
  %v4390 = vpop.f32.mrf.mxu0
  %v4391 = vadd.f32 %v905, %v4390
  %4392 = vmatmul.bf16.gmra.mxu0 %v523
  %v4393 = vpop.f32.mrf.mxu0
  %v4394 = vadd.f32 %v905, %v4393
  %v4395 = vpop.f32.mrf.mxu0
  %v4396 = vadd.f32 %v905, %v4395
  %4397 = vmatmul.bf16.gmra.mxu0 %v530
  %v4398 = vpop.f32.mrf.mxu0
  %v4399 = vadd.f32 %v905, %v4398
  %v4400 = vpop.f32.mrf.mxu0
  %v4401 = vadd.f32 %v905, %v4400
  %4402 = vmatmul.bf16.gmra.mxu0 %v537
  %v4403 = vpop.f32.mrf.mxu0
  %v4404 = vadd.f32 %v905, %v4403
  %v4405 = vpop.f32.mrf.mxu0
  %v4406 = vadd.f32 %v905, %v4405
  %4407 = vmatmul.bf16.gmra.mxu0 %v544
  %v4408 = vpop.f32.mrf.mxu0
  %v4409 = vadd.f32 %v905, %v4408
  %v4410 = vpop.f32.mrf.mxu0
  %v4411 = vadd.f32 %v905, %v4410
  %4412 = vmatmul.bf16.gmra.mxu0 %v551
  %v4413 = vpop.f32.mrf.mxu0
  %v4414 = vadd.f32 %v905, %v4413
  %v4415 = vpop.f32.mrf.mxu0
  %v4416 = vadd.f32 %v905, %v4415
  %4417 = vmatmul.bf16.gmra.mxu0 %v558
  %v4418 = vpop.f32.mrf.mxu0
  %v4419 = vadd.f32 %v905, %v4418
  %v4420 = vpop.f32.mrf.mxu0
  %v4421 = vadd.f32 %v905, %v4420
  %4422 = vmatmul.bf16.gmra.mxu0 %v565
  %v4423 = vpop.f32.mrf.mxu0
  %v4424 = vadd.f32 %v905, %v4423
  %v4425 = vpop.f32.mrf.mxu0
  %v4426 = vadd.f32 %v905, %v4425
  %4427 = vmatmul.bf16.gmra.mxu0 %v572
  %v4428 = vpop.f32.mrf.mxu0
  %v4429 = vadd.f32 %v905, %v4428
  %v4430 = vpop.f32.mrf.mxu0
  %v4431 = vadd.f32 %v905, %v4430
  %4432 = vmatmul.bf16.gmra.mxu0 %v579
  %v4433 = vpop.f32.mrf.mxu0
  %v4434 = vadd.f32 %v905, %v4433
  %v4435 = vpop.f32.mrf.mxu0
  %v4436 = vadd.f32 %v905, %v4435
  %4437 = vmatmul.bf16.gmra.mxu0 %v586
  %v4438 = vpop.f32.mrf.mxu0
  %v4439 = vadd.f32 %v905, %v4438
  %v4440 = vpop.f32.mrf.mxu0
  %v4441 = vadd.f32 %v905, %v4440
  %4442 = vmatmul.bf16.gmra.mxu0 %v593
  %v4443 = vpop.f32.mrf.mxu0
  %v4444 = vadd.f32 %v905, %v4443
  %v4445 = vpop.f32.mrf.mxu0
  %v4446 = vadd.f32 %v905, %v4445
  %4447 = vmatmul.bf16.gmra.mxu0 %v600
  %v4448 = vpop.f32.mrf.mxu0
  %v4449 = vadd.f32 %v905, %v4448
  %v4450 = vpop.f32.mrf.mxu0
  %v4451 = vadd.f32 %v905, %v4450
  %4452 = vmatmul.bf16.gmra.mxu0 %v607
  %v4453 = vpop.f32.mrf.mxu0
  %v4454 = vadd.f32 %v905, %v4453
  %v4455 = vpop.f32.mrf.mxu0
  %v4456 = vadd.f32 %v905, %v4455
  %4457 = vmatmul.bf16.gmra.mxu0 %v614
  %v4458 = vpop.f32.mrf.mxu0
  %v4459 = vadd.f32 %v905, %v4458
  %v4460 = vpop.f32.mrf.mxu0
  %v4461 = vadd.f32 %v905, %v4460
  %4462 = vmatmul.bf16.gmra.mxu0 %v621
  %v4463 = vpop.f32.mrf.mxu0
  %v4464 = vadd.f32 %v905, %v4463
  %v4465 = vpop.f32.mrf.mxu0
  %v4466 = vadd.f32 %v905, %v4465
  %4467 = vmatmul.bf16.gmra.mxu0 %v628
  %v4468 = vpop.f32.mrf.mxu0
  %v4469 = vadd.f32 %v905, %v4468
  %v4470 = vpop.f32.mrf.mxu0
  %v4471 = vadd.f32 %v905, %v4470
  %4472 = vmatmul.bf16.gmra.mxu0 %v635
  %v4473 = vpop.f32.mrf.mxu0
  %v4474 = vadd.f32 %v905, %v4473
  %v4475 = vpop.f32.mrf.mxu0
  %v4476 = vadd.f32 %v905, %v4475
  %4477 = vmatmul.bf16.gmra.mxu0 %v642
  %v4478 = vpop.f32.mrf.mxu0
  %v4479 = vadd.f32 %v905, %v4478
  %v4480 = vpop.f32.mrf.mxu0
  %v4481 = vadd.f32 %v905, %v4480
  %4482 = vmatmul.bf16.gmra.mxu0 %v649
  %v4483 = vpop.f32.mrf.mxu0
  %v4484 = vadd.f32 %v905, %v4483
  %v4485 = vpop.f32.mrf.mxu0
  %v4486 = vadd.f32 %v905, %v4485
  %4487 = vmatmul.bf16.gmra.mxu0 %v656
  %v4488 = vpop.f32.mrf.mxu0
  %v4489 = vadd.f32 %v905, %v4488
  %v4490 = vpop.f32.mrf.mxu0
  %v4491 = vadd.f32 %v905, %v4490
  %4492 = vmatmul.bf16.gmra.mxu0 %v663
  %v4493 = vpop.f32.mrf.mxu0
  %v4494 = vadd.f32 %v905, %v4493
  %v4495 = vpop.f32.mrf.mxu0
  %v4496 = vadd.f32 %v905, %v4495
  %4497 = vmatmul.bf16.gmra.mxu0 %v670
  %v4498 = vpop.f32.mrf.mxu0
  %v4499 = vadd.f32 %v905, %v4498
  %v4500 = vpop.f32.mrf.mxu0
  %v4501 = vadd.f32 %v905, %v4500
  %4502 = vmatmul.bf16.gmra.mxu0 %v677
  %v4503 = vpop.f32.mrf.mxu0
  %v4504 = vadd.f32 %v905, %v4503
  %v4505 = vpop.f32.mrf.mxu0
  %v4506 = vadd.f32 %v905, %v4505
  %4507 = vmatmul.bf16.gmra.mxu0 %v684
  %v4508 = vpop.f32.mrf.mxu0
  %v4509 = vadd.f32 %v905, %v4508
  %v4510 = vpop.f32.mrf.mxu0
  %v4511 = vadd.f32 %v905, %v4510
  %4512 = vmatmul.bf16.gmra.mxu0 %v691
  %v4513 = vpop.f32.mrf.mxu0
  %v4514 = vadd.f32 %v905, %v4513
  %v4515 = vpop.f32.mrf.mxu0
  %v4516 = vadd.f32 %v905, %v4515
  %4517 = vmatmul.bf16.gmra.mxu0 %v698
  %v4518 = vpop.f32.mrf.mxu0
  %v4519 = vadd.f32 %v905, %v4518
  %v4520 = vpop.f32.mrf.mxu0
  %v4521 = vadd.f32 %v905, %v4520
  %4522 = vdwg.mxu0
  %4523 = vmatpush.bf16.msra.mxu0 %v1561
  %4524 = vmatpush.bf16.msra.mxu0 %v1557
  %4525 = vmatpush.bf16.msra.mxu0 %v1553
  %4526 = vmatpush.bf16.msra.mxu0 %v1549
  %4527 = vmatpush.bf16.msra.mxu0 %v1545
  %4528 = vmatpush.bf16.msra.mxu0 %v1541
  %4529 = vmatpush.bf16.msra.mxu0 %v1537
  %4530 = vmatpush.bf16.msra.mxu0 %v1533
  %4531 = vmatmul.bf16.gmra.mxu0 %v482
  %v4532 = vpop.f32.mrf.mxu0
  %v4533 = vadd.f32 %v4364, %v4532
  %v4534 = vpop.f32.mrf.mxu0
  %v4535 = vadd.f32 %v4366, %v4534
  %4536 = vmatmul.bf16.gmra.mxu0 %v489
  %v4537 = vpop.f32.mrf.mxu0
  %v4538 = vadd.f32 %v4369, %v4537
  %v4539 = vpop.f32.mrf.mxu0
  %v4540 = vadd.f32 %v4371, %v4539
  %4541 = vmatmul.bf16.gmra.mxu0 %v496
  %v4542 = vpop.f32.mrf.mxu0
  %v4543 = vadd.f32 %v4374, %v4542
  %v4544 = vpop.f32.mrf.mxu0
  %v4545 = vadd.f32 %v4376, %v4544
  %4546 = vmatmul.bf16.gmra.mxu0 %v503
  %v4547 = vpop.f32.mrf.mxu0
  %v4548 = vadd.f32 %v4379, %v4547
  %v4549 = vpop.f32.mrf.mxu0
  %v4550 = vadd.f32 %v4381, %v4549
  %4551 = vmatmul.bf16.gmra.mxu0 %v510
  %v4552 = vpop.f32.mrf.mxu0
  %v4553 = vadd.f32 %v4384, %v4552
  %v4554 = vpop.f32.mrf.mxu0
  %v4555 = vadd.f32 %v4386, %v4554
  %4556 = vmatmul.bf16.gmra.mxu0 %v517
  %v4557 = vpop.f32.mrf.mxu0
  %v4558 = vadd.f32 %v4389, %v4557
  %v4559 = vpop.f32.mrf.mxu0
  %v4560 = vadd.f32 %v4391, %v4559
  %4561 = vmatmul.bf16.gmra.mxu0 %v524
  %v4562 = vpop.f32.mrf.mxu0
  %v4563 = vadd.f32 %v4394, %v4562
  %v4564 = vpop.f32.mrf.mxu0
  %v4565 = vadd.f32 %v4396, %v4564
  %4566 = vmatmul.bf16.gmra.mxu0 %v531
  %v4567 = vpop.f32.mrf.mxu0
  %v4568 = vadd.f32 %v4399, %v4567
  %v4569 = vpop.f32.mrf.mxu0
  %v4570 = vadd.f32 %v4401, %v4569
  %4571 = vmatmul.bf16.gmra.mxu0 %v538
  %v4572 = vpop.f32.mrf.mxu0
  %v4573 = vadd.f32 %v4404, %v4572
  %v4574 = vpop.f32.mrf.mxu0
  %v4575 = vadd.f32 %v4406, %v4574
  %4576 = vmatmul.bf16.gmra.mxu0 %v545
  %v4577 = vpop.f32.mrf.mxu0
  %v4578 = vadd.f32 %v4409, %v4577
  %v4579 = vpop.f32.mrf.mxu0
  %v4580 = vadd.f32 %v4411, %v4579
  %4581 = vmatmul.bf16.gmra.mxu0 %v552
  %v4582 = vpop.f32.mrf.mxu0
  %v4583 = vadd.f32 %v4414, %v4582
  %v4584 = vpop.f32.mrf.mxu0
  %v4585 = vadd.f32 %v4416, %v4584
  %4586 = vmatmul.bf16.gmra.mxu0 %v559
  %v4587 = vpop.f32.mrf.mxu0
  %v4588 = vadd.f32 %v4419, %v4587
  %v4589 = vpop.f32.mrf.mxu0
  %v4590 = vadd.f32 %v4421, %v4589
  %4591 = vmatmul.bf16.gmra.mxu0 %v566
  %v4592 = vpop.f32.mrf.mxu0
  %v4593 = vadd.f32 %v4424, %v4592
  %v4594 = vpop.f32.mrf.mxu0
  %v4595 = vadd.f32 %v4426, %v4594
  %4596 = vmatmul.bf16.gmra.mxu0 %v573
  %v4597 = vpop.f32.mrf.mxu0
  %v4598 = vadd.f32 %v4429, %v4597
  %v4599 = vpop.f32.mrf.mxu0
  %v4600 = vadd.f32 %v4431, %v4599
  %4601 = vmatmul.bf16.gmra.mxu0 %v580
  %v4602 = vpop.f32.mrf.mxu0
  %v4603 = vadd.f32 %v4434, %v4602
  %v4604 = vpop.f32.mrf.mxu0
  %v4605 = vadd.f32 %v4436, %v4604
  %4606 = vmatmul.bf16.gmra.mxu0 %v587
  %v4607 = vpop.f32.mrf.mxu0
  %v4608 = vadd.f32 %v4439, %v4607
  %v4609 = vpop.f32.mrf.mxu0
  %v4610 = vadd.f32 %v4441, %v4609
  %4611 = vmatmul.bf16.gmra.mxu0 %v594
  %v4612 = vpop.f32.mrf.mxu0
  %v4613 = vadd.f32 %v4444, %v4612
  %v4614 = vpop.f32.mrf.mxu0
  %v4615 = vadd.f32 %v4446, %v4614
  %4616 = vmatmul.bf16.gmra.mxu0 %v601
  %v4617 = vpop.f32.mrf.mxu0
  %v4618 = vadd.f32 %v4449, %v4617
  %v4619 = vpop.f32.mrf.mxu0
  %v4620 = vadd.f32 %v4451, %v4619
  %4621 = vmatmul.bf16.gmra.mxu0 %v608
  %v4622 = vpop.f32.mrf.mxu0
  %v4623 = vadd.f32 %v4454, %v4622
  %v4624 = vpop.f32.mrf.mxu0
  %v4625 = vadd.f32 %v4456, %v4624
  %4626 = vmatmul.bf16.gmra.mxu0 %v615
  %v4627 = vpop.f32.mrf.mxu0
  %v4628 = vadd.f32 %v4459, %v4627
  %v4629 = vpop.f32.mrf.mxu0
  %v4630 = vadd.f32 %v4461, %v4629
  %4631 = vmatmul.bf16.gmra.mxu0 %v622
  %v4632 = vpop.f32.mrf.mxu0
  %v4633 = vadd.f32 %v4464, %v4632
  %v4634 = vpop.f32.mrf.mxu0
  %v4635 = vadd.f32 %v4466, %v4634
  %4636 = vmatmul.bf16.gmra.mxu0 %v629
  %v4637 = vpop.f32.mrf.mxu0
  %v4638 = vadd.f32 %v4469, %v4637
  %v4639 = vpop.f32.mrf.mxu0
  %v4640 = vadd.f32 %v4471, %v4639
  %4641 = vmatmul.bf16.gmra.mxu0 %v636
  %v4642 = vpop.f32.mrf.mxu0
  %v4643 = vadd.f32 %v4474, %v4642
  %v4644 = vpop.f32.mrf.mxu0
  %v4645 = vadd.f32 %v4476, %v4644
  %4646 = vmatmul.bf16.gmra.mxu0 %v643
  %v4647 = vpop.f32.mrf.mxu0
  %v4648 = vadd.f32 %v4479, %v4647
  %v4649 = vpop.f32.mrf.mxu0
  %v4650 = vadd.f32 %v4481, %v4649
  %4651 = vmatmul.bf16.gmra.mxu0 %v650
  %v4652 = vpop.f32.mrf.mxu0
  %v4653 = vadd.f32 %v4484, %v4652
  %v4654 = vpop.f32.mrf.mxu0
  %v4655 = vadd.f32 %v4486, %v4654
  %4656 = vmatmul.bf16.gmra.mxu0 %v657
  %v4657 = vpop.f32.mrf.mxu0
  %v4658 = vadd.f32 %v4489, %v4657
  %v4659 = vpop.f32.mrf.mxu0
  %v4660 = vadd.f32 %v4491, %v4659
  %4661 = vmatmul.bf16.gmra.mxu0 %v664
  %v4662 = vpop.f32.mrf.mxu0
  %v4663 = vadd.f32 %v4494, %v4662
  %v4664 = vpop.f32.mrf.mxu0
  %v4665 = vadd.f32 %v4496, %v4664
  %4666 = vmatmul.bf16.gmra.mxu0 %v671
  %v4667 = vpop.f32.mrf.mxu0
  %v4668 = vadd.f32 %v4499, %v4667
  %v4669 = vpop.f32.mrf.mxu0
  %v4670 = vadd.f32 %v4501, %v4669
  %4671 = vmatmul.bf16.gmra.mxu0 %v678
  %v4672 = vpop.f32.mrf.mxu0
  %v4673 = vadd.f32 %v4504, %v4672
  %v4674 = vpop.f32.mrf.mxu0
  %v4675 = vadd.f32 %v4506, %v4674
  %4676 = vmatmul.bf16.gmra.mxu0 %v685
  %v4677 = vpop.f32.mrf.mxu0
  %v4678 = vadd.f32 %v4509, %v4677
  %v4679 = vpop.f32.mrf.mxu0
  %v4680 = vadd.f32 %v4511, %v4679
  %4681 = vmatmul.bf16.gmra.mxu0 %v692
  %v4682 = vpop.f32.mrf.mxu0
  %v4683 = vadd.f32 %v4514, %v4682
  %v4684 = vpop.f32.mrf.mxu0
  %v4685 = vadd.f32 %v4516, %v4684
  %4686 = vmatmul.bf16.gmra.mxu0 %v699
  %v4687 = vpop.f32.mrf.mxu0
  %v4688 = vadd.f32 %v4519, %v4687
  %v4689 = vpop.f32.mrf.mxu0
  %v4690 = vadd.f32 %v4521, %v4689
  %4691 = vdwg.mxu0
  %4692 = vmatpush.bf16.msra.mxu0 %v1593
  %4693 = vmatpush.bf16.msra.mxu0 %v1589
  %4694 = vmatpush.bf16.msra.mxu0 %v1585
  %4695 = vmatpush.bf16.msra.mxu0 %v1581
  %4696 = vmatpush.bf16.msra.mxu0 %v1577
  %4697 = vmatpush.bf16.msra.mxu0 %v1573
  %4698 = vmatpush.bf16.msra.mxu0 %v1569
  %4699 = vmatpush.bf16.msra.mxu0 %v1565
  %4700 = vmatmul.bf16.gmra.mxu0 %v483
  %v4701 = vpop.f32.mrf.mxu0
  %v4702 = vadd.f32 %v4533, %v4701
  %v4703 = vpop.f32.mrf.mxu0
  %v4704 = vadd.f32 %v4535, %v4703
  %4705 = vmatmul.bf16.gmra.mxu0 %v490
  %v4706 = vpop.f32.mrf.mxu0
  %v4707 = vadd.f32 %v4538, %v4706
  %v4708 = vpop.f32.mrf.mxu0
  %v4709 = vadd.f32 %v4540, %v4708
  %4710 = vmatmul.bf16.gmra.mxu0 %v497
  %v4711 = vpop.f32.mrf.mxu0
  %v4712 = vadd.f32 %v4543, %v4711
  %v4713 = vpop.f32.mrf.mxu0
  %v4714 = vadd.f32 %v4545, %v4713
  %4715 = vmatmul.bf16.gmra.mxu0 %v504
  %v4716 = vpop.f32.mrf.mxu0
  %v4717 = vadd.f32 %v4548, %v4716
  %v4718 = vpop.f32.mrf.mxu0
  %v4719 = vadd.f32 %v4550, %v4718
  %4720 = vmatmul.bf16.gmra.mxu0 %v511
  %v4721 = vpop.f32.mrf.mxu0
  %v4722 = vadd.f32 %v4553, %v4721
  %v4723 = vpop.f32.mrf.mxu0
  %v4724 = vadd.f32 %v4555, %v4723
  %4725 = vmatmul.bf16.gmra.mxu0 %v518
  %v4726 = vpop.f32.mrf.mxu0
  %v4727 = vadd.f32 %v4558, %v4726
  %v4728 = vpop.f32.mrf.mxu0
  %v4729 = vadd.f32 %v4560, %v4728
  %4730 = vmatmul.bf16.gmra.mxu0 %v525
  %v4731 = vpop.f32.mrf.mxu0
  %v4732 = vadd.f32 %v4563, %v4731
  %v4733 = vpop.f32.mrf.mxu0
  %v4734 = vadd.f32 %v4565, %v4733
  %4735 = vmatmul.bf16.gmra.mxu0 %v532
  %v4736 = vpop.f32.mrf.mxu0
  %v4737 = vadd.f32 %v4568, %v4736
  %v4738 = vpop.f32.mrf.mxu0
  %v4739 = vadd.f32 %v4570, %v4738
  %4740 = vmatmul.bf16.gmra.mxu0 %v539
  %v4741 = vpop.f32.mrf.mxu0
  %v4742 = vadd.f32 %v4573, %v4741
  %v4743 = vpop.f32.mrf.mxu0
  %v4744 = vadd.f32 %v4575, %v4743
  %4745 = vmatmul.bf16.gmra.mxu0 %v546
  %v4746 = vpop.f32.mrf.mxu0
  %v4747 = vadd.f32 %v4578, %v4746
  %v4748 = vpop.f32.mrf.mxu0
  %v4749 = vadd.f32 %v4580, %v4748
  %4750 = vmatmul.bf16.gmra.mxu0 %v553
  %v4751 = vpop.f32.mrf.mxu0
  %v4752 = vadd.f32 %v4583, %v4751
  %v4753 = vpop.f32.mrf.mxu0
  %v4754 = vadd.f32 %v4585, %v4753
  %4755 = vmatmul.bf16.gmra.mxu0 %v560
  %v4756 = vpop.f32.mrf.mxu0
  %v4757 = vadd.f32 %v4588, %v4756
  %v4758 = vpop.f32.mrf.mxu0
  %v4759 = vadd.f32 %v4590, %v4758
  %4760 = vmatmul.bf16.gmra.mxu0 %v567
  %v4761 = vpop.f32.mrf.mxu0
  %v4762 = vadd.f32 %v4593, %v4761
  %v4763 = vpop.f32.mrf.mxu0
  %v4764 = vadd.f32 %v4595, %v4763
  %4765 = vmatmul.bf16.gmra.mxu0 %v574
  %v4766 = vpop.f32.mrf.mxu0
  %v4767 = vadd.f32 %v4598, %v4766
  %v4768 = vpop.f32.mrf.mxu0
  %v4769 = vadd.f32 %v4600, %v4768
  %4770 = vmatmul.bf16.gmra.mxu0 %v581
  %v4771 = vpop.f32.mrf.mxu0
  %v4772 = vadd.f32 %v4603, %v4771
  %v4773 = vpop.f32.mrf.mxu0
  %v4774 = vadd.f32 %v4605, %v4773
  %4775 = vmatmul.bf16.gmra.mxu0 %v588
  %v4776 = vpop.f32.mrf.mxu0
  %v4777 = vadd.f32 %v4608, %v4776
  %v4778 = vpop.f32.mrf.mxu0
  %v4779 = vadd.f32 %v4610, %v4778
  %4780 = vmatmul.bf16.gmra.mxu0 %v595
  %v4781 = vpop.f32.mrf.mxu0
  %v4782 = vadd.f32 %v4613, %v4781
  %v4783 = vpop.f32.mrf.mxu0
  %v4784 = vadd.f32 %v4615, %v4783
  %4785 = vmatmul.bf16.gmra.mxu0 %v602
  %v4786 = vpop.f32.mrf.mxu0
  %v4787 = vadd.f32 %v4618, %v4786
  %v4788 = vpop.f32.mrf.mxu0
  %v4789 = vadd.f32 %v4620, %v4788
  %4790 = vmatmul.bf16.gmra.mxu0 %v609
  %v4791 = vpop.f32.mrf.mxu0
  %v4792 = vadd.f32 %v4623, %v4791
  %v4793 = vpop.f32.mrf.mxu0
  %v4794 = vadd.f32 %v4625, %v4793
  %4795 = vmatmul.bf16.gmra.mxu0 %v616
  %v4796 = vpop.f32.mrf.mxu0
  %v4797 = vadd.f32 %v4628, %v4796
  %v4798 = vpop.f32.mrf.mxu0
  %v4799 = vadd.f32 %v4630, %v4798
  %4800 = vmatmul.bf16.gmra.mxu0 %v623
  %v4801 = vpop.f32.mrf.mxu0
  %v4802 = vadd.f32 %v4633, %v4801
  %v4803 = vpop.f32.mrf.mxu0
  %v4804 = vadd.f32 %v4635, %v4803
  %4805 = vmatmul.bf16.gmra.mxu0 %v630
  %v4806 = vpop.f32.mrf.mxu0
  %v4807 = vadd.f32 %v4638, %v4806
  %v4808 = vpop.f32.mrf.mxu0
  %v4809 = vadd.f32 %v4640, %v4808
  %4810 = vmatmul.bf16.gmra.mxu0 %v637
  %v4811 = vpop.f32.mrf.mxu0
  %v4812 = vadd.f32 %v4643, %v4811
  %v4813 = vpop.f32.mrf.mxu0
  %v4814 = vadd.f32 %v4645, %v4813
  %4815 = vmatmul.bf16.gmra.mxu0 %v644
  %v4816 = vpop.f32.mrf.mxu0
  %v4817 = vadd.f32 %v4648, %v4816
  %v4818 = vpop.f32.mrf.mxu0
  %v4819 = vadd.f32 %v4650, %v4818
  %4820 = vmatmul.bf16.gmra.mxu0 %v651
  %v4821 = vpop.f32.mrf.mxu0
  %v4822 = vadd.f32 %v4653, %v4821
  %v4823 = vpop.f32.mrf.mxu0
  %v4824 = vadd.f32 %v4655, %v4823
  %4825 = vmatmul.bf16.gmra.mxu0 %v658
  %v4826 = vpop.f32.mrf.mxu0
  %v4827 = vadd.f32 %v4658, %v4826
  %v4828 = vpop.f32.mrf.mxu0
  %v4829 = vadd.f32 %v4660, %v4828
  %4830 = vmatmul.bf16.gmra.mxu0 %v665
  %v4831 = vpop.f32.mrf.mxu0
  %v4832 = vadd.f32 %v4663, %v4831
  %v4833 = vpop.f32.mrf.mxu0
  %v4834 = vadd.f32 %v4665, %v4833
  %4835 = vmatmul.bf16.gmra.mxu0 %v672
  %v4836 = vpop.f32.mrf.mxu0
  %v4837 = vadd.f32 %v4668, %v4836
  %v4838 = vpop.f32.mrf.mxu0
  %v4839 = vadd.f32 %v4670, %v4838
  %4840 = vmatmul.bf16.gmra.mxu0 %v679
  %v4841 = vpop.f32.mrf.mxu0
  %v4842 = vadd.f32 %v4673, %v4841
  %v4843 = vpop.f32.mrf.mxu0
  %v4844 = vadd.f32 %v4675, %v4843
  %4845 = vmatmul.bf16.gmra.mxu0 %v686
  %v4846 = vpop.f32.mrf.mxu0
  %v4847 = vadd.f32 %v4678, %v4846
  %v4848 = vpop.f32.mrf.mxu0
  %v4849 = vadd.f32 %v4680, %v4848
  %4850 = vmatmul.bf16.gmra.mxu0 %v693
  %v4851 = vpop.f32.mrf.mxu0
  %v4852 = vadd.f32 %v4683, %v4851
  %v4853 = vpop.f32.mrf.mxu0
  %v4854 = vadd.f32 %v4685, %v4853
  %4855 = vmatmul.bf16.gmra.mxu0 %v700
  %v4856 = vpop.f32.mrf.mxu0
  %v4857 = vadd.f32 %v4688, %v4856
  %v4858 = vpop.f32.mrf.mxu0
  %v4859 = vadd.f32 %v4690, %v4858
  %4860 = vdwg.mxu0
  %4861 = vmatpush.bf16.msra.mxu0 %v1625
  %4862 = vmatpush.bf16.msra.mxu0 %v1621
  %4863 = vmatpush.bf16.msra.mxu0 %v1617
  %4864 = vmatpush.bf16.msra.mxu0 %v1613
  %4865 = vmatpush.bf16.msra.mxu0 %v1609
  %4866 = vmatpush.bf16.msra.mxu0 %v1605
  %4867 = vmatpush.bf16.msra.mxu0 %v1601
  %4868 = vmatpush.bf16.msra.mxu0 %v1597
  %4869 = vmatmul.bf16.gmra.mxu0 %v484
  %v4870 = vpop.f32.mrf.mxu0
  %v4871 = vadd.f32 %v4702, %v4870
  %v4872 = vpop.f32.mrf.mxu0
  %v4873 = vadd.f32 %v4704, %v4872
  %4874 = vmatmul.bf16.gmra.mxu0 %v491
  %v4875 = vpop.f32.mrf.mxu0
  %v4876 = vadd.f32 %v4707, %v4875
  %v4877 = vpop.f32.mrf.mxu0
  %v4878 = vadd.f32 %v4709, %v4877
  %4879 = vmatmul.bf16.gmra.mxu0 %v498
  %v4880 = vpop.f32.mrf.mxu0
  %v4881 = vadd.f32 %v4712, %v4880
  %v4882 = vpop.f32.mrf.mxu0
  %v4883 = vadd.f32 %v4714, %v4882
  %4884 = vmatmul.bf16.gmra.mxu0 %v505
  %v4885 = vpop.f32.mrf.mxu0
  %v4886 = vadd.f32 %v4717, %v4885
  %v4887 = vpop.f32.mrf.mxu0
  %v4888 = vadd.f32 %v4719, %v4887
  %4889 = vmatmul.bf16.gmra.mxu0 %v512
  %v4890 = vpop.f32.mrf.mxu0
  %v4891 = vadd.f32 %v4722, %v4890
  %v4892 = vpop.f32.mrf.mxu0
  %v4893 = vadd.f32 %v4724, %v4892
  %4894 = vmatmul.bf16.gmra.mxu0 %v519
  %v4895 = vpop.f32.mrf.mxu0
  %v4896 = vadd.f32 %v4727, %v4895
  %v4897 = vpop.f32.mrf.mxu0
  %v4898 = vadd.f32 %v4729, %v4897
  %4899 = vmatmul.bf16.gmra.mxu0 %v526
  %v4900 = vpop.f32.mrf.mxu0
  %v4901 = vadd.f32 %v4732, %v4900
  %v4902 = vpop.f32.mrf.mxu0
  %v4903 = vadd.f32 %v4734, %v4902
  %4904 = vmatmul.bf16.gmra.mxu0 %v533
  %v4905 = vpop.f32.mrf.mxu0
  %v4906 = vadd.f32 %v4737, %v4905
  %v4907 = vpop.f32.mrf.mxu0
  %v4908 = vadd.f32 %v4739, %v4907
  %4909 = vmatmul.bf16.gmra.mxu0 %v540
  %v4910 = vpop.f32.mrf.mxu0
  %v4911 = vadd.f32 %v4742, %v4910
  %v4912 = vpop.f32.mrf.mxu0
  %v4913 = vadd.f32 %v4744, %v4912
  %4914 = vmatmul.bf16.gmra.mxu0 %v547
  %v4915 = vpop.f32.mrf.mxu0
  %v4916 = vadd.f32 %v4747, %v4915
  %v4917 = vpop.f32.mrf.mxu0
  %v4918 = vadd.f32 %v4749, %v4917
  %4919 = vmatmul.bf16.gmra.mxu0 %v554
  %v4920 = vpop.f32.mrf.mxu0
  %v4921 = vadd.f32 %v4752, %v4920
  %v4922 = vpop.f32.mrf.mxu0
  %v4923 = vadd.f32 %v4754, %v4922
  %4924 = vmatmul.bf16.gmra.mxu0 %v561
  %v4925 = vpop.f32.mrf.mxu0
  %v4926 = vadd.f32 %v4757, %v4925
  %v4927 = vpop.f32.mrf.mxu0
  %v4928 = vadd.f32 %v4759, %v4927
  %4929 = vmatmul.bf16.gmra.mxu0 %v568
  %v4930 = vpop.f32.mrf.mxu0
  %v4931 = vadd.f32 %v4762, %v4930
  %v4932 = vpop.f32.mrf.mxu0
  %v4933 = vadd.f32 %v4764, %v4932
  %4934 = vmatmul.bf16.gmra.mxu0 %v575
  %v4935 = vpop.f32.mrf.mxu0
  %v4936 = vadd.f32 %v4767, %v4935
  %v4937 = vpop.f32.mrf.mxu0
  %v4938 = vadd.f32 %v4769, %v4937
  %4939 = vmatmul.bf16.gmra.mxu0 %v582
  %v4940 = vpop.f32.mrf.mxu0
  %v4941 = vadd.f32 %v4772, %v4940
  %v4942 = vpop.f32.mrf.mxu0
  %v4943 = vadd.f32 %v4774, %v4942
  %4944 = vmatmul.bf16.gmra.mxu0 %v589
  %v4945 = vpop.f32.mrf.mxu0
  %v4946 = vadd.f32 %v4777, %v4945
  %v4947 = vpop.f32.mrf.mxu0
  %v4948 = vadd.f32 %v4779, %v4947
  %4949 = vmatmul.bf16.gmra.mxu0 %v596
  %v4950 = vpop.f32.mrf.mxu0
  %v4951 = vadd.f32 %v4782, %v4950
  %v4952 = vpop.f32.mrf.mxu0
  %v4953 = vadd.f32 %v4784, %v4952
  %4954 = vmatmul.bf16.gmra.mxu0 %v603
  %v4955 = vpop.f32.mrf.mxu0
  %v4956 = vadd.f32 %v4787, %v4955
  %v4957 = vpop.f32.mrf.mxu0
  %v4958 = vadd.f32 %v4789, %v4957
  %4959 = vmatmul.bf16.gmra.mxu0 %v610
  %v4960 = vpop.f32.mrf.mxu0
  %v4961 = vadd.f32 %v4792, %v4960
  %v4962 = vpop.f32.mrf.mxu0
  %v4963 = vadd.f32 %v4794, %v4962
  %4964 = vmatmul.bf16.gmra.mxu0 %v617
  %v4965 = vpop.f32.mrf.mxu0
  %v4966 = vadd.f32 %v4797, %v4965
  %v4967 = vpop.f32.mrf.mxu0
  %v4968 = vadd.f32 %v4799, %v4967
  %4969 = vmatmul.bf16.gmra.mxu0 %v624
  %v4970 = vpop.f32.mrf.mxu0
  %v4971 = vadd.f32 %v4802, %v4970
  %v4972 = vpop.f32.mrf.mxu0
  %v4973 = vadd.f32 %v4804, %v4972
  %4974 = vmatmul.bf16.gmra.mxu0 %v631
  %v4975 = vpop.f32.mrf.mxu0
  %v4976 = vadd.f32 %v4807, %v4975
  %v4977 = vpop.f32.mrf.mxu0
  %v4978 = vadd.f32 %v4809, %v4977
  %4979 = vmatmul.bf16.gmra.mxu0 %v638
  %v4980 = vpop.f32.mrf.mxu0
  %v4981 = vadd.f32 %v4812, %v4980
  %v4982 = vpop.f32.mrf.mxu0
  %v4983 = vadd.f32 %v4814, %v4982
  %4984 = vmatmul.bf16.gmra.mxu0 %v645
  %v4985 = vpop.f32.mrf.mxu0
  %v4986 = vadd.f32 %v4817, %v4985
  %v4987 = vpop.f32.mrf.mxu0
  %v4988 = vadd.f32 %v4819, %v4987
  %4989 = vmatmul.bf16.gmra.mxu0 %v652
  %v4990 = vpop.f32.mrf.mxu0
  %v4991 = vadd.f32 %v4822, %v4990
  %v4992 = vpop.f32.mrf.mxu0
  %v4993 = vadd.f32 %v4824, %v4992
  %4994 = vmatmul.bf16.gmra.mxu0 %v659
  %v4995 = vpop.f32.mrf.mxu0
  %v4996 = vadd.f32 %v4827, %v4995
  %v4997 = vpop.f32.mrf.mxu0
  %v4998 = vadd.f32 %v4829, %v4997
  %4999 = vmatmul.bf16.gmra.mxu0 %v666
  %v5000 = vpop.f32.mrf.mxu0
  %v5001 = vadd.f32 %v4832, %v5000
  %v5002 = vpop.f32.mrf.mxu0
  %v5003 = vadd.f32 %v4834, %v5002
  %5004 = vmatmul.bf16.gmra.mxu0 %v673
  %v5005 = vpop.f32.mrf.mxu0
  %v5006 = vadd.f32 %v4837, %v5005
  %v5007 = vpop.f32.mrf.mxu0
  %v5008 = vadd.f32 %v4839, %v5007
  %5009 = vmatmul.bf16.gmra.mxu0 %v680
  %v5010 = vpop.f32.mrf.mxu0
  %v5011 = vadd.f32 %v4842, %v5010
  %v5012 = vpop.f32.mrf.mxu0
  %v5013 = vadd.f32 %v4844, %v5012
  %5014 = vmatmul.bf16.gmra.mxu0 %v687
  %v5015 = vpop.f32.mrf.mxu0
  %v5016 = vadd.f32 %v4847, %v5015
  %v5017 = vpop.f32.mrf.mxu0
  %v5018 = vadd.f32 %v4849, %v5017
  %5019 = vmatmul.bf16.gmra.mxu0 %v694
  %v5020 = vpop.f32.mrf.mxu0
  %v5021 = vadd.f32 %v4852, %v5020
  %v5022 = vpop.f32.mrf.mxu0
  %v5023 = vadd.f32 %v4854, %v5022
  %5024 = vmatmul.bf16.gmra.mxu0 %v701
  %v5025 = vpop.f32.mrf.mxu0
  %v5026 = vadd.f32 %v4857, %v5025
  %v5027 = vpop.f32.mrf.mxu0
  %v5028 = vadd.f32 %v4859, %v5027
  %5029 = vdwg.mxu0
  %5030 = vmatpush.bf16.msra.mxu0 %v1657
  %5031 = vmatpush.bf16.msra.mxu0 %v1653
  %5032 = vmatpush.bf16.msra.mxu0 %v1649
  %5033 = vmatpush.bf16.msra.mxu0 %v1645
  %5034 = vmatpush.bf16.msra.mxu0 %v1641
  %5035 = vmatpush.bf16.msra.mxu0 %v1637
  %5036 = vmatpush.bf16.msra.mxu0 %v1633
  %5037 = vmatpush.bf16.msra.mxu0 %v1629
  %5038 = vmatmul.bf16.gmra.mxu0 %v485
  %v5039 = vpop.f32.mrf.mxu0
  %v5040 = vadd.f32 %v4871, %v5039
  %v5041 = vpop.f32.mrf.mxu0
  %v5042 = vadd.f32 %v4873, %v5041
  %5043 = vmatmul.bf16.gmra.mxu0 %v492
  %v5044 = vpop.f32.mrf.mxu0
  %v5045 = vadd.f32 %v4876, %v5044
  %v5046 = vpop.f32.mrf.mxu0
  %v5047 = vadd.f32 %v4878, %v5046
  %5048 = vmatmul.bf16.gmra.mxu0 %v499
  %v5049 = vpop.f32.mrf.mxu0
  %v5050 = vadd.f32 %v4881, %v5049
  %v5051 = vpop.f32.mrf.mxu0
  %v5052 = vadd.f32 %v4883, %v5051
  %5053 = vmatmul.bf16.gmra.mxu0 %v506
  %v5054 = vpop.f32.mrf.mxu0
  %v5055 = vadd.f32 %v4886, %v5054
  %v5056 = vpop.f32.mrf.mxu0
  %v5057 = vadd.f32 %v4888, %v5056
  %5058 = vmatmul.bf16.gmra.mxu0 %v513
  %v5059 = vpop.f32.mrf.mxu0
  %v5060 = vadd.f32 %v4891, %v5059
  %v5061 = vpop.f32.mrf.mxu0
  %v5062 = vadd.f32 %v4893, %v5061
  %5063 = vmatmul.bf16.gmra.mxu0 %v520
  %v5064 = vpop.f32.mrf.mxu0
  %v5065 = vadd.f32 %v4896, %v5064
  %v5066 = vpop.f32.mrf.mxu0
  %v5067 = vadd.f32 %v4898, %v5066
  %5068 = vmatmul.bf16.gmra.mxu0 %v527
  %v5069 = vpop.f32.mrf.mxu0
  %v5070 = vadd.f32 %v4901, %v5069
  %v5071 = vpop.f32.mrf.mxu0
  %v5072 = vadd.f32 %v4903, %v5071
  %5073 = vmatmul.bf16.gmra.mxu0 %v534
  %v5074 = vpop.f32.mrf.mxu0
  %v5075 = vadd.f32 %v4906, %v5074
  %v5076 = vpop.f32.mrf.mxu0
  %v5077 = vadd.f32 %v4908, %v5076
  %5078 = vmatmul.bf16.gmra.mxu0 %v541
  %v5079 = vpop.f32.mrf.mxu0
  %v5080 = vadd.f32 %v4911, %v5079
  %v5081 = vpop.f32.mrf.mxu0
  %v5082 = vadd.f32 %v4913, %v5081
  %5083 = vmatmul.bf16.gmra.mxu0 %v548
  %v5084 = vpop.f32.mrf.mxu0
  %v5085 = vadd.f32 %v4916, %v5084
  %v5086 = vpop.f32.mrf.mxu0
  %v5087 = vadd.f32 %v4918, %v5086
  %5088 = vmatmul.bf16.gmra.mxu0 %v555
  %v5089 = vpop.f32.mrf.mxu0
  %v5090 = vadd.f32 %v4921, %v5089
  %v5091 = vpop.f32.mrf.mxu0
  %v5092 = vadd.f32 %v4923, %v5091
  %5093 = vmatmul.bf16.gmra.mxu0 %v562
  %v5094 = vpop.f32.mrf.mxu0
  %v5095 = vadd.f32 %v4926, %v5094
  %v5096 = vpop.f32.mrf.mxu0
  %v5097 = vadd.f32 %v4928, %v5096
  %5098 = vmatmul.bf16.gmra.mxu0 %v569
  %v5099 = vpop.f32.mrf.mxu0
  %v5100 = vadd.f32 %v4931, %v5099
  %v5101 = vpop.f32.mrf.mxu0
  %v5102 = vadd.f32 %v4933, %v5101
  %5103 = vmatmul.bf16.gmra.mxu0 %v576
  %v5104 = vpop.f32.mrf.mxu0
  %v5105 = vadd.f32 %v4936, %v5104
  %v5106 = vpop.f32.mrf.mxu0
  %v5107 = vadd.f32 %v4938, %v5106
  %5108 = vmatmul.bf16.gmra.mxu0 %v583
  %v5109 = vpop.f32.mrf.mxu0
  %v5110 = vadd.f32 %v4941, %v5109
  %v5111 = vpop.f32.mrf.mxu0
  %v5112 = vadd.f32 %v4943, %v5111
  %5113 = vmatmul.bf16.gmra.mxu0 %v590
  %v5114 = vpop.f32.mrf.mxu0
  %v5115 = vadd.f32 %v4946, %v5114
  %v5116 = vpop.f32.mrf.mxu0
  %v5117 = vadd.f32 %v4948, %v5116
  %5118 = vmatmul.bf16.gmra.mxu0 %v597
  %v5119 = vpop.f32.mrf.mxu0
  %v5120 = vadd.f32 %v4951, %v5119
  %v5121 = vpop.f32.mrf.mxu0
  %v5122 = vadd.f32 %v4953, %v5121
  %5123 = vmatmul.bf16.gmra.mxu0 %v604
  %v5124 = vpop.f32.mrf.mxu0
  %v5125 = vadd.f32 %v4956, %v5124
  %v5126 = vpop.f32.mrf.mxu0
  %v5127 = vadd.f32 %v4958, %v5126
  %5128 = vmatmul.bf16.gmra.mxu0 %v611
  %v5129 = vpop.f32.mrf.mxu0
  %v5130 = vadd.f32 %v4961, %v5129
  %v5131 = vpop.f32.mrf.mxu0
  %v5132 = vadd.f32 %v4963, %v5131
  %5133 = vmatmul.bf16.gmra.mxu0 %v618
  %v5134 = vpop.f32.mrf.mxu0
  %v5135 = vadd.f32 %v4966, %v5134
  %v5136 = vpop.f32.mrf.mxu0
  %v5137 = vadd.f32 %v4968, %v5136
  %5138 = vmatmul.bf16.gmra.mxu0 %v625
  %v5139 = vpop.f32.mrf.mxu0
  %v5140 = vadd.f32 %v4971, %v5139
  %v5141 = vpop.f32.mrf.mxu0
  %v5142 = vadd.f32 %v4973, %v5141
  %5143 = vmatmul.bf16.gmra.mxu0 %v632
  %v5144 = vpop.f32.mrf.mxu0
  %v5145 = vadd.f32 %v4976, %v5144
  %v5146 = vpop.f32.mrf.mxu0
  %v5147 = vadd.f32 %v4978, %v5146
  %5148 = vmatmul.bf16.gmra.mxu0 %v639
  %v5149 = vpop.f32.mrf.mxu0
  %v5150 = vadd.f32 %v4981, %v5149
  %v5151 = vpop.f32.mrf.mxu0
  %v5152 = vadd.f32 %v4983, %v5151
  %5153 = vmatmul.bf16.gmra.mxu0 %v646
  %v5154 = vpop.f32.mrf.mxu0
  %v5155 = vadd.f32 %v4986, %v5154
  %v5156 = vpop.f32.mrf.mxu0
  %v5157 = vadd.f32 %v4988, %v5156
  %5158 = vmatmul.bf16.gmra.mxu0 %v653
  %v5159 = vpop.f32.mrf.mxu0
  %v5160 = vadd.f32 %v4991, %v5159
  %v5161 = vpop.f32.mrf.mxu0
  %v5162 = vadd.f32 %v4993, %v5161
  %5163 = vmatmul.bf16.gmra.mxu0 %v660
  %v5164 = vpop.f32.mrf.mxu0
  %v5165 = vadd.f32 %v4996, %v5164
  %v5166 = vpop.f32.mrf.mxu0
  %v5167 = vadd.f32 %v4998, %v5166
  %5168 = vmatmul.bf16.gmra.mxu0 %v667
  %v5169 = vpop.f32.mrf.mxu0
  %v5170 = vadd.f32 %v5001, %v5169
  %v5171 = vpop.f32.mrf.mxu0
  %v5172 = vadd.f32 %v5003, %v5171
  %5173 = vmatmul.bf16.gmra.mxu0 %v674
  %v5174 = vpop.f32.mrf.mxu0
  %v5175 = vadd.f32 %v5006, %v5174
  %v5176 = vpop.f32.mrf.mxu0
  %v5177 = vadd.f32 %v5008, %v5176
  %5178 = vmatmul.bf16.gmra.mxu0 %v681
  %v5179 = vpop.f32.mrf.mxu0
  %v5180 = vadd.f32 %v5011, %v5179
  %v5181 = vpop.f32.mrf.mxu0
  %v5182 = vadd.f32 %v5013, %v5181
  %5183 = vmatmul.bf16.gmra.mxu0 %v688
  %v5184 = vpop.f32.mrf.mxu0
  %v5185 = vadd.f32 %v5016, %v5184
  %v5186 = vpop.f32.mrf.mxu0
  %v5187 = vadd.f32 %v5018, %v5186
  %5188 = vmatmul.bf16.gmra.mxu0 %v695
  %v5189 = vpop.f32.mrf.mxu0
  %v5190 = vadd.f32 %v5021, %v5189
  %v5191 = vpop.f32.mrf.mxu0
  %v5192 = vadd.f32 %v5023, %v5191
  %5193 = vmatmul.bf16.gmra.mxu0 %v702
  %v5194 = vpop.f32.mrf.mxu0
  %v5195 = vadd.f32 %v5026, %v5194
  %v5196 = vpop.f32.mrf.mxu0
  %v5197 = vadd.f32 %v5028, %v5196
  %5198 = vdwg.mxu0
  %5199 = vmatpush.bf16.msra.mxu0 %v1689
  %5200 = vmatpush.bf16.msra.mxu0 %v1685
  %5201 = vmatpush.bf16.msra.mxu0 %v1681
  %5202 = vmatpush.bf16.msra.mxu0 %v1677
  %5203 = vmatpush.bf16.msra.mxu0 %v1673
  %5204 = vmatpush.bf16.msra.mxu0 %v1669
  %5205 = vmatpush.bf16.msra.mxu0 %v1665
  %5206 = vmatpush.bf16.msra.mxu0 %v1661
  %5207 = vmatmul.bf16.gmra.mxu0 %v486
  %v5208 = vpop.f32.mrf.mxu0
  %v5209 = vadd.f32 %v5040, %v5208
  %v5210 = vpop.f32.mrf.mxu0
  %v5211 = vadd.f32 %v5042, %v5210
  %5212 = vmatmul.bf16.gmra.mxu0 %v493
  %v5213 = vpop.f32.mrf.mxu0
  %v5214 = vadd.f32 %v5045, %v5213
  %v5215 = vpop.f32.mrf.mxu0
  %v5216 = vadd.f32 %v5047, %v5215
  %5217 = vmatmul.bf16.gmra.mxu0 %v500
  %v5218 = vpop.f32.mrf.mxu0
  %v5219 = vadd.f32 %v5050, %v5218
  %v5220 = vpop.f32.mrf.mxu0
  %v5221 = vadd.f32 %v5052, %v5220
  %5222 = vmatmul.bf16.gmra.mxu0 %v507
  %v5223 = vpop.f32.mrf.mxu0
  %v5224 = vadd.f32 %v5055, %v5223
  %v5225 = vpop.f32.mrf.mxu0
  %v5226 = vadd.f32 %v5057, %v5225
  %5227 = vmatmul.bf16.gmra.mxu0 %v514
  %v5228 = vpop.f32.mrf.mxu0
  %v5229 = vadd.f32 %v5060, %v5228
  %v5230 = vpop.f32.mrf.mxu0
  %v5231 = vadd.f32 %v5062, %v5230
  %5232 = vmatmul.bf16.gmra.mxu0 %v521
  %v5233 = vpop.f32.mrf.mxu0
  %v5234 = vadd.f32 %v5065, %v5233
  %v5235 = vpop.f32.mrf.mxu0
  %v5236 = vadd.f32 %v5067, %v5235
  %5237 = vmatmul.bf16.gmra.mxu0 %v528
  %v5238 = vpop.f32.mrf.mxu0
  %v5239 = vadd.f32 %v5070, %v5238
  %v5240 = vpop.f32.mrf.mxu0
  %v5241 = vadd.f32 %v5072, %v5240
  %5242 = vmatmul.bf16.gmra.mxu0 %v535
  %v5243 = vpop.f32.mrf.mxu0
  %v5244 = vadd.f32 %v5075, %v5243
  %v5245 = vpop.f32.mrf.mxu0
  %v5246 = vadd.f32 %v5077, %v5245
  %5247 = vmatmul.bf16.gmra.mxu0 %v542
  %v5248 = vpop.f32.mrf.mxu0
  %v5249 = vadd.f32 %v5080, %v5248
  %v5250 = vpop.f32.mrf.mxu0
  %v5251 = vadd.f32 %v5082, %v5250
  %5252 = vmatmul.bf16.gmra.mxu0 %v549
  %v5253 = vpop.f32.mrf.mxu0
  %v5254 = vadd.f32 %v5085, %v5253
  %v5255 = vpop.f32.mrf.mxu0
  %v5256 = vadd.f32 %v5087, %v5255
  %5257 = vmatmul.bf16.gmra.mxu0 %v556
  %v5258 = vpop.f32.mrf.mxu0
  %v5259 = vadd.f32 %v5090, %v5258
  %v5260 = vpop.f32.mrf.mxu0
  %v5261 = vadd.f32 %v5092, %v5260
  %5262 = vmatmul.bf16.gmra.mxu0 %v563
  %v5263 = vpop.f32.mrf.mxu0
  %v5264 = vadd.f32 %v5095, %v5263
  %v5265 = vpop.f32.mrf.mxu0
  %v5266 = vadd.f32 %v5097, %v5265
  %5267 = vmatmul.bf16.gmra.mxu0 %v570
  %v5268 = vpop.f32.mrf.mxu0
  %v5269 = vadd.f32 %v5100, %v5268
  %v5270 = vpop.f32.mrf.mxu0
  %v5271 = vadd.f32 %v5102, %v5270
  %5272 = vmatmul.bf16.gmra.mxu0 %v577
  %v5273 = vpop.f32.mrf.mxu0
  %v5274 = vadd.f32 %v5105, %v5273
  %v5275 = vpop.f32.mrf.mxu0
  %v5276 = vadd.f32 %v5107, %v5275
  %5277 = vmatmul.bf16.gmra.mxu0 %v584
  %v5278 = vpop.f32.mrf.mxu0
  %v5279 = vadd.f32 %v5110, %v5278
  %v5280 = vpop.f32.mrf.mxu0
  %v5281 = vadd.f32 %v5112, %v5280
  %5282 = vmatmul.bf16.gmra.mxu0 %v591
  %v5283 = vpop.f32.mrf.mxu0
  %v5284 = vadd.f32 %v5115, %v5283
  %v5285 = vpop.f32.mrf.mxu0
  %v5286 = vadd.f32 %v5117, %v5285
  %5287 = vmatmul.bf16.gmra.mxu0 %v598
  %v5288 = vpop.f32.mrf.mxu0
  %v5289 = vadd.f32 %v5120, %v5288
  %v5290 = vpop.f32.mrf.mxu0
  %v5291 = vadd.f32 %v5122, %v5290
  %5292 = vmatmul.bf16.gmra.mxu0 %v605
  %v5293 = vpop.f32.mrf.mxu0
  %v5294 = vadd.f32 %v5125, %v5293
  %v5295 = vpop.f32.mrf.mxu0
  %v5296 = vadd.f32 %v5127, %v5295
  %5297 = vmatmul.bf16.gmra.mxu0 %v612
  %v5298 = vpop.f32.mrf.mxu0
  %v5299 = vadd.f32 %v5130, %v5298
  %v5300 = vpop.f32.mrf.mxu0
  %v5301 = vadd.f32 %v5132, %v5300
  %5302 = vmatmul.bf16.gmra.mxu0 %v619
  %v5303 = vpop.f32.mrf.mxu0
  %v5304 = vadd.f32 %v5135, %v5303
  %v5305 = vpop.f32.mrf.mxu0
  %v5306 = vadd.f32 %v5137, %v5305
  %5307 = vmatmul.bf16.gmra.mxu0 %v626
  %v5308 = vpop.f32.mrf.mxu0
  %v5309 = vadd.f32 %v5140, %v5308
  %v5310 = vpop.f32.mrf.mxu0
  %v5311 = vadd.f32 %v5142, %v5310
  %5312 = vmatmul.bf16.gmra.mxu0 %v633
  %v5313 = vpop.f32.mrf.mxu0
  %v5314 = vadd.f32 %v5145, %v5313
  %v5315 = vpop.f32.mrf.mxu0
  %v5316 = vadd.f32 %v5147, %v5315
  %5317 = vmatmul.bf16.gmra.mxu0 %v640
  %v5318 = vpop.f32.mrf.mxu0
  %v5319 = vadd.f32 %v5150, %v5318
  %v5320 = vpop.f32.mrf.mxu0
  %v5321 = vadd.f32 %v5152, %v5320
  %5322 = vmatmul.bf16.gmra.mxu0 %v647
  %v5323 = vpop.f32.mrf.mxu0
  %v5324 = vadd.f32 %v5155, %v5323
  %v5325 = vpop.f32.mrf.mxu0
  %v5326 = vadd.f32 %v5157, %v5325
  %5327 = vmatmul.bf16.gmra.mxu0 %v654
  %v5328 = vpop.f32.mrf.mxu0
  %v5329 = vadd.f32 %v5160, %v5328
  %v5330 = vpop.f32.mrf.mxu0
  %v5331 = vadd.f32 %v5162, %v5330
  %5332 = vmatmul.bf16.gmra.mxu0 %v661
  %v5333 = vpop.f32.mrf.mxu0
  %v5334 = vadd.f32 %v5165, %v5333
  %v5335 = vpop.f32.mrf.mxu0
  %v5336 = vadd.f32 %v5167, %v5335
  %5337 = vmatmul.bf16.gmra.mxu0 %v668
  %v5338 = vpop.f32.mrf.mxu0
  %v5339 = vadd.f32 %v5170, %v5338
  %v5340 = vpop.f32.mrf.mxu0
  %v5341 = vadd.f32 %v5172, %v5340
  %5342 = vmatmul.bf16.gmra.mxu0 %v675
  %v5343 = vpop.f32.mrf.mxu0
  %v5344 = vadd.f32 %v5175, %v5343
  %v5345 = vpop.f32.mrf.mxu0
  %v5346 = vadd.f32 %v5177, %v5345
  %5347 = vmatmul.bf16.gmra.mxu0 %v682
  %v5348 = vpop.f32.mrf.mxu0
  %v5349 = vadd.f32 %v5180, %v5348
  %v5350 = vpop.f32.mrf.mxu0
  %v5351 = vadd.f32 %v5182, %v5350
  %5352 = vmatmul.bf16.gmra.mxu0 %v689
  %v5353 = vpop.f32.mrf.mxu0
  %v5354 = vadd.f32 %v5185, %v5353
  %v5355 = vpop.f32.mrf.mxu0
  %v5356 = vadd.f32 %v5187, %v5355
  %5357 = vmatmul.bf16.gmra.mxu0 %v696
  %v5358 = vpop.f32.mrf.mxu0
  %v5359 = vadd.f32 %v5190, %v5358
  %v5360 = vpop.f32.mrf.mxu0
  %v5361 = vadd.f32 %v5192, %v5360
  %5362 = vmatmul.bf16.gmra.mxu0 %v703
  %v5363 = vpop.f32.mrf.mxu0
  %v5364 = vadd.f32 %v5195, %v5363
  %v5365 = vpop.f32.mrf.mxu0
  %v5366 = vadd.f32 %v5197, %v5365
  %5367 = vdwg.mxu0
  %5368 = vmatpush.bf16.msra.mxu0 0
  %5369 = vmatpush.bf16.msra.mxu0 0
  %5370 = vmatpush.bf16.msra.mxu0 0
  %5371 = vmatpush.bf16.msra.mxu0 0
  %5372 = vmatpush.bf16.msra.mxu0 0
  %5373 = vmatpush.bf16.msra.mxu0 0
  %5374 = vmatpush.bf16.msra.mxu0 0
  %5375 = vmatpush.bf16.msra.mxu0 %v1693
  %5376 = vmatmul.bf16.gmra.mxu0 %v1893
  %v5377 = vpop.f32.mrf.mxu0
  %v5378 = vadd.f32 %v5209, %v5377
  %v5379 = vpop.f32.mrf.mxu0
  %v5380 = vadd.f32 %v5211, %v5379
  %5381 = vmatmul.bf16.gmra.mxu0 %v1896
  %v5382 = vpop.f32.mrf.mxu0
  %v5383 = vadd.f32 %v5214, %v5382
  %v5384 = vpop.f32.mrf.mxu0
  %v5385 = vadd.f32 %v5216, %v5384
  %5386 = vmatmul.bf16.gmra.mxu0 %v1899
  %v5387 = vpop.f32.mrf.mxu0
  %v5388 = vadd.f32 %v5219, %v5387
  %v5389 = vpop.f32.mrf.mxu0
  %v5390 = vadd.f32 %v5221, %v5389
  %5391 = vmatmul.bf16.gmra.mxu0 %v1902
  %v5392 = vpop.f32.mrf.mxu0
  %v5393 = vadd.f32 %v5224, %v5392
  %v5394 = vpop.f32.mrf.mxu0
  %v5395 = vadd.f32 %v5226, %v5394
  %5396 = vmatmul.bf16.gmra.mxu0 %v1905
  %v5397 = vpop.f32.mrf.mxu0
  %v5398 = vadd.f32 %v5229, %v5397
  %v5399 = vpop.f32.mrf.mxu0
  %v5400 = vadd.f32 %v5231, %v5399
  %5401 = vmatmul.bf16.gmra.mxu0 %v1908
  %v5402 = vpop.f32.mrf.mxu0
  %v5403 = vadd.f32 %v5234, %v5402
  %v5404 = vpop.f32.mrf.mxu0
  %v5405 = vadd.f32 %v5236, %v5404
  %5406 = vmatmul.bf16.gmra.mxu0 %v1911
  %v5407 = vpop.f32.mrf.mxu0
  %v5408 = vadd.f32 %v5239, %v5407
  %v5409 = vpop.f32.mrf.mxu0
  %v5410 = vadd.f32 %v5241, %v5409
  %5411 = vmatmul.bf16.gmra.mxu0 %v1914
  %v5412 = vpop.f32.mrf.mxu0
  %v5413 = vadd.f32 %v5244, %v5412
  %v5414 = vpop.f32.mrf.mxu0
  %v5415 = vadd.f32 %v5246, %v5414
  %5416 = vmatmul.bf16.gmra.mxu0 %v1917
  %v5417 = vpop.f32.mrf.mxu0
  %v5418 = vadd.f32 %v5249, %v5417
  %v5419 = vpop.f32.mrf.mxu0
  %v5420 = vadd.f32 %v5251, %v5419
  %5421 = vmatmul.bf16.gmra.mxu0 %v1920
  %v5422 = vpop.f32.mrf.mxu0
  %v5423 = vadd.f32 %v5254, %v5422
  %v5424 = vpop.f32.mrf.mxu0
  %v5425 = vadd.f32 %v5256, %v5424
  %5426 = vmatmul.bf16.gmra.mxu0 %v1923
  %v5427 = vpop.f32.mrf.mxu0
  %v5428 = vadd.f32 %v5259, %v5427
  %v5429 = vpop.f32.mrf.mxu0
  %v5430 = vadd.f32 %v5261, %v5429
  %5431 = vmatmul.bf16.gmra.mxu0 %v1926
  %v5432 = vpop.f32.mrf.mxu0
  %v5433 = vadd.f32 %v5264, %v5432
  %v5434 = vpop.f32.mrf.mxu0
  %v5435 = vadd.f32 %v5266, %v5434
  %5436 = vmatmul.bf16.gmra.mxu0 %v1929
  %v5437 = vpop.f32.mrf.mxu0
  %v5438 = vadd.f32 %v5269, %v5437
  %v5439 = vpop.f32.mrf.mxu0
  %v5440 = vadd.f32 %v5271, %v5439
  %5441 = vmatmul.bf16.gmra.mxu0 %v1932
  %v5442 = vpop.f32.mrf.mxu0
  %v5443 = vadd.f32 %v5274, %v5442
  %v5444 = vpop.f32.mrf.mxu0
  %v5445 = vadd.f32 %v5276, %v5444
  %5446 = vmatmul.bf16.gmra.mxu0 %v1935
  %v5447 = vpop.f32.mrf.mxu0
  %v5448 = vadd.f32 %v5279, %v5447
  %v5449 = vpop.f32.mrf.mxu0
  %v5450 = vadd.f32 %v5281, %v5449
  %5451 = vmatmul.bf16.gmra.mxu0 %v1938
  %v5452 = vpop.f32.mrf.mxu0
  %v5453 = vadd.f32 %v5284, %v5452
  %v5454 = vpop.f32.mrf.mxu0
  %v5455 = vadd.f32 %v5286, %v5454
  %5456 = vmatmul.bf16.gmra.mxu0 %v1941
  %v5457 = vpop.f32.mrf.mxu0
  %v5458 = vadd.f32 %v5289, %v5457
  %v5459 = vpop.f32.mrf.mxu0
  %v5460 = vadd.f32 %v5291, %v5459
  %5461 = vmatmul.bf16.gmra.mxu0 %v1944
  %v5462 = vpop.f32.mrf.mxu0
  %v5463 = vadd.f32 %v5294, %v5462
  %v5464 = vpop.f32.mrf.mxu0
  %v5465 = vadd.f32 %v5296, %v5464
  %5466 = vmatmul.bf16.gmra.mxu0 %v1947
  %v5467 = vpop.f32.mrf.mxu0
  %v5468 = vadd.f32 %v5299, %v5467
  %v5469 = vpop.f32.mrf.mxu0
  %v5470 = vadd.f32 %v5301, %v5469
  %5471 = vmatmul.bf16.gmra.mxu0 %v1950
  %v5472 = vpop.f32.mrf.mxu0
  %v5473 = vadd.f32 %v5304, %v5472
  %v5474 = vpop.f32.mrf.mxu0
  %v5475 = vadd.f32 %v5306, %v5474
  %5476 = vmatmul.bf16.gmra.mxu0 %v1953
  %v5477 = vpop.f32.mrf.mxu0
  %v5478 = vadd.f32 %v5309, %v5477
  %v5479 = vpop.f32.mrf.mxu0
  %v5480 = vadd.f32 %v5311, %v5479
  %5481 = vmatmul.bf16.gmra.mxu0 %v1956
  %v5482 = vpop.f32.mrf.mxu0
  %v5483 = vadd.f32 %v5314, %v5482
  %v5484 = vpop.f32.mrf.mxu0
  %v5485 = vadd.f32 %v5316, %v5484
  %5486 = vmatmul.bf16.gmra.mxu0 %v1959
  %v5487 = vpop.f32.mrf.mxu0
  %v5488 = vadd.f32 %v5319, %v5487
  %v5489 = vpop.f32.mrf.mxu0
  %v5490 = vadd.f32 %v5321, %v5489
  %5491 = vmatmul.bf16.gmra.mxu0 %v1962
  %v5492 = vpop.f32.mrf.mxu0
  %v5493 = vadd.f32 %v5324, %v5492
  %v5494 = vpop.f32.mrf.mxu0
  %v5495 = vadd.f32 %v5326, %v5494
  %5496 = vmatmul.bf16.gmra.mxu0 %v1965
  %v5497 = vpop.f32.mrf.mxu0
  %v5498 = vadd.f32 %v5329, %v5497
  %v5499 = vpop.f32.mrf.mxu0
  %v5500 = vadd.f32 %v5331, %v5499
  %5501 = vmatmul.bf16.gmra.mxu0 %v1968
  %v5502 = vpop.f32.mrf.mxu0
  %v5503 = vadd.f32 %v5334, %v5502
  %v5504 = vpop.f32.mrf.mxu0
  %v5505 = vadd.f32 %v5336, %v5504
  %5506 = vmatmul.bf16.gmra.mxu0 %v1971
  %v5507 = vpop.f32.mrf.mxu0
  %v5508 = vadd.f32 %v5339, %v5507
  %v5509 = vpop.f32.mrf.mxu0
  %v5510 = vadd.f32 %v5341, %v5509
  %5511 = vmatmul.bf16.gmra.mxu0 %v1974
  %v5512 = vpop.f32.mrf.mxu0
  %v5513 = vadd.f32 %v5344, %v5512
  %v5514 = vpop.f32.mrf.mxu0
  %v5515 = vadd.f32 %v5346, %v5514
  %5516 = vmatmul.bf16.gmra.mxu0 %v1977
  %v5517 = vpop.f32.mrf.mxu0
  %v5518 = vadd.f32 %v5349, %v5517
  %v5519 = vpop.f32.mrf.mxu0
  %v5520 = vadd.f32 %v5351, %v5519
  %5521 = vmatmul.bf16.gmra.mxu0 %v1980
  %v5522 = vpop.f32.mrf.mxu0
  %v5523 = vadd.f32 %v5354, %v5522
  %v5524 = vpop.f32.mrf.mxu0
  %v5525 = vadd.f32 %v5356, %v5524
  %5526 = vmatmul.bf16.gmra.mxu0 %v1983
  %v5527 = vpop.f32.mrf.mxu0
  %v5528 = vadd.f32 %v5359, %v5527
  %v5529 = vpop.f32.mrf.mxu0
  %v5530 = vadd.f32 %v5361, %v5529
  %5531 = vmatmul.bf16.gmra.mxu0 %v1986
  %v5532 = vpop.f32.mrf.mxu0
  %v5533 = vadd.f32 %v5364, %v5532
  %v5534 = vpop.f32.mrf.mxu0
  %v5535 = vadd.f32 %v5366, %v5534
  %5536 = vdwg.mxu0
  %5537 = vmatpush.bf16.msra.mxu0 %v1530
  %5538 = vmatpush.bf16.msra.mxu0 %v1526
  %5539 = vmatpush.bf16.msra.mxu0 %v1522
  %5540 = vmatpush.bf16.msra.mxu0 %v1518
  %5541 = vmatpush.bf16.msra.mxu0 %v1514
  %5542 = vmatpush.bf16.msra.mxu0 %v1510
  %5543 = vmatpush.bf16.msra.mxu0 %v1506
  %5544 = vmatpush.bf16.msra.mxu0 %v1502
  %5545 = vmatmul.bf16.gmra.mxu0 %v481
  %v5546 = vpop.f32.mrf.mxu0
  %v5547 = vadd.f32 %v906, %v5546
  %v5548 = vpop.f32.mrf.mxu0
  %v5549 = vadd.f32 %v906, %v5548
  %5550 = vmatmul.bf16.gmra.mxu0 %v488
  %v5551 = vpop.f32.mrf.mxu0
  %v5552 = vadd.f32 %v906, %v5551
  %v5553 = vpop.f32.mrf.mxu0
  %v5554 = vadd.f32 %v906, %v5553
  %5555 = vmatmul.bf16.gmra.mxu0 %v495
  %v5556 = vpop.f32.mrf.mxu0
  %v5557 = vadd.f32 %v906, %v5556
  %v5558 = vpop.f32.mrf.mxu0
  %v5559 = vadd.f32 %v906, %v5558
  %5560 = vmatmul.bf16.gmra.mxu0 %v502
  %v5561 = vpop.f32.mrf.mxu0
  %v5562 = vadd.f32 %v906, %v5561
  %v5563 = vpop.f32.mrf.mxu0
  %v5564 = vadd.f32 %v906, %v5563
  %5565 = vmatmul.bf16.gmra.mxu0 %v509
  %v5566 = vpop.f32.mrf.mxu0
  %v5567 = vadd.f32 %v906, %v5566
  %v5568 = vpop.f32.mrf.mxu0
  %v5569 = vadd.f32 %v906, %v5568
  %5570 = vmatmul.bf16.gmra.mxu0 %v516
  %v5571 = vpop.f32.mrf.mxu0
  %v5572 = vadd.f32 %v906, %v5571
  %v5573 = vpop.f32.mrf.mxu0
  %v5574 = vadd.f32 %v906, %v5573
  %5575 = vmatmul.bf16.gmra.mxu0 %v523
  %v5576 = vpop.f32.mrf.mxu0
  %v5577 = vadd.f32 %v906, %v5576
  %v5578 = vpop.f32.mrf.mxu0
  %v5579 = vadd.f32 %v906, %v5578
  %5580 = vmatmul.bf16.gmra.mxu0 %v530
  %v5581 = vpop.f32.mrf.mxu0
  %v5582 = vadd.f32 %v906, %v5581
  %v5583 = vpop.f32.mrf.mxu0
  %v5584 = vadd.f32 %v906, %v5583
  %5585 = vmatmul.bf16.gmra.mxu0 %v537
  %v5586 = vpop.f32.mrf.mxu0
  %v5587 = vadd.f32 %v906, %v5586
  %v5588 = vpop.f32.mrf.mxu0
  %v5589 = vadd.f32 %v906, %v5588
  %5590 = vmatmul.bf16.gmra.mxu0 %v544
  %v5591 = vpop.f32.mrf.mxu0
  %v5592 = vadd.f32 %v906, %v5591
  %v5593 = vpop.f32.mrf.mxu0
  %v5594 = vadd.f32 %v906, %v5593
  %5595 = vmatmul.bf16.gmra.mxu0 %v551
  %v5596 = vpop.f32.mrf.mxu0
  %v5597 = vadd.f32 %v906, %v5596
  %v5598 = vpop.f32.mrf.mxu0
  %v5599 = vadd.f32 %v906, %v5598
  %5600 = vmatmul.bf16.gmra.mxu0 %v558
  %v5601 = vpop.f32.mrf.mxu0
  %v5602 = vadd.f32 %v906, %v5601
  %v5603 = vpop.f32.mrf.mxu0
  %v5604 = vadd.f32 %v906, %v5603
  %5605 = vmatmul.bf16.gmra.mxu0 %v565
  %v5606 = vpop.f32.mrf.mxu0
  %v5607 = vadd.f32 %v906, %v5606
  %v5608 = vpop.f32.mrf.mxu0
  %v5609 = vadd.f32 %v906, %v5608
  %5610 = vmatmul.bf16.gmra.mxu0 %v572
  %v5611 = vpop.f32.mrf.mxu0
  %v5612 = vadd.f32 %v906, %v5611
  %v5613 = vpop.f32.mrf.mxu0
  %v5614 = vadd.f32 %v906, %v5613
  %5615 = vmatmul.bf16.gmra.mxu0 %v579
  %v5616 = vpop.f32.mrf.mxu0
  %v5617 = vadd.f32 %v906, %v5616
  %v5618 = vpop.f32.mrf.mxu0
  %v5619 = vadd.f32 %v906, %v5618
  %5620 = vmatmul.bf16.gmra.mxu0 %v586
  %v5621 = vpop.f32.mrf.mxu0
  %v5622 = vadd.f32 %v906, %v5621
  %v5623 = vpop.f32.mrf.mxu0
  %v5624 = vadd.f32 %v906, %v5623
  %5625 = vmatmul.bf16.gmra.mxu0 %v593
  %v5626 = vpop.f32.mrf.mxu0
  %v5627 = vadd.f32 %v906, %v5626
  %v5628 = vpop.f32.mrf.mxu0
  %v5629 = vadd.f32 %v906, %v5628
  %5630 = vmatmul.bf16.gmra.mxu0 %v600
  %v5631 = vpop.f32.mrf.mxu0
  %v5632 = vadd.f32 %v906, %v5631
  %v5633 = vpop.f32.mrf.mxu0
  %v5634 = vadd.f32 %v906, %v5633
  %5635 = vmatmul.bf16.gmra.mxu0 %v607
  %v5636 = vpop.f32.mrf.mxu0
  %v5637 = vadd.f32 %v906, %v5636
  %v5638 = vpop.f32.mrf.mxu0
  %v5639 = vadd.f32 %v906, %v5638
  %5640 = vmatmul.bf16.gmra.mxu0 %v614
  %v5641 = vpop.f32.mrf.mxu0
  %v5642 = vadd.f32 %v906, %v5641
  %v5643 = vpop.f32.mrf.mxu0
  %v5644 = vadd.f32 %v906, %v5643
  %5645 = vmatmul.bf16.gmra.mxu0 %v621
  %v5646 = vpop.f32.mrf.mxu0
  %v5647 = vadd.f32 %v906, %v5646
  %v5648 = vpop.f32.mrf.mxu0
  %v5649 = vadd.f32 %v906, %v5648
  %5650 = vmatmul.bf16.gmra.mxu0 %v628
  %v5651 = vpop.f32.mrf.mxu0
  %v5652 = vadd.f32 %v906, %v5651
  %v5653 = vpop.f32.mrf.mxu0
  %v5654 = vadd.f32 %v906, %v5653
  %5655 = vmatmul.bf16.gmra.mxu0 %v635
  %v5656 = vpop.f32.mrf.mxu0
  %v5657 = vadd.f32 %v906, %v5656
  %v5658 = vpop.f32.mrf.mxu0
  %v5659 = vadd.f32 %v906, %v5658
  %5660 = vmatmul.bf16.gmra.mxu0 %v642
  %v5661 = vpop.f32.mrf.mxu0
  %v5662 = vadd.f32 %v906, %v5661
  %v5663 = vpop.f32.mrf.mxu0
  %v5664 = vadd.f32 %v906, %v5663
  %5665 = vmatmul.bf16.gmra.mxu0 %v649
  %v5666 = vpop.f32.mrf.mxu0
  %v5667 = vadd.f32 %v906, %v5666
  %v5668 = vpop.f32.mrf.mxu0
  %v5669 = vadd.f32 %v906, %v5668
  %5670 = vmatmul.bf16.gmra.mxu0 %v656
  %v5671 = vpop.f32.mrf.mxu0
  %v5672 = vadd.f32 %v906, %v5671
  %v5673 = vpop.f32.mrf.mxu0
  %v5674 = vadd.f32 %v906, %v5673
  %5675 = vmatmul.bf16.gmra.mxu0 %v663
  %v5676 = vpop.f32.mrf.mxu0
  %v5677 = vadd.f32 %v906, %v5676
  %v5678 = vpop.f32.mrf.mxu0
  %v5679 = vadd.f32 %v906, %v5678
  %5680 = vmatmul.bf16.gmra.mxu0 %v670
  %v5681 = vpop.f32.mrf.mxu0
  %v5682 = vadd.f32 %v906, %v5681
  %v5683 = vpop.f32.mrf.mxu0
  %v5684 = vadd.f32 %v906, %v5683
  %5685 = vmatmul.bf16.gmra.mxu0 %v677
  %v5686 = vpop.f32.mrf.mxu0
  %v5687 = vadd.f32 %v906, %v5686
  %v5688 = vpop.f32.mrf.mxu0
  %v5689 = vadd.f32 %v906, %v5688
  %5690 = vmatmul.bf16.gmra.mxu0 %v684
  %v5691 = vpop.f32.mrf.mxu0
  %v5692 = vadd.f32 %v906, %v5691
  %v5693 = vpop.f32.mrf.mxu0
  %v5694 = vadd.f32 %v906, %v5693
  %5695 = vmatmul.bf16.gmra.mxu0 %v691
  %v5696 = vpop.f32.mrf.mxu0
  %v5697 = vadd.f32 %v906, %v5696
  %v5698 = vpop.f32.mrf.mxu0
  %v5699 = vadd.f32 %v906, %v5698
  %5700 = vmatmul.bf16.gmra.mxu0 %v698
  %v5701 = vpop.f32.mrf.mxu0
  %v5702 = vadd.f32 %v906, %v5701
  %v5703 = vpop.f32.mrf.mxu0
  %v5704 = vadd.f32 %v906, %v5703
  %5705 = vdwg.mxu0
  %5706 = vmatpush.bf16.msra.mxu0 %v1562
  %5707 = vmatpush.bf16.msra.mxu0 %v1558
  %5708 = vmatpush.bf16.msra.mxu0 %v1554
  %5709 = vmatpush.bf16.msra.mxu0 %v1550
  %5710 = vmatpush.bf16.msra.mxu0 %v1546
  %5711 = vmatpush.bf16.msra.mxu0 %v1542
  %5712 = vmatpush.bf16.msra.mxu0 %v1538
  %5713 = vmatpush.bf16.msra.mxu0 %v1534
  %5714 = vmatmul.bf16.gmra.mxu0 %v482
  %v5715 = vpop.f32.mrf.mxu0
  %v5716 = vadd.f32 %v5547, %v5715
  %v5717 = vpop.f32.mrf.mxu0
  %v5718 = vadd.f32 %v5549, %v5717
  %5719 = vmatmul.bf16.gmra.mxu0 %v489
  %v5720 = vpop.f32.mrf.mxu0
  %v5721 = vadd.f32 %v5552, %v5720
  %v5722 = vpop.f32.mrf.mxu0
  %v5723 = vadd.f32 %v5554, %v5722
  %5724 = vmatmul.bf16.gmra.mxu0 %v496
  %v5725 = vpop.f32.mrf.mxu0
  %v5726 = vadd.f32 %v5557, %v5725
  %v5727 = vpop.f32.mrf.mxu0
  %v5728 = vadd.f32 %v5559, %v5727
  %5729 = vmatmul.bf16.gmra.mxu0 %v503
  %v5730 = vpop.f32.mrf.mxu0
  %v5731 = vadd.f32 %v5562, %v5730
  %v5732 = vpop.f32.mrf.mxu0
  %v5733 = vadd.f32 %v5564, %v5732
  %5734 = vmatmul.bf16.gmra.mxu0 %v510
  %v5735 = vpop.f32.mrf.mxu0
  %v5736 = vadd.f32 %v5567, %v5735
  %v5737 = vpop.f32.mrf.mxu0
  %v5738 = vadd.f32 %v5569, %v5737
  %5739 = vmatmul.bf16.gmra.mxu0 %v517
  %v5740 = vpop.f32.mrf.mxu0
  %v5741 = vadd.f32 %v5572, %v5740
  %v5742 = vpop.f32.mrf.mxu0
  %v5743 = vadd.f32 %v5574, %v5742
  %5744 = vmatmul.bf16.gmra.mxu0 %v524
  %v5745 = vpop.f32.mrf.mxu0
  %v5746 = vadd.f32 %v5577, %v5745
  %v5747 = vpop.f32.mrf.mxu0
  %v5748 = vadd.f32 %v5579, %v5747
  %5749 = vmatmul.bf16.gmra.mxu0 %v531
  %v5750 = vpop.f32.mrf.mxu0
  %v5751 = vadd.f32 %v5582, %v5750
  %v5752 = vpop.f32.mrf.mxu0
  %v5753 = vadd.f32 %v5584, %v5752
  %5754 = vmatmul.bf16.gmra.mxu0 %v538
  %v5755 = vpop.f32.mrf.mxu0
  %v5756 = vadd.f32 %v5587, %v5755
  %v5757 = vpop.f32.mrf.mxu0
  %v5758 = vadd.f32 %v5589, %v5757
  %5759 = vmatmul.bf16.gmra.mxu0 %v545
  %v5760 = vpop.f32.mrf.mxu0
  %v5761 = vadd.f32 %v5592, %v5760
  %v5762 = vpop.f32.mrf.mxu0
  %v5763 = vadd.f32 %v5594, %v5762
  %5764 = vmatmul.bf16.gmra.mxu0 %v552
  %v5765 = vpop.f32.mrf.mxu0
  %v5766 = vadd.f32 %v5597, %v5765
  %v5767 = vpop.f32.mrf.mxu0
  %v5768 = vadd.f32 %v5599, %v5767
  %5769 = vmatmul.bf16.gmra.mxu0 %v559
  %v5770 = vpop.f32.mrf.mxu0
  %v5771 = vadd.f32 %v5602, %v5770
  %v5772 = vpop.f32.mrf.mxu0
  %v5773 = vadd.f32 %v5604, %v5772
  %5774 = vmatmul.bf16.gmra.mxu0 %v566
  %v5775 = vpop.f32.mrf.mxu0
  %v5776 = vadd.f32 %v5607, %v5775
  %v5777 = vpop.f32.mrf.mxu0
  %v5778 = vadd.f32 %v5609, %v5777
  %5779 = vmatmul.bf16.gmra.mxu0 %v573
  %v5780 = vpop.f32.mrf.mxu0
  %v5781 = vadd.f32 %v5612, %v5780
  %v5782 = vpop.f32.mrf.mxu0
  %v5783 = vadd.f32 %v5614, %v5782
  %5784 = vmatmul.bf16.gmra.mxu0 %v580
  %v5785 = vpop.f32.mrf.mxu0
  %v5786 = vadd.f32 %v5617, %v5785
  %v5787 = vpop.f32.mrf.mxu0
  %v5788 = vadd.f32 %v5619, %v5787
  %5789 = vmatmul.bf16.gmra.mxu0 %v587
  %v5790 = vpop.f32.mrf.mxu0
  %v5791 = vadd.f32 %v5622, %v5790
  %v5792 = vpop.f32.mrf.mxu0
  %v5793 = vadd.f32 %v5624, %v5792
  %5794 = vmatmul.bf16.gmra.mxu0 %v594
  %v5795 = vpop.f32.mrf.mxu0
  %v5796 = vadd.f32 %v5627, %v5795
  %v5797 = vpop.f32.mrf.mxu0
  %v5798 = vadd.f32 %v5629, %v5797
  %5799 = vmatmul.bf16.gmra.mxu0 %v601
  %v5800 = vpop.f32.mrf.mxu0
  %v5801 = vadd.f32 %v5632, %v5800
  %v5802 = vpop.f32.mrf.mxu0
  %v5803 = vadd.f32 %v5634, %v5802
  %5804 = vmatmul.bf16.gmra.mxu0 %v608
  %v5805 = vpop.f32.mrf.mxu0
  %v5806 = vadd.f32 %v5637, %v5805
  %v5807 = vpop.f32.mrf.mxu0
  %v5808 = vadd.f32 %v5639, %v5807
  %5809 = vmatmul.bf16.gmra.mxu0 %v615
  %v5810 = vpop.f32.mrf.mxu0
  %v5811 = vadd.f32 %v5642, %v5810
  %v5812 = vpop.f32.mrf.mxu0
  %v5813 = vadd.f32 %v5644, %v5812
  %5814 = vmatmul.bf16.gmra.mxu0 %v622
  %v5815 = vpop.f32.mrf.mxu0
  %v5816 = vadd.f32 %v5647, %v5815
  %v5817 = vpop.f32.mrf.mxu0
  %v5818 = vadd.f32 %v5649, %v5817
  %5819 = vmatmul.bf16.gmra.mxu0 %v629
  %v5820 = vpop.f32.mrf.mxu0
  %v5821 = vadd.f32 %v5652, %v5820
  %v5822 = vpop.f32.mrf.mxu0
  %v5823 = vadd.f32 %v5654, %v5822
  %5824 = vmatmul.bf16.gmra.mxu0 %v636
  %v5825 = vpop.f32.mrf.mxu0
  %v5826 = vadd.f32 %v5657, %v5825
  %v5827 = vpop.f32.mrf.mxu0
  %v5828 = vadd.f32 %v5659, %v5827
  %5829 = vmatmul.bf16.gmra.mxu0 %v643
  %v5830 = vpop.f32.mrf.mxu0
  %v5831 = vadd.f32 %v5662, %v5830
  %v5832 = vpop.f32.mrf.mxu0
  %v5833 = vadd.f32 %v5664, %v5832
  %5834 = vmatmul.bf16.gmra.mxu0 %v650
  %v5835 = vpop.f32.mrf.mxu0
  %v5836 = vadd.f32 %v5667, %v5835
  %v5837 = vpop.f32.mrf.mxu0
  %v5838 = vadd.f32 %v5669, %v5837
  %5839 = vmatmul.bf16.gmra.mxu0 %v657
  %v5840 = vpop.f32.mrf.mxu0
  %v5841 = vadd.f32 %v5672, %v5840
  %v5842 = vpop.f32.mrf.mxu0
  %v5843 = vadd.f32 %v5674, %v5842
  %5844 = vmatmul.bf16.gmra.mxu0 %v664
  %v5845 = vpop.f32.mrf.mxu0
  %v5846 = vadd.f32 %v5677, %v5845
  %v5847 = vpop.f32.mrf.mxu0
  %v5848 = vadd.f32 %v5679, %v5847
  %5849 = vmatmul.bf16.gmra.mxu0 %v671
  %v5850 = vpop.f32.mrf.mxu0
  %v5851 = vadd.f32 %v5682, %v5850
  %v5852 = vpop.f32.mrf.mxu0
  %v5853 = vadd.f32 %v5684, %v5852
  %5854 = vmatmul.bf16.gmra.mxu0 %v678
  %v5855 = vpop.f32.mrf.mxu0
  %v5856 = vadd.f32 %v5687, %v5855
  %v5857 = vpop.f32.mrf.mxu0
  %v5858 = vadd.f32 %v5689, %v5857
  %5859 = vmatmul.bf16.gmra.mxu0 %v685
  %v5860 = vpop.f32.mrf.mxu0
  %v5861 = vadd.f32 %v5692, %v5860
  %v5862 = vpop.f32.mrf.mxu0
  %v5863 = vadd.f32 %v5694, %v5862
  %5864 = vmatmul.bf16.gmra.mxu0 %v692
  %v5865 = vpop.f32.mrf.mxu0
  %v5866 = vadd.f32 %v5697, %v5865
  %v5867 = vpop.f32.mrf.mxu0
  %v5868 = vadd.f32 %v5699, %v5867
  %5869 = vmatmul.bf16.gmra.mxu0 %v699
  %v5870 = vpop.f32.mrf.mxu0
  %v5871 = vadd.f32 %v5702, %v5870
  %v5872 = vpop.f32.mrf.mxu0
  %v5873 = vadd.f32 %v5704, %v5872
  %5874 = vdwg.mxu0
  %5875 = vmatpush.bf16.msra.mxu0 %v1594
  %5876 = vmatpush.bf16.msra.mxu0 %v1590
  %5877 = vmatpush.bf16.msra.mxu0 %v1586
  %5878 = vmatpush.bf16.msra.mxu0 %v1582
  %5879 = vmatpush.bf16.msra.mxu0 %v1578
  %5880 = vmatpush.bf16.msra.mxu0 %v1574
  %5881 = vmatpush.bf16.msra.mxu0 %v1570
  %5882 = vmatpush.bf16.msra.mxu0 %v1566
  %5883 = vmatmul.bf16.gmra.mxu0 %v483
  %v5884 = vpop.f32.mrf.mxu0
  %v5885 = vadd.f32 %v5716, %v5884
  %v5886 = vpop.f32.mrf.mxu0
  %v5887 = vadd.f32 %v5718, %v5886
  %5888 = vmatmul.bf16.gmra.mxu0 %v490
  %v5889 = vpop.f32.mrf.mxu0
  %v5890 = vadd.f32 %v5721, %v5889
  %v5891 = vpop.f32.mrf.mxu0
  %v5892 = vadd.f32 %v5723, %v5891
  %5893 = vmatmul.bf16.gmra.mxu0 %v497
  %v5894 = vpop.f32.mrf.mxu0
  %v5895 = vadd.f32 %v5726, %v5894
  %v5896 = vpop.f32.mrf.mxu0
  %v5897 = vadd.f32 %v5728, %v5896
  %5898 = vmatmul.bf16.gmra.mxu0 %v504
  %v5899 = vpop.f32.mrf.mxu0
  %v5900 = vadd.f32 %v5731, %v5899
  %v5901 = vpop.f32.mrf.mxu0
  %v5902 = vadd.f32 %v5733, %v5901
  %5903 = vmatmul.bf16.gmra.mxu0 %v511
  %v5904 = vpop.f32.mrf.mxu0
  %v5905 = vadd.f32 %v5736, %v5904
  %v5906 = vpop.f32.mrf.mxu0
  %v5907 = vadd.f32 %v5738, %v5906
  %5908 = vmatmul.bf16.gmra.mxu0 %v518
  %v5909 = vpop.f32.mrf.mxu0
  %v5910 = vadd.f32 %v5741, %v5909
  %v5911 = vpop.f32.mrf.mxu0
  %v5912 = vadd.f32 %v5743, %v5911
  %5913 = vmatmul.bf16.gmra.mxu0 %v525
  %v5914 = vpop.f32.mrf.mxu0
  %v5915 = vadd.f32 %v5746, %v5914
  %v5916 = vpop.f32.mrf.mxu0
  %v5917 = vadd.f32 %v5748, %v5916
  %5918 = vmatmul.bf16.gmra.mxu0 %v532
  %v5919 = vpop.f32.mrf.mxu0
  %v5920 = vadd.f32 %v5751, %v5919
  %v5921 = vpop.f32.mrf.mxu0
  %v5922 = vadd.f32 %v5753, %v5921
  %5923 = vmatmul.bf16.gmra.mxu0 %v539
  %v5924 = vpop.f32.mrf.mxu0
  %v5925 = vadd.f32 %v5756, %v5924
  %v5926 = vpop.f32.mrf.mxu0
  %v5927 = vadd.f32 %v5758, %v5926
  %5928 = vmatmul.bf16.gmra.mxu0 %v546
  %v5929 = vpop.f32.mrf.mxu0
  %v5930 = vadd.f32 %v5761, %v5929
  %v5931 = vpop.f32.mrf.mxu0
  %v5932 = vadd.f32 %v5763, %v5931
  %5933 = vmatmul.bf16.gmra.mxu0 %v553
  %v5934 = vpop.f32.mrf.mxu0
  %v5935 = vadd.f32 %v5766, %v5934
  %v5936 = vpop.f32.mrf.mxu0
  %v5937 = vadd.f32 %v5768, %v5936
  %5938 = vmatmul.bf16.gmra.mxu0 %v560
  %v5939 = vpop.f32.mrf.mxu0
  %v5940 = vadd.f32 %v5771, %v5939
  %v5941 = vpop.f32.mrf.mxu0
  %v5942 = vadd.f32 %v5773, %v5941
  %5943 = vmatmul.bf16.gmra.mxu0 %v567
  %v5944 = vpop.f32.mrf.mxu0
  %v5945 = vadd.f32 %v5776, %v5944
  %v5946 = vpop.f32.mrf.mxu0
  %v5947 = vadd.f32 %v5778, %v5946
  %5948 = vmatmul.bf16.gmra.mxu0 %v574
  %v5949 = vpop.f32.mrf.mxu0
  %v5950 = vadd.f32 %v5781, %v5949
  %v5951 = vpop.f32.mrf.mxu0
  %v5952 = vadd.f32 %v5783, %v5951
  %5953 = vmatmul.bf16.gmra.mxu0 %v581
  %v5954 = vpop.f32.mrf.mxu0
  %v5955 = vadd.f32 %v5786, %v5954
  %v5956 = vpop.f32.mrf.mxu0
  %v5957 = vadd.f32 %v5788, %v5956
  %5958 = vmatmul.bf16.gmra.mxu0 %v588
  %v5959 = vpop.f32.mrf.mxu0
  %v5960 = vadd.f32 %v5791, %v5959
  %v5961 = vpop.f32.mrf.mxu0
  %v5962 = vadd.f32 %v5793, %v5961
  %5963 = vmatmul.bf16.gmra.mxu0 %v595
  %v5964 = vpop.f32.mrf.mxu0
  %v5965 = vadd.f32 %v5796, %v5964
  %v5966 = vpop.f32.mrf.mxu0
  %v5967 = vadd.f32 %v5798, %v5966
  %5968 = vmatmul.bf16.gmra.mxu0 %v602
  %v5969 = vpop.f32.mrf.mxu0
  %v5970 = vadd.f32 %v5801, %v5969
  %v5971 = vpop.f32.mrf.mxu0
  %v5972 = vadd.f32 %v5803, %v5971
  %5973 = vmatmul.bf16.gmra.mxu0 %v609
  %v5974 = vpop.f32.mrf.mxu0
  %v5975 = vadd.f32 %v5806, %v5974
  %v5976 = vpop.f32.mrf.mxu0
  %v5977 = vadd.f32 %v5808, %v5976
  %5978 = vmatmul.bf16.gmra.mxu0 %v616
  %v5979 = vpop.f32.mrf.mxu0
  %v5980 = vadd.f32 %v5811, %v5979
  %v5981 = vpop.f32.mrf.mxu0
  %v5982 = vadd.f32 %v5813, %v5981
  %5983 = vmatmul.bf16.gmra.mxu0 %v623
  %v5984 = vpop.f32.mrf.mxu0
  %v5985 = vadd.f32 %v5816, %v5984
  %v5986 = vpop.f32.mrf.mxu0
  %v5987 = vadd.f32 %v5818, %v5986
  %5988 = vmatmul.bf16.gmra.mxu0 %v630
  %v5989 = vpop.f32.mrf.mxu0
  %v5990 = vadd.f32 %v5821, %v5989
  %v5991 = vpop.f32.mrf.mxu0
  %v5992 = vadd.f32 %v5823, %v5991
  %5993 = vmatmul.bf16.gmra.mxu0 %v637
  %v5994 = vpop.f32.mrf.mxu0
  %v5995 = vadd.f32 %v5826, %v5994
  %v5996 = vpop.f32.mrf.mxu0
  %v5997 = vadd.f32 %v5828, %v5996
  %5998 = vmatmul.bf16.gmra.mxu0 %v644
  %v5999 = vpop.f32.mrf.mxu0
  %v6000 = vadd.f32 %v5831, %v5999
  %v6001 = vpop.f32.mrf.mxu0
  %v6002 = vadd.f32 %v5833, %v6001
  %6003 = vmatmul.bf16.gmra.mxu0 %v651
  %v6004 = vpop.f32.mrf.mxu0
  %v6005 = vadd.f32 %v5836, %v6004
  %v6006 = vpop.f32.mrf.mxu0
  %v6007 = vadd.f32 %v5838, %v6006
  %6008 = vmatmul.bf16.gmra.mxu0 %v658
  %v6009 = vpop.f32.mrf.mxu0
  %v6010 = vadd.f32 %v5841, %v6009
  %v6011 = vpop.f32.mrf.mxu0
  %v6012 = vadd.f32 %v5843, %v6011
  %6013 = vmatmul.bf16.gmra.mxu0 %v665
  %v6014 = vpop.f32.mrf.mxu0
  %v6015 = vadd.f32 %v5846, %v6014
  %v6016 = vpop.f32.mrf.mxu0
  %v6017 = vadd.f32 %v5848, %v6016
  %6018 = vmatmul.bf16.gmra.mxu0 %v672
  %v6019 = vpop.f32.mrf.mxu0
  %v6020 = vadd.f32 %v5851, %v6019
  %v6021 = vpop.f32.mrf.mxu0
  %v6022 = vadd.f32 %v5853, %v6021
  %6023 = vmatmul.bf16.gmra.mxu0 %v679
  %v6024 = vpop.f32.mrf.mxu0
  %v6025 = vadd.f32 %v5856, %v6024
  %v6026 = vpop.f32.mrf.mxu0
  %v6027 = vadd.f32 %v5858, %v6026
  %6028 = vmatmul.bf16.gmra.mxu0 %v686
  %v6029 = vpop.f32.mrf.mxu0
  %v6030 = vadd.f32 %v5861, %v6029
  %v6031 = vpop.f32.mrf.mxu0
  %v6032 = vadd.f32 %v5863, %v6031
  %6033 = vmatmul.bf16.gmra.mxu0 %v693
  %v6034 = vpop.f32.mrf.mxu0
  %v6035 = vadd.f32 %v5866, %v6034
  %v6036 = vpop.f32.mrf.mxu0
  %v6037 = vadd.f32 %v5868, %v6036
  %6038 = vmatmul.bf16.gmra.mxu0 %v700
  %v6039 = vpop.f32.mrf.mxu0
  %v6040 = vadd.f32 %v5871, %v6039
  %v6041 = vpop.f32.mrf.mxu0
  %v6042 = vadd.f32 %v5873, %v6041
  %6043 = vdwg.mxu0
  %6044 = vmatpush.bf16.msra.mxu0 %v1626
  %6045 = vmatpush.bf16.msra.mxu0 %v1622
  %6046 = vmatpush.bf16.msra.mxu0 %v1618
  %6047 = vmatpush.bf16.msra.mxu0 %v1614
  %6048 = vmatpush.bf16.msra.mxu0 %v1610
  %6049 = vmatpush.bf16.msra.mxu0 %v1606
  %6050 = vmatpush.bf16.msra.mxu0 %v1602
  %6051 = vmatpush.bf16.msra.mxu0 %v1598
  %6052 = vmatmul.bf16.gmra.mxu0 %v484
  %v6053 = vpop.f32.mrf.mxu0
  %v6054 = vadd.f32 %v5885, %v6053
  %v6055 = vpop.f32.mrf.mxu0
  %v6056 = vadd.f32 %v5887, %v6055
  %6057 = vmatmul.bf16.gmra.mxu0 %v491
  %v6058 = vpop.f32.mrf.mxu0
  %v6059 = vadd.f32 %v5890, %v6058
  %v6060 = vpop.f32.mrf.mxu0
  %v6061 = vadd.f32 %v5892, %v6060
  %6062 = vmatmul.bf16.gmra.mxu0 %v498
  %v6063 = vpop.f32.mrf.mxu0
  %v6064 = vadd.f32 %v5895, %v6063
  %v6065 = vpop.f32.mrf.mxu0
  %v6066 = vadd.f32 %v5897, %v6065
  %6067 = vmatmul.bf16.gmra.mxu0 %v505
  %v6068 = vpop.f32.mrf.mxu0
  %v6069 = vadd.f32 %v5900, %v6068
  %v6070 = vpop.f32.mrf.mxu0
  %v6071 = vadd.f32 %v5902, %v6070
  %6072 = vmatmul.bf16.gmra.mxu0 %v512
  %v6073 = vpop.f32.mrf.mxu0
  %v6074 = vadd.f32 %v5905, %v6073
  %v6075 = vpop.f32.mrf.mxu0
  %v6076 = vadd.f32 %v5907, %v6075
  %6077 = vmatmul.bf16.gmra.mxu0 %v519
  %v6078 = vpop.f32.mrf.mxu0
  %v6079 = vadd.f32 %v5910, %v6078
  %v6080 = vpop.f32.mrf.mxu0
  %v6081 = vadd.f32 %v5912, %v6080
  %6082 = vmatmul.bf16.gmra.mxu0 %v526
  %v6083 = vpop.f32.mrf.mxu0
  %v6084 = vadd.f32 %v5915, %v6083
  %v6085 = vpop.f32.mrf.mxu0
  %v6086 = vadd.f32 %v5917, %v6085
  %6087 = vmatmul.bf16.gmra.mxu0 %v533
  %v6088 = vpop.f32.mrf.mxu0
  %v6089 = vadd.f32 %v5920, %v6088
  %v6090 = vpop.f32.mrf.mxu0
  %v6091 = vadd.f32 %v5922, %v6090
  %6092 = vmatmul.bf16.gmra.mxu0 %v540
  %v6093 = vpop.f32.mrf.mxu0
  %v6094 = vadd.f32 %v5925, %v6093
  %v6095 = vpop.f32.mrf.mxu0
  %v6096 = vadd.f32 %v5927, %v6095
  %6097 = vmatmul.bf16.gmra.mxu0 %v547
  %v6098 = vpop.f32.mrf.mxu0
  %v6099 = vadd.f32 %v5930, %v6098
  %v6100 = vpop.f32.mrf.mxu0
  %v6101 = vadd.f32 %v5932, %v6100
  %6102 = vmatmul.bf16.gmra.mxu0 %v554
  %v6103 = vpop.f32.mrf.mxu0
  %v6104 = vadd.f32 %v5935, %v6103
  %v6105 = vpop.f32.mrf.mxu0
  %v6106 = vadd.f32 %v5937, %v6105
  %6107 = vmatmul.bf16.gmra.mxu0 %v561
  %v6108 = vpop.f32.mrf.mxu0
  %v6109 = vadd.f32 %v5940, %v6108
  %v6110 = vpop.f32.mrf.mxu0
  %v6111 = vadd.f32 %v5942, %v6110
  %6112 = vmatmul.bf16.gmra.mxu0 %v568
  %v6113 = vpop.f32.mrf.mxu0
  %v6114 = vadd.f32 %v5945, %v6113
  %v6115 = vpop.f32.mrf.mxu0
  %v6116 = vadd.f32 %v5947, %v6115
  %6117 = vmatmul.bf16.gmra.mxu0 %v575
  %v6118 = vpop.f32.mrf.mxu0
  %v6119 = vadd.f32 %v5950, %v6118
  %v6120 = vpop.f32.mrf.mxu0
  %v6121 = vadd.f32 %v5952, %v6120
  %6122 = vmatmul.bf16.gmra.mxu0 %v582
  %v6123 = vpop.f32.mrf.mxu0
  %v6124 = vadd.f32 %v5955, %v6123
  %v6125 = vpop.f32.mrf.mxu0
  %v6126 = vadd.f32 %v5957, %v6125
  %6127 = vmatmul.bf16.gmra.mxu0 %v589
  %v6128 = vpop.f32.mrf.mxu0
  %v6129 = vadd.f32 %v5960, %v6128
  %v6130 = vpop.f32.mrf.mxu0
  %v6131 = vadd.f32 %v5962, %v6130
  %6132 = vmatmul.bf16.gmra.mxu0 %v596
  %v6133 = vpop.f32.mrf.mxu0
  %v6134 = vadd.f32 %v5965, %v6133
  %v6135 = vpop.f32.mrf.mxu0
  %v6136 = vadd.f32 %v5967, %v6135
  %6137 = vmatmul.bf16.gmra.mxu0 %v603
  %v6138 = vpop.f32.mrf.mxu0
  %v6139 = vadd.f32 %v5970, %v6138
  %v6140 = vpop.f32.mrf.mxu0
  %v6141 = vadd.f32 %v5972, %v6140
  %6142 = vmatmul.bf16.gmra.mxu0 %v610
  %v6143 = vpop.f32.mrf.mxu0
  %v6144 = vadd.f32 %v5975, %v6143
  %v6145 = vpop.f32.mrf.mxu0
  %v6146 = vadd.f32 %v5977, %v6145
  %6147 = vmatmul.bf16.gmra.mxu0 %v617
  %v6148 = vpop.f32.mrf.mxu0
  %v6149 = vadd.f32 %v5980, %v6148
  %v6150 = vpop.f32.mrf.mxu0
  %v6151 = vadd.f32 %v5982, %v6150
  %6152 = vmatmul.bf16.gmra.mxu0 %v624
  %v6153 = vpop.f32.mrf.mxu0
  %v6154 = vadd.f32 %v5985, %v6153
  %v6155 = vpop.f32.mrf.mxu0
  %v6156 = vadd.f32 %v5987, %v6155
  %6157 = vmatmul.bf16.gmra.mxu0 %v631
  %v6158 = vpop.f32.mrf.mxu0
  %v6159 = vadd.f32 %v5990, %v6158
  %v6160 = vpop.f32.mrf.mxu0
  %v6161 = vadd.f32 %v5992, %v6160
  %6162 = vmatmul.bf16.gmra.mxu0 %v638
  %v6163 = vpop.f32.mrf.mxu0
  %v6164 = vadd.f32 %v5995, %v6163
  %v6165 = vpop.f32.mrf.mxu0
  %v6166 = vadd.f32 %v5997, %v6165
  %6167 = vmatmul.bf16.gmra.mxu0 %v645
  %v6168 = vpop.f32.mrf.mxu0
  %v6169 = vadd.f32 %v6000, %v6168
  %v6170 = vpop.f32.mrf.mxu0
  %v6171 = vadd.f32 %v6002, %v6170
  %6172 = vmatmul.bf16.gmra.mxu0 %v652
  %v6173 = vpop.f32.mrf.mxu0
  %v6174 = vadd.f32 %v6005, %v6173
  %v6175 = vpop.f32.mrf.mxu0
  %v6176 = vadd.f32 %v6007, %v6175
  %6177 = vmatmul.bf16.gmra.mxu0 %v659
  %v6178 = vpop.f32.mrf.mxu0
  %v6179 = vadd.f32 %v6010, %v6178
  %v6180 = vpop.f32.mrf.mxu0
  %v6181 = vadd.f32 %v6012, %v6180
  %6182 = vmatmul.bf16.gmra.mxu0 %v666
  %v6183 = vpop.f32.mrf.mxu0
  %v6184 = vadd.f32 %v6015, %v6183
  %v6185 = vpop.f32.mrf.mxu0
  %v6186 = vadd.f32 %v6017, %v6185
  %6187 = vmatmul.bf16.gmra.mxu0 %v673
  %v6188 = vpop.f32.mrf.mxu0
  %v6189 = vadd.f32 %v6020, %v6188
  %v6190 = vpop.f32.mrf.mxu0
  %v6191 = vadd.f32 %v6022, %v6190
  %6192 = vmatmul.bf16.gmra.mxu0 %v680
  %v6193 = vpop.f32.mrf.mxu0
  %v6194 = vadd.f32 %v6025, %v6193
  %v6195 = vpop.f32.mrf.mxu0
  %v6196 = vadd.f32 %v6027, %v6195
  %6197 = vmatmul.bf16.gmra.mxu0 %v687
  %v6198 = vpop.f32.mrf.mxu0
  %v6199 = vadd.f32 %v6030, %v6198
  %v6200 = vpop.f32.mrf.mxu0
  %v6201 = vadd.f32 %v6032, %v6200
  %6202 = vmatmul.bf16.gmra.mxu0 %v694
  %v6203 = vpop.f32.mrf.mxu0
  %v6204 = vadd.f32 %v6035, %v6203
  %v6205 = vpop.f32.mrf.mxu0
  %v6206 = vadd.f32 %v6037, %v6205
  %6207 = vmatmul.bf16.gmra.mxu0 %v701
  %v6208 = vpop.f32.mrf.mxu0
  %v6209 = vadd.f32 %v6040, %v6208
  %v6210 = vpop.f32.mrf.mxu0
  %v6211 = vadd.f32 %v6042, %v6210
  %6212 = vdwg.mxu0
  %6213 = vmatpush.bf16.msra.mxu0 %v1658
  %6214 = vmatpush.bf16.msra.mxu0 %v1654
  %6215 = vmatpush.bf16.msra.mxu0 %v1650
  %6216 = vmatpush.bf16.msra.mxu0 %v1646
  %6217 = vmatpush.bf16.msra.mxu0 %v1642
  %6218 = vmatpush.bf16.msra.mxu0 %v1638
  %6219 = vmatpush.bf16.msra.mxu0 %v1634
  %6220 = vmatpush.bf16.msra.mxu0 %v1630
  %6221 = vmatmul.bf16.gmra.mxu0 %v485
  %v6222 = vpop.f32.mrf.mxu0
  %v6223 = vadd.f32 %v6054, %v6222
  %v6224 = vpop.f32.mrf.mxu0
  %v6225 = vadd.f32 %v6056, %v6224
  %6226 = vmatmul.bf16.gmra.mxu0 %v492
  %v6227 = vpop.f32.mrf.mxu0
  %v6228 = vadd.f32 %v6059, %v6227
  %v6229 = vpop.f32.mrf.mxu0
  %v6230 = vadd.f32 %v6061, %v6229
  %6231 = vmatmul.bf16.gmra.mxu0 %v499
  %v6232 = vpop.f32.mrf.mxu0
  %v6233 = vadd.f32 %v6064, %v6232
  %v6234 = vpop.f32.mrf.mxu0
  %v6235 = vadd.f32 %v6066, %v6234
  %6236 = vmatmul.bf16.gmra.mxu0 %v506
  %v6237 = vpop.f32.mrf.mxu0
  %v6238 = vadd.f32 %v6069, %v6237
  %v6239 = vpop.f32.mrf.mxu0
  %v6240 = vadd.f32 %v6071, %v6239
  %6241 = vmatmul.bf16.gmra.mxu0 %v513
  %v6242 = vpop.f32.mrf.mxu0
  %v6243 = vadd.f32 %v6074, %v6242
  %v6244 = vpop.f32.mrf.mxu0
  %v6245 = vadd.f32 %v6076, %v6244
  %6246 = vmatmul.bf16.gmra.mxu0 %v520
  %v6247 = vpop.f32.mrf.mxu0
  %v6248 = vadd.f32 %v6079, %v6247
  %v6249 = vpop.f32.mrf.mxu0
  %v6250 = vadd.f32 %v6081, %v6249
  %6251 = vmatmul.bf16.gmra.mxu0 %v527
  %v6252 = vpop.f32.mrf.mxu0
  %v6253 = vadd.f32 %v6084, %v6252
  %v6254 = vpop.f32.mrf.mxu0
  %v6255 = vadd.f32 %v6086, %v6254
  %6256 = vmatmul.bf16.gmra.mxu0 %v534
  %v6257 = vpop.f32.mrf.mxu0
  %v6258 = vadd.f32 %v6089, %v6257
  %v6259 = vpop.f32.mrf.mxu0
  %v6260 = vadd.f32 %v6091, %v6259
  %6261 = vmatmul.bf16.gmra.mxu0 %v541
  %v6262 = vpop.f32.mrf.mxu0
  %v6263 = vadd.f32 %v6094, %v6262
  %v6264 = vpop.f32.mrf.mxu0
  %v6265 = vadd.f32 %v6096, %v6264
  %6266 = vmatmul.bf16.gmra.mxu0 %v548
  %v6267 = vpop.f32.mrf.mxu0
  %v6268 = vadd.f32 %v6099, %v6267
  %v6269 = vpop.f32.mrf.mxu0
  %v6270 = vadd.f32 %v6101, %v6269
  %6271 = vmatmul.bf16.gmra.mxu0 %v555
  %v6272 = vpop.f32.mrf.mxu0
  %v6273 = vadd.f32 %v6104, %v6272
  %v6274 = vpop.f32.mrf.mxu0
  %v6275 = vadd.f32 %v6106, %v6274
  %6276 = vmatmul.bf16.gmra.mxu0 %v562
  %v6277 = vpop.f32.mrf.mxu0
  %v6278 = vadd.f32 %v6109, %v6277
  %v6279 = vpop.f32.mrf.mxu0
  %v6280 = vadd.f32 %v6111, %v6279
  %6281 = vmatmul.bf16.gmra.mxu0 %v569
  %v6282 = vpop.f32.mrf.mxu0
  %v6283 = vadd.f32 %v6114, %v6282
  %v6284 = vpop.f32.mrf.mxu0
  %v6285 = vadd.f32 %v6116, %v6284
  %6286 = vmatmul.bf16.gmra.mxu0 %v576
  %v6287 = vpop.f32.mrf.mxu0
  %v6288 = vadd.f32 %v6119, %v6287
  %v6289 = vpop.f32.mrf.mxu0
  %v6290 = vadd.f32 %v6121, %v6289
  %6291 = vmatmul.bf16.gmra.mxu0 %v583
  %v6292 = vpop.f32.mrf.mxu0
  %v6293 = vadd.f32 %v6124, %v6292
  %v6294 = vpop.f32.mrf.mxu0
  %v6295 = vadd.f32 %v6126, %v6294
  %6296 = vmatmul.bf16.gmra.mxu0 %v590
  %v6297 = vpop.f32.mrf.mxu0
  %v6298 = vadd.f32 %v6129, %v6297
  %v6299 = vpop.f32.mrf.mxu0
  %v6300 = vadd.f32 %v6131, %v6299
  %6301 = vmatmul.bf16.gmra.mxu0 %v597
  %v6302 = vpop.f32.mrf.mxu0
  %v6303 = vadd.f32 %v6134, %v6302
  %v6304 = vpop.f32.mrf.mxu0
  %v6305 = vadd.f32 %v6136, %v6304
  %6306 = vmatmul.bf16.gmra.mxu0 %v604
  %v6307 = vpop.f32.mrf.mxu0
  %v6308 = vadd.f32 %v6139, %v6307
  %v6309 = vpop.f32.mrf.mxu0
  %v6310 = vadd.f32 %v6141, %v6309
  %6311 = vmatmul.bf16.gmra.mxu0 %v611
  %v6312 = vpop.f32.mrf.mxu0
  %v6313 = vadd.f32 %v6144, %v6312
  %v6314 = vpop.f32.mrf.mxu0
  %v6315 = vadd.f32 %v6146, %v6314
  %6316 = vmatmul.bf16.gmra.mxu0 %v618
  %v6317 = vpop.f32.mrf.mxu0
  %v6318 = vadd.f32 %v6149, %v6317
  %v6319 = vpop.f32.mrf.mxu0
  %v6320 = vadd.f32 %v6151, %v6319
  %6321 = vmatmul.bf16.gmra.mxu0 %v625
  %v6322 = vpop.f32.mrf.mxu0
  %v6323 = vadd.f32 %v6154, %v6322
  %v6324 = vpop.f32.mrf.mxu0
  %v6325 = vadd.f32 %v6156, %v6324
  %6326 = vmatmul.bf16.gmra.mxu0 %v632
  %v6327 = vpop.f32.mrf.mxu0
  %v6328 = vadd.f32 %v6159, %v6327
  %v6329 = vpop.f32.mrf.mxu0
  %v6330 = vadd.f32 %v6161, %v6329
  %6331 = vmatmul.bf16.gmra.mxu0 %v639
  %v6332 = vpop.f32.mrf.mxu0
  %v6333 = vadd.f32 %v6164, %v6332
  %v6334 = vpop.f32.mrf.mxu0
  %v6335 = vadd.f32 %v6166, %v6334
  %6336 = vmatmul.bf16.gmra.mxu0 %v646
  %v6337 = vpop.f32.mrf.mxu0
  %v6338 = vadd.f32 %v6169, %v6337
  %v6339 = vpop.f32.mrf.mxu0
  %v6340 = vadd.f32 %v6171, %v6339
  %6341 = vmatmul.bf16.gmra.mxu0 %v653
  %v6342 = vpop.f32.mrf.mxu0
  %v6343 = vadd.f32 %v6174, %v6342
  %v6344 = vpop.f32.mrf.mxu0
  %v6345 = vadd.f32 %v6176, %v6344
  %6346 = vmatmul.bf16.gmra.mxu0 %v660
  %v6347 = vpop.f32.mrf.mxu0
  %v6348 = vadd.f32 %v6179, %v6347
  %v6349 = vpop.f32.mrf.mxu0
  %v6350 = vadd.f32 %v6181, %v6349
  %6351 = vmatmul.bf16.gmra.mxu0 %v667
  %v6352 = vpop.f32.mrf.mxu0
  %v6353 = vadd.f32 %v6184, %v6352
  %v6354 = vpop.f32.mrf.mxu0
  %v6355 = vadd.f32 %v6186, %v6354
  %6356 = vmatmul.bf16.gmra.mxu0 %v674
  %v6357 = vpop.f32.mrf.mxu0
  %v6358 = vadd.f32 %v6189, %v6357
  %v6359 = vpop.f32.mrf.mxu0
  %v6360 = vadd.f32 %v6191, %v6359
  %6361 = vmatmul.bf16.gmra.mxu0 %v681
  %v6362 = vpop.f32.mrf.mxu0
  %v6363 = vadd.f32 %v6194, %v6362
  %v6364 = vpop.f32.mrf.mxu0
  %v6365 = vadd.f32 %v6196, %v6364
  %6366 = vmatmul.bf16.gmra.mxu0 %v688
  %v6367 = vpop.f32.mrf.mxu0
  %v6368 = vadd.f32 %v6199, %v6367
  %v6369 = vpop.f32.mrf.mxu0
  %v6370 = vadd.f32 %v6201, %v6369
  %6371 = vmatmul.bf16.gmra.mxu0 %v695
  %v6372 = vpop.f32.mrf.mxu0
  %v6373 = vadd.f32 %v6204, %v6372
  %v6374 = vpop.f32.mrf.mxu0
  %v6375 = vadd.f32 %v6206, %v6374
  %6376 = vmatmul.bf16.gmra.mxu0 %v702
  %v6377 = vpop.f32.mrf.mxu0
  %v6378 = vadd.f32 %v6209, %v6377
  %v6379 = vpop.f32.mrf.mxu0
  %v6380 = vadd.f32 %v6211, %v6379
  %6381 = vdwg.mxu0
  %6382 = vmatpush.bf16.msra.mxu0 %v1690
  %6383 = vmatpush.bf16.msra.mxu0 %v1686
  %6384 = vmatpush.bf16.msra.mxu0 %v1682
  %6385 = vmatpush.bf16.msra.mxu0 %v1678
  %6386 = vmatpush.bf16.msra.mxu0 %v1674
  %6387 = vmatpush.bf16.msra.mxu0 %v1670
  %6388 = vmatpush.bf16.msra.mxu0 %v1666
  %6389 = vmatpush.bf16.msra.mxu0 %v1662
  %6390 = vmatmul.bf16.gmra.mxu0 %v486
  %v6391 = vpop.f32.mrf.mxu0
  %v6392 = vadd.f32 %v6223, %v6391
  %v6393 = vpop.f32.mrf.mxu0
  %v6394 = vadd.f32 %v6225, %v6393
  %6395 = vmatmul.bf16.gmra.mxu0 %v493
  %v6396 = vpop.f32.mrf.mxu0
  %v6397 = vadd.f32 %v6228, %v6396
  %v6398 = vpop.f32.mrf.mxu0
  %v6399 = vadd.f32 %v6230, %v6398
  %6400 = vmatmul.bf16.gmra.mxu0 %v500
  %v6401 = vpop.f32.mrf.mxu0
  %v6402 = vadd.f32 %v6233, %v6401
  %v6403 = vpop.f32.mrf.mxu0
  %v6404 = vadd.f32 %v6235, %v6403
  %6405 = vmatmul.bf16.gmra.mxu0 %v507
  %v6406 = vpop.f32.mrf.mxu0
  %v6407 = vadd.f32 %v6238, %v6406
  %v6408 = vpop.f32.mrf.mxu0
  %v6409 = vadd.f32 %v6240, %v6408
  %6410 = vmatmul.bf16.gmra.mxu0 %v514
  %v6411 = vpop.f32.mrf.mxu0
  %v6412 = vadd.f32 %v6243, %v6411
  %v6413 = vpop.f32.mrf.mxu0
  %v6414 = vadd.f32 %v6245, %v6413
  %6415 = vmatmul.bf16.gmra.mxu0 %v521
  %v6416 = vpop.f32.mrf.mxu0
  %v6417 = vadd.f32 %v6248, %v6416
  %v6418 = vpop.f32.mrf.mxu0
  %v6419 = vadd.f32 %v6250, %v6418
  %6420 = vmatmul.bf16.gmra.mxu0 %v528
  %v6421 = vpop.f32.mrf.mxu0
  %v6422 = vadd.f32 %v6253, %v6421
  %v6423 = vpop.f32.mrf.mxu0
  %v6424 = vadd.f32 %v6255, %v6423
  %6425 = vmatmul.bf16.gmra.mxu0 %v535
  %v6426 = vpop.f32.mrf.mxu0
  %v6427 = vadd.f32 %v6258, %v6426
  %v6428 = vpop.f32.mrf.mxu0
  %v6429 = vadd.f32 %v6260, %v6428
  %6430 = vmatmul.bf16.gmra.mxu0 %v542
  %v6431 = vpop.f32.mrf.mxu0
  %v6432 = vadd.f32 %v6263, %v6431
  %v6433 = vpop.f32.mrf.mxu0
  %v6434 = vadd.f32 %v6265, %v6433
  %6435 = vmatmul.bf16.gmra.mxu0 %v549
  %v6436 = vpop.f32.mrf.mxu0
  %v6437 = vadd.f32 %v6268, %v6436
  %v6438 = vpop.f32.mrf.mxu0
  %v6439 = vadd.f32 %v6270, %v6438
  %6440 = vmatmul.bf16.gmra.mxu0 %v556
  %v6441 = vpop.f32.mrf.mxu0
  %v6442 = vadd.f32 %v6273, %v6441
  %v6443 = vpop.f32.mrf.mxu0
  %v6444 = vadd.f32 %v6275, %v6443
  %6445 = vmatmul.bf16.gmra.mxu0 %v563
  %v6446 = vpop.f32.mrf.mxu0
  %v6447 = vadd.f32 %v6278, %v6446
  %v6448 = vpop.f32.mrf.mxu0
  %v6449 = vadd.f32 %v6280, %v6448
  %6450 = vmatmul.bf16.gmra.mxu0 %v570
  %v6451 = vpop.f32.mrf.mxu0
  %v6452 = vadd.f32 %v6283, %v6451
  %v6453 = vpop.f32.mrf.mxu0
  %v6454 = vadd.f32 %v6285, %v6453
  %6455 = vmatmul.bf16.gmra.mxu0 %v577
  %v6456 = vpop.f32.mrf.mxu0
  %v6457 = vadd.f32 %v6288, %v6456
  %v6458 = vpop.f32.mrf.mxu0
  %v6459 = vadd.f32 %v6290, %v6458
  %6460 = vmatmul.bf16.gmra.mxu0 %v584
  %v6461 = vpop.f32.mrf.mxu0
  %v6462 = vadd.f32 %v6293, %v6461
  %v6463 = vpop.f32.mrf.mxu0
  %v6464 = vadd.f32 %v6295, %v6463
  %6465 = vmatmul.bf16.gmra.mxu0 %v591
  %v6466 = vpop.f32.mrf.mxu0
  %v6467 = vadd.f32 %v6298, %v6466
  %v6468 = vpop.f32.mrf.mxu0
  %v6469 = vadd.f32 %v6300, %v6468
  %6470 = vmatmul.bf16.gmra.mxu0 %v598
  %v6471 = vpop.f32.mrf.mxu0
  %v6472 = vadd.f32 %v6303, %v6471
  %v6473 = vpop.f32.mrf.mxu0
  %v6474 = vadd.f32 %v6305, %v6473
  %6475 = vmatmul.bf16.gmra.mxu0 %v605
  %v6476 = vpop.f32.mrf.mxu0
  %v6477 = vadd.f32 %v6308, %v6476
  %v6478 = vpop.f32.mrf.mxu0
  %v6479 = vadd.f32 %v6310, %v6478
  %6480 = vmatmul.bf16.gmra.mxu0 %v612
  %v6481 = vpop.f32.mrf.mxu0
  %v6482 = vadd.f32 %v6313, %v6481
  %v6483 = vpop.f32.mrf.mxu0
  %v6484 = vadd.f32 %v6315, %v6483
  %6485 = vmatmul.bf16.gmra.mxu0 %v619
  %v6486 = vpop.f32.mrf.mxu0
  %v6487 = vadd.f32 %v6318, %v6486
  %v6488 = vpop.f32.mrf.mxu0
  %v6489 = vadd.f32 %v6320, %v6488
  %6490 = vmatmul.bf16.gmra.mxu0 %v626
  %v6491 = vpop.f32.mrf.mxu0
  %v6492 = vadd.f32 %v6323, %v6491
  %v6493 = vpop.f32.mrf.mxu0
  %v6494 = vadd.f32 %v6325, %v6493
  %6495 = vmatmul.bf16.gmra.mxu0 %v633
  %v6496 = vpop.f32.mrf.mxu0
  %v6497 = vadd.f32 %v6328, %v6496
  %v6498 = vpop.f32.mrf.mxu0
  %v6499 = vadd.f32 %v6330, %v6498
  %6500 = vmatmul.bf16.gmra.mxu0 %v640
  %v6501 = vpop.f32.mrf.mxu0
  %v6502 = vadd.f32 %v6333, %v6501
  %v6503 = vpop.f32.mrf.mxu0
  %v6504 = vadd.f32 %v6335, %v6503
  %6505 = vmatmul.bf16.gmra.mxu0 %v647
  %v6506 = vpop.f32.mrf.mxu0
  %v6507 = vadd.f32 %v6338, %v6506
  %v6508 = vpop.f32.mrf.mxu0
  %v6509 = vadd.f32 %v6340, %v6508
  %6510 = vmatmul.bf16.gmra.mxu0 %v654
  %v6511 = vpop.f32.mrf.mxu0
  %v6512 = vadd.f32 %v6343, %v6511
  %v6513 = vpop.f32.mrf.mxu0
  %v6514 = vadd.f32 %v6345, %v6513
  %6515 = vmatmul.bf16.gmra.mxu0 %v661
  %v6516 = vpop.f32.mrf.mxu0
  %v6517 = vadd.f32 %v6348, %v6516
  %v6518 = vpop.f32.mrf.mxu0
  %v6519 = vadd.f32 %v6350, %v6518
  %6520 = vmatmul.bf16.gmra.mxu0 %v668
  %v6521 = vpop.f32.mrf.mxu0
  %v6522 = vadd.f32 %v6353, %v6521
  %v6523 = vpop.f32.mrf.mxu0
  %v6524 = vadd.f32 %v6355, %v6523
  %6525 = vmatmul.bf16.gmra.mxu0 %v675
  %v6526 = vpop.f32.mrf.mxu0
  %v6527 = vadd.f32 %v6358, %v6526
  %v6528 = vpop.f32.mrf.mxu0
  %v6529 = vadd.f32 %v6360, %v6528
  %6530 = vmatmul.bf16.gmra.mxu0 %v682
  %v6531 = vpop.f32.mrf.mxu0
  %v6532 = vadd.f32 %v6363, %v6531
  %v6533 = vpop.f32.mrf.mxu0
  %v6534 = vadd.f32 %v6365, %v6533
  %6535 = vmatmul.bf16.gmra.mxu0 %v689
  %v6536 = vpop.f32.mrf.mxu0
  %v6537 = vadd.f32 %v6368, %v6536
  %v6538 = vpop.f32.mrf.mxu0
  %v6539 = vadd.f32 %v6370, %v6538
  %6540 = vmatmul.bf16.gmra.mxu0 %v696
  %v6541 = vpop.f32.mrf.mxu0
  %v6542 = vadd.f32 %v6373, %v6541
  %v6543 = vpop.f32.mrf.mxu0
  %v6544 = vadd.f32 %v6375, %v6543
  %6545 = vmatmul.bf16.gmra.mxu0 %v703
  %v6546 = vpop.f32.mrf.mxu0
  %v6547 = vadd.f32 %v6378, %v6546
  %v6548 = vpop.f32.mrf.mxu0
  %v6549 = vadd.f32 %v6380, %v6548
  %6550 = vdwg.mxu0
  %6551 = vmatpush.bf16.msra.mxu0 0
  %6552 = vmatpush.bf16.msra.mxu0 0
  %6553 = vmatpush.bf16.msra.mxu0 0
  %6554 = vmatpush.bf16.msra.mxu0 0
  %6555 = vmatpush.bf16.msra.mxu0 0
  %6556 = vmatpush.bf16.msra.mxu0 0
  %6557 = vmatpush.bf16.msra.mxu0 0
  %6558 = vmatpush.bf16.msra.mxu0 %v1694
  %6559 = vmatmul.bf16.gmra.mxu0 %v1893
  %v6560 = vpop.f32.mrf.mxu0
  %v6561 = vadd.f32 %v6392, %v6560
  %v6562 = vpop.f32.mrf.mxu0
  %v6563 = vadd.f32 %v6394, %v6562
  %6564 = vmatmul.bf16.gmra.mxu0 %v1896
  %v6565 = vpop.f32.mrf.mxu0
  %v6566 = vadd.f32 %v6397, %v6565
  %v6567 = vpop.f32.mrf.mxu0
  %v6568 = vadd.f32 %v6399, %v6567
  %6569 = vmatmul.bf16.gmra.mxu0 %v1899
  %v6570 = vpop.f32.mrf.mxu0
  %v6571 = vadd.f32 %v6402, %v6570
  %v6572 = vpop.f32.mrf.mxu0
  %v6573 = vadd.f32 %v6404, %v6572
  %6574 = vmatmul.bf16.gmra.mxu0 %v1902
  %v6575 = vpop.f32.mrf.mxu0
  %v6576 = vadd.f32 %v6407, %v6575
  %v6577 = vpop.f32.mrf.mxu0
  %v6578 = vadd.f32 %v6409, %v6577
  %6579 = vmatmul.bf16.gmra.mxu0 %v1905
  %v6580 = vpop.f32.mrf.mxu0
  %v6581 = vadd.f32 %v6412, %v6580
  %v6582 = vpop.f32.mrf.mxu0
  %v6583 = vadd.f32 %v6414, %v6582
  %6584 = vmatmul.bf16.gmra.mxu0 %v1908
  %v6585 = vpop.f32.mrf.mxu0
  %v6586 = vadd.f32 %v6417, %v6585
  %v6587 = vpop.f32.mrf.mxu0
  %v6588 = vadd.f32 %v6419, %v6587
  %6589 = vmatmul.bf16.gmra.mxu0 %v1911
  %v6590 = vpop.f32.mrf.mxu0
  %v6591 = vadd.f32 %v6422, %v6590
  %v6592 = vpop.f32.mrf.mxu0
  %v6593 = vadd.f32 %v6424, %v6592
  %6594 = vmatmul.bf16.gmra.mxu0 %v1914
  %v6595 = vpop.f32.mrf.mxu0
  %v6596 = vadd.f32 %v6427, %v6595
  %v6597 = vpop.f32.mrf.mxu0
  %v6598 = vadd.f32 %v6429, %v6597
  %6599 = vmatmul.bf16.gmra.mxu0 %v1917
  %v6600 = vpop.f32.mrf.mxu0
  %v6601 = vadd.f32 %v6432, %v6600
  %v6602 = vpop.f32.mrf.mxu0
  %v6603 = vadd.f32 %v6434, %v6602
  %6604 = vmatmul.bf16.gmra.mxu0 %v1920
  %v6605 = vpop.f32.mrf.mxu0
  %v6606 = vadd.f32 %v6437, %v6605
  %v6607 = vpop.f32.mrf.mxu0
  %v6608 = vadd.f32 %v6439, %v6607
  %6609 = vmatmul.bf16.gmra.mxu0 %v1923
  %v6610 = vpop.f32.mrf.mxu0
  %v6611 = vadd.f32 %v6442, %v6610
  %v6612 = vpop.f32.mrf.mxu0
  %v6613 = vadd.f32 %v6444, %v6612
  %6614 = vmatmul.bf16.gmra.mxu0 %v1926
  %v6615 = vpop.f32.mrf.mxu0
  %v6616 = vadd.f32 %v6447, %v6615
  %v6617 = vpop.f32.mrf.mxu0
  %v6618 = vadd.f32 %v6449, %v6617
  %6619 = vmatmul.bf16.gmra.mxu0 %v1929
  %v6620 = vpop.f32.mrf.mxu0
  %v6621 = vadd.f32 %v6452, %v6620
  %v6622 = vpop.f32.mrf.mxu0
  %v6623 = vadd.f32 %v6454, %v6622
  %6624 = vmatmul.bf16.gmra.mxu0 %v1932
  %v6625 = vpop.f32.mrf.mxu0
  %v6626 = vadd.f32 %v6457, %v6625
  %v6627 = vpop.f32.mrf.mxu0
  %v6628 = vadd.f32 %v6459, %v6627
  %6629 = vmatmul.bf16.gmra.mxu0 %v1935
  %v6630 = vpop.f32.mrf.mxu0
  %v6631 = vadd.f32 %v6462, %v6630
  %v6632 = vpop.f32.mrf.mxu0
  %v6633 = vadd.f32 %v6464, %v6632
  %6634 = vmatmul.bf16.gmra.mxu0 %v1938
  %v6635 = vpop.f32.mrf.mxu0
  %v6636 = vadd.f32 %v6467, %v6635
  %v6637 = vpop.f32.mrf.mxu0
  %v6638 = vadd.f32 %v6469, %v6637
  %6639 = vmatmul.bf16.gmra.mxu0 %v1941
  %v6640 = vpop.f32.mrf.mxu0
  %v6641 = vadd.f32 %v6472, %v6640
  %v6642 = vpop.f32.mrf.mxu0
  %v6643 = vadd.f32 %v6474, %v6642
  %6644 = vmatmul.bf16.gmra.mxu0 %v1944
  %v6645 = vpop.f32.mrf.mxu0
  %v6646 = vadd.f32 %v6477, %v6645
  %v6647 = vpop.f32.mrf.mxu0
  %v6648 = vadd.f32 %v6479, %v6647
  %6649 = vmatmul.bf16.gmra.mxu0 %v1947
  %v6650 = vpop.f32.mrf.mxu0
  %v6651 = vadd.f32 %v6482, %v6650
  %v6652 = vpop.f32.mrf.mxu0
  %v6653 = vadd.f32 %v6484, %v6652
  %6654 = vmatmul.bf16.gmra.mxu0 %v1950
  %v6655 = vpop.f32.mrf.mxu0
  %v6656 = vadd.f32 %v6487, %v6655
  %v6657 = vpop.f32.mrf.mxu0
  %v6658 = vadd.f32 %v6489, %v6657
  %6659 = vmatmul.bf16.gmra.mxu0 %v1953
  %v6660 = vpop.f32.mrf.mxu0
  %v6661 = vadd.f32 %v6492, %v6660
  %v6662 = vpop.f32.mrf.mxu0
  %v6663 = vadd.f32 %v6494, %v6662
  %6664 = vmatmul.bf16.gmra.mxu0 %v1956
  %v6665 = vpop.f32.mrf.mxu0
  %v6666 = vadd.f32 %v6497, %v6665
  %v6667 = vpop.f32.mrf.mxu0
  %v6668 = vadd.f32 %v6499, %v6667
  %6669 = vmatmul.bf16.gmra.mxu0 %v1959
  %v6670 = vpop.f32.mrf.mxu0
  %v6671 = vadd.f32 %v6502, %v6670
  %v6672 = vpop.f32.mrf.mxu0
  %v6673 = vadd.f32 %v6504, %v6672
  %6674 = vmatmul.bf16.gmra.mxu0 %v1962
  %v6675 = vpop.f32.mrf.mxu0
  %v6676 = vadd.f32 %v6507, %v6675
  %v6677 = vpop.f32.mrf.mxu0
  %v6678 = vadd.f32 %v6509, %v6677
  %6679 = vmatmul.bf16.gmra.mxu0 %v1965
  %v6680 = vpop.f32.mrf.mxu0
  %v6681 = vadd.f32 %v6512, %v6680
  %v6682 = vpop.f32.mrf.mxu0
  %v6683 = vadd.f32 %v6514, %v6682
  %6684 = vmatmul.bf16.gmra.mxu0 %v1968
  %v6685 = vpop.f32.mrf.mxu0
  %v6686 = vadd.f32 %v6517, %v6685
  %v6687 = vpop.f32.mrf.mxu0
  %v6688 = vadd.f32 %v6519, %v6687
  %6689 = vmatmul.bf16.gmra.mxu0 %v1971
  %v6690 = vpop.f32.mrf.mxu0
  %v6691 = vadd.f32 %v6522, %v6690
  %v6692 = vpop.f32.mrf.mxu0
  %v6693 = vadd.f32 %v6524, %v6692
  %6694 = vmatmul.bf16.gmra.mxu0 %v1974
  %v6695 = vpop.f32.mrf.mxu0
  %v6696 = vadd.f32 %v6527, %v6695
  %v6697 = vpop.f32.mrf.mxu0
  %v6698 = vadd.f32 %v6529, %v6697
  %6699 = vmatmul.bf16.gmra.mxu0 %v1977
  %v6700 = vpop.f32.mrf.mxu0
  %v6701 = vadd.f32 %v6532, %v6700
  %v6702 = vpop.f32.mrf.mxu0
  %v6703 = vadd.f32 %v6534, %v6702
  %6704 = vmatmul.bf16.gmra.mxu0 %v1980
  %v6705 = vpop.f32.mrf.mxu0
  %v6706 = vadd.f32 %v6537, %v6705
  %v6707 = vpop.f32.mrf.mxu0
  %v6708 = vadd.f32 %v6539, %v6707
  %6709 = vmatmul.bf16.gmra.mxu0 %v1983
  %v6710 = vpop.f32.mrf.mxu0
  %v6711 = vadd.f32 %v6542, %v6710
  %v6712 = vpop.f32.mrf.mxu0
  %v6713 = vadd.f32 %v6544, %v6712
  %6714 = vmatmul.bf16.gmra.mxu0 %v1986
  %v6715 = vpop.f32.mrf.mxu0
  %v6716 = vadd.f32 %v6547, %v6715
  %v6717 = vpop.f32.mrf.mxu0
  %v6718 = vadd.f32 %v6549, %v6717
  %6719 = vdwg.mxu0
  %v6720 = vmul.f32 %v3012, 0.2
  %v6721 = vmul.f32 %v4195, 0.2
  %v6722 = vmul.f32 %v5378, 0.2
  %v6723 = vmul.f32 %v6561, 0.2
  %v6724 = vmul.f32 %v3014, 0.2
  %v6725 = vmul.f32 %v4197, 0.2
  %v6726 = vmul.f32 %v5380, 0.2
  %v6727 = vmul.f32 %v6563, 0.2
  %v6728 = vmul.f32 %v3017, 0.2
  %v6729 = vmul.f32 %v4200, 0.2
  %v6730 = vmul.f32 %v5383, 0.2
  %v6731 = vmul.f32 %v6566, 0.2
  %v6732 = vmul.f32 %v3019, 0.2
  %v6733 = vmul.f32 %v4202, 0.2
  %v6734 = vmul.f32 %v5385, 0.2
  %v6735 = vmul.f32 %v6568, 0.2
  %v6736 = vmul.f32 %v3022, 0.2
  %v6737 = vmul.f32 %v4205, 0.2
  %v6738 = vmul.f32 %v5388, 0.2
  %v6739 = vmul.f32 %v6571, 0.2
  %v6740 = vmul.f32 %v3024, 0.2
  %v6741 = vmul.f32 %v4207, 0.2
  %v6742 = vmul.f32 %v5390, 0.2
  %v6743 = vmul.f32 %v6573, 0.2
  %v6744 = vmul.f32 %v3027, 0.2
  %v6745 = vmul.f32 %v4210, 0.2
  %v6746 = vmul.f32 %v5393, 0.2
  %v6747 = vmul.f32 %v6576, 0.2
  %v6748 = vmul.f32 %v3029, 0.2
  %v6749 = vmul.f32 %v4212, 0.2
  %v6750 = vmul.f32 %v5395, 0.2
  %v6751 = vmul.f32 %v6578, 0.2
  %v6752 = vmul.f32 %v3032, 0.2
  %v6753 = vmul.f32 %v4215, 0.2
  %v6754 = vmul.f32 %v5398, 0.2
  %v6755 = vmul.f32 %v6581, 0.2
  %v6756 = vmul.f32 %v3034, 0.2
  %v6757 = vmul.f32 %v4217, 0.2
  %v6758 = vmul.f32 %v5400, 0.2
  %v6759 = vmul.f32 %v6583, 0.2
  %v6760 = vmul.f32 %v3037, 0.2
  %v6761 = vmul.f32 %v4220, 0.2
  %v6762 = vmul.f32 %v5403, 0.2
  %v6763 = vmul.f32 %v6586, 0.2
  %v6764 = vmul.f32 %v3039, 0.2
  %v6765 = vmul.f32 %v4222, 0.2
  %v6766 = vmul.f32 %v5405, 0.2
  %v6767 = vmul.f32 %v6588, 0.2
  %v6768 = vmul.f32 %v3042, 0.2
  %v6769 = vmul.f32 %v4225, 0.2
  %v6770 = vmul.f32 %v5408, 0.2
  %v6771 = vmul.f32 %v6591, 0.2
  %v6772 = vmul.f32 %v3044, 0.2
  %v6773 = vmul.f32 %v4227, 0.2
  %v6774 = vmul.f32 %v5410, 0.2
  %v6775 = vmul.f32 %v6593, 0.2
  %v6776 = vmul.f32 %v3047, 0.2
  %v6777 = vmul.f32 %v4230, 0.2
  %v6778 = vmul.f32 %v5413, 0.2
  %v6779 = vmul.f32 %v6596, 0.2
  %v6780 = vmul.f32 %v3049, 0.2
  %v6781 = vmul.f32 %v4232, 0.2
  %v6782 = vmul.f32 %v5415, 0.2
  %v6783 = vmul.f32 %v6598, 0.2
  %v6784 = vmul.f32 %v3052, 0.2
  %v6785 = vmul.f32 %v4235, 0.2
  %v6786 = vmul.f32 %v5418, 0.2
  %v6787 = vmul.f32 %v6601, 0.2
  %v6788 = vmul.f32 %v3054, 0.2
  %v6789 = vmul.f32 %v4237, 0.2
  %v6790 = vmul.f32 %v5420, 0.2
  %v6791 = vmul.f32 %v6603, 0.2
  %v6792 = vmul.f32 %v3057, 0.2
  %v6793 = vmul.f32 %v4240, 0.2
  %v6794 = vmul.f32 %v5423, 0.2
  %v6795 = vmul.f32 %v6606, 0.2
  %v6796 = vmul.f32 %v3059, 0.2
  %v6797 = vmul.f32 %v4242, 0.2
  %v6798 = vmul.f32 %v5425, 0.2
  %v6799 = vmul.f32 %v6608, 0.2
  %v6800 = vmul.f32 %v3062, 0.2
  %v6801 = vmul.f32 %v4245, 0.2
  %v6802 = vmul.f32 %v5428, 0.2
  %v6803 = vmul.f32 %v6611, 0.2
  %v6804 = vmul.f32 %v3064, 0.2
  %v6805 = vmul.f32 %v4247, 0.2
  %v6806 = vmul.f32 %v5430, 0.2
  %v6807 = vmul.f32 %v6613, 0.2
  %v6808 = vmul.f32 %v3067, 0.2
  %v6809 = vmul.f32 %v4250, 0.2
  %v6810 = vmul.f32 %v5433, 0.2
  %v6811 = vmul.f32 %v6616, 0.2
  %v6812 = vmul.f32 %v3069, 0.2
  %v6813 = vmul.f32 %v4252, 0.2
  %v6814 = vmul.f32 %v5435, 0.2
  %v6815 = vmul.f32 %v6618, 0.2
  %v6816 = vmul.f32 %v3072, 0.2
  %v6817 = vmul.f32 %v4255, 0.2
  %v6818 = vmul.f32 %v5438, 0.2
  %v6819 = vmul.f32 %v6621, 0.2
  %v6820 = vmul.f32 %v3074, 0.2
  %v6821 = vmul.f32 %v4257, 0.2
  %v6822 = vmul.f32 %v5440, 0.2
  %v6823 = vmul.f32 %v6623, 0.2
  %v6824 = vmul.f32 %v3077, 0.2
  %v6825 = vmul.f32 %v4260, 0.2
  %v6826 = vmul.f32 %v5443, 0.2
  %v6827 = vmul.f32 %v6626, 0.2
  %v6828 = vmul.f32 %v3079, 0.2
  %v6829 = vmul.f32 %v4262, 0.2
  %v6830 = vmul.f32 %v5445, 0.2
  %v6831 = vmul.f32 %v6628, 0.2
  %v6832 = vmul.f32 %v3082, 0.2
  %v6833 = vmul.f32 %v4265, 0.2
  %v6834 = vmul.f32 %v5448, 0.2
  %v6835 = vmul.f32 %v6631, 0.2
  %v6836 = vmul.f32 %v3084, 0.2
  %v6837 = vmul.f32 %v4267, 0.2
  %v6838 = vmul.f32 %v5450, 0.2
  %v6839 = vmul.f32 %v6633, 0.2
  %v6840 = vmul.f32 %v3087, 0.2
  %v6841 = vmul.f32 %v4270, 0.2
  %v6842 = vmul.f32 %v5453, 0.2
  %v6843 = vmul.f32 %v6636, 0.2
  %v6844 = vmul.f32 %v3089, 0.2
  %v6845 = vmul.f32 %v4272, 0.2
  %v6846 = vmul.f32 %v5455, 0.2
  %v6847 = vmul.f32 %v6638, 0.2
  %v6848 = vmul.f32 %v3092, 0.2
  %v6849 = vmul.f32 %v4275, 0.2
  %v6850 = vmul.f32 %v5458, 0.2
  %v6851 = vmul.f32 %v6641, 0.2
  %v6852 = vmul.f32 %v3094, 0.2
  %v6853 = vmul.f32 %v4277, 0.2
  %v6854 = vmul.f32 %v5460, 0.2
  %v6855 = vmul.f32 %v6643, 0.2
  %v6856 = vmul.f32 %v3097, 0.2
  %v6857 = vmul.f32 %v4280, 0.2
  %v6858 = vmul.f32 %v5463, 0.2
  %v6859 = vmul.f32 %v6646, 0.2
  %v6860 = vmul.f32 %v3099, 0.2
  %v6861 = vmul.f32 %v4282, 0.2
  %v6862 = vmul.f32 %v5465, 0.2
  %v6863 = vmul.f32 %v6648, 0.2
  %v6864 = vmul.f32 %v3102, 0.2
  %v6865 = vmul.f32 %v4285, 0.2
  %v6866 = vmul.f32 %v5468, 0.2
  %v6867 = vmul.f32 %v6651, 0.2
  %v6868 = vmul.f32 %v3104, 0.2
  %v6869 = vmul.f32 %v4287, 0.2
  %v6870 = vmul.f32 %v5470, 0.2
  %v6871 = vmul.f32 %v6653, 0.2
  %v6872 = vmul.f32 %v3107, 0.2
  %v6873 = vmul.f32 %v4290, 0.2
  %v6874 = vmul.f32 %v5473, 0.2
  %v6875 = vmul.f32 %v6656, 0.2
  %v6876 = vmul.f32 %v3109, 0.2
  %v6877 = vmul.f32 %v4292, 0.2
  %v6878 = vmul.f32 %v5475, 0.2
  %v6879 = vmul.f32 %v6658, 0.2
  %v6880 = vmul.f32 %v3112, 0.2
  %v6881 = vmul.f32 %v4295, 0.2
  %v6882 = vmul.f32 %v5478, 0.2
  %v6883 = vmul.f32 %v6661, 0.2
  %v6884 = vmul.f32 %v3114, 0.2
  %v6885 = vmul.f32 %v4297, 0.2
  %v6886 = vmul.f32 %v5480, 0.2
  %v6887 = vmul.f32 %v6663, 0.2
  %v6888 = vmul.f32 %v3117, 0.2
  %v6889 = vmul.f32 %v4300, 0.2
  %v6890 = vmul.f32 %v5483, 0.2
  %v6891 = vmul.f32 %v6666, 0.2
  %v6892 = vmul.f32 %v3119, 0.2
  %v6893 = vmul.f32 %v4302, 0.2
  %v6894 = vmul.f32 %v5485, 0.2
  %v6895 = vmul.f32 %v6668, 0.2
  %v6896 = vmul.f32 %v3122, 0.2
  %v6897 = vmul.f32 %v4305, 0.2
  %v6898 = vmul.f32 %v5488, 0.2
  %v6899 = vmul.f32 %v6671, 0.2
  %v6900 = vmul.f32 %v3124, 0.2
  %v6901 = vmul.f32 %v4307, 0.2
  %v6902 = vmul.f32 %v5490, 0.2
  %v6903 = vmul.f32 %v6673, 0.2
  %v6904 = vmul.f32 %v3127, 0.2
  %v6905 = vmul.f32 %v4310, 0.2
  %v6906 = vmul.f32 %v5493, 0.2
  %v6907 = vmul.f32 %v6676, 0.2
  %v6908 = vmul.f32 %v3129, 0.2
  %v6909 = vmul.f32 %v4312, 0.2
  %v6910 = vmul.f32 %v5495, 0.2
  %v6911 = vmul.f32 %v6678, 0.2
  %v6912 = vmul.f32 %v3132, 0.2
  %v6913 = vmul.f32 %v4315, 0.2
  %v6914 = vmul.f32 %v5498, 0.2
  %v6915 = vmul.f32 %v6681, 0.2
  %v6916 = vmul.f32 %v3134, 0.2
  %v6917 = vmul.f32 %v4317, 0.2
  %v6918 = vmul.f32 %v5500, 0.2
  %v6919 = vmul.f32 %v6683, 0.2
  %v6920 = vmul.f32 %v3137, 0.2
  %v6921 = vmul.f32 %v4320, 0.2
  %v6922 = vmul.f32 %v5503, 0.2
  %v6923 = vmul.f32 %v6686, 0.2
  %v6924 = vmul.f32 %v3139, 0.2
  %v6925 = vmul.f32 %v4322, 0.2
  %v6926 = vmul.f32 %v5505, 0.2
  %v6927 = vmul.f32 %v6688, 0.2
  %v6928 = vmul.f32 %v3142, 0.2
  %v6929 = vmul.f32 %v4325, 0.2
  %v6930 = vmul.f32 %v5508, 0.2
  %v6931 = vmul.f32 %v6691, 0.2
  %v6932 = vmul.f32 %v3144, 0.2
  %v6933 = vmul.f32 %v4327, 0.2
  %v6934 = vmul.f32 %v5510, 0.2
  %v6935 = vmul.f32 %v6693, 0.2
  %v6936 = vmul.f32 %v3147, 0.2
  %v6937 = vmul.f32 %v4330, 0.2
  %v6938 = vmul.f32 %v5513, 0.2
  %v6939 = vmul.f32 %v6696, 0.2
  %v6940 = vmul.f32 %v3149, 0.2
  %v6941 = vmul.f32 %v4332, 0.2
  %v6942 = vmul.f32 %v5515, 0.2
  %v6943 = vmul.f32 %v6698, 0.2
  %v6944 = vmul.f32 %v3152, 0.2
  %v6945 = vmul.f32 %v4335, 0.2
  %v6946 = vmul.f32 %v5518, 0.2
  %v6947 = vmul.f32 %v6701, 0.2
  %v6948 = vmul.f32 %v3154, 0.2
  %v6949 = vmul.f32 %v4337, 0.2
  %v6950 = vmul.f32 %v5520, 0.2
  %v6951 = vmul.f32 %v6703, 0.2
  %v6952 = vmul.f32 %v3157, 0.2
  %v6953 = vmul.f32 %v4340, 0.2
  %v6954 = vmul.f32 %v5523, 0.2
  %v6955 = vmul.f32 %v6706, 0.2
  %v6956 = vmul.f32 %v3159, 0.2
  %v6957 = vmul.f32 %v4342, 0.2
  %v6958 = vmul.f32 %v5525, 0.2
  %v6959 = vmul.f32 %v6708, 0.2
  %v6960 = vmul.f32 %v3162, 0.2
  %v6961 = vmul.f32 %v4345, 0.2
  %v6962 = vmul.f32 %v5528, 0.2
  %v6963 = vmul.f32 %v6711, 0.2
  %v6964 = vmul.f32 %v3164, 0.2
  %v6965 = vmul.f32 %v4347, 0.2
  %v6966 = vmul.f32 %v5530, 0.2
  %v6967 = vmul.f32 %v6713, 0.2
  %v6968 = vmul.f32 %v3167, 0.2
  %v6969 = vmul.f32 %v4350, 0.2
  %v6970 = vmul.f32 %v5533, 0.2
  %v6971 = vmul.f32 %v6716, 0.2
  %v6972 = vmul.f32 %v3169, 0.2
  %v6973 = vmul.f32 %v4352, 0.2
  %v6974 = vmul.f32 %v5535, 0.2
  %v6975 = vmul.f32 %v6718, 0.2
  %v6976 = vmax.f32 %v3012, %v6720
  %v6977 = vmax.f32 %v4195, %v6721
  %v6978 = vmax.f32 %v5378, %v6722
  %v6979 = vmax.f32 %v6561, %v6723
  %v6980 = vmax.f32 %v3014, %v6724
  %v6981 = vmax.f32 %v4197, %v6725
  %v6982 = vmax.f32 %v5380, %v6726
  %v6983 = vmax.f32 %v6563, %v6727
  %v6984 = vmax.f32 %v3017, %v6728
  %v6985 = vmax.f32 %v4200, %v6729
  %v6986 = vmax.f32 %v5383, %v6730
  %v6987 = vmax.f32 %v6566, %v6731
  %v6988 = vmax.f32 %v3019, %v6732
  %v6989 = vmax.f32 %v4202, %v6733
  %v6990 = vmax.f32 %v5385, %v6734
  %v6991 = vmax.f32 %v6568, %v6735
  %v6992 = vmax.f32 %v3022, %v6736
  %v6993 = vmax.f32 %v4205, %v6737
  %v6994 = vmax.f32 %v5388, %v6738
  %v6995 = vmax.f32 %v6571, %v6739
  %v6996 = vmax.f32 %v3024, %v6740
  %v6997 = vmax.f32 %v4207, %v6741
  %v6998 = vmax.f32 %v5390, %v6742
  %v6999 = vmax.f32 %v6573, %v6743
  %v7000 = vmax.f32 %v3027, %v6744
  %v7001 = vmax.f32 %v4210, %v6745
  %v7002 = vmax.f32 %v5393, %v6746
  %v7003 = vmax.f32 %v6576, %v6747
  %v7004 = vmax.f32 %v3029, %v6748
  %v7005 = vmax.f32 %v4212, %v6749
  %v7006 = vmax.f32 %v5395, %v6750
  %v7007 = vmax.f32 %v6578, %v6751
  %v7008 = vmax.f32 %v3032, %v6752
  %v7009 = vmax.f32 %v4215, %v6753
  %v7010 = vmax.f32 %v5398, %v6754
  %v7011 = vmax.f32 %v6581, %v6755
  %v7012 = vmax.f32 %v3034, %v6756
  %v7013 = vmax.f32 %v4217, %v6757
  %v7014 = vmax.f32 %v5400, %v6758
  %v7015 = vmax.f32 %v6583, %v6759
  %v7016 = vmax.f32 %v3037, %v6760
  %v7017 = vmax.f32 %v4220, %v6761
  %v7018 = vmax.f32 %v5403, %v6762
  %v7019 = vmax.f32 %v6586, %v6763
  %v7020 = vmax.f32 %v3039, %v6764
  %v7021 = vmax.f32 %v4222, %v6765
  %v7022 = vmax.f32 %v5405, %v6766
  %v7023 = vmax.f32 %v6588, %v6767
  %v7024 = vmax.f32 %v3042, %v6768
  %v7025 = vmax.f32 %v4225, %v6769
  %v7026 = vmax.f32 %v5408, %v6770
  %v7027 = vmax.f32 %v6591, %v6771
  %v7028 = vmax.f32 %v3044, %v6772
  %v7029 = vmax.f32 %v4227, %v6773
  %v7030 = vmax.f32 %v5410, %v6774
  %v7031 = vmax.f32 %v6593, %v6775
  %v7032 = vmax.f32 %v3047, %v6776
  %v7033 = vmax.f32 %v4230, %v6777
  %v7034 = vmax.f32 %v5413, %v6778
  %v7035 = vmax.f32 %v6596, %v6779
  %v7036 = vmax.f32 %v3049, %v6780
  %v7037 = vmax.f32 %v4232, %v6781
  %v7038 = vmax.f32 %v5415, %v6782
  %v7039 = vmax.f32 %v6598, %v6783
  %v7040 = vmax.f32 %v3052, %v6784
  %v7041 = vmax.f32 %v4235, %v6785
  %v7042 = vmax.f32 %v5418, %v6786
  %v7043 = vmax.f32 %v6601, %v6787
  %v7044 = vmax.f32 %v3054, %v6788
  %v7045 = vmax.f32 %v4237, %v6789
  %v7046 = vmax.f32 %v5420, %v6790
  %v7047 = vmax.f32 %v6603, %v6791
  %v7048 = vmax.f32 %v3057, %v6792
  %v7049 = vmax.f32 %v4240, %v6793
  %v7050 = vmax.f32 %v5423, %v6794
  %v7051 = vmax.f32 %v6606, %v6795
  %v7052 = vmax.f32 %v3059, %v6796
  %v7053 = vmax.f32 %v4242, %v6797
  %v7054 = vmax.f32 %v5425, %v6798
  %v7055 = vmax.f32 %v6608, %v6799
  %v7056 = vmax.f32 %v3062, %v6800
  %v7057 = vmax.f32 %v4245, %v6801
  %v7058 = vmax.f32 %v5428, %v6802
  %v7059 = vmax.f32 %v6611, %v6803
  %v7060 = vmax.f32 %v3064, %v6804
  %v7061 = vmax.f32 %v4247, %v6805
  %v7062 = vmax.f32 %v5430, %v6806
  %v7063 = vmax.f32 %v6613, %v6807
  %v7064 = vmax.f32 %v3067, %v6808
  %v7065 = vmax.f32 %v4250, %v6809
  %v7066 = vmax.f32 %v5433, %v6810
  %v7067 = vmax.f32 %v6616, %v6811
  %v7068 = vmax.f32 %v3069, %v6812
  %v7069 = vmax.f32 %v4252, %v6813
  %v7070 = vmax.f32 %v5435, %v6814
  %v7071 = vmax.f32 %v6618, %v6815
  %v7072 = vmax.f32 %v3072, %v6816
  %v7073 = vmax.f32 %v4255, %v6817
  %v7074 = vmax.f32 %v5438, %v6818
  %v7075 = vmax.f32 %v6621, %v6819
  %v7076 = vmax.f32 %v3074, %v6820
  %v7077 = vmax.f32 %v4257, %v6821
  %v7078 = vmax.f32 %v5440, %v6822
  %v7079 = vmax.f32 %v6623, %v6823
  %v7080 = vmax.f32 %v3077, %v6824
  %v7081 = vmax.f32 %v4260, %v6825
  %v7082 = vmax.f32 %v5443, %v6826
  %v7083 = vmax.f32 %v6626, %v6827
  %v7084 = vmax.f32 %v3079, %v6828
  %v7085 = vmax.f32 %v4262, %v6829
  %v7086 = vmax.f32 %v5445, %v6830
  %v7087 = vmax.f32 %v6628, %v6831
  %v7088 = vmax.f32 %v3082, %v6832
  %v7089 = vmax.f32 %v4265, %v6833
  %v7090 = vmax.f32 %v5448, %v6834
  %v7091 = vmax.f32 %v6631, %v6835
  %v7092 = vmax.f32 %v3084, %v6836
  %v7093 = vmax.f32 %v4267, %v6837
  %v7094 = vmax.f32 %v5450, %v6838
  %v7095 = vmax.f32 %v6633, %v6839
  %v7096 = vmax.f32 %v3087, %v6840
  %v7097 = vmax.f32 %v4270, %v6841
  %v7098 = vmax.f32 %v5453, %v6842
  %v7099 = vmax.f32 %v6636, %v6843
  %v7100 = vmax.f32 %v3089, %v6844
  %v7101 = vmax.f32 %v4272, %v6845
  %v7102 = vmax.f32 %v5455, %v6846
  %v7103 = vmax.f32 %v6638, %v6847
  %v7104 = vmax.f32 %v3092, %v6848
  %v7105 = vmax.f32 %v4275, %v6849
  %v7106 = vmax.f32 %v5458, %v6850
  %v7107 = vmax.f32 %v6641, %v6851
  %v7108 = vmax.f32 %v3094, %v6852
  %v7109 = vmax.f32 %v4277, %v6853
  %v7110 = vmax.f32 %v5460, %v6854
  %v7111 = vmax.f32 %v6643, %v6855
  %v7112 = vmax.f32 %v3097, %v6856
  %v7113 = vmax.f32 %v4280, %v6857
  %v7114 = vmax.f32 %v5463, %v6858
  %v7115 = vmax.f32 %v6646, %v6859
  %v7116 = vmax.f32 %v3099, %v6860
  %v7117 = vmax.f32 %v4282, %v6861
  %v7118 = vmax.f32 %v5465, %v6862
  %v7119 = vmax.f32 %v6648, %v6863
  %v7120 = vmax.f32 %v3102, %v6864
  %v7121 = vmax.f32 %v4285, %v6865
  %v7122 = vmax.f32 %v5468, %v6866
  %v7123 = vmax.f32 %v6651, %v6867
  %v7124 = vmax.f32 %v3104, %v6868
  %v7125 = vmax.f32 %v4287, %v6869
  %v7126 = vmax.f32 %v5470, %v6870
  %v7127 = vmax.f32 %v6653, %v6871
  %v7128 = vmax.f32 %v3107, %v6872
  %v7129 = vmax.f32 %v4290, %v6873
  %v7130 = vmax.f32 %v5473, %v6874
  %v7131 = vmax.f32 %v6656, %v6875
  %v7132 = vmax.f32 %v3109, %v6876
  %v7133 = vmax.f32 %v4292, %v6877
  %v7134 = vmax.f32 %v5475, %v6878
  %v7135 = vmax.f32 %v6658, %v6879
  %v7136 = vmax.f32 %v3112, %v6880
  %v7137 = vmax.f32 %v4295, %v6881
  %v7138 = vmax.f32 %v5478, %v6882
  %v7139 = vmax.f32 %v6661, %v6883
  %v7140 = vmax.f32 %v3114, %v6884
  %v7141 = vmax.f32 %v4297, %v6885
  %v7142 = vmax.f32 %v5480, %v6886
  %v7143 = vmax.f32 %v6663, %v6887
  %v7144 = vmax.f32 %v3117, %v6888
  %v7145 = vmax.f32 %v4300, %v6889
  %v7146 = vmax.f32 %v5483, %v6890
  %v7147 = vmax.f32 %v6666, %v6891
  %v7148 = vmax.f32 %v3119, %v6892
  %v7149 = vmax.f32 %v4302, %v6893
  %v7150 = vmax.f32 %v5485, %v6894
  %v7151 = vmax.f32 %v6668, %v6895
  %v7152 = vmax.f32 %v3122, %v6896
  %v7153 = vmax.f32 %v4305, %v6897
  %v7154 = vmax.f32 %v5488, %v6898
  %v7155 = vmax.f32 %v6671, %v6899
  %v7156 = vmax.f32 %v3124, %v6900
  %v7157 = vmax.f32 %v4307, %v6901
  %v7158 = vmax.f32 %v5490, %v6902
  %v7159 = vmax.f32 %v6673, %v6903
  %v7160 = vmax.f32 %v3127, %v6904
  %v7161 = vmax.f32 %v4310, %v6905
  %v7162 = vmax.f32 %v5493, %v6906
  %v7163 = vmax.f32 %v6676, %v6907
  %v7164 = vmax.f32 %v3129, %v6908
  %v7165 = vmax.f32 %v4312, %v6909
  %v7166 = vmax.f32 %v5495, %v6910
  %v7167 = vmax.f32 %v6678, %v6911
  %v7168 = vmax.f32 %v3132, %v6912
  %v7169 = vmax.f32 %v4315, %v6913
  %v7170 = vmax.f32 %v5498, %v6914
  %v7171 = vmax.f32 %v6681, %v6915
  %v7172 = vmax.f32 %v3134, %v6916
  %v7173 = vmax.f32 %v4317, %v6917
  %v7174 = vmax.f32 %v5500, %v6918
  %v7175 = vmax.f32 %v6683, %v6919
  %v7176 = vmax.f32 %v3137, %v6920
  %v7177 = vmax.f32 %v4320, %v6921
  %v7178 = vmax.f32 %v5503, %v6922
  %v7179 = vmax.f32 %v6686, %v6923
  %v7180 = vmax.f32 %v3139, %v6924
  %v7181 = vmax.f32 %v4322, %v6925
  %v7182 = vmax.f32 %v5505, %v6926
  %v7183 = vmax.f32 %v6688, %v6927
  %v7184 = vmax.f32 %v3142, %v6928
  %v7185 = vmax.f32 %v4325, %v6929
  %v7186 = vmax.f32 %v5508, %v6930
  %v7187 = vmax.f32 %v6691, %v6931
  %v7188 = vmax.f32 %v3144, %v6932
  %v7189 = vmax.f32 %v4327, %v6933
  %v7190 = vmax.f32 %v5510, %v6934
  %v7191 = vmax.f32 %v6693, %v6935
  %v7192 = vmax.f32 %v3147, %v6936
  %v7193 = vmax.f32 %v4330, %v6937
  %v7194 = vmax.f32 %v5513, %v6938
  %v7195 = vmax.f32 %v6696, %v6939
  %v7196 = vmax.f32 %v3149, %v6940
  %v7197 = vmax.f32 %v4332, %v6941
  %v7198 = vmax.f32 %v5515, %v6942
  %v7199 = vmax.f32 %v6698, %v6943
  %v7200 = vmax.f32 %v3152, %v6944
  %v7201 = vmax.f32 %v4335, %v6945
  %v7202 = vmax.f32 %v5518, %v6946
  %v7203 = vmax.f32 %v6701, %v6947
  %v7204 = vmax.f32 %v3154, %v6948
  %v7205 = vmax.f32 %v4337, %v6949
  %v7206 = vmax.f32 %v5520, %v6950
  %v7207 = vmax.f32 %v6703, %v6951
  %v7208 = vmax.f32 %v3157, %v6952
  %v7209 = vmax.f32 %v4340, %v6953
  %v7210 = vmax.f32 %v5523, %v6954
  %v7211 = vmax.f32 %v6706, %v6955
  %v7212 = vmax.f32 %v3159, %v6956
  %v7213 = vmax.f32 %v4342, %v6957
  %v7214 = vmax.f32 %v5525, %v6958
  %v7215 = vmax.f32 %v6708, %v6959
  %v7216 = vmax.f32 %v3162, %v6960
  %v7217 = vmax.f32 %v4345, %v6961
  %v7218 = vmax.f32 %v5528, %v6962
  %v7219 = vmax.f32 %v6711, %v6963
  %v7220 = vmax.f32 %v3164, %v6964
  %v7221 = vmax.f32 %v4347, %v6965
  %v7222 = vmax.f32 %v5530, %v6966
  %v7223 = vmax.f32 %v6713, %v6967
  %v7224 = vmax.f32 %v3167, %v6968
  %v7225 = vmax.f32 %v4350, %v6969
  %v7226 = vmax.f32 %v5533, %v6970
  %v7227 = vmax.f32 %v6716, %v6971
  %v7228 = vmax.f32 %v3169, %v6972
  %v7229 = vmax.f32 %v4352, %v6973
  %v7230 = vmax.f32 %v5535, %v6974
  %v7231 = vmax.f32 %v6718, %v6975
  %v7232 = vpack.c.bf16 %v6980, %v6976
  %v7233 = vpack.c.bf16 %v6981, %v6977
  %v7234 = vpack.c.bf16 %v6982, %v6978
  %v7235 = vpack.c.bf16 %v6983, %v6979
  %v7236 = vpack.c.bf16 %v6988, %v6984
  %v7237 = vpack.c.bf16 %v6989, %v6985
  %v7238 = vpack.c.bf16 %v6990, %v6986
  %v7239 = vpack.c.bf16 %v6991, %v6987
  %v7240 = vpack.c.bf16 %v6996, %v6992
  %v7241 = vpack.c.bf16 %v6997, %v6993
  %v7242 = vpack.c.bf16 %v6998, %v6994
  %v7243 = vpack.c.bf16 %v6999, %v6995
  %v7244 = vpack.c.bf16 %v7004, %v7000
  %v7245 = vpack.c.bf16 %v7005, %v7001
  %v7246 = vpack.c.bf16 %v7006, %v7002
  %v7247 = vpack.c.bf16 %v7007, %v7003
  %v7248 = vpack.c.bf16 %v7012, %v7008
  %v7249 = vpack.c.bf16 %v7013, %v7009
  %v7250 = vpack.c.bf16 %v7014, %v7010
  %v7251 = vpack.c.bf16 %v7015, %v7011
  %v7252 = vpack.c.bf16 %v7020, %v7016
  %v7253 = vpack.c.bf16 %v7021, %v7017
  %v7254 = vpack.c.bf16 %v7022, %v7018
  %v7255 = vpack.c.bf16 %v7023, %v7019
  %v7256 = vpack.c.bf16 %v7028, %v7024
  %v7257 = vpack.c.bf16 %v7029, %v7025
  %v7258 = vpack.c.bf16 %v7030, %v7026
  %v7259 = vpack.c.bf16 %v7031, %v7027
  %v7260 = vpack.c.bf16 %v7036, %v7032
  %v7261 = vpack.c.bf16 %v7037, %v7033
  %v7262 = vpack.c.bf16 %v7038, %v7034
  %v7263 = vpack.c.bf16 %v7039, %v7035
  %v7264 = vpack.c.bf16 %v7044, %v7040
  %v7265 = vpack.c.bf16 %v7045, %v7041
  %v7266 = vpack.c.bf16 %v7046, %v7042
  %v7267 = vpack.c.bf16 %v7047, %v7043
  %v7268 = vpack.c.bf16 %v7052, %v7048
  %v7269 = vpack.c.bf16 %v7053, %v7049
  %v7270 = vpack.c.bf16 %v7054, %v7050
  %v7271 = vpack.c.bf16 %v7055, %v7051
  %v7272 = vpack.c.bf16 %v7060, %v7056
  %v7273 = vpack.c.bf16 %v7061, %v7057
  %v7274 = vpack.c.bf16 %v7062, %v7058
  %v7275 = vpack.c.bf16 %v7063, %v7059
  %v7276 = vpack.c.bf16 %v7068, %v7064
  %v7277 = vpack.c.bf16 %v7069, %v7065
  %v7278 = vpack.c.bf16 %v7070, %v7066
  %v7279 = vpack.c.bf16 %v7071, %v7067
  %v7280 = vpack.c.bf16 %v7076, %v7072
  %v7281 = vpack.c.bf16 %v7077, %v7073
  %v7282 = vpack.c.bf16 %v7078, %v7074
  %v7283 = vpack.c.bf16 %v7079, %v7075
  %v7284 = vpack.c.bf16 %v7084, %v7080
  %v7285 = vpack.c.bf16 %v7085, %v7081
  %v7286 = vpack.c.bf16 %v7086, %v7082
  %v7287 = vpack.c.bf16 %v7087, %v7083
  %v7288 = vpack.c.bf16 %v7092, %v7088
  %v7289 = vpack.c.bf16 %v7093, %v7089
  %v7290 = vpack.c.bf16 %v7094, %v7090
  %v7291 = vpack.c.bf16 %v7095, %v7091
  %v7292 = vpack.c.bf16 %v7100, %v7096
  %v7293 = vpack.c.bf16 %v7101, %v7097
  %v7294 = vpack.c.bf16 %v7102, %v7098
  %v7295 = vpack.c.bf16 %v7103, %v7099
  %v7296 = vpack.c.bf16 %v7108, %v7104
  %v7297 = vpack.c.bf16 %v7109, %v7105
  %v7298 = vpack.c.bf16 %v7110, %v7106
  %v7299 = vpack.c.bf16 %v7111, %v7107
  %v7300 = vpack.c.bf16 %v7116, %v7112
  %v7301 = vpack.c.bf16 %v7117, %v7113
  %v7302 = vpack.c.bf16 %v7118, %v7114
  %v7303 = vpack.c.bf16 %v7119, %v7115
  %v7304 = vpack.c.bf16 %v7124, %v7120
  %v7305 = vpack.c.bf16 %v7125, %v7121
  %v7306 = vpack.c.bf16 %v7126, %v7122
  %v7307 = vpack.c.bf16 %v7127, %v7123
  %v7308 = vpack.c.bf16 %v7132, %v7128
  %v7309 = vpack.c.bf16 %v7133, %v7129
  %v7310 = vpack.c.bf16 %v7134, %v7130
  %v7311 = vpack.c.bf16 %v7135, %v7131
  %v7312 = vpack.c.bf16 %v7140, %v7136
  %v7313 = vpack.c.bf16 %v7141, %v7137
  %v7314 = vpack.c.bf16 %v7142, %v7138
  %v7315 = vpack.c.bf16 %v7143, %v7139
  %v7316 = vpack.c.bf16 %v7148, %v7144
  %v7317 = vpack.c.bf16 %v7149, %v7145
  %v7318 = vpack.c.bf16 %v7150, %v7146
  %v7319 = vpack.c.bf16 %v7151, %v7147
  %v7320 = vpack.c.bf16 %v7156, %v7152
  %v7321 = vpack.c.bf16 %v7157, %v7153
  %v7322 = vpack.c.bf16 %v7158, %v7154
  %v7323 = vpack.c.bf16 %v7159, %v7155
  %v7324 = vpack.c.bf16 %v7164, %v7160
  %v7325 = vpack.c.bf16 %v7165, %v7161
  %v7326 = vpack.c.bf16 %v7166, %v7162
  %v7327 = vpack.c.bf16 %v7167, %v7163
  %v7328 = vpack.c.bf16 %v7172, %v7168
  %v7329 = vpack.c.bf16 %v7173, %v7169
  %v7330 = vpack.c.bf16 %v7174, %v7170
  %v7331 = vpack.c.bf16 %v7175, %v7171
  %v7332 = vpack.c.bf16 %v7180, %v7176
  %v7333 = vpack.c.bf16 %v7181, %v7177
  %v7334 = vpack.c.bf16 %v7182, %v7178
  %v7335 = vpack.c.bf16 %v7183, %v7179
  %v7336 = vpack.c.bf16 %v7188, %v7184
  %v7337 = vpack.c.bf16 %v7189, %v7185
  %v7338 = vpack.c.bf16 %v7190, %v7186
  %v7339 = vpack.c.bf16 %v7191, %v7187
  %v7340 = vpack.c.bf16 %v7196, %v7192
  %v7341 = vpack.c.bf16 %v7197, %v7193
  %v7342 = vpack.c.bf16 %v7198, %v7194
  %v7343 = vpack.c.bf16 %v7199, %v7195
  %v7344 = vpack.c.bf16 %v7204, %v7200
  %v7345 = vpack.c.bf16 %v7205, %v7201
  %v7346 = vpack.c.bf16 %v7206, %v7202
  %v7347 = vpack.c.bf16 %v7207, %v7203
  %v7348 = vpack.c.bf16 %v7212, %v7208
  %v7349 = vpack.c.bf16 %v7213, %v7209
  %v7350 = vpack.c.bf16 %v7214, %v7210
  %v7351 = vpack.c.bf16 %v7215, %v7211
  %v7352 = vpack.c.bf16 %v7220, %v7216
  %v7353 = vpack.c.bf16 %v7221, %v7217
  %v7354 = vpack.c.bf16 %v7222, %v7218
  %v7355 = vpack.c.bf16 %v7223, %v7219
  %v7356 = vpack.c.bf16 %v7228, %v7224
  %v7357 = vpack.c.bf16 %v7229, %v7225
  %v7358 = vpack.c.bf16 %v7230, %v7226
  %v7359 = vpack.c.bf16 %v7231, %v7227
  %v7360 = vld [vmem:[%s3] sm:$0xff]
  %v7361 = vld [vmem:[%s3 + $0x8] sm:$0xff]
  %v7362 = vld [vmem:[%s3 + $0x10] sm:$0xff]
  %v7363 = vld [vmem:[%s3 + $0x18] sm:$0xff]
  %v7364 = vld [vmem:[%s3 + $0x20] sm:$0xff]
  %v7365 = vld [vmem:[%s3 + $0x28] sm:$0xff]
  %v7366 = vld [vmem:[%s3 + $0x30] sm:$0xff]
  %v7367 = vld [vmem:[%s3 + $0x38] sm:$0xff]
  %v7368 = vld [vmem:[%s3 + $0x40] sm:$0xff]
  %v7369 = vld [vmem:[%s3 + $0x48] sm:$0xff]
  %v7370 = vld [vmem:[%s3 + $0x50] sm:$0xff]
  %v7371 = vld [vmem:[%s3 + $0x58] sm:$0xff]
  %v7372 = vld [vmem:[%s3 + $0x60] sm:$0xff]
  %v7373 = vld [vmem:[%s3 + $0x68] sm:$0xff]
  %v7374 = vld [vmem:[%s3 + $0x70] sm:$0xff]
  %v7375 = vld [vmem:[%s3 + $0x78] sm:$0xff]
  %v7376 = vld [vmem:[%s3 + $0x80] sm:$0xff]
  %v7377 = vld [vmem:[%s3 + $0x88] sm:$0xff]
  %v7378 = vld [vmem:[%s3 + $0x90] sm:$0xff]
  %v7379 = vld [vmem:[%s3 + $0x98] sm:$0xff]
  %v7380 = vld [vmem:[%s3 + $0xa0] sm:$0xff]
  %v7381 = vld [vmem:[%s3 + $0xa8] sm:$0xff]
  %v7382 = vld [vmem:[%s3 + $0xb0] sm:$0xff]
  %v7383 = vld [vmem:[%s3 + $0xb8] sm:$0xff]
  %v7384 = vld [vmem:[%s3 + $0xc0] sm:$0xff]
  %v7385 = vld [vmem:[%s3 + $0xc8] sm:$0xff]
  %v7386 = vld [vmem:[%s3 + $0xd0] sm:$0xff]
  %v7387 = vld [vmem:[%s3 + $0xd8] sm:$0xff]
  %v7388 = vld [vmem:[%s3 + $0xe0] sm:$0xff]
  %v7389 = vld [vmem:[%s3 + $0xe8] sm:$0xff]
  %v7390 = vld [vmem:[%s3 + $0xf0] sm:$0xff]
  %v7391 = vld [vmem:[%s3 + $0xf8] sm:$0xff]
  %v7392 = vld [vmem:[%s3 + $0x100] sm:$0xff]
  %v7393 = vld [vmem:[%s3 + $0x108] sm:$0xff]
  %v7394 = vld [vmem:[%s3 + $0x110] sm:$0xff]
  %v7395 = vld [vmem:[%s3 + $0x118] sm:$0xff]
  %v7396 = vld [vmem:[%s3 + $0x120] sm:$0xff]
  %v7397 = vld [vmem:[%s3 + $0x128] sm:$0xff]
  %v7398 = vld [vmem:[%s3 + $0x130] sm:$0xff]
  %v7399 = vld [vmem:[%s3 + $0x138] sm:$0xff]
  %v7400 = vld [vmem:[%s3 + $0x140] sm:$0xff]
  %v7401 = vld [vmem:[%s3 + $0x148] sm:$0xff]
  %v7402 = vld [vmem:[%s3 + $0x150] sm:$0xff]
  %v7403 = vld [vmem:[%s3 + $0x158] sm:$0xff]
  %v7404 = vld [vmem:[%s3 + $0x160] sm:$0xff]
  %v7405 = vld [vmem:[%s3 + $0x168] sm:$0xff]
  %v7406 = vld [vmem:[%s3 + $0x170] sm:$0xff]
  %v7407 = vld [vmem:[%s3 + $0x178] sm:$0xff]
  %v7408 = vld [vmem:[%s3 + $0x180] sm:$0xff]
  %v7409 = vld [vmem:[%s3 + $0x188] sm:$0xff]
  %v7410 = vld [vmem:[%s3 + $0x190] sm:$0xff]
  %v7411 = vld [vmem:[%s3 + $0x198] sm:$0xff]
  %v7412 = vld [vmem:[%s3 + $0x1a0] sm:$0xff]
  %v7413 = vld [vmem:[%s3 + $0x1a8] sm:$0xff]
  %v7414 = vld [vmem:[%s3 + $0x1b0] sm:$0xff]
  %v7415 = vld [vmem:[%s3 + $0x1b8] sm:$0xff]
  %v7416 = vld [vmem:[%s3 + $0x1c0] sm:$0xff]
  %v7417 = vld [vmem:[%s3 + $0x1c8] sm:$0xff]
  %v7418 = vld [vmem:[%s3 + $0x1d0] sm:$0xff]
  %v7419 = vld [vmem:[%s3 + $0x1d8] sm:$0xff]
  %v7420 = vld [vmem:[%s3 + $0x1e0] sm:$0xff]
  %v7421 = vld [vmem:[%s3 + $0x1e8] sm:$0xff]
  %v7422 = vld [vmem:[%s3 + $0x1f0] sm:$0xff]
  %v7423 = vld [vmem:[%s3 + $0x1f8] sm:$0xff]
  %v7424 = vld [vmem:[%s4] sm:$0x3]
  %v7426 = vperm.slane %v7424, 0
  %v7427 = vperm.slane %v7424, 1
  %v7494 = vunpack.c.l.b16 %v7360
  %v7495 = vunpack.c.h.b16 %v7360
  %v7496 = vunpack.c.l.b16 %v7361
  %v7497 = vunpack.c.h.b16 %v7361
  %v7498 = vunpack.c.l.b16 %v7362
  %v7499 = vunpack.c.h.b16 %v7362
  %v7500 = vunpack.c.l.b16 %v7363
  %v7501 = vunpack.c.h.b16 %v7363
  %v7502 = vunpack.c.l.b16 %v7364
  %v7503 = vunpack.c.h.b16 %v7364
  %v7504 = vunpack.c.l.b16 %v7365
  %v7505 = vunpack.c.h.b16 %v7365
  %v7506 = vunpack.c.l.b16 %v7366
  %v7507 = vunpack.c.h.b16 %v7366
  %v7508 = vunpack.c.l.b16 %v7367
  %v7509 = vunpack.c.h.b16 %v7367
  %v7510 = vunpack.c.l.b16 %v7368
  %v7511 = vunpack.c.h.b16 %v7368
  %v7512 = vunpack.c.l.b16 %v7369
  %v7513 = vunpack.c.h.b16 %v7369
  %v7514 = vunpack.c.l.b16 %v7370
  %v7515 = vunpack.c.h.b16 %v7370
  %v7516 = vunpack.c.l.b16 %v7371
  %v7517 = vunpack.c.h.b16 %v7371
  %v7518 = vunpack.c.l.b16 %v7372
  %v7519 = vunpack.c.h.b16 %v7372
  %v7520 = vunpack.c.l.b16 %v7373
  %v7521 = vunpack.c.h.b16 %v7373
  %v7522 = vunpack.c.l.b16 %v7374
  %v7523 = vunpack.c.h.b16 %v7374
  %v7524 = vunpack.c.l.b16 %v7375
  %v7525 = vunpack.c.h.b16 %v7375
  %v7526 = vunpack.c.l.b16 %v7376
  %v7527 = vunpack.c.h.b16 %v7376
  %v7528 = vunpack.c.l.b16 %v7377
  %v7529 = vunpack.c.h.b16 %v7377
  %v7530 = vunpack.c.l.b16 %v7378
  %v7531 = vunpack.c.h.b16 %v7378
  %v7532 = vunpack.c.l.b16 %v7379
  %v7533 = vunpack.c.h.b16 %v7379
  %v7534 = vunpack.c.l.b16 %v7380
  %v7535 = vunpack.c.h.b16 %v7380
  %v7536 = vunpack.c.l.b16 %v7381
  %v7537 = vunpack.c.h.b16 %v7381
  %v7538 = vunpack.c.l.b16 %v7382
  %v7539 = vunpack.c.h.b16 %v7382
  %v7540 = vunpack.c.l.b16 %v7383
  %v7541 = vunpack.c.h.b16 %v7383
  %v7542 = vunpack.c.l.b16 %v7384
  %v7543 = vunpack.c.h.b16 %v7384
  %v7544 = vunpack.c.l.b16 %v7385
  %v7545 = vunpack.c.h.b16 %v7385
  %v7546 = vunpack.c.l.b16 %v7386
  %v7547 = vunpack.c.h.b16 %v7386
  %v7548 = vunpack.c.l.b16 %v7387
  %v7549 = vunpack.c.h.b16 %v7387
  %v7550 = vunpack.c.l.b16 %v7388
  %v7551 = vunpack.c.h.b16 %v7388
  %v7552 = vunpack.c.l.b16 %v7389
  %v7553 = vunpack.c.h.b16 %v7389
  %v7554 = vunpack.c.l.b16 %v7390
  %v7555 = vunpack.c.h.b16 %v7390
  %v7556 = vunpack.c.l.b16 %v7391
  %v7557 = vunpack.c.h.b16 %v7391
  %v7558 = vunpack.c.l.b16 %v7392
  %v7559 = vunpack.c.h.b16 %v7392
  %v7560 = vunpack.c.l.b16 %v7393
  %v7561 = vunpack.c.h.b16 %v7393
  %v7562 = vunpack.c.l.b16 %v7394
  %v7563 = vunpack.c.h.b16 %v7394
  %v7564 = vunpack.c.l.b16 %v7395
  %v7565 = vunpack.c.h.b16 %v7395
  %v7566 = vunpack.c.l.b16 %v7396
  %v7567 = vunpack.c.h.b16 %v7396
  %v7568 = vunpack.c.l.b16 %v7397
  %v7569 = vunpack.c.h.b16 %v7397
  %v7570 = vunpack.c.l.b16 %v7398
  %v7571 = vunpack.c.h.b16 %v7398
  %v7572 = vunpack.c.l.b16 %v7399
  %v7573 = vunpack.c.h.b16 %v7399
  %v7574 = vunpack.c.l.b16 %v7400
  %v7575 = vunpack.c.h.b16 %v7400
  %v7576 = vunpack.c.l.b16 %v7401
  %v7577 = vunpack.c.h.b16 %v7401
  %v7578 = vunpack.c.l.b16 %v7402
  %v7579 = vunpack.c.h.b16 %v7402
  %v7580 = vunpack.c.l.b16 %v7403
  %v7581 = vunpack.c.h.b16 %v7403
  %v7582 = vunpack.c.l.b16 %v7404
  %v7583 = vunpack.c.h.b16 %v7404
  %v7584 = vunpack.c.l.b16 %v7405
  %v7585 = vunpack.c.h.b16 %v7405
  %v7586 = vunpack.c.l.b16 %v7406
  %v7587 = vunpack.c.h.b16 %v7406
  %v7588 = vunpack.c.l.b16 %v7407
  %v7589 = vunpack.c.h.b16 %v7407
  %v7590 = vunpack.c.l.b16 %v7408
  %v7591 = vunpack.c.h.b16 %v7408
  %v7592 = vunpack.c.l.b16 %v7409
  %v7593 = vunpack.c.h.b16 %v7409
  %v7594 = vunpack.c.l.b16 %v7410
  %v7595 = vunpack.c.h.b16 %v7410
  %v7596 = vunpack.c.l.b16 %v7411
  %v7597 = vunpack.c.h.b16 %v7411
  %v7598 = vunpack.c.l.b16 %v7412
  %v7599 = vunpack.c.h.b16 %v7412
  %v7600 = vunpack.c.l.b16 %v7413
  %v7601 = vunpack.c.h.b16 %v7413
  %v7602 = vunpack.c.l.b16 %v7414
  %v7603 = vunpack.c.h.b16 %v7414
  %v7604 = vunpack.c.l.b16 %v7415
  %v7605 = vunpack.c.h.b16 %v7415
  %v7606 = vunpack.c.l.b16 %v7416
  %v7607 = vunpack.c.h.b16 %v7416
  %v7608 = vunpack.c.l.b16 %v7417
  %v7609 = vunpack.c.h.b16 %v7417
  %v7610 = vunpack.c.l.b16 %v7418
  %v7611 = vunpack.c.h.b16 %v7418
  %v7612 = vunpack.c.l.b16 %v7419
  %v7613 = vunpack.c.h.b16 %v7419
  %v7614 = vunpack.c.l.b16 %v7420
  %v7615 = vunpack.c.h.b16 %v7420
  %v7616 = vunpack.c.l.b16 %v7421
  %v7617 = vunpack.c.h.b16 %v7421
  %v7618 = vunpack.c.l.b16 %v7422
  %v7619 = vunpack.c.h.b16 %v7422
  %v7620 = vunpack.c.l.b16 %v7423
  %v7621 = vunpack.c.h.b16 %v7423
  %v7622 = vpack.c.b16 %v7496, %v7494
  %v7623 = vpack.c.b16 %v7497, %v7495
  %v7624 = vpack.c.b16 %v7500, %v7498
  %v7625 = vpack.c.b16 %v7501, %v7499
  %v7626 = vpack.c.b16 %v7504, %v7502
  %v7627 = vpack.c.b16 %v7505, %v7503
  %v7628 = vpack.c.b16 %v7508, %v7506
  %v7629 = vpack.c.b16 %v7509, %v7507
  %v7630 = vpack.c.b16 %v7512, %v7510
  %v7631 = vpack.c.b16 %v7513, %v7511
  %v7632 = vpack.c.b16 %v7516, %v7514
  %v7633 = vpack.c.b16 %v7517, %v7515
  %v7634 = vpack.c.b16 %v7520, %v7518
  %v7635 = vpack.c.b16 %v7521, %v7519
  %v7636 = vpack.c.b16 %v7524, %v7522
  %v7637 = vpack.c.b16 %v7525, %v7523
  %v7638 = vpack.c.b16 %v7528, %v7526
  %v7639 = vpack.c.b16 %v7529, %v7527
  %v7640 = vpack.c.b16 %v7532, %v7530
  %v7641 = vpack.c.b16 %v7533, %v7531
  %v7642 = vpack.c.b16 %v7536, %v7534
  %v7643 = vpack.c.b16 %v7537, %v7535
  %v7644 = vpack.c.b16 %v7540, %v7538
  %v7645 = vpack.c.b16 %v7541, %v7539
  %v7646 = vpack.c.b16 %v7544, %v7542
  %v7647 = vpack.c.b16 %v7545, %v7543
  %v7648 = vpack.c.b16 %v7548, %v7546
  %v7649 = vpack.c.b16 %v7549, %v7547
  %v7650 = vpack.c.b16 %v7552, %v7550
  %v7651 = vpack.c.b16 %v7553, %v7551
  %v7652 = vpack.c.b16 %v7556, %v7554
  %v7653 = vpack.c.b16 %v7557, %v7555
  %v7654 = vpack.c.b16 %v7560, %v7558
  %v7655 = vpack.c.b16 %v7561, %v7559
  %v7656 = vpack.c.b16 %v7564, %v7562
  %v7657 = vpack.c.b16 %v7565, %v7563
  %v7658 = vpack.c.b16 %v7568, %v7566
  %v7659 = vpack.c.b16 %v7569, %v7567
  %v7660 = vpack.c.b16 %v7572, %v7570
  %v7661 = vpack.c.b16 %v7573, %v7571
  %v7662 = vpack.c.b16 %v7576, %v7574
  %v7663 = vpack.c.b16 %v7577, %v7575
  %v7664 = vpack.c.b16 %v7580, %v7578
  %v7665 = vpack.c.b16 %v7581, %v7579
  %v7666 = vpack.c.b16 %v7584, %v7582
  %v7667 = vpack.c.b16 %v7585, %v7583
  %v7668 = vpack.c.b16 %v7588, %v7586
  %v7669 = vpack.c.b16 %v7589, %v7587
  %v7670 = vpack.c.b16 %v7592, %v7590
  %v7671 = vpack.c.b16 %v7593, %v7591
  %v7672 = vpack.c.b16 %v7596, %v7594
  %v7673 = vpack.c.b16 %v7597, %v7595
  %v7674 = vpack.c.b16 %v7600, %v7598
  %v7675 = vpack.c.b16 %v7601, %v7599
  %v7676 = vpack.c.b16 %v7604, %v7602
  %v7677 = vpack.c.b16 %v7605, %v7603
  %v7678 = vpack.c.b16 %v7608, %v7606
  %v7679 = vpack.c.b16 %v7609, %v7607
  %v7680 = vpack.c.b16 %v7612, %v7610
  %v7681 = vpack.c.b16 %v7613, %v7611
  %v7682 = vpack.c.b16 %v7616, %v7614
  %v7683 = vpack.c.b16 %v7617, %v7615
  %v7684 = vpack.c.b16 %v7620, %v7618
  %v7685 = vpack.c.b16 %v7621, %v7619
  %7750 = vmatpush.bf16.msra.mxu0 %v7636
  %7751 = vmatpush.bf16.msra.mxu0 %v7634
  %7752 = vmatpush.bf16.msra.mxu0 %v7632
  %7753 = vmatpush.bf16.msra.mxu0 %v7630
  %7754 = vmatpush.bf16.msra.mxu0 %v7628
  %7755 = vmatpush.bf16.msra.mxu0 %v7626
  %7756 = vmatpush.bf16.msra.mxu0 %v7624
  %7757 = vmatpush.bf16.msra.mxu0 %v7622
  %7758 = vmatmul.bf16.gmra.mxu0 %v7232
  %v7759 = vpop.f32.mrf.mxu0
  %v7760 = vadd.f32 %v7426, %v7759
  %v7761 = vpop.f32.mrf.mxu0
  %v7762 = vadd.f32 %v7426, %v7761
  %7763 = vmatmul.bf16.gmra.mxu0 %v7236
  %v7764 = vpop.f32.mrf.mxu0
  %v7765 = vadd.f32 %v7426, %v7764
  %v7766 = vpop.f32.mrf.mxu0
  %v7767 = vadd.f32 %v7426, %v7766
  %7768 = vmatmul.bf16.gmra.mxu0 %v7240
  %v7769 = vpop.f32.mrf.mxu0
  %v7770 = vadd.f32 %v7426, %v7769
  %v7771 = vpop.f32.mrf.mxu0
  %v7772 = vadd.f32 %v7426, %v7771
  %7773 = vmatmul.bf16.gmra.mxu0 %v7244
  %v7774 = vpop.f32.mrf.mxu0
  %v7775 = vadd.f32 %v7426, %v7774
  %v7776 = vpop.f32.mrf.mxu0
  %v7777 = vadd.f32 %v7426, %v7776
  %7778 = vmatmul.bf16.gmra.mxu0 %v7248
  %v7779 = vpop.f32.mrf.mxu0
  %v7780 = vadd.f32 %v7426, %v7779
  %v7781 = vpop.f32.mrf.mxu0
  %v7782 = vadd.f32 %v7426, %v7781
  %7783 = vmatmul.bf16.gmra.mxu0 %v7252
  %v7784 = vpop.f32.mrf.mxu0
  %v7785 = vadd.f32 %v7426, %v7784
  %v7786 = vpop.f32.mrf.mxu0
  %v7787 = vadd.f32 %v7426, %v7786
  %7788 = vmatmul.bf16.gmra.mxu0 %v7256
  %v7789 = vpop.f32.mrf.mxu0
  %v7790 = vadd.f32 %v7426, %v7789
  %v7791 = vpop.f32.mrf.mxu0
  %v7792 = vadd.f32 %v7426, %v7791
  %7793 = vmatmul.bf16.gmra.mxu0 %v7260
  %v7794 = vpop.f32.mrf.mxu0
  %v7795 = vadd.f32 %v7426, %v7794
  %v7796 = vpop.f32.mrf.mxu0
  %v7797 = vadd.f32 %v7426, %v7796
  %7798 = vmatmul.bf16.gmra.mxu0 %v7264
  %v7799 = vpop.f32.mrf.mxu0
  %v7800 = vadd.f32 %v7426, %v7799
  %v7801 = vpop.f32.mrf.mxu0
  %v7802 = vadd.f32 %v7426, %v7801
  %7803 = vmatmul.bf16.gmra.mxu0 %v7268
  %v7804 = vpop.f32.mrf.mxu0
  %v7805 = vadd.f32 %v7426, %v7804
  %v7806 = vpop.f32.mrf.mxu0
  %v7807 = vadd.f32 %v7426, %v7806
  %7808 = vmatmul.bf16.gmra.mxu0 %v7272
  %v7809 = vpop.f32.mrf.mxu0
  %v7810 = vadd.f32 %v7426, %v7809
  %v7811 = vpop.f32.mrf.mxu0
  %v7812 = vadd.f32 %v7426, %v7811
  %7813 = vmatmul.bf16.gmra.mxu0 %v7276
  %v7814 = vpop.f32.mrf.mxu0
  %v7815 = vadd.f32 %v7426, %v7814
  %v7816 = vpop.f32.mrf.mxu0
  %v7817 = vadd.f32 %v7426, %v7816
  %7818 = vmatmul.bf16.gmra.mxu0 %v7280
  %v7819 = vpop.f32.mrf.mxu0
  %v7820 = vadd.f32 %v7426, %v7819
  %v7821 = vpop.f32.mrf.mxu0
  %v7822 = vadd.f32 %v7426, %v7821
  %7823 = vmatmul.bf16.gmra.mxu0 %v7284
  %v7824 = vpop.f32.mrf.mxu0
  %v7825 = vadd.f32 %v7426, %v7824
  %v7826 = vpop.f32.mrf.mxu0
  %v7827 = vadd.f32 %v7426, %v7826
  %7828 = vmatmul.bf16.gmra.mxu0 %v7288
  %v7829 = vpop.f32.mrf.mxu0
  %v7830 = vadd.f32 %v7426, %v7829
  %v7831 = vpop.f32.mrf.mxu0
  %v7832 = vadd.f32 %v7426, %v7831
  %7833 = vmatmul.bf16.gmra.mxu0 %v7292
  %v7834 = vpop.f32.mrf.mxu0
  %v7835 = vadd.f32 %v7426, %v7834
  %v7836 = vpop.f32.mrf.mxu0
  %v7837 = vadd.f32 %v7426, %v7836
  %7838 = vmatmul.bf16.gmra.mxu0 %v7296
  %v7839 = vpop.f32.mrf.mxu0
  %v7840 = vadd.f32 %v7426, %v7839
  %v7841 = vpop.f32.mrf.mxu0
  %v7842 = vadd.f32 %v7426, %v7841
  %7843 = vmatmul.bf16.gmra.mxu0 %v7300
  %v7844 = vpop.f32.mrf.mxu0
  %v7845 = vadd.f32 %v7426, %v7844
  %v7846 = vpop.f32.mrf.mxu0
  %v7847 = vadd.f32 %v7426, %v7846
  %7848 = vmatmul.bf16.gmra.mxu0 %v7304
  %v7849 = vpop.f32.mrf.mxu0
  %v7850 = vadd.f32 %v7426, %v7849
  %v7851 = vpop.f32.mrf.mxu0
  %v7852 = vadd.f32 %v7426, %v7851
  %7853 = vmatmul.bf16.gmra.mxu0 %v7308
  %v7854 = vpop.f32.mrf.mxu0
  %v7855 = vadd.f32 %v7426, %v7854
  %v7856 = vpop.f32.mrf.mxu0
  %v7857 = vadd.f32 %v7426, %v7856
  %7858 = vmatmul.bf16.gmra.mxu0 %v7312
  %v7859 = vpop.f32.mrf.mxu0
  %v7860 = vadd.f32 %v7426, %v7859
  %v7861 = vpop.f32.mrf.mxu0
  %v7862 = vadd.f32 %v7426, %v7861
  %7863 = vmatmul.bf16.gmra.mxu0 %v7316
  %v7864 = vpop.f32.mrf.mxu0
  %v7865 = vadd.f32 %v7426, %v7864
  %v7866 = vpop.f32.mrf.mxu0
  %v7867 = vadd.f32 %v7426, %v7866
  %7868 = vmatmul.bf16.gmra.mxu0 %v7320
  %v7869 = vpop.f32.mrf.mxu0
  %v7870 = vadd.f32 %v7426, %v7869
  %v7871 = vpop.f32.mrf.mxu0
  %v7872 = vadd.f32 %v7426, %v7871
  %7873 = vmatmul.bf16.gmra.mxu0 %v7324
  %v7874 = vpop.f32.mrf.mxu0
  %v7875 = vadd.f32 %v7426, %v7874
  %v7876 = vpop.f32.mrf.mxu0
  %v7877 = vadd.f32 %v7426, %v7876
  %7878 = vmatmul.bf16.gmra.mxu0 %v7328
  %v7879 = vpop.f32.mrf.mxu0
  %v7880 = vadd.f32 %v7426, %v7879
  %v7881 = vpop.f32.mrf.mxu0
  %v7882 = vadd.f32 %v7426, %v7881
  %7883 = vmatmul.bf16.gmra.mxu0 %v7332
  %v7884 = vpop.f32.mrf.mxu0
  %v7885 = vadd.f32 %v7426, %v7884
  %v7886 = vpop.f32.mrf.mxu0
  %v7887 = vadd.f32 %v7426, %v7886
  %7888 = vmatmul.bf16.gmra.mxu0 %v7336
  %v7889 = vpop.f32.mrf.mxu0
  %v7890 = vadd.f32 %v7426, %v7889
  %v7891 = vpop.f32.mrf.mxu0
  %v7892 = vadd.f32 %v7426, %v7891
  %7893 = vmatmul.bf16.gmra.mxu0 %v7340
  %v7894 = vpop.f32.mrf.mxu0
  %v7895 = vadd.f32 %v7426, %v7894
  %v7896 = vpop.f32.mrf.mxu0
  %v7897 = vadd.f32 %v7426, %v7896
  %7898 = vmatmul.bf16.gmra.mxu0 %v7344
  %v7899 = vpop.f32.mrf.mxu0
  %v7900 = vadd.f32 %v7426, %v7899
  %v7901 = vpop.f32.mrf.mxu0
  %v7902 = vadd.f32 %v7426, %v7901
  %7903 = vmatmul.bf16.gmra.mxu0 %v7348
  %v7904 = vpop.f32.mrf.mxu0
  %v7905 = vadd.f32 %v7426, %v7904
  %v7906 = vpop.f32.mrf.mxu0
  %v7907 = vadd.f32 %v7426, %v7906
  %7908 = vmatmul.bf16.gmra.mxu0 %v7352
  %v7909 = vpop.f32.mrf.mxu0
  %v7910 = vadd.f32 %v7426, %v7909
  %v7911 = vpop.f32.mrf.mxu0
  %v7912 = vadd.f32 %v7426, %v7911
  %7913 = vmatmul.bf16.gmra.mxu0 %v7356
  %v7914 = vpop.f32.mrf.mxu0
  %v7915 = vadd.f32 %v7426, %v7914
  %v7916 = vpop.f32.mrf.mxu0
  %v7917 = vadd.f32 %v7426, %v7916
  %7918 = vdwg.mxu0
  %7919 = vmatpush.bf16.msra.mxu0 %v7652
  %7920 = vmatpush.bf16.msra.mxu0 %v7650
  %7921 = vmatpush.bf16.msra.mxu0 %v7648
  %7922 = vmatpush.bf16.msra.mxu0 %v7646
  %7923 = vmatpush.bf16.msra.mxu0 %v7644
  %7924 = vmatpush.bf16.msra.mxu0 %v7642
  %7925 = vmatpush.bf16.msra.mxu0 %v7640
  %7926 = vmatpush.bf16.msra.mxu0 %v7638
  %7927 = vmatmul.bf16.gmra.mxu0 %v7233
  %v7928 = vpop.f32.mrf.mxu0
  %v7929 = vadd.f32 %v7760, %v7928
  %v7930 = vpop.f32.mrf.mxu0
  %v7931 = vadd.f32 %v7762, %v7930
  %7932 = vmatmul.bf16.gmra.mxu0 %v7237
  %v7933 = vpop.f32.mrf.mxu0
  %v7934 = vadd.f32 %v7765, %v7933
  %v7935 = vpop.f32.mrf.mxu0
  %v7936 = vadd.f32 %v7767, %v7935
  %7937 = vmatmul.bf16.gmra.mxu0 %v7241
  %v7938 = vpop.f32.mrf.mxu0
  %v7939 = vadd.f32 %v7770, %v7938
  %v7940 = vpop.f32.mrf.mxu0
  %v7941 = vadd.f32 %v7772, %v7940
  %7942 = vmatmul.bf16.gmra.mxu0 %v7245
  %v7943 = vpop.f32.mrf.mxu0
  %v7944 = vadd.f32 %v7775, %v7943
  %v7945 = vpop.f32.mrf.mxu0
  %v7946 = vadd.f32 %v7777, %v7945
  %7947 = vmatmul.bf16.gmra.mxu0 %v7249
  %v7948 = vpop.f32.mrf.mxu0
  %v7949 = vadd.f32 %v7780, %v7948
  %v7950 = vpop.f32.mrf.mxu0
  %v7951 = vadd.f32 %v7782, %v7950
  %7952 = vmatmul.bf16.gmra.mxu0 %v7253
  %v7953 = vpop.f32.mrf.mxu0
  %v7954 = vadd.f32 %v7785, %v7953
  %v7955 = vpop.f32.mrf.mxu0
  %v7956 = vadd.f32 %v7787, %v7955
  %7957 = vmatmul.bf16.gmra.mxu0 %v7257
  %v7958 = vpop.f32.mrf.mxu0
  %v7959 = vadd.f32 %v7790, %v7958
  %v7960 = vpop.f32.mrf.mxu0
  %v7961 = vadd.f32 %v7792, %v7960
  %7962 = vmatmul.bf16.gmra.mxu0 %v7261
  %v7963 = vpop.f32.mrf.mxu0
  %v7964 = vadd.f32 %v7795, %v7963
  %v7965 = vpop.f32.mrf.mxu0
  %v7966 = vadd.f32 %v7797, %v7965
  %7967 = vmatmul.bf16.gmra.mxu0 %v7265
  %v7968 = vpop.f32.mrf.mxu0
  %v7969 = vadd.f32 %v7800, %v7968
  %v7970 = vpop.f32.mrf.mxu0
  %v7971 = vadd.f32 %v7802, %v7970
  %7972 = vmatmul.bf16.gmra.mxu0 %v7269
  %v7973 = vpop.f32.mrf.mxu0
  %v7974 = vadd.f32 %v7805, %v7973
  %v7975 = vpop.f32.mrf.mxu0
  %v7976 = vadd.f32 %v7807, %v7975
  %7977 = vmatmul.bf16.gmra.mxu0 %v7273
  %v7978 = vpop.f32.mrf.mxu0
  %v7979 = vadd.f32 %v7810, %v7978
  %v7980 = vpop.f32.mrf.mxu0
  %v7981 = vadd.f32 %v7812, %v7980
  %7982 = vmatmul.bf16.gmra.mxu0 %v7277
  %v7983 = vpop.f32.mrf.mxu0
  %v7984 = vadd.f32 %v7815, %v7983
  %v7985 = vpop.f32.mrf.mxu0
  %v7986 = vadd.f32 %v7817, %v7985
  %7987 = vmatmul.bf16.gmra.mxu0 %v7281
  %v7988 = vpop.f32.mrf.mxu0
  %v7989 = vadd.f32 %v7820, %v7988
  %v7990 = vpop.f32.mrf.mxu0
  %v7991 = vadd.f32 %v7822, %v7990
  %7992 = vmatmul.bf16.gmra.mxu0 %v7285
  %v7993 = vpop.f32.mrf.mxu0
  %v7994 = vadd.f32 %v7825, %v7993
  %v7995 = vpop.f32.mrf.mxu0
  %v7996 = vadd.f32 %v7827, %v7995
  %7997 = vmatmul.bf16.gmra.mxu0 %v7289
  %v7998 = vpop.f32.mrf.mxu0
  %v7999 = vadd.f32 %v7830, %v7998
  %v8000 = vpop.f32.mrf.mxu0
  %v8001 = vadd.f32 %v7832, %v8000
  %8002 = vmatmul.bf16.gmra.mxu0 %v7293
  %v8003 = vpop.f32.mrf.mxu0
  %v8004 = vadd.f32 %v7835, %v8003
  %v8005 = vpop.f32.mrf.mxu0
  %v8006 = vadd.f32 %v7837, %v8005
  %8007 = vmatmul.bf16.gmra.mxu0 %v7297
  %v8008 = vpop.f32.mrf.mxu0
  %v8009 = vadd.f32 %v7840, %v8008
  %v8010 = vpop.f32.mrf.mxu0
  %v8011 = vadd.f32 %v7842, %v8010
  %8012 = vmatmul.bf16.gmra.mxu0 %v7301
  %v8013 = vpop.f32.mrf.mxu0
  %v8014 = vadd.f32 %v7845, %v8013
  %v8015 = vpop.f32.mrf.mxu0
  %v8016 = vadd.f32 %v7847, %v8015
  %8017 = vmatmul.bf16.gmra.mxu0 %v7305
  %v8018 = vpop.f32.mrf.mxu0
  %v8019 = vadd.f32 %v7850, %v8018
  %v8020 = vpop.f32.mrf.mxu0
  %v8021 = vadd.f32 %v7852, %v8020
  %8022 = vmatmul.bf16.gmra.mxu0 %v7309
  %v8023 = vpop.f32.mrf.mxu0
  %v8024 = vadd.f32 %v7855, %v8023
  %v8025 = vpop.f32.mrf.mxu0
  %v8026 = vadd.f32 %v7857, %v8025
  %8027 = vmatmul.bf16.gmra.mxu0 %v7313
  %v8028 = vpop.f32.mrf.mxu0
  %v8029 = vadd.f32 %v7860, %v8028
  %v8030 = vpop.f32.mrf.mxu0
  %v8031 = vadd.f32 %v7862, %v8030
  %8032 = vmatmul.bf16.gmra.mxu0 %v7317
  %v8033 = vpop.f32.mrf.mxu0
  %v8034 = vadd.f32 %v7865, %v8033
  %v8035 = vpop.f32.mrf.mxu0
  %v8036 = vadd.f32 %v7867, %v8035
  %8037 = vmatmul.bf16.gmra.mxu0 %v7321
  %v8038 = vpop.f32.mrf.mxu0
  %v8039 = vadd.f32 %v7870, %v8038
  %v8040 = vpop.f32.mrf.mxu0
  %v8041 = vadd.f32 %v7872, %v8040
  %8042 = vmatmul.bf16.gmra.mxu0 %v7325
  %v8043 = vpop.f32.mrf.mxu0
  %v8044 = vadd.f32 %v7875, %v8043
  %v8045 = vpop.f32.mrf.mxu0
  %v8046 = vadd.f32 %v7877, %v8045
  %8047 = vmatmul.bf16.gmra.mxu0 %v7329
  %v8048 = vpop.f32.mrf.mxu0
  %v8049 = vadd.f32 %v7880, %v8048
  %v8050 = vpop.f32.mrf.mxu0
  %v8051 = vadd.f32 %v7882, %v8050
  %8052 = vmatmul.bf16.gmra.mxu0 %v7333
  %v8053 = vpop.f32.mrf.mxu0
  %v8054 = vadd.f32 %v7885, %v8053
  %v8055 = vpop.f32.mrf.mxu0
  %v8056 = vadd.f32 %v7887, %v8055
  %8057 = vmatmul.bf16.gmra.mxu0 %v7337
  %v8058 = vpop.f32.mrf.mxu0
  %v8059 = vadd.f32 %v7890, %v8058
  %v8060 = vpop.f32.mrf.mxu0
  %v8061 = vadd.f32 %v7892, %v8060
  %8062 = vmatmul.bf16.gmra.mxu0 %v7341
  %v8063 = vpop.f32.mrf.mxu0
  %v8064 = vadd.f32 %v7895, %v8063
  %v8065 = vpop.f32.mrf.mxu0
  %v8066 = vadd.f32 %v7897, %v8065
  %8067 = vmatmul.bf16.gmra.mxu0 %v7345
  %v8068 = vpop.f32.mrf.mxu0
  %v8069 = vadd.f32 %v7900, %v8068
  %v8070 = vpop.f32.mrf.mxu0
  %v8071 = vadd.f32 %v7902, %v8070
  %8072 = vmatmul.bf16.gmra.mxu0 %v7349
  %v8073 = vpop.f32.mrf.mxu0
  %v8074 = vadd.f32 %v7905, %v8073
  %v8075 = vpop.f32.mrf.mxu0
  %v8076 = vadd.f32 %v7907, %v8075
  %8077 = vmatmul.bf16.gmra.mxu0 %v7353
  %v8078 = vpop.f32.mrf.mxu0
  %v8079 = vadd.f32 %v7910, %v8078
  %v8080 = vpop.f32.mrf.mxu0
  %v8081 = vadd.f32 %v7912, %v8080
  %8082 = vmatmul.bf16.gmra.mxu0 %v7357
  %v8083 = vpop.f32.mrf.mxu0
  %v8084 = vadd.f32 %v7915, %v8083
  %v8085 = vpop.f32.mrf.mxu0
  %v8086 = vadd.f32 %v7917, %v8085
  %8087 = vdwg.mxu0
  %8088 = vmatpush.bf16.msra.mxu0 %v7668
  %8089 = vmatpush.bf16.msra.mxu0 %v7666
  %8090 = vmatpush.bf16.msra.mxu0 %v7664
  %8091 = vmatpush.bf16.msra.mxu0 %v7662
  %8092 = vmatpush.bf16.msra.mxu0 %v7660
  %8093 = vmatpush.bf16.msra.mxu0 %v7658
  %8094 = vmatpush.bf16.msra.mxu0 %v7656
  %8095 = vmatpush.bf16.msra.mxu0 %v7654
  %8096 = vmatmul.bf16.gmra.mxu0 %v7234
  %v8097 = vpop.f32.mrf.mxu0
  %v8098 = vadd.f32 %v7929, %v8097
  %v8099 = vpop.f32.mrf.mxu0
  %v8100 = vadd.f32 %v7931, %v8099
  %8101 = vmatmul.bf16.gmra.mxu0 %v7238
  %v8102 = vpop.f32.mrf.mxu0
  %v8103 = vadd.f32 %v7934, %v8102
  %v8104 = vpop.f32.mrf.mxu0
  %v8105 = vadd.f32 %v7936, %v8104
  %8106 = vmatmul.bf16.gmra.mxu0 %v7242
  %v8107 = vpop.f32.mrf.mxu0
  %v8108 = vadd.f32 %v7939, %v8107
  %v8109 = vpop.f32.mrf.mxu0
  %v8110 = vadd.f32 %v7941, %v8109
  %8111 = vmatmul.bf16.gmra.mxu0 %v7246
  %v8112 = vpop.f32.mrf.mxu0
  %v8113 = vadd.f32 %v7944, %v8112
  %v8114 = vpop.f32.mrf.mxu0
  %v8115 = vadd.f32 %v7946, %v8114
  %8116 = vmatmul.bf16.gmra.mxu0 %v7250
  %v8117 = vpop.f32.mrf.mxu0
  %v8118 = vadd.f32 %v7949, %v8117
  %v8119 = vpop.f32.mrf.mxu0
  %v8120 = vadd.f32 %v7951, %v8119
  %8121 = vmatmul.bf16.gmra.mxu0 %v7254
  %v8122 = vpop.f32.mrf.mxu0
  %v8123 = vadd.f32 %v7954, %v8122
  %v8124 = vpop.f32.mrf.mxu0
  %v8125 = vadd.f32 %v7956, %v8124
  %8126 = vmatmul.bf16.gmra.mxu0 %v7258
  %v8127 = vpop.f32.mrf.mxu0
  %v8128 = vadd.f32 %v7959, %v8127
  %v8129 = vpop.f32.mrf.mxu0
  %v8130 = vadd.f32 %v7961, %v8129
  %8131 = vmatmul.bf16.gmra.mxu0 %v7262
  %v8132 = vpop.f32.mrf.mxu0
  %v8133 = vadd.f32 %v7964, %v8132
  %v8134 = vpop.f32.mrf.mxu0
  %v8135 = vadd.f32 %v7966, %v8134
  %8136 = vmatmul.bf16.gmra.mxu0 %v7266
  %v8137 = vpop.f32.mrf.mxu0
  %v8138 = vadd.f32 %v7969, %v8137
  %v8139 = vpop.f32.mrf.mxu0
  %v8140 = vadd.f32 %v7971, %v8139
  %8141 = vmatmul.bf16.gmra.mxu0 %v7270
  %v8142 = vpop.f32.mrf.mxu0
  %v8143 = vadd.f32 %v7974, %v8142
  %v8144 = vpop.f32.mrf.mxu0
  %v8145 = vadd.f32 %v7976, %v8144
  %8146 = vmatmul.bf16.gmra.mxu0 %v7274
  %v8147 = vpop.f32.mrf.mxu0
  %v8148 = vadd.f32 %v7979, %v8147
  %v8149 = vpop.f32.mrf.mxu0
  %v8150 = vadd.f32 %v7981, %v8149
  %8151 = vmatmul.bf16.gmra.mxu0 %v7278
  %v8152 = vpop.f32.mrf.mxu0
  %v8153 = vadd.f32 %v7984, %v8152
  %v8154 = vpop.f32.mrf.mxu0
  %v8155 = vadd.f32 %v7986, %v8154
  %8156 = vmatmul.bf16.gmra.mxu0 %v7282
  %v8157 = vpop.f32.mrf.mxu0
  %v8158 = vadd.f32 %v7989, %v8157
  %v8159 = vpop.f32.mrf.mxu0
  %v8160 = vadd.f32 %v7991, %v8159
  %8161 = vmatmul.bf16.gmra.mxu0 %v7286
  %v8162 = vpop.f32.mrf.mxu0
  %v8163 = vadd.f32 %v7994, %v8162
  %v8164 = vpop.f32.mrf.mxu0
  %v8165 = vadd.f32 %v7996, %v8164
  %8166 = vmatmul.bf16.gmra.mxu0 %v7290
  %v8167 = vpop.f32.mrf.mxu0
  %v8168 = vadd.f32 %v7999, %v8167
  %v8169 = vpop.f32.mrf.mxu0
  %v8170 = vadd.f32 %v8001, %v8169
  %8171 = vmatmul.bf16.gmra.mxu0 %v7294
  %v8172 = vpop.f32.mrf.mxu0
  %v8173 = vadd.f32 %v8004, %v8172
  %v8174 = vpop.f32.mrf.mxu0
  %v8175 = vadd.f32 %v8006, %v8174
  %8176 = vmatmul.bf16.gmra.mxu0 %v7298
  %v8177 = vpop.f32.mrf.mxu0
  %v8178 = vadd.f32 %v8009, %v8177
  %v8179 = vpop.f32.mrf.mxu0
  %v8180 = vadd.f32 %v8011, %v8179
  %8181 = vmatmul.bf16.gmra.mxu0 %v7302
  %v8182 = vpop.f32.mrf.mxu0
  %v8183 = vadd.f32 %v8014, %v8182
  %v8184 = vpop.f32.mrf.mxu0
  %v8185 = vadd.f32 %v8016, %v8184
  %8186 = vmatmul.bf16.gmra.mxu0 %v7306
  %v8187 = vpop.f32.mrf.mxu0
  %v8188 = vadd.f32 %v8019, %v8187
  %v8189 = vpop.f32.mrf.mxu0
  %v8190 = vadd.f32 %v8021, %v8189
  %8191 = vmatmul.bf16.gmra.mxu0 %v7310
  %v8192 = vpop.f32.mrf.mxu0
  %v8193 = vadd.f32 %v8024, %v8192
  %v8194 = vpop.f32.mrf.mxu0
  %v8195 = vadd.f32 %v8026, %v8194
  %8196 = vmatmul.bf16.gmra.mxu0 %v7314
  %v8197 = vpop.f32.mrf.mxu0
  %v8198 = vadd.f32 %v8029, %v8197
  %v8199 = vpop.f32.mrf.mxu0
  %v8200 = vadd.f32 %v8031, %v8199
  %8201 = vmatmul.bf16.gmra.mxu0 %v7318
  %v8202 = vpop.f32.mrf.mxu0
  %v8203 = vadd.f32 %v8034, %v8202
  %v8204 = vpop.f32.mrf.mxu0
  %v8205 = vadd.f32 %v8036, %v8204
  %8206 = vmatmul.bf16.gmra.mxu0 %v7322
  %v8207 = vpop.f32.mrf.mxu0
  %v8208 = vadd.f32 %v8039, %v8207
  %v8209 = vpop.f32.mrf.mxu0
  %v8210 = vadd.f32 %v8041, %v8209
  %8211 = vmatmul.bf16.gmra.mxu0 %v7326
  %v8212 = vpop.f32.mrf.mxu0
  %v8213 = vadd.f32 %v8044, %v8212
  %v8214 = vpop.f32.mrf.mxu0
  %v8215 = vadd.f32 %v8046, %v8214
  %8216 = vmatmul.bf16.gmra.mxu0 %v7330
  %v8217 = vpop.f32.mrf.mxu0
  %v8218 = vadd.f32 %v8049, %v8217
  %v8219 = vpop.f32.mrf.mxu0
  %v8220 = vadd.f32 %v8051, %v8219
  %8221 = vmatmul.bf16.gmra.mxu0 %v7334
  %v8222 = vpop.f32.mrf.mxu0
  %v8223 = vadd.f32 %v8054, %v8222
  %v8224 = vpop.f32.mrf.mxu0
  %v8225 = vadd.f32 %v8056, %v8224
  %8226 = vmatmul.bf16.gmra.mxu0 %v7338
  %v8227 = vpop.f32.mrf.mxu0
  %v8228 = vadd.f32 %v8059, %v8227
  %v8229 = vpop.f32.mrf.mxu0
  %v8230 = vadd.f32 %v8061, %v8229
  %8231 = vmatmul.bf16.gmra.mxu0 %v7342
  %v8232 = vpop.f32.mrf.mxu0
  %v8233 = vadd.f32 %v8064, %v8232
  %v8234 = vpop.f32.mrf.mxu0
  %v8235 = vadd.f32 %v8066, %v8234
  %8236 = vmatmul.bf16.gmra.mxu0 %v7346
  %v8237 = vpop.f32.mrf.mxu0
  %v8238 = vadd.f32 %v8069, %v8237
  %v8239 = vpop.f32.mrf.mxu0
  %v8240 = vadd.f32 %v8071, %v8239
  %8241 = vmatmul.bf16.gmra.mxu0 %v7350
  %v8242 = vpop.f32.mrf.mxu0
  %v8243 = vadd.f32 %v8074, %v8242
  %v8244 = vpop.f32.mrf.mxu0
  %v8245 = vadd.f32 %v8076, %v8244
  %8246 = vmatmul.bf16.gmra.mxu0 %v7354
  %v8247 = vpop.f32.mrf.mxu0
  %v8248 = vadd.f32 %v8079, %v8247
  %v8249 = vpop.f32.mrf.mxu0
  %v8250 = vadd.f32 %v8081, %v8249
  %8251 = vmatmul.bf16.gmra.mxu0 %v7358
  %v8252 = vpop.f32.mrf.mxu0
  %v8253 = vadd.f32 %v8084, %v8252
  %v8254 = vpop.f32.mrf.mxu0
  %v8255 = vadd.f32 %v8086, %v8254
  %8256 = vdwg.mxu0
  %8257 = vmatpush.bf16.msra.mxu0 %v7684
  %8258 = vmatpush.bf16.msra.mxu0 %v7682
  %8259 = vmatpush.bf16.msra.mxu0 %v7680
  %8260 = vmatpush.bf16.msra.mxu0 %v7678
  %8261 = vmatpush.bf16.msra.mxu0 %v7676
  %8262 = vmatpush.bf16.msra.mxu0 %v7674
  %8263 = vmatpush.bf16.msra.mxu0 %v7672
  %8264 = vmatpush.bf16.msra.mxu0 %v7670
  %8265 = vmatmul.bf16.gmra.mxu0 %v7235
  %v8266 = vpop.f32.mrf.mxu0
  %v8267 = vadd.f32 %v8098, %v8266
  %v8268 = vpop.f32.mrf.mxu0
  %v8269 = vadd.f32 %v8100, %v8268
  %8270 = vmatmul.bf16.gmra.mxu0 %v7239
  %v8271 = vpop.f32.mrf.mxu0
  %v8272 = vadd.f32 %v8103, %v8271
  %v8273 = vpop.f32.mrf.mxu0
  %v8274 = vadd.f32 %v8105, %v8273
  %8275 = vmatmul.bf16.gmra.mxu0 %v7243
  %v8276 = vpop.f32.mrf.mxu0
  %v8277 = vadd.f32 %v8108, %v8276
  %v8278 = vpop.f32.mrf.mxu0
  %v8279 = vadd.f32 %v8110, %v8278
  %8280 = vmatmul.bf16.gmra.mxu0 %v7247
  %v8281 = vpop.f32.mrf.mxu0
  %v8282 = vadd.f32 %v8113, %v8281
  %v8283 = vpop.f32.mrf.mxu0
  %v8284 = vadd.f32 %v8115, %v8283
  %8285 = vmatmul.bf16.gmra.mxu0 %v7251
  %v8286 = vpop.f32.mrf.mxu0
  %v8287 = vadd.f32 %v8118, %v8286
  %v8288 = vpop.f32.mrf.mxu0
  %v8289 = vadd.f32 %v8120, %v8288
  %8290 = vmatmul.bf16.gmra.mxu0 %v7255
  %v8291 = vpop.f32.mrf.mxu0
  %v8292 = vadd.f32 %v8123, %v8291
  %v8293 = vpop.f32.mrf.mxu0
  %v8294 = vadd.f32 %v8125, %v8293
  %8295 = vmatmul.bf16.gmra.mxu0 %v7259
  %v8296 = vpop.f32.mrf.mxu0
  %v8297 = vadd.f32 %v8128, %v8296
  %v8298 = vpop.f32.mrf.mxu0
  %v8299 = vadd.f32 %v8130, %v8298
  %8300 = vmatmul.bf16.gmra.mxu0 %v7263
  %v8301 = vpop.f32.mrf.mxu0
  %v8302 = vadd.f32 %v8133, %v8301
  %v8303 = vpop.f32.mrf.mxu0
  %v8304 = vadd.f32 %v8135, %v8303
  %8305 = vmatmul.bf16.gmra.mxu0 %v7267
  %v8306 = vpop.f32.mrf.mxu0
  %v8307 = vadd.f32 %v8138, %v8306
  %v8308 = vpop.f32.mrf.mxu0
  %v8309 = vadd.f32 %v8140, %v8308
  %8310 = vmatmul.bf16.gmra.mxu0 %v7271
  %v8311 = vpop.f32.mrf.mxu0
  %v8312 = vadd.f32 %v8143, %v8311
  %v8313 = vpop.f32.mrf.mxu0
  %v8314 = vadd.f32 %v8145, %v8313
  %8315 = vmatmul.bf16.gmra.mxu0 %v7275
  %v8316 = vpop.f32.mrf.mxu0
  %v8317 = vadd.f32 %v8148, %v8316
  %v8318 = vpop.f32.mrf.mxu0
  %v8319 = vadd.f32 %v8150, %v8318
  %8320 = vmatmul.bf16.gmra.mxu0 %v7279
  %v8321 = vpop.f32.mrf.mxu0
  %v8322 = vadd.f32 %v8153, %v8321
  %v8323 = vpop.f32.mrf.mxu0
  %v8324 = vadd.f32 %v8155, %v8323
  %8325 = vmatmul.bf16.gmra.mxu0 %v7283
  %v8326 = vpop.f32.mrf.mxu0
  %v8327 = vadd.f32 %v8158, %v8326
  %v8328 = vpop.f32.mrf.mxu0
  %v8329 = vadd.f32 %v8160, %v8328
  %8330 = vmatmul.bf16.gmra.mxu0 %v7287
  %v8331 = vpop.f32.mrf.mxu0
  %v8332 = vadd.f32 %v8163, %v8331
  %v8333 = vpop.f32.mrf.mxu0
  %v8334 = vadd.f32 %v8165, %v8333
  %8335 = vmatmul.bf16.gmra.mxu0 %v7291
  %v8336 = vpop.f32.mrf.mxu0
  %v8337 = vadd.f32 %v8168, %v8336
  %v8338 = vpop.f32.mrf.mxu0
  %v8339 = vadd.f32 %v8170, %v8338
  %8340 = vmatmul.bf16.gmra.mxu0 %v7295
  %v8341 = vpop.f32.mrf.mxu0
  %v8342 = vadd.f32 %v8173, %v8341
  %v8343 = vpop.f32.mrf.mxu0
  %v8344 = vadd.f32 %v8175, %v8343
  %8345 = vmatmul.bf16.gmra.mxu0 %v7299
  %v8346 = vpop.f32.mrf.mxu0
  %v8347 = vadd.f32 %v8178, %v8346
  %v8348 = vpop.f32.mrf.mxu0
  %v8349 = vadd.f32 %v8180, %v8348
  %8350 = vmatmul.bf16.gmra.mxu0 %v7303
  %v8351 = vpop.f32.mrf.mxu0
  %v8352 = vadd.f32 %v8183, %v8351
  %v8353 = vpop.f32.mrf.mxu0
  %v8354 = vadd.f32 %v8185, %v8353
  %8355 = vmatmul.bf16.gmra.mxu0 %v7307
  %v8356 = vpop.f32.mrf.mxu0
  %v8357 = vadd.f32 %v8188, %v8356
  %v8358 = vpop.f32.mrf.mxu0
  %v8359 = vadd.f32 %v8190, %v8358
  %8360 = vmatmul.bf16.gmra.mxu0 %v7311
  %v8361 = vpop.f32.mrf.mxu0
  %v8362 = vadd.f32 %v8193, %v8361
  %v8363 = vpop.f32.mrf.mxu0
  %v8364 = vadd.f32 %v8195, %v8363
  %8365 = vmatmul.bf16.gmra.mxu0 %v7315
  %v8366 = vpop.f32.mrf.mxu0
  %v8367 = vadd.f32 %v8198, %v8366
  %v8368 = vpop.f32.mrf.mxu0
  %v8369 = vadd.f32 %v8200, %v8368
  %8370 = vmatmul.bf16.gmra.mxu0 %v7319
  %v8371 = vpop.f32.mrf.mxu0
  %v8372 = vadd.f32 %v8203, %v8371
  %v8373 = vpop.f32.mrf.mxu0
  %v8374 = vadd.f32 %v8205, %v8373
  %8375 = vmatmul.bf16.gmra.mxu0 %v7323
  %v8376 = vpop.f32.mrf.mxu0
  %v8377 = vadd.f32 %v8208, %v8376
  %v8378 = vpop.f32.mrf.mxu0
  %v8379 = vadd.f32 %v8210, %v8378
  %8380 = vmatmul.bf16.gmra.mxu0 %v7327
  %v8381 = vpop.f32.mrf.mxu0
  %v8382 = vadd.f32 %v8213, %v8381
  %v8383 = vpop.f32.mrf.mxu0
  %v8384 = vadd.f32 %v8215, %v8383
  %8385 = vmatmul.bf16.gmra.mxu0 %v7331
  %v8386 = vpop.f32.mrf.mxu0
  %v8387 = vadd.f32 %v8218, %v8386
  %v8388 = vpop.f32.mrf.mxu0
  %v8389 = vadd.f32 %v8220, %v8388
  %8390 = vmatmul.bf16.gmra.mxu0 %v7335
  %v8391 = vpop.f32.mrf.mxu0
  %v8392 = vadd.f32 %v8223, %v8391
  %v8393 = vpop.f32.mrf.mxu0
  %v8394 = vadd.f32 %v8225, %v8393
  %8395 = vmatmul.bf16.gmra.mxu0 %v7339
  %v8396 = vpop.f32.mrf.mxu0
  %v8397 = vadd.f32 %v8228, %v8396
  %v8398 = vpop.f32.mrf.mxu0
  %v8399 = vadd.f32 %v8230, %v8398
  %8400 = vmatmul.bf16.gmra.mxu0 %v7343
  %v8401 = vpop.f32.mrf.mxu0
  %v8402 = vadd.f32 %v8233, %v8401
  %v8403 = vpop.f32.mrf.mxu0
  %v8404 = vadd.f32 %v8235, %v8403
  %8405 = vmatmul.bf16.gmra.mxu0 %v7347
  %v8406 = vpop.f32.mrf.mxu0
  %v8407 = vadd.f32 %v8238, %v8406
  %v8408 = vpop.f32.mrf.mxu0
  %v8409 = vadd.f32 %v8240, %v8408
  %8410 = vmatmul.bf16.gmra.mxu0 %v7351
  %v8411 = vpop.f32.mrf.mxu0
  %v8412 = vadd.f32 %v8243, %v8411
  %v8413 = vpop.f32.mrf.mxu0
  %v8414 = vadd.f32 %v8245, %v8413
  %8415 = vmatmul.bf16.gmra.mxu0 %v7355
  %v8416 = vpop.f32.mrf.mxu0
  %v8417 = vadd.f32 %v8248, %v8416
  %v8418 = vpop.f32.mrf.mxu0
  %v8419 = vadd.f32 %v8250, %v8418
  %8420 = vmatmul.bf16.gmra.mxu0 %v7359
  %v8421 = vpop.f32.mrf.mxu0
  %v8422 = vadd.f32 %v8253, %v8421
  %v8423 = vpop.f32.mrf.mxu0
  %v8424 = vadd.f32 %v8255, %v8423
  %8425 = vdwg.mxu0
  %8426 = vmatpush.bf16.msra.mxu0 %v7637
  %8427 = vmatpush.bf16.msra.mxu0 %v7635
  %8428 = vmatpush.bf16.msra.mxu0 %v7633
  %8429 = vmatpush.bf16.msra.mxu0 %v7631
  %8430 = vmatpush.bf16.msra.mxu0 %v7629
  %8431 = vmatpush.bf16.msra.mxu0 %v7627
  %8432 = vmatpush.bf16.msra.mxu0 %v7625
  %8433 = vmatpush.bf16.msra.mxu0 %v7623
  %8434 = vmatmul.bf16.gmra.mxu0 %v7232
  %v8435 = vpop.f32.mrf.mxu0
  %v8436 = vadd.f32 %v7427, %v8435
  %v8437 = vpop.f32.mrf.mxu0
  %v8438 = vadd.f32 %v7427, %v8437
  %8439 = vmatmul.bf16.gmra.mxu0 %v7236
  %v8440 = vpop.f32.mrf.mxu0
  %v8441 = vadd.f32 %v7427, %v8440
  %v8442 = vpop.f32.mrf.mxu0
  %v8443 = vadd.f32 %v7427, %v8442
  %8444 = vmatmul.bf16.gmra.mxu0 %v7240
  %v8445 = vpop.f32.mrf.mxu0
  %v8446 = vadd.f32 %v7427, %v8445
  %v8447 = vpop.f32.mrf.mxu0
  %v8448 = vadd.f32 %v7427, %v8447
  %8449 = vmatmul.bf16.gmra.mxu0 %v7244
  %v8450 = vpop.f32.mrf.mxu0
  %v8451 = vadd.f32 %v7427, %v8450
  %v8452 = vpop.f32.mrf.mxu0
  %v8453 = vadd.f32 %v7427, %v8452
  %8454 = vmatmul.bf16.gmra.mxu0 %v7248
  %v8455 = vpop.f32.mrf.mxu0
  %v8456 = vadd.f32 %v7427, %v8455
  %v8457 = vpop.f32.mrf.mxu0
  %v8458 = vadd.f32 %v7427, %v8457
  %8459 = vmatmul.bf16.gmra.mxu0 %v7252
  %v8460 = vpop.f32.mrf.mxu0
  %v8461 = vadd.f32 %v7427, %v8460
  %v8462 = vpop.f32.mrf.mxu0
  %v8463 = vadd.f32 %v7427, %v8462
  %8464 = vmatmul.bf16.gmra.mxu0 %v7256
  %v8465 = vpop.f32.mrf.mxu0
  %v8466 = vadd.f32 %v7427, %v8465
  %v8467 = vpop.f32.mrf.mxu0
  %v8468 = vadd.f32 %v7427, %v8467
  %8469 = vmatmul.bf16.gmra.mxu0 %v7260
  %v8470 = vpop.f32.mrf.mxu0
  %v8471 = vadd.f32 %v7427, %v8470
  %v8472 = vpop.f32.mrf.mxu0
  %v8473 = vadd.f32 %v7427, %v8472
  %8474 = vmatmul.bf16.gmra.mxu0 %v7264
  %v8475 = vpop.f32.mrf.mxu0
  %v8476 = vadd.f32 %v7427, %v8475
  %v8477 = vpop.f32.mrf.mxu0
  %v8478 = vadd.f32 %v7427, %v8477
  %8479 = vmatmul.bf16.gmra.mxu0 %v7268
  %v8480 = vpop.f32.mrf.mxu0
  %v8481 = vadd.f32 %v7427, %v8480
  %v8482 = vpop.f32.mrf.mxu0
  %v8483 = vadd.f32 %v7427, %v8482
  %8484 = vmatmul.bf16.gmra.mxu0 %v7272
  %v8485 = vpop.f32.mrf.mxu0
  %v8486 = vadd.f32 %v7427, %v8485
  %v8487 = vpop.f32.mrf.mxu0
  %v8488 = vadd.f32 %v7427, %v8487
  %8489 = vmatmul.bf16.gmra.mxu0 %v7276
  %v8490 = vpop.f32.mrf.mxu0
  %v8491 = vadd.f32 %v7427, %v8490
  %v8492 = vpop.f32.mrf.mxu0
  %v8493 = vadd.f32 %v7427, %v8492
  %8494 = vmatmul.bf16.gmra.mxu0 %v7280
  %v8495 = vpop.f32.mrf.mxu0
  %v8496 = vadd.f32 %v7427, %v8495
  %v8497 = vpop.f32.mrf.mxu0
  %v8498 = vadd.f32 %v7427, %v8497
  %8499 = vmatmul.bf16.gmra.mxu0 %v7284
  %v8500 = vpop.f32.mrf.mxu0
  %v8501 = vadd.f32 %v7427, %v8500
  %v8502 = vpop.f32.mrf.mxu0
  %v8503 = vadd.f32 %v7427, %v8502
  %8504 = vmatmul.bf16.gmra.mxu0 %v7288
  %v8505 = vpop.f32.mrf.mxu0
  %v8506 = vadd.f32 %v7427, %v8505
  %v8507 = vpop.f32.mrf.mxu0
  %v8508 = vadd.f32 %v7427, %v8507
  %8509 = vmatmul.bf16.gmra.mxu0 %v7292
  %v8510 = vpop.f32.mrf.mxu0
  %v8511 = vadd.f32 %v7427, %v8510
  %v8512 = vpop.f32.mrf.mxu0
  %v8513 = vadd.f32 %v7427, %v8512
  %8514 = vmatmul.bf16.gmra.mxu0 %v7296
  %v8515 = vpop.f32.mrf.mxu0
  %v8516 = vadd.f32 %v7427, %v8515
  %v8517 = vpop.f32.mrf.mxu0
  %v8518 = vadd.f32 %v7427, %v8517
  %8519 = vmatmul.bf16.gmra.mxu0 %v7300
  %v8520 = vpop.f32.mrf.mxu0
  %v8521 = vadd.f32 %v7427, %v8520
  %v8522 = vpop.f32.mrf.mxu0
  %v8523 = vadd.f32 %v7427, %v8522
  %8524 = vmatmul.bf16.gmra.mxu0 %v7304
  %v8525 = vpop.f32.mrf.mxu0
  %v8526 = vadd.f32 %v7427, %v8525
  %v8527 = vpop.f32.mrf.mxu0
  %v8528 = vadd.f32 %v7427, %v8527
  %8529 = vmatmul.bf16.gmra.mxu0 %v7308
  %v8530 = vpop.f32.mrf.mxu0
  %v8531 = vadd.f32 %v7427, %v8530
  %v8532 = vpop.f32.mrf.mxu0
  %v8533 = vadd.f32 %v7427, %v8532
  %8534 = vmatmul.bf16.gmra.mxu0 %v7312
  %v8535 = vpop.f32.mrf.mxu0
  %v8536 = vadd.f32 %v7427, %v8535
  %v8537 = vpop.f32.mrf.mxu0
  %v8538 = vadd.f32 %v7427, %v8537
  %8539 = vmatmul.bf16.gmra.mxu0 %v7316
  %v8540 = vpop.f32.mrf.mxu0
  %v8541 = vadd.f32 %v7427, %v8540
  %v8542 = vpop.f32.mrf.mxu0
  %v8543 = vadd.f32 %v7427, %v8542
  %8544 = vmatmul.bf16.gmra.mxu0 %v7320
  %v8545 = vpop.f32.mrf.mxu0
  %v8546 = vadd.f32 %v7427, %v8545
  %v8547 = vpop.f32.mrf.mxu0
  %v8548 = vadd.f32 %v7427, %v8547
  %8549 = vmatmul.bf16.gmra.mxu0 %v7324
  %v8550 = vpop.f32.mrf.mxu0
  %v8551 = vadd.f32 %v7427, %v8550
  %v8552 = vpop.f32.mrf.mxu0
  %v8553 = vadd.f32 %v7427, %v8552
  %8554 = vmatmul.bf16.gmra.mxu0 %v7328
  %v8555 = vpop.f32.mrf.mxu0
  %v8556 = vadd.f32 %v7427, %v8555
  %v8557 = vpop.f32.mrf.mxu0
  %v8558 = vadd.f32 %v7427, %v8557
  %8559 = vmatmul.bf16.gmra.mxu0 %v7332
  %v8560 = vpop.f32.mrf.mxu0
  %v8561 = vadd.f32 %v7427, %v8560
  %v8562 = vpop.f32.mrf.mxu0
  %v8563 = vadd.f32 %v7427, %v8562
  %8564 = vmatmul.bf16.gmra.mxu0 %v7336
  %v8565 = vpop.f32.mrf.mxu0
  %v8566 = vadd.f32 %v7427, %v8565
  %v8567 = vpop.f32.mrf.mxu0
  %v8568 = vadd.f32 %v7427, %v8567
  %8569 = vmatmul.bf16.gmra.mxu0 %v7340
  %v8570 = vpop.f32.mrf.mxu0
  %v8571 = vadd.f32 %v7427, %v8570
  %v8572 = vpop.f32.mrf.mxu0
  %v8573 = vadd.f32 %v7427, %v8572
  %8574 = vmatmul.bf16.gmra.mxu0 %v7344
  %v8575 = vpop.f32.mrf.mxu0
  %v8576 = vadd.f32 %v7427, %v8575
  %v8577 = vpop.f32.mrf.mxu0
  %v8578 = vadd.f32 %v7427, %v8577
  %8579 = vmatmul.bf16.gmra.mxu0 %v7348
  %v8580 = vpop.f32.mrf.mxu0
  %v8581 = vadd.f32 %v7427, %v8580
  %v8582 = vpop.f32.mrf.mxu0
  %v8583 = vadd.f32 %v7427, %v8582
  %8584 = vmatmul.bf16.gmra.mxu0 %v7352
  %v8585 = vpop.f32.mrf.mxu0
  %v8586 = vadd.f32 %v7427, %v8585
  %v8587 = vpop.f32.mrf.mxu0
  %v8588 = vadd.f32 %v7427, %v8587
  %8589 = vmatmul.bf16.gmra.mxu0 %v7356
  %v8590 = vpop.f32.mrf.mxu0
  %v8591 = vadd.f32 %v7427, %v8590
  %v8592 = vpop.f32.mrf.mxu0
  %v8593 = vadd.f32 %v7427, %v8592
  %8594 = vdwg.mxu0
  %8595 = vmatpush.bf16.msra.mxu0 %v7653
  %8596 = vmatpush.bf16.msra.mxu0 %v7651
  %8597 = vmatpush.bf16.msra.mxu0 %v7649
  %8598 = vmatpush.bf16.msra.mxu0 %v7647
  %8599 = vmatpush.bf16.msra.mxu0 %v7645
  %8600 = vmatpush.bf16.msra.mxu0 %v7643
  %8601 = vmatpush.bf16.msra.mxu0 %v7641
  %8602 = vmatpush.bf16.msra.mxu0 %v7639
  %8603 = vmatmul.bf16.gmra.mxu0 %v7233
  %v8604 = vpop.f32.mrf.mxu0
  %v8605 = vadd.f32 %v8436, %v8604
  %v8606 = vpop.f32.mrf.mxu0
  %v8607 = vadd.f32 %v8438, %v8606
  %8608 = vmatmul.bf16.gmra.mxu0 %v7237
  %v8609 = vpop.f32.mrf.mxu0
  %v8610 = vadd.f32 %v8441, %v8609
  %v8611 = vpop.f32.mrf.mxu0
  %v8612 = vadd.f32 %v8443, %v8611
  %8613 = vmatmul.bf16.gmra.mxu0 %v7241
  %v8614 = vpop.f32.mrf.mxu0
  %v8615 = vadd.f32 %v8446, %v8614
  %v8616 = vpop.f32.mrf.mxu0
  %v8617 = vadd.f32 %v8448, %v8616
  %8618 = vmatmul.bf16.gmra.mxu0 %v7245
  %v8619 = vpop.f32.mrf.mxu0
  %v8620 = vadd.f32 %v8451, %v8619
  %v8621 = vpop.f32.mrf.mxu0
  %v8622 = vadd.f32 %v8453, %v8621
  %8623 = vmatmul.bf16.gmra.mxu0 %v7249
  %v8624 = vpop.f32.mrf.mxu0
  %v8625 = vadd.f32 %v8456, %v8624
  %v8626 = vpop.f32.mrf.mxu0
  %v8627 = vadd.f32 %v8458, %v8626
  %8628 = vmatmul.bf16.gmra.mxu0 %v7253
  %v8629 = vpop.f32.mrf.mxu0
  %v8630 = vadd.f32 %v8461, %v8629
  %v8631 = vpop.f32.mrf.mxu0
  %v8632 = vadd.f32 %v8463, %v8631
  %8633 = vmatmul.bf16.gmra.mxu0 %v7257
  %v8634 = vpop.f32.mrf.mxu0
  %v8635 = vadd.f32 %v8466, %v8634
  %v8636 = vpop.f32.mrf.mxu0
  %v8637 = vadd.f32 %v8468, %v8636
  %8638 = vmatmul.bf16.gmra.mxu0 %v7261
  %v8639 = vpop.f32.mrf.mxu0
  %v8640 = vadd.f32 %v8471, %v8639
  %v8641 = vpop.f32.mrf.mxu0
  %v8642 = vadd.f32 %v8473, %v8641
  %8643 = vmatmul.bf16.gmra.mxu0 %v7265
  %v8644 = vpop.f32.mrf.mxu0
  %v8645 = vadd.f32 %v8476, %v8644
  %v8646 = vpop.f32.mrf.mxu0
  %v8647 = vadd.f32 %v8478, %v8646
  %8648 = vmatmul.bf16.gmra.mxu0 %v7269
  %v8649 = vpop.f32.mrf.mxu0
  %v8650 = vadd.f32 %v8481, %v8649
  %v8651 = vpop.f32.mrf.mxu0
  %v8652 = vadd.f32 %v8483, %v8651
  %8653 = vmatmul.bf16.gmra.mxu0 %v7273
  %v8654 = vpop.f32.mrf.mxu0
  %v8655 = vadd.f32 %v8486, %v8654
  %v8656 = vpop.f32.mrf.mxu0
  %v8657 = vadd.f32 %v8488, %v8656
  %8658 = vmatmul.bf16.gmra.mxu0 %v7277
  %v8659 = vpop.f32.mrf.mxu0
  %v8660 = vadd.f32 %v8491, %v8659
  %v8661 = vpop.f32.mrf.mxu0
  %v8662 = vadd.f32 %v8493, %v8661
  %8663 = vmatmul.bf16.gmra.mxu0 %v7281
  %v8664 = vpop.f32.mrf.mxu0
  %v8665 = vadd.f32 %v8496, %v8664
  %v8666 = vpop.f32.mrf.mxu0
  %v8667 = vadd.f32 %v8498, %v8666
  %8668 = vmatmul.bf16.gmra.mxu0 %v7285
  %v8669 = vpop.f32.mrf.mxu0
  %v8670 = vadd.f32 %v8501, %v8669
  %v8671 = vpop.f32.mrf.mxu0
  %v8672 = vadd.f32 %v8503, %v8671
  %8673 = vmatmul.bf16.gmra.mxu0 %v7289
  %v8674 = vpop.f32.mrf.mxu0
  %v8675 = vadd.f32 %v8506, %v8674
  %v8676 = vpop.f32.mrf.mxu0
  %v8677 = vadd.f32 %v8508, %v8676
  %8678 = vmatmul.bf16.gmra.mxu0 %v7293
  %v8679 = vpop.f32.mrf.mxu0
  %v8680 = vadd.f32 %v8511, %v8679
  %v8681 = vpop.f32.mrf.mxu0
  %v8682 = vadd.f32 %v8513, %v8681
  %8683 = vmatmul.bf16.gmra.mxu0 %v7297
  %v8684 = vpop.f32.mrf.mxu0
  %v8685 = vadd.f32 %v8516, %v8684
  %v8686 = vpop.f32.mrf.mxu0
  %v8687 = vadd.f32 %v8518, %v8686
  %8688 = vmatmul.bf16.gmra.mxu0 %v7301
  %v8689 = vpop.f32.mrf.mxu0
  %v8690 = vadd.f32 %v8521, %v8689
  %v8691 = vpop.f32.mrf.mxu0
  %v8692 = vadd.f32 %v8523, %v8691
  %8693 = vmatmul.bf16.gmra.mxu0 %v7305
  %v8694 = vpop.f32.mrf.mxu0
  %v8695 = vadd.f32 %v8526, %v8694
  %v8696 = vpop.f32.mrf.mxu0
  %v8697 = vadd.f32 %v8528, %v8696
  %8698 = vmatmul.bf16.gmra.mxu0 %v7309
  %v8699 = vpop.f32.mrf.mxu0
  %v8700 = vadd.f32 %v8531, %v8699
  %v8701 = vpop.f32.mrf.mxu0
  %v8702 = vadd.f32 %v8533, %v8701
  %8703 = vmatmul.bf16.gmra.mxu0 %v7313
  %v8704 = vpop.f32.mrf.mxu0
  %v8705 = vadd.f32 %v8536, %v8704
  %v8706 = vpop.f32.mrf.mxu0
  %v8707 = vadd.f32 %v8538, %v8706
  %8708 = vmatmul.bf16.gmra.mxu0 %v7317
  %v8709 = vpop.f32.mrf.mxu0
  %v8710 = vadd.f32 %v8541, %v8709
  %v8711 = vpop.f32.mrf.mxu0
  %v8712 = vadd.f32 %v8543, %v8711
  %8713 = vmatmul.bf16.gmra.mxu0 %v7321
  %v8714 = vpop.f32.mrf.mxu0
  %v8715 = vadd.f32 %v8546, %v8714
  %v8716 = vpop.f32.mrf.mxu0
  %v8717 = vadd.f32 %v8548, %v8716
  %8718 = vmatmul.bf16.gmra.mxu0 %v7325
  %v8719 = vpop.f32.mrf.mxu0
  %v8720 = vadd.f32 %v8551, %v8719
  %v8721 = vpop.f32.mrf.mxu0
  %v8722 = vadd.f32 %v8553, %v8721
  %8723 = vmatmul.bf16.gmra.mxu0 %v7329
  %v8724 = vpop.f32.mrf.mxu0
  %v8725 = vadd.f32 %v8556, %v8724
  %v8726 = vpop.f32.mrf.mxu0
  %v8727 = vadd.f32 %v8558, %v8726
  %8728 = vmatmul.bf16.gmra.mxu0 %v7333
  %v8729 = vpop.f32.mrf.mxu0
  %v8730 = vadd.f32 %v8561, %v8729
  %v8731 = vpop.f32.mrf.mxu0
  %v8732 = vadd.f32 %v8563, %v8731
  %8733 = vmatmul.bf16.gmra.mxu0 %v7337
  %v8734 = vpop.f32.mrf.mxu0
  %v8735 = vadd.f32 %v8566, %v8734
  %v8736 = vpop.f32.mrf.mxu0
  %v8737 = vadd.f32 %v8568, %v8736
  %8738 = vmatmul.bf16.gmra.mxu0 %v7341
  %v8739 = vpop.f32.mrf.mxu0
  %v8740 = vadd.f32 %v8571, %v8739
  %v8741 = vpop.f32.mrf.mxu0
  %v8742 = vadd.f32 %v8573, %v8741
  %8743 = vmatmul.bf16.gmra.mxu0 %v7345
  %v8744 = vpop.f32.mrf.mxu0
  %v8745 = vadd.f32 %v8576, %v8744
  %v8746 = vpop.f32.mrf.mxu0
  %v8747 = vadd.f32 %v8578, %v8746
  %8748 = vmatmul.bf16.gmra.mxu0 %v7349
  %v8749 = vpop.f32.mrf.mxu0
  %v8750 = vadd.f32 %v8581, %v8749
  %v8751 = vpop.f32.mrf.mxu0
  %v8752 = vadd.f32 %v8583, %v8751
  %8753 = vmatmul.bf16.gmra.mxu0 %v7353
  %v8754 = vpop.f32.mrf.mxu0
  %v8755 = vadd.f32 %v8586, %v8754
  %v8756 = vpop.f32.mrf.mxu0
  %v8757 = vadd.f32 %v8588, %v8756
  %8758 = vmatmul.bf16.gmra.mxu0 %v7357
  %v8759 = vpop.f32.mrf.mxu0
  %v8760 = vadd.f32 %v8591, %v8759
  %v8761 = vpop.f32.mrf.mxu0
  %v8762 = vadd.f32 %v8593, %v8761
  %8763 = vdwg.mxu0
  %8764 = vmatpush.bf16.msra.mxu0 %v7669
  %8765 = vmatpush.bf16.msra.mxu0 %v7667
  %8766 = vmatpush.bf16.msra.mxu0 %v7665
  %8767 = vmatpush.bf16.msra.mxu0 %v7663
  %8768 = vmatpush.bf16.msra.mxu0 %v7661
  %8769 = vmatpush.bf16.msra.mxu0 %v7659
  %8770 = vmatpush.bf16.msra.mxu0 %v7657
  %8771 = vmatpush.bf16.msra.mxu0 %v7655
  %8772 = vmatmul.bf16.gmra.mxu0 %v7234
  %v8773 = vpop.f32.mrf.mxu0
  %v8774 = vadd.f32 %v8605, %v8773
  %v8775 = vpop.f32.mrf.mxu0
  %v8776 = vadd.f32 %v8607, %v8775
  %8777 = vmatmul.bf16.gmra.mxu0 %v7238
  %v8778 = vpop.f32.mrf.mxu0
  %v8779 = vadd.f32 %v8610, %v8778
  %v8780 = vpop.f32.mrf.mxu0
  %v8781 = vadd.f32 %v8612, %v8780
  %8782 = vmatmul.bf16.gmra.mxu0 %v7242
  %v8783 = vpop.f32.mrf.mxu0
  %v8784 = vadd.f32 %v8615, %v8783
  %v8785 = vpop.f32.mrf.mxu0
  %v8786 = vadd.f32 %v8617, %v8785
  %8787 = vmatmul.bf16.gmra.mxu0 %v7246
  %v8788 = vpop.f32.mrf.mxu0
  %v8789 = vadd.f32 %v8620, %v8788
  %v8790 = vpop.f32.mrf.mxu0
  %v8791 = vadd.f32 %v8622, %v8790
  %8792 = vmatmul.bf16.gmra.mxu0 %v7250
  %v8793 = vpop.f32.mrf.mxu0
  %v8794 = vadd.f32 %v8625, %v8793
  %v8795 = vpop.f32.mrf.mxu0
  %v8796 = vadd.f32 %v8627, %v8795
  %8797 = vmatmul.bf16.gmra.mxu0 %v7254
  %v8798 = vpop.f32.mrf.mxu0
  %v8799 = vadd.f32 %v8630, %v8798
  %v8800 = vpop.f32.mrf.mxu0
  %v8801 = vadd.f32 %v8632, %v8800
  %8802 = vmatmul.bf16.gmra.mxu0 %v7258
  %v8803 = vpop.f32.mrf.mxu0
  %v8804 = vadd.f32 %v8635, %v8803
  %v8805 = vpop.f32.mrf.mxu0
  %v8806 = vadd.f32 %v8637, %v8805
  %8807 = vmatmul.bf16.gmra.mxu0 %v7262
  %v8808 = vpop.f32.mrf.mxu0
  %v8809 = vadd.f32 %v8640, %v8808
  %v8810 = vpop.f32.mrf.mxu0
  %v8811 = vadd.f32 %v8642, %v8810
  %8812 = vmatmul.bf16.gmra.mxu0 %v7266
  %v8813 = vpop.f32.mrf.mxu0
  %v8814 = vadd.f32 %v8645, %v8813
  %v8815 = vpop.f32.mrf.mxu0
  %v8816 = vadd.f32 %v8647, %v8815
  %8817 = vmatmul.bf16.gmra.mxu0 %v7270
  %v8818 = vpop.f32.mrf.mxu0
  %v8819 = vadd.f32 %v8650, %v8818
  %v8820 = vpop.f32.mrf.mxu0
  %v8821 = vadd.f32 %v8652, %v8820
  %8822 = vmatmul.bf16.gmra.mxu0 %v7274
  %v8823 = vpop.f32.mrf.mxu0
  %v8824 = vadd.f32 %v8655, %v8823
  %v8825 = vpop.f32.mrf.mxu0
  %v8826 = vadd.f32 %v8657, %v8825
  %8827 = vmatmul.bf16.gmra.mxu0 %v7278
  %v8828 = vpop.f32.mrf.mxu0
  %v8829 = vadd.f32 %v8660, %v8828
  %v8830 = vpop.f32.mrf.mxu0
  %v8831 = vadd.f32 %v8662, %v8830
  %8832 = vmatmul.bf16.gmra.mxu0 %v7282
  %v8833 = vpop.f32.mrf.mxu0
  %v8834 = vadd.f32 %v8665, %v8833
  %v8835 = vpop.f32.mrf.mxu0
  %v8836 = vadd.f32 %v8667, %v8835
  %8837 = vmatmul.bf16.gmra.mxu0 %v7286
  %v8838 = vpop.f32.mrf.mxu0
  %v8839 = vadd.f32 %v8670, %v8838
  %v8840 = vpop.f32.mrf.mxu0
  %v8841 = vadd.f32 %v8672, %v8840
  %8842 = vmatmul.bf16.gmra.mxu0 %v7290
  %v8843 = vpop.f32.mrf.mxu0
  %v8844 = vadd.f32 %v8675, %v8843
  %v8845 = vpop.f32.mrf.mxu0
  %v8846 = vadd.f32 %v8677, %v8845
  %8847 = vmatmul.bf16.gmra.mxu0 %v7294
  %v8848 = vpop.f32.mrf.mxu0
  %v8849 = vadd.f32 %v8680, %v8848
  %v8850 = vpop.f32.mrf.mxu0
  %v8851 = vadd.f32 %v8682, %v8850
  %8852 = vmatmul.bf16.gmra.mxu0 %v7298
  %v8853 = vpop.f32.mrf.mxu0
  %v8854 = vadd.f32 %v8685, %v8853
  %v8855 = vpop.f32.mrf.mxu0
  %v8856 = vadd.f32 %v8687, %v8855
  %8857 = vmatmul.bf16.gmra.mxu0 %v7302
  %v8858 = vpop.f32.mrf.mxu0
  %v8859 = vadd.f32 %v8690, %v8858
  %v8860 = vpop.f32.mrf.mxu0
  %v8861 = vadd.f32 %v8692, %v8860
  %8862 = vmatmul.bf16.gmra.mxu0 %v7306
  %v8863 = vpop.f32.mrf.mxu0
  %v8864 = vadd.f32 %v8695, %v8863
  %v8865 = vpop.f32.mrf.mxu0
  %v8866 = vadd.f32 %v8697, %v8865
  %8867 = vmatmul.bf16.gmra.mxu0 %v7310
  %v8868 = vpop.f32.mrf.mxu0
  %v8869 = vadd.f32 %v8700, %v8868
  %v8870 = vpop.f32.mrf.mxu0
  %v8871 = vadd.f32 %v8702, %v8870
  %8872 = vmatmul.bf16.gmra.mxu0 %v7314
  %v8873 = vpop.f32.mrf.mxu0
  %v8874 = vadd.f32 %v8705, %v8873
  %v8875 = vpop.f32.mrf.mxu0
  %v8876 = vadd.f32 %v8707, %v8875
  %8877 = vmatmul.bf16.gmra.mxu0 %v7318
  %v8878 = vpop.f32.mrf.mxu0
  %v8879 = vadd.f32 %v8710, %v8878
  %v8880 = vpop.f32.mrf.mxu0
  %v8881 = vadd.f32 %v8712, %v8880
  %8882 = vmatmul.bf16.gmra.mxu0 %v7322
  %v8883 = vpop.f32.mrf.mxu0
  %v8884 = vadd.f32 %v8715, %v8883
  %v8885 = vpop.f32.mrf.mxu0
  %v8886 = vadd.f32 %v8717, %v8885
  %8887 = vmatmul.bf16.gmra.mxu0 %v7326
  %v8888 = vpop.f32.mrf.mxu0
  %v8889 = vadd.f32 %v8720, %v8888
  %v8890 = vpop.f32.mrf.mxu0
  %v8891 = vadd.f32 %v8722, %v8890
  %8892 = vmatmul.bf16.gmra.mxu0 %v7330
  %v8893 = vpop.f32.mrf.mxu0
  %v8894 = vadd.f32 %v8725, %v8893
  %v8895 = vpop.f32.mrf.mxu0
  %v8896 = vadd.f32 %v8727, %v8895
  %8897 = vmatmul.bf16.gmra.mxu0 %v7334
  %v8898 = vpop.f32.mrf.mxu0
  %v8899 = vadd.f32 %v8730, %v8898
  %v8900 = vpop.f32.mrf.mxu0
  %v8901 = vadd.f32 %v8732, %v8900
  %8902 = vmatmul.bf16.gmra.mxu0 %v7338
  %v8903 = vpop.f32.mrf.mxu0
  %v8904 = vadd.f32 %v8735, %v8903
  %v8905 = vpop.f32.mrf.mxu0
  %v8906 = vadd.f32 %v8737, %v8905
  %8907 = vmatmul.bf16.gmra.mxu0 %v7342
  %v8908 = vpop.f32.mrf.mxu0
  %v8909 = vadd.f32 %v8740, %v8908
  %v8910 = vpop.f32.mrf.mxu0
  %v8911 = vadd.f32 %v8742, %v8910
  %8912 = vmatmul.bf16.gmra.mxu0 %v7346
  %v8913 = vpop.f32.mrf.mxu0
  %v8914 = vadd.f32 %v8745, %v8913
  %v8915 = vpop.f32.mrf.mxu0
  %v8916 = vadd.f32 %v8747, %v8915
  %8917 = vmatmul.bf16.gmra.mxu0 %v7350
  %v8918 = vpop.f32.mrf.mxu0
  %v8919 = vadd.f32 %v8750, %v8918
  %v8920 = vpop.f32.mrf.mxu0
  %v8921 = vadd.f32 %v8752, %v8920
  %8922 = vmatmul.bf16.gmra.mxu0 %v7354
  %v8923 = vpop.f32.mrf.mxu0
  %v8924 = vadd.f32 %v8755, %v8923
  %v8925 = vpop.f32.mrf.mxu0
  %v8926 = vadd.f32 %v8757, %v8925
  %8927 = vmatmul.bf16.gmra.mxu0 %v7358
  %v8928 = vpop.f32.mrf.mxu0
  %v8929 = vadd.f32 %v8760, %v8928
  %v8930 = vpop.f32.mrf.mxu0
  %v8931 = vadd.f32 %v8762, %v8930
  %8932 = vdwg.mxu0
  %8933 = vmatpush.bf16.msra.mxu0 %v7685
  %8934 = vmatpush.bf16.msra.mxu0 %v7683
  %8935 = vmatpush.bf16.msra.mxu0 %v7681
  %8936 = vmatpush.bf16.msra.mxu0 %v7679
  %8937 = vmatpush.bf16.msra.mxu0 %v7677
  %8938 = vmatpush.bf16.msra.mxu0 %v7675
  %8939 = vmatpush.bf16.msra.mxu0 %v7673
  %8940 = vmatpush.bf16.msra.mxu0 %v7671
  %8941 = vmatmul.bf16.gmra.mxu0 %v7235
  %v8942 = vpop.f32.mrf.mxu0
  %v8943 = vadd.f32 %v8774, %v8942
  %v8944 = vpop.f32.mrf.mxu0
  %v8945 = vadd.f32 %v8776, %v8944
  %8946 = vmatmul.bf16.gmra.mxu0 %v7239
  %v8947 = vpop.f32.mrf.mxu0
  %v8948 = vadd.f32 %v8779, %v8947
  %v8949 = vpop.f32.mrf.mxu0
  %v8950 = vadd.f32 %v8781, %v8949
  %8951 = vmatmul.bf16.gmra.mxu0 %v7243
  %v8952 = vpop.f32.mrf.mxu0
  %v8953 = vadd.f32 %v8784, %v8952
  %v8954 = vpop.f32.mrf.mxu0
  %v8955 = vadd.f32 %v8786, %v8954
  %8956 = vmatmul.bf16.gmra.mxu0 %v7247
  %v8957 = vpop.f32.mrf.mxu0
  %v8958 = vadd.f32 %v8789, %v8957
  %v8959 = vpop.f32.mrf.mxu0
  %v8960 = vadd.f32 %v8791, %v8959
  %8961 = vmatmul.bf16.gmra.mxu0 %v7251
  %v8962 = vpop.f32.mrf.mxu0
  %v8963 = vadd.f32 %v8794, %v8962
  %v8964 = vpop.f32.mrf.mxu0
  %v8965 = vadd.f32 %v8796, %v8964
  %8966 = vmatmul.bf16.gmra.mxu0 %v7255
  %v8967 = vpop.f32.mrf.mxu0
  %v8968 = vadd.f32 %v8799, %v8967
  %v8969 = vpop.f32.mrf.mxu0
  %v8970 = vadd.f32 %v8801, %v8969
  %8971 = vmatmul.bf16.gmra.mxu0 %v7259
  %v8972 = vpop.f32.mrf.mxu0
  %v8973 = vadd.f32 %v8804, %v8972
  %v8974 = vpop.f32.mrf.mxu0
  %v8975 = vadd.f32 %v8806, %v8974
  %8976 = vmatmul.bf16.gmra.mxu0 %v7263
  %v8977 = vpop.f32.mrf.mxu0
  %v8978 = vadd.f32 %v8809, %v8977
  %v8979 = vpop.f32.mrf.mxu0
  %v8980 = vadd.f32 %v8811, %v8979
  %8981 = vmatmul.bf16.gmra.mxu0 %v7267
  %v8982 = vpop.f32.mrf.mxu0
  %v8983 = vadd.f32 %v8814, %v8982
  %v8984 = vpop.f32.mrf.mxu0
  %v8985 = vadd.f32 %v8816, %v8984
  %8986 = vmatmul.bf16.gmra.mxu0 %v7271
  %v8987 = vpop.f32.mrf.mxu0
  %v8988 = vadd.f32 %v8819, %v8987
  %v8989 = vpop.f32.mrf.mxu0
  %v8990 = vadd.f32 %v8821, %v8989
  %8991 = vmatmul.bf16.gmra.mxu0 %v7275
  %v8992 = vpop.f32.mrf.mxu0
  %v8993 = vadd.f32 %v8824, %v8992
  %v8994 = vpop.f32.mrf.mxu0
  %v8995 = vadd.f32 %v8826, %v8994
  %8996 = vmatmul.bf16.gmra.mxu0 %v7279
  %v8997 = vpop.f32.mrf.mxu0
  %v8998 = vadd.f32 %v8829, %v8997
  %v8999 = vpop.f32.mrf.mxu0
  %v9000 = vadd.f32 %v8831, %v8999
  %9001 = vmatmul.bf16.gmra.mxu0 %v7283
  %v9002 = vpop.f32.mrf.mxu0
  %v9003 = vadd.f32 %v8834, %v9002
  %v9004 = vpop.f32.mrf.mxu0
  %v9005 = vadd.f32 %v8836, %v9004
  %9006 = vmatmul.bf16.gmra.mxu0 %v7287
  %v9007 = vpop.f32.mrf.mxu0
  %v9008 = vadd.f32 %v8839, %v9007
  %v9009 = vpop.f32.mrf.mxu0
  %v9010 = vadd.f32 %v8841, %v9009
  %9011 = vmatmul.bf16.gmra.mxu0 %v7291
  %v9012 = vpop.f32.mrf.mxu0
  %v9013 = vadd.f32 %v8844, %v9012
  %v9014 = vpop.f32.mrf.mxu0
  %v9015 = vadd.f32 %v8846, %v9014
  %9016 = vmatmul.bf16.gmra.mxu0 %v7295
  %v9017 = vpop.f32.mrf.mxu0
  %v9018 = vadd.f32 %v8849, %v9017
  %v9019 = vpop.f32.mrf.mxu0
  %v9020 = vadd.f32 %v8851, %v9019
  %9021 = vmatmul.bf16.gmra.mxu0 %v7299
  %v9022 = vpop.f32.mrf.mxu0
  %v9023 = vadd.f32 %v8854, %v9022
  %v9024 = vpop.f32.mrf.mxu0
  %v9025 = vadd.f32 %v8856, %v9024
  %9026 = vmatmul.bf16.gmra.mxu0 %v7303
  %v9027 = vpop.f32.mrf.mxu0
  %v9028 = vadd.f32 %v8859, %v9027
  %v9029 = vpop.f32.mrf.mxu0
  %v9030 = vadd.f32 %v8861, %v9029
  %9031 = vmatmul.bf16.gmra.mxu0 %v7307
  %v9032 = vpop.f32.mrf.mxu0
  %v9033 = vadd.f32 %v8864, %v9032
  %v9034 = vpop.f32.mrf.mxu0
  %v9035 = vadd.f32 %v8866, %v9034
  %9036 = vmatmul.bf16.gmra.mxu0 %v7311
  %v9037 = vpop.f32.mrf.mxu0
  %v9038 = vadd.f32 %v8869, %v9037
  %v9039 = vpop.f32.mrf.mxu0
  %v9040 = vadd.f32 %v8871, %v9039
  %9041 = vmatmul.bf16.gmra.mxu0 %v7315
  %v9042 = vpop.f32.mrf.mxu0
  %v9043 = vadd.f32 %v8874, %v9042
  %v9044 = vpop.f32.mrf.mxu0
  %v9045 = vadd.f32 %v8876, %v9044
  %9046 = vmatmul.bf16.gmra.mxu0 %v7319
  %v9047 = vpop.f32.mrf.mxu0
  %v9048 = vadd.f32 %v8879, %v9047
  %v9049 = vpop.f32.mrf.mxu0
  %v9050 = vadd.f32 %v8881, %v9049
  %9051 = vmatmul.bf16.gmra.mxu0 %v7323
  %v9052 = vpop.f32.mrf.mxu0
  %v9053 = vadd.f32 %v8884, %v9052
  %v9054 = vpop.f32.mrf.mxu0
  %v9055 = vadd.f32 %v8886, %v9054
  %9056 = vmatmul.bf16.gmra.mxu0 %v7327
  %v9057 = vpop.f32.mrf.mxu0
  %v9058 = vadd.f32 %v8889, %v9057
  %v9059 = vpop.f32.mrf.mxu0
  %v9060 = vadd.f32 %v8891, %v9059
  %9061 = vmatmul.bf16.gmra.mxu0 %v7331
  %v9062 = vpop.f32.mrf.mxu0
  %v9063 = vadd.f32 %v8894, %v9062
  %v9064 = vpop.f32.mrf.mxu0
  %v9065 = vadd.f32 %v8896, %v9064
  %9066 = vmatmul.bf16.gmra.mxu0 %v7335
  %v9067 = vpop.f32.mrf.mxu0
  %v9068 = vadd.f32 %v8899, %v9067
  %v9069 = vpop.f32.mrf.mxu0
  %v9070 = vadd.f32 %v8901, %v9069
  %9071 = vmatmul.bf16.gmra.mxu0 %v7339
  %v9072 = vpop.f32.mrf.mxu0
  %v9073 = vadd.f32 %v8904, %v9072
  %v9074 = vpop.f32.mrf.mxu0
  %v9075 = vadd.f32 %v8906, %v9074
  %9076 = vmatmul.bf16.gmra.mxu0 %v7343
  %v9077 = vpop.f32.mrf.mxu0
  %v9078 = vadd.f32 %v8909, %v9077
  %v9079 = vpop.f32.mrf.mxu0
  %v9080 = vadd.f32 %v8911, %v9079
  %9081 = vmatmul.bf16.gmra.mxu0 %v7347
  %v9082 = vpop.f32.mrf.mxu0
  %v9083 = vadd.f32 %v8914, %v9082
  %v9084 = vpop.f32.mrf.mxu0
  %v9085 = vadd.f32 %v8916, %v9084
  %9086 = vmatmul.bf16.gmra.mxu0 %v7351
  %v9087 = vpop.f32.mrf.mxu0
  %v9088 = vadd.f32 %v8919, %v9087
  %v9089 = vpop.f32.mrf.mxu0
  %v9090 = vadd.f32 %v8921, %v9089
  %9091 = vmatmul.bf16.gmra.mxu0 %v7355
  %v9092 = vpop.f32.mrf.mxu0
  %v9093 = vadd.f32 %v8924, %v9092
  %v9094 = vpop.f32.mrf.mxu0
  %v9095 = vadd.f32 %v8926, %v9094
  %9096 = vmatmul.bf16.gmra.mxu0 %v7359
  %v9097 = vpop.f32.mrf.mxu0
  %v9098 = vadd.f32 %v8929, %v9097
  %v9099 = vpop.f32.mrf.mxu0
  %v9100 = vadd.f32 %v8931, %v9099
  %9101 = vdwg.mxu0
  %v9102 = vmul.f32 %v8267, 0.2
  %v9103 = vmul.f32 %v8943, 0.2
  %v9104 = vmul.f32 %v8269, 0.2
  %v9105 = vmul.f32 %v8945, 0.2
  %v9106 = vmul.f32 %v8272, 0.2
  %v9107 = vmul.f32 %v8948, 0.2
  %v9108 = vmul.f32 %v8274, 0.2
  %v9109 = vmul.f32 %v8950, 0.2
  %v9110 = vmul.f32 %v8277, 0.2
  %v9111 = vmul.f32 %v8953, 0.2
  %v9112 = vmul.f32 %v8279, 0.2
  %v9113 = vmul.f32 %v8955, 0.2
  %v9114 = vmul.f32 %v8282, 0.2
  %v9115 = vmul.f32 %v8958, 0.2
  %v9116 = vmul.f32 %v8284, 0.2
  %v9117 = vmul.f32 %v8960, 0.2
  %v9118 = vmul.f32 %v8287, 0.2
  %v9119 = vmul.f32 %v8963, 0.2
  %v9120 = vmul.f32 %v8289, 0.2
  %v9121 = vmul.f32 %v8965, 0.2
  %v9122 = vmul.f32 %v8292, 0.2
  %v9123 = vmul.f32 %v8968, 0.2
  %v9124 = vmul.f32 %v8294, 0.2
  %v9125 = vmul.f32 %v8970, 0.2
  %v9126 = vmul.f32 %v8297, 0.2
  %v9127 = vmul.f32 %v8973, 0.2
  %v9128 = vmul.f32 %v8299, 0.2
  %v9129 = vmul.f32 %v8975, 0.2
  %v9130 = vmul.f32 %v8302, 0.2
  %v9131 = vmul.f32 %v8978, 0.2
  %v9132 = vmul.f32 %v8304, 0.2
  %v9133 = vmul.f32 %v8980, 0.2
  %v9134 = vmul.f32 %v8307, 0.2
  %v9135 = vmul.f32 %v8983, 0.2
  %v9136 = vmul.f32 %v8309, 0.2
  %v9137 = vmul.f32 %v8985, 0.2
  %v9138 = vmul.f32 %v8312, 0.2
  %v9139 = vmul.f32 %v8988, 0.2
  %v9140 = vmul.f32 %v8314, 0.2
  %v9141 = vmul.f32 %v8990, 0.2
  %v9142 = vmul.f32 %v8317, 0.2
  %v9143 = vmul.f32 %v8993, 0.2
  %v9144 = vmul.f32 %v8319, 0.2
  %v9145 = vmul.f32 %v8995, 0.2
  %v9146 = vmul.f32 %v8322, 0.2
  %v9147 = vmul.f32 %v8998, 0.2
  %v9148 = vmul.f32 %v8324, 0.2
  %v9149 = vmul.f32 %v9000, 0.2
  %v9150 = vmul.f32 %v8327, 0.2
  %v9151 = vmul.f32 %v9003, 0.2
  %v9152 = vmul.f32 %v8329, 0.2
  %v9153 = vmul.f32 %v9005, 0.2
  %v9154 = vmul.f32 %v8332, 0.2
  %v9155 = vmul.f32 %v9008, 0.2
  %v9156 = vmul.f32 %v8334, 0.2
  %v9157 = vmul.f32 %v9010, 0.2
  %v9158 = vmul.f32 %v8337, 0.2
  %v9159 = vmul.f32 %v9013, 0.2
  %v9160 = vmul.f32 %v8339, 0.2
  %v9161 = vmul.f32 %v9015, 0.2
  %v9162 = vmul.f32 %v8342, 0.2
  %v9163 = vmul.f32 %v9018, 0.2
  %v9164 = vmul.f32 %v8344, 0.2
  %v9165 = vmul.f32 %v9020, 0.2
  %v9166 = vmul.f32 %v8347, 0.2
  %v9167 = vmul.f32 %v9023, 0.2
  %v9168 = vmul.f32 %v8349, 0.2
  %v9169 = vmul.f32 %v9025, 0.2
  %v9170 = vmul.f32 %v8352, 0.2
  %v9171 = vmul.f32 %v9028, 0.2
  %v9172 = vmul.f32 %v8354, 0.2
  %v9173 = vmul.f32 %v9030, 0.2
  %v9174 = vmul.f32 %v8357, 0.2
  %v9175 = vmul.f32 %v9033, 0.2
  %v9176 = vmul.f32 %v8359, 0.2
  %v9177 = vmul.f32 %v9035, 0.2
  %v9178 = vmul.f32 %v8362, 0.2
  %v9179 = vmul.f32 %v9038, 0.2
  %v9180 = vmul.f32 %v8364, 0.2
  %v9181 = vmul.f32 %v9040, 0.2
  %v9182 = vmul.f32 %v8367, 0.2
  %v9183 = vmul.f32 %v9043, 0.2
  %v9184 = vmul.f32 %v8369, 0.2
  %v9185 = vmul.f32 %v9045, 0.2
  %v9186 = vmul.f32 %v8372, 0.2
  %v9187 = vmul.f32 %v9048, 0.2
  %v9188 = vmul.f32 %v8374, 0.2
  %v9189 = vmul.f32 %v9050, 0.2
  %v9190 = vmul.f32 %v8377, 0.2
  %v9191 = vmul.f32 %v9053, 0.2
  %v9192 = vmul.f32 %v8379, 0.2
  %v9193 = vmul.f32 %v9055, 0.2
  %v9194 = vmul.f32 %v8382, 0.2
  %v9195 = vmul.f32 %v9058, 0.2
  %v9196 = vmul.f32 %v8384, 0.2
  %v9197 = vmul.f32 %v9060, 0.2
  %v9198 = vmul.f32 %v8387, 0.2
  %v9199 = vmul.f32 %v9063, 0.2
  %v9200 = vmul.f32 %v8389, 0.2
  %v9201 = vmul.f32 %v9065, 0.2
  %v9202 = vmul.f32 %v8392, 0.2
  %v9203 = vmul.f32 %v9068, 0.2
  %v9204 = vmul.f32 %v8394, 0.2
  %v9205 = vmul.f32 %v9070, 0.2
  %v9206 = vmul.f32 %v8397, 0.2
  %v9207 = vmul.f32 %v9073, 0.2
  %v9208 = vmul.f32 %v8399, 0.2
  %v9209 = vmul.f32 %v9075, 0.2
  %v9210 = vmul.f32 %v8402, 0.2
  %v9211 = vmul.f32 %v9078, 0.2
  %v9212 = vmul.f32 %v8404, 0.2
  %v9213 = vmul.f32 %v9080, 0.2
  %v9214 = vmul.f32 %v8407, 0.2
  %v9215 = vmul.f32 %v9083, 0.2
  %v9216 = vmul.f32 %v8409, 0.2
  %v9217 = vmul.f32 %v9085, 0.2
  %v9218 = vmul.f32 %v8412, 0.2
  %v9219 = vmul.f32 %v9088, 0.2
  %v9220 = vmul.f32 %v8414, 0.2
  %v9221 = vmul.f32 %v9090, 0.2
  %v9222 = vmul.f32 %v8417, 0.2
  %v9223 = vmul.f32 %v9093, 0.2
  %v9224 = vmul.f32 %v8419, 0.2
  %v9225 = vmul.f32 %v9095, 0.2
  %v9226 = vmul.f32 %v8422, 0.2
  %v9227 = vmul.f32 %v9098, 0.2
  %v9228 = vmul.f32 %v8424, 0.2
  %v9229 = vmul.f32 %v9100, 0.2
  %v9230 = vmax.f32 %v8267, %v9102
  %v9231 = vmax.f32 %v8943, %v9103
  %v9232 = vmax.f32 %v8269, %v9104
  %v9233 = vmax.f32 %v8945, %v9105
  %v9234 = vmax.f32 %v8272, %v9106
  %v9235 = vmax.f32 %v8948, %v9107
  %v9236 = vmax.f32 %v8274, %v9108
  %v9237 = vmax.f32 %v8950, %v9109
  %v9238 = vmax.f32 %v8277, %v9110
  %v9239 = vmax.f32 %v8953, %v9111
  %v9240 = vmax.f32 %v8279, %v9112
  %v9241 = vmax.f32 %v8955, %v9113
  %v9242 = vmax.f32 %v8282, %v9114
  %v9243 = vmax.f32 %v8958, %v9115
  %v9244 = vmax.f32 %v8284, %v9116
  %v9245 = vmax.f32 %v8960, %v9117
  %v9246 = vmax.f32 %v8287, %v9118
  %v9247 = vmax.f32 %v8963, %v9119
  %v9248 = vmax.f32 %v8289, %v9120
  %v9249 = vmax.f32 %v8965, %v9121
  %v9250 = vmax.f32 %v8292, %v9122
  %v9251 = vmax.f32 %v8968, %v9123
  %v9252 = vmax.f32 %v8294, %v9124
  %v9253 = vmax.f32 %v8970, %v9125
  %v9254 = vmax.f32 %v8297, %v9126
  %v9255 = vmax.f32 %v8973, %v9127
  %v9256 = vmax.f32 %v8299, %v9128
  %v9257 = vmax.f32 %v8975, %v9129
  %v9258 = vmax.f32 %v8302, %v9130
  %v9259 = vmax.f32 %v8978, %v9131
  %v9260 = vmax.f32 %v8304, %v9132
  %v9261 = vmax.f32 %v8980, %v9133
  %v9262 = vmax.f32 %v8307, %v9134
  %v9263 = vmax.f32 %v8983, %v9135
  %v9264 = vmax.f32 %v8309, %v9136
  %v9265 = vmax.f32 %v8985, %v9137
  %v9266 = vmax.f32 %v8312, %v9138
  %v9267 = vmax.f32 %v8988, %v9139
  %v9268 = vmax.f32 %v8314, %v9140
  %v9269 = vmax.f32 %v8990, %v9141
  %v9270 = vmax.f32 %v8317, %v9142
  %v9271 = vmax.f32 %v8993, %v9143
  %v9272 = vmax.f32 %v8319, %v9144
  %v9273 = vmax.f32 %v8995, %v9145
  %v9274 = vmax.f32 %v8322, %v9146
  %v9275 = vmax.f32 %v8998, %v9147
  %v9276 = vmax.f32 %v8324, %v9148
  %v9277 = vmax.f32 %v9000, %v9149
  %v9278 = vmax.f32 %v8327, %v9150
  %v9279 = vmax.f32 %v9003, %v9151
  %v9280 = vmax.f32 %v8329, %v9152
  %v9281 = vmax.f32 %v9005, %v9153
  %v9282 = vmax.f32 %v8332, %v9154
  %v9283 = vmax.f32 %v9008, %v9155
  %v9284 = vmax.f32 %v8334, %v9156
  %v9285 = vmax.f32 %v9010, %v9157
  %v9286 = vmax.f32 %v8337, %v9158
  %v9287 = vmax.f32 %v9013, %v9159
  %v9288 = vmax.f32 %v8339, %v9160
  %v9289 = vmax.f32 %v9015, %v9161
  %v9290 = vmax.f32 %v8342, %v9162
  %v9291 = vmax.f32 %v9018, %v9163
  %v9292 = vmax.f32 %v8344, %v9164
  %v9293 = vmax.f32 %v9020, %v9165
  %v9294 = vmax.f32 %v8347, %v9166
  %v9295 = vmax.f32 %v9023, %v9167
  %v9296 = vmax.f32 %v8349, %v9168
  %v9297 = vmax.f32 %v9025, %v9169
  %v9298 = vmax.f32 %v8352, %v9170
  %v9299 = vmax.f32 %v9028, %v9171
  %v9300 = vmax.f32 %v8354, %v9172
  %v9301 = vmax.f32 %v9030, %v9173
  %v9302 = vmax.f32 %v8357, %v9174
  %v9303 = vmax.f32 %v9033, %v9175
  %v9304 = vmax.f32 %v8359, %v9176
  %v9305 = vmax.f32 %v9035, %v9177
  %v9306 = vmax.f32 %v8362, %v9178
  %v9307 = vmax.f32 %v9038, %v9179
  %v9308 = vmax.f32 %v8364, %v9180
  %v9309 = vmax.f32 %v9040, %v9181
  %v9310 = vmax.f32 %v8367, %v9182
  %v9311 = vmax.f32 %v9043, %v9183
  %v9312 = vmax.f32 %v8369, %v9184
  %v9313 = vmax.f32 %v9045, %v9185
  %v9314 = vmax.f32 %v8372, %v9186
  %v9315 = vmax.f32 %v9048, %v9187
  %v9316 = vmax.f32 %v8374, %v9188
  %v9317 = vmax.f32 %v9050, %v9189
  %v9318 = vmax.f32 %v8377, %v9190
  %v9319 = vmax.f32 %v9053, %v9191
  %v9320 = vmax.f32 %v8379, %v9192
  %v9321 = vmax.f32 %v9055, %v9193
  %v9322 = vmax.f32 %v8382, %v9194
  %v9323 = vmax.f32 %v9058, %v9195
  %v9324 = vmax.f32 %v8384, %v9196
  %v9325 = vmax.f32 %v9060, %v9197
  %v9326 = vmax.f32 %v8387, %v9198
  %v9327 = vmax.f32 %v9063, %v9199
  %v9328 = vmax.f32 %v8389, %v9200
  %v9329 = vmax.f32 %v9065, %v9201
  %v9330 = vmax.f32 %v8392, %v9202
  %v9331 = vmax.f32 %v9068, %v9203
  %v9332 = vmax.f32 %v8394, %v9204
  %v9333 = vmax.f32 %v9070, %v9205
  %v9334 = vmax.f32 %v8397, %v9206
  %v9335 = vmax.f32 %v9073, %v9207
  %v9336 = vmax.f32 %v8399, %v9208
  %v9337 = vmax.f32 %v9075, %v9209
  %v9338 = vmax.f32 %v8402, %v9210
  %v9339 = vmax.f32 %v9078, %v9211
  %v9340 = vmax.f32 %v8404, %v9212
  %v9341 = vmax.f32 %v9080, %v9213
  %v9342 = vmax.f32 %v8407, %v9214
  %v9343 = vmax.f32 %v9083, %v9215
  %v9344 = vmax.f32 %v8409, %v9216
  %v9345 = vmax.f32 %v9085, %v9217
  %v9346 = vmax.f32 %v8412, %v9218
  %v9347 = vmax.f32 %v9088, %v9219
  %v9348 = vmax.f32 %v8414, %v9220
  %v9349 = vmax.f32 %v9090, %v9221
  %v9350 = vmax.f32 %v8417, %v9222
  %v9351 = vmax.f32 %v9093, %v9223
  %v9352 = vmax.f32 %v8419, %v9224
  %v9353 = vmax.f32 %v9095, %v9225
  %v9354 = vmax.f32 %v8422, %v9226
  %v9355 = vmax.f32 %v9098, %v9227
  %v9356 = vmax.f32 %v8424, %v9228
  %v9357 = vmax.f32 %v9100, %v9229
  %v9358 = vpack.c.bf16 %v9232, %v9230
  %v9359 = vpack.c.bf16 %v9233, %v9231
  %v9360 = vpack.c.bf16 %v9236, %v9234
  %v9361 = vpack.c.bf16 %v9237, %v9235
  %v9362 = vpack.c.bf16 %v9240, %v9238
  %v9363 = vpack.c.bf16 %v9241, %v9239
  %v9364 = vpack.c.bf16 %v9244, %v9242
  %v9365 = vpack.c.bf16 %v9245, %v9243
  %v9366 = vpack.c.bf16 %v9248, %v9246
  %v9367 = vpack.c.bf16 %v9249, %v9247
  %v9368 = vpack.c.bf16 %v9252, %v9250
  %v9369 = vpack.c.bf16 %v9253, %v9251
  %v9370 = vpack.c.bf16 %v9256, %v9254
  %v9371 = vpack.c.bf16 %v9257, %v9255
  %v9372 = vpack.c.bf16 %v9260, %v9258
  %v9373 = vpack.c.bf16 %v9261, %v9259
  %v9374 = vpack.c.bf16 %v9264, %v9262
  %v9375 = vpack.c.bf16 %v9265, %v9263
  %v9376 = vpack.c.bf16 %v9268, %v9266
  %v9377 = vpack.c.bf16 %v9269, %v9267
  %v9378 = vpack.c.bf16 %v9272, %v9270
  %v9379 = vpack.c.bf16 %v9273, %v9271
  %v9380 = vpack.c.bf16 %v9276, %v9274
  %v9381 = vpack.c.bf16 %v9277, %v9275
  %v9382 = vpack.c.bf16 %v9280, %v9278
  %v9383 = vpack.c.bf16 %v9281, %v9279
  %v9384 = vpack.c.bf16 %v9284, %v9282
  %v9385 = vpack.c.bf16 %v9285, %v9283
  %v9386 = vpack.c.bf16 %v9288, %v9286
  %v9387 = vpack.c.bf16 %v9289, %v9287
  %v9388 = vpack.c.bf16 %v9292, %v9290
  %v9389 = vpack.c.bf16 %v9293, %v9291
  %v9390 = vpack.c.bf16 %v9296, %v9294
  %v9391 = vpack.c.bf16 %v9297, %v9295
  %v9392 = vpack.c.bf16 %v9300, %v9298
  %v9393 = vpack.c.bf16 %v9301, %v9299
  %v9394 = vpack.c.bf16 %v9304, %v9302
  %v9395 = vpack.c.bf16 %v9305, %v9303
  %v9396 = vpack.c.bf16 %v9308, %v9306
  %v9397 = vpack.c.bf16 %v9309, %v9307
  %v9398 = vpack.c.bf16 %v9312, %v9310
  %v9399 = vpack.c.bf16 %v9313, %v9311
  %v9400 = vpack.c.bf16 %v9316, %v9314
  %v9401 = vpack.c.bf16 %v9317, %v9315
  %v9402 = vpack.c.bf16 %v9320, %v9318
  %v9403 = vpack.c.bf16 %v9321, %v9319
  %v9404 = vpack.c.bf16 %v9324, %v9322
  %v9405 = vpack.c.bf16 %v9325, %v9323
  %v9406 = vpack.c.bf16 %v9328, %v9326
  %v9407 = vpack.c.bf16 %v9329, %v9327
  %v9408 = vpack.c.bf16 %v9332, %v9330
  %v9409 = vpack.c.bf16 %v9333, %v9331
  %v9410 = vpack.c.bf16 %v9336, %v9334
  %v9411 = vpack.c.bf16 %v9337, %v9335
  %v9412 = vpack.c.bf16 %v9340, %v9338
  %v9413 = vpack.c.bf16 %v9341, %v9339
  %v9414 = vpack.c.bf16 %v9344, %v9342
  %v9415 = vpack.c.bf16 %v9345, %v9343
  %v9416 = vpack.c.bf16 %v9348, %v9346
  %v9417 = vpack.c.bf16 %v9349, %v9347
  %v9418 = vpack.c.bf16 %v9352, %v9350
  %v9419 = vpack.c.bf16 %v9353, %v9351
  %v9420 = vpack.c.bf16 %v9356, %v9354
  %v9421 = vpack.c.bf16 %v9357, %v9355
  %v9422 = vld [vmem:[%s5] sm:$0xf]
  %v9423 = vld [vmem:[%s5 + $0x4] sm:$0xf]
  %v9424 = vld [vmem:[%s5 + $0x8] sm:$0xf]
  %v9425 = vld [vmem:[%s5 + $0xc] sm:$0xf]
  %v9426 = vld [vmem:[%s5 + $0x10] sm:$0xf]
  %v9427 = vld [vmem:[%s5 + $0x14] sm:$0xf]
  %v9428 = vld [vmem:[%s5 + $0x18] sm:$0xf]
  %v9429 = vld [vmem:[%s5 + $0x1c] sm:$0xf]
  %v9430 = vld [vmem:[%s5 + $0x20] sm:$0xf]
  %v9431 = vld [vmem:[%s5 + $0x24] sm:$0xf]
  %v9432 = vld [vmem:[%s5 + $0x28] sm:$0xf]
  %v9433 = vld [vmem:[%s5 + $0x2c] sm:$0xf]
  %v9434 = vld [vmem:[%s5 + $0x30] sm:$0xf]
  %v9435 = vld [vmem:[%s5 + $0x34] sm:$0xf]
  %v9436 = vld [vmem:[%s5 + $0x38] sm:$0xf]
  %v9437 = vld [vmem:[%s5 + $0x3c] sm:$0xf]
  %v9438 = vld [vmem:[%s5 + $0x40] sm:$0xf]
  %v9439 = vld [vmem:[%s5 + $0x44] sm:$0xf]
  %v9440 = vld [vmem:[%s5 + $0x48] sm:$0xf]
  %v9441 = vld [vmem:[%s5 + $0x4c] sm:$0xf]
  %v9442 = vld [vmem:[%s5 + $0x50] sm:$0xf]
  %v9443 = vld [vmem:[%s5 + $0x54] sm:$0xf]
  %v9444 = vld [vmem:[%s5 + $0x58] sm:$0xf]
  %v9445 = vld [vmem:[%s5 + $0x5c] sm:$0xf]
  %v9446 = vld [vmem:[%s5 + $0x60] sm:$0xf]
  %v9447 = vld [vmem:[%s5 + $0x64] sm:$0xf]
  %v9448 = vld [vmem:[%s5 + $0x68] sm:$0xf]
  %v9449 = vld [vmem:[%s5 + $0x6c] sm:$0xf]
  %v9450 = vld [vmem:[%s5 + $0x70] sm:$0xf]
  %v9451 = vld [vmem:[%s5 + $0x74] sm:$0xf]
  %v9452 = vld [vmem:[%s5 + $0x78] sm:$0xf]
  %v9453 = vld [vmem:[%s5 + $0x7c] sm:$0xf]
  %v9454 = vld [vmem:[%s6] sm:$0x1]
  %v9456 = vperm.slane %v9454, 0
  %v9490 = vunpack.c.l.b16 %v9422
  %v9491 = vunpack.c.l.b16 %v9423
  %v9492 = vunpack.c.l.b16 %v9424
  %v9493 = vunpack.c.l.b16 %v9425
  %v9494 = vunpack.c.l.b16 %v9426
  %v9495 = vunpack.c.l.b16 %v9427
  %v9496 = vunpack.c.l.b16 %v9428
  %v9497 = vunpack.c.l.b16 %v9429
  %v9498 = vunpack.c.l.b16 %v9430
  %v9499 = vunpack.c.l.b16 %v9431
  %v9500 = vunpack.c.l.b16 %v9432
  %v9501 = vunpack.c.l.b16 %v9433
  %v9502 = vunpack.c.l.b16 %v9434
  %v9503 = vunpack.c.l.b16 %v9435
  %v9504 = vunpack.c.l.b16 %v9436
  %v9505 = vunpack.c.l.b16 %v9437
  %v9506 = vunpack.c.l.b16 %v9438
  %v9507 = vunpack.c.l.b16 %v9439
  %v9508 = vunpack.c.l.b16 %v9440
  %v9509 = vunpack.c.l.b16 %v9441
  %v9510 = vunpack.c.l.b16 %v9442
  %v9511 = vunpack.c.l.b16 %v9443
  %v9512 = vunpack.c.l.b16 %v9444
  %v9513 = vunpack.c.l.b16 %v9445
  %v9514 = vunpack.c.l.b16 %v9446
  %v9515 = vunpack.c.l.b16 %v9447
  %v9516 = vunpack.c.l.b16 %v9448
  %v9517 = vunpack.c.l.b16 %v9449
  %v9518 = vunpack.c.l.b16 %v9450
  %v9519 = vunpack.c.l.b16 %v9451
  %v9520 = vunpack.c.l.b16 %v9452
  %v9521 = vunpack.c.l.b16 %v9453
  %v9522 = vpack.c.b16 %v9491, %v9490
  %v9523 = vpack.c.b16 %v9493, %v9492
  %v9524 = vpack.c.b16 %v9495, %v9494
  %v9525 = vpack.c.b16 %v9497, %v9496
  %v9526 = vpack.c.b16 %v9499, %v9498
  %v9527 = vpack.c.b16 %v9501, %v9500
  %v9528 = vpack.c.b16 %v9503, %v9502
  %v9529 = vpack.c.b16 %v9505, %v9504
  %v9530 = vpack.c.b16 %v9507, %v9506
  %v9531 = vpack.c.b16 %v9509, %v9508
  %v9532 = vpack.c.b16 %v9511, %v9510
  %v9533 = vpack.c.b16 %v9513, %v9512
  %v9534 = vpack.c.b16 %v9515, %v9514
  %v9535 = vpack.c.b16 %v9517, %v9516
  %v9536 = vpack.c.b16 %v9519, %v9518
  %v9537 = vpack.c.b16 %v9521, %v9520
  %9554 = vmatpush.bf16.msra.mxu0 %v9529
  %9555 = vmatpush.bf16.msra.mxu0 %v9528
  %9556 = vmatpush.bf16.msra.mxu0 %v9527
  %9557 = vmatpush.bf16.msra.mxu0 %v9526
  %9558 = vmatpush.bf16.msra.mxu0 %v9525
  %9559 = vmatpush.bf16.msra.mxu0 %v9524
  %9560 = vmatpush.bf16.msra.mxu0 %v9523
  %9561 = vmatpush.bf16.msra.mxu0 %v9522
  %9562 = vmatmul.bf16.gmra.mxu0 %v9358
  %v9563 = vpop.f32.mrf.mxu0
  %v9564 = vadd.f32 %v9456, %v9563
  %v9565 = vpop.f32.mrf.mxu0
  %v9566 = vadd.f32 %v9456, %v9565
  %9567 = vmatmul.bf16.gmra.mxu0 %v9360
  %v9568 = vpop.f32.mrf.mxu0
  %v9569 = vadd.f32 %v9456, %v9568
  %v9570 = vpop.f32.mrf.mxu0
  %v9571 = vadd.f32 %v9456, %v9570
  %9572 = vmatmul.bf16.gmra.mxu0 %v9362
  %v9573 = vpop.f32.mrf.mxu0
  %v9574 = vadd.f32 %v9456, %v9573
  %v9575 = vpop.f32.mrf.mxu0
  %v9576 = vadd.f32 %v9456, %v9575
  %9577 = vmatmul.bf16.gmra.mxu0 %v9364
  %v9578 = vpop.f32.mrf.mxu0
  %v9579 = vadd.f32 %v9456, %v9578
  %v9580 = vpop.f32.mrf.mxu0
  %v9581 = vadd.f32 %v9456, %v9580
  %9582 = vmatmul.bf16.gmra.mxu0 %v9366
  %v9583 = vpop.f32.mrf.mxu0
  %v9584 = vadd.f32 %v9456, %v9583
  %v9585 = vpop.f32.mrf.mxu0
  %v9586 = vadd.f32 %v9456, %v9585
  %9587 = vmatmul.bf16.gmra.mxu0 %v9368
  %v9588 = vpop.f32.mrf.mxu0
  %v9589 = vadd.f32 %v9456, %v9588
  %v9590 = vpop.f32.mrf.mxu0
  %v9591 = vadd.f32 %v9456, %v9590
  %9592 = vmatmul.bf16.gmra.mxu0 %v9370
  %v9593 = vpop.f32.mrf.mxu0
  %v9594 = vadd.f32 %v9456, %v9593
  %v9595 = vpop.f32.mrf.mxu0
  %v9596 = vadd.f32 %v9456, %v9595
  %9597 = vmatmul.bf16.gmra.mxu0 %v9372
  %v9598 = vpop.f32.mrf.mxu0
  %v9599 = vadd.f32 %v9456, %v9598
  %v9600 = vpop.f32.mrf.mxu0
  %v9601 = vadd.f32 %v9456, %v9600
  %9602 = vmatmul.bf16.gmra.mxu0 %v9374
  %v9603 = vpop.f32.mrf.mxu0
  %v9604 = vadd.f32 %v9456, %v9603
  %v9605 = vpop.f32.mrf.mxu0
  %v9606 = vadd.f32 %v9456, %v9605
  %9607 = vmatmul.bf16.gmra.mxu0 %v9376
  %v9608 = vpop.f32.mrf.mxu0
  %v9609 = vadd.f32 %v9456, %v9608
  %v9610 = vpop.f32.mrf.mxu0
  %v9611 = vadd.f32 %v9456, %v9610
  %9612 = vmatmul.bf16.gmra.mxu0 %v9378
  %v9613 = vpop.f32.mrf.mxu0
  %v9614 = vadd.f32 %v9456, %v9613
  %v9615 = vpop.f32.mrf.mxu0
  %v9616 = vadd.f32 %v9456, %v9615
  %9617 = vmatmul.bf16.gmra.mxu0 %v9380
  %v9618 = vpop.f32.mrf.mxu0
  %v9619 = vadd.f32 %v9456, %v9618
  %v9620 = vpop.f32.mrf.mxu0
  %v9621 = vadd.f32 %v9456, %v9620
  %9622 = vmatmul.bf16.gmra.mxu0 %v9382
  %v9623 = vpop.f32.mrf.mxu0
  %v9624 = vadd.f32 %v9456, %v9623
  %v9625 = vpop.f32.mrf.mxu0
  %v9626 = vadd.f32 %v9456, %v9625
  %9627 = vmatmul.bf16.gmra.mxu0 %v9384
  %v9628 = vpop.f32.mrf.mxu0
  %v9629 = vadd.f32 %v9456, %v9628
  %v9630 = vpop.f32.mrf.mxu0
  %v9631 = vadd.f32 %v9456, %v9630
  %9632 = vmatmul.bf16.gmra.mxu0 %v9386
  %v9633 = vpop.f32.mrf.mxu0
  %v9634 = vadd.f32 %v9456, %v9633
  %v9635 = vpop.f32.mrf.mxu0
  %v9636 = vadd.f32 %v9456, %v9635
  %9637 = vmatmul.bf16.gmra.mxu0 %v9388
  %v9638 = vpop.f32.mrf.mxu0
  %v9639 = vadd.f32 %v9456, %v9638
  %v9640 = vpop.f32.mrf.mxu0
  %v9641 = vadd.f32 %v9456, %v9640
  %9642 = vmatmul.bf16.gmra.mxu0 %v9390
  %v9643 = vpop.f32.mrf.mxu0
  %v9644 = vadd.f32 %v9456, %v9643
  %v9645 = vpop.f32.mrf.mxu0
  %v9646 = vadd.f32 %v9456, %v9645
  %9647 = vmatmul.bf16.gmra.mxu0 %v9392
  %v9648 = vpop.f32.mrf.mxu0
  %v9649 = vadd.f32 %v9456, %v9648
  %v9650 = vpop.f32.mrf.mxu0
  %v9651 = vadd.f32 %v9456, %v9650
  %9652 = vmatmul.bf16.gmra.mxu0 %v9394
  %v9653 = vpop.f32.mrf.mxu0
  %v9654 = vadd.f32 %v9456, %v9653
  %v9655 = vpop.f32.mrf.mxu0
  %v9656 = vadd.f32 %v9456, %v9655
  %9657 = vmatmul.bf16.gmra.mxu0 %v9396
  %v9658 = vpop.f32.mrf.mxu0
  %v9659 = vadd.f32 %v9456, %v9658
  %v9660 = vpop.f32.mrf.mxu0
  %v9661 = vadd.f32 %v9456, %v9660
  %9662 = vmatmul.bf16.gmra.mxu0 %v9398
  %v9663 = vpop.f32.mrf.mxu0
  %v9664 = vadd.f32 %v9456, %v9663
  %v9665 = vpop.f32.mrf.mxu0
  %v9666 = vadd.f32 %v9456, %v9665
  %9667 = vmatmul.bf16.gmra.mxu0 %v9400
  %v9668 = vpop.f32.mrf.mxu0
  %v9669 = vadd.f32 %v9456, %v9668
  %v9670 = vpop.f32.mrf.mxu0
  %v9671 = vadd.f32 %v9456, %v9670
  %9672 = vmatmul.bf16.gmra.mxu0 %v9402
  %v9673 = vpop.f32.mrf.mxu0
  %v9674 = vadd.f32 %v9456, %v9673
  %v9675 = vpop.f32.mrf.mxu0
  %v9676 = vadd.f32 %v9456, %v9675
  %9677 = vmatmul.bf16.gmra.mxu0 %v9404
  %v9678 = vpop.f32.mrf.mxu0
  %v9679 = vadd.f32 %v9456, %v9678
  %v9680 = vpop.f32.mrf.mxu0
  %v9681 = vadd.f32 %v9456, %v9680
  %9682 = vmatmul.bf16.gmra.mxu0 %v9406
  %v9683 = vpop.f32.mrf.mxu0
  %v9684 = vadd.f32 %v9456, %v9683
  %v9685 = vpop.f32.mrf.mxu0
  %v9686 = vadd.f32 %v9456, %v9685
  %9687 = vmatmul.bf16.gmra.mxu0 %v9408
  %v9688 = vpop.f32.mrf.mxu0
  %v9689 = vadd.f32 %v9456, %v9688
  %v9690 = vpop.f32.mrf.mxu0
  %v9691 = vadd.f32 %v9456, %v9690
  %9692 = vmatmul.bf16.gmra.mxu0 %v9410
  %v9693 = vpop.f32.mrf.mxu0
  %v9694 = vadd.f32 %v9456, %v9693
  %v9695 = vpop.f32.mrf.mxu0
  %v9696 = vadd.f32 %v9456, %v9695
  %9697 = vmatmul.bf16.gmra.mxu0 %v9412
  %v9698 = vpop.f32.mrf.mxu0
  %v9699 = vadd.f32 %v9456, %v9698
  %v9700 = vpop.f32.mrf.mxu0
  %v9701 = vadd.f32 %v9456, %v9700
  %9702 = vmatmul.bf16.gmra.mxu0 %v9414
  %v9703 = vpop.f32.mrf.mxu0
  %v9704 = vadd.f32 %v9456, %v9703
  %v9705 = vpop.f32.mrf.mxu0
  %v9706 = vadd.f32 %v9456, %v9705
  %9707 = vmatmul.bf16.gmra.mxu0 %v9416
  %v9708 = vpop.f32.mrf.mxu0
  %v9709 = vadd.f32 %v9456, %v9708
  %v9710 = vpop.f32.mrf.mxu0
  %v9711 = vadd.f32 %v9456, %v9710
  %9712 = vmatmul.bf16.gmra.mxu0 %v9418
  %v9713 = vpop.f32.mrf.mxu0
  %v9714 = vadd.f32 %v9456, %v9713
  %v9715 = vpop.f32.mrf.mxu0
  %v9716 = vadd.f32 %v9456, %v9715
  %9717 = vmatmul.bf16.gmra.mxu0 %v9420
  %v9718 = vpop.f32.mrf.mxu0
  %v9719 = vadd.f32 %v9456, %v9718
  %v9720 = vpop.f32.mrf.mxu0
  %v9721 = vadd.f32 %v9456, %v9720
  %9722 = vdwg.mxu0
  %9723 = vmatpush.bf16.msra.mxu0 %v9537
  %9724 = vmatpush.bf16.msra.mxu0 %v9536
  %9725 = vmatpush.bf16.msra.mxu0 %v9535
  %9726 = vmatpush.bf16.msra.mxu0 %v9534
  %9727 = vmatpush.bf16.msra.mxu0 %v9533
  %9728 = vmatpush.bf16.msra.mxu0 %v9532
  %9729 = vmatpush.bf16.msra.mxu0 %v9531
  %9730 = vmatpush.bf16.msra.mxu0 %v9530
  %9731 = vmatmul.bf16.gmra.mxu0 %v9359
  %v9732 = vpop.f32.mrf.mxu0
  %v9733 = vadd.f32 %v9564, %v9732
  %v9734 = vpop.f32.mrf.mxu0
  %v9735 = vadd.f32 %v9566, %v9734
  %9736 = vmatmul.bf16.gmra.mxu0 %v9361
  %v9737 = vpop.f32.mrf.mxu0
  %v9738 = vadd.f32 %v9569, %v9737
  %v9739 = vpop.f32.mrf.mxu0
  %v9740 = vadd.f32 %v9571, %v9739
  %9741 = vmatmul.bf16.gmra.mxu0 %v9363
  %v9742 = vpop.f32.mrf.mxu0
  %v9743 = vadd.f32 %v9574, %v9742
  %v9744 = vpop.f32.mrf.mxu0
  %v9745 = vadd.f32 %v9576, %v9744
  %9746 = vmatmul.bf16.gmra.mxu0 %v9365
  %v9747 = vpop.f32.mrf.mxu0
  %v9748 = vadd.f32 %v9579, %v9747
  %v9749 = vpop.f32.mrf.mxu0
  %v9750 = vadd.f32 %v9581, %v9749
  %9751 = vmatmul.bf16.gmra.mxu0 %v9367
  %v9752 = vpop.f32.mrf.mxu0
  %v9753 = vadd.f32 %v9584, %v9752
  %v9754 = vpop.f32.mrf.mxu0
  %v9755 = vadd.f32 %v9586, %v9754
  %9756 = vmatmul.bf16.gmra.mxu0 %v9369
  %v9757 = vpop.f32.mrf.mxu0
  %v9758 = vadd.f32 %v9589, %v9757
  %v9759 = vpop.f32.mrf.mxu0
  %v9760 = vadd.f32 %v9591, %v9759
  %9761 = vmatmul.bf16.gmra.mxu0 %v9371
  %v9762 = vpop.f32.mrf.mxu0
  %v9763 = vadd.f32 %v9594, %v9762
  %v9764 = vpop.f32.mrf.mxu0
  %v9765 = vadd.f32 %v9596, %v9764
  %9766 = vmatmul.bf16.gmra.mxu0 %v9373
  %v9767 = vpop.f32.mrf.mxu0
  %v9768 = vadd.f32 %v9599, %v9767
  %v9769 = vpop.f32.mrf.mxu0
  %v9770 = vadd.f32 %v9601, %v9769
  %9771 = vmatmul.bf16.gmra.mxu0 %v9375
  %v9772 = vpop.f32.mrf.mxu0
  %v9773 = vadd.f32 %v9604, %v9772
  %v9774 = vpop.f32.mrf.mxu0
  %v9775 = vadd.f32 %v9606, %v9774
  %9776 = vmatmul.bf16.gmra.mxu0 %v9377
  %v9777 = vpop.f32.mrf.mxu0
  %v9778 = vadd.f32 %v9609, %v9777
  %v9779 = vpop.f32.mrf.mxu0
  %v9780 = vadd.f32 %v9611, %v9779
  %9781 = vmatmul.bf16.gmra.mxu0 %v9379
  %v9782 = vpop.f32.mrf.mxu0
  %v9783 = vadd.f32 %v9614, %v9782
  %v9784 = vpop.f32.mrf.mxu0
  %v9785 = vadd.f32 %v9616, %v9784
  %9786 = vmatmul.bf16.gmra.mxu0 %v9381
  %v9787 = vpop.f32.mrf.mxu0
  %v9788 = vadd.f32 %v9619, %v9787
  %v9789 = vpop.f32.mrf.mxu0
  %v9790 = vadd.f32 %v9621, %v9789
  %9791 = vmatmul.bf16.gmra.mxu0 %v9383
  %v9792 = vpop.f32.mrf.mxu0
  %v9793 = vadd.f32 %v9624, %v9792
  %v9794 = vpop.f32.mrf.mxu0
  %v9795 = vadd.f32 %v9626, %v9794
  %9796 = vmatmul.bf16.gmra.mxu0 %v9385
  %v9797 = vpop.f32.mrf.mxu0
  %v9798 = vadd.f32 %v9629, %v9797
  %v9799 = vpop.f32.mrf.mxu0
  %v9800 = vadd.f32 %v9631, %v9799
  %9801 = vmatmul.bf16.gmra.mxu0 %v9387
  %v9802 = vpop.f32.mrf.mxu0
  %v9803 = vadd.f32 %v9634, %v9802
  %v9804 = vpop.f32.mrf.mxu0
  %v9805 = vadd.f32 %v9636, %v9804
  %9806 = vmatmul.bf16.gmra.mxu0 %v9389
  %v9807 = vpop.f32.mrf.mxu0
  %v9808 = vadd.f32 %v9639, %v9807
  %v9809 = vpop.f32.mrf.mxu0
  %v9810 = vadd.f32 %v9641, %v9809
  %9811 = vmatmul.bf16.gmra.mxu0 %v9391
  %v9812 = vpop.f32.mrf.mxu0
  %v9813 = vadd.f32 %v9644, %v9812
  %v9814 = vpop.f32.mrf.mxu0
  %v9815 = vadd.f32 %v9646, %v9814
  %9816 = vmatmul.bf16.gmra.mxu0 %v9393
  %v9817 = vpop.f32.mrf.mxu0
  %v9818 = vadd.f32 %v9649, %v9817
  %v9819 = vpop.f32.mrf.mxu0
  %v9820 = vadd.f32 %v9651, %v9819
  %9821 = vmatmul.bf16.gmra.mxu0 %v9395
  %v9822 = vpop.f32.mrf.mxu0
  %v9823 = vadd.f32 %v9654, %v9822
  %v9824 = vpop.f32.mrf.mxu0
  %v9825 = vadd.f32 %v9656, %v9824
  %9826 = vmatmul.bf16.gmra.mxu0 %v9397
  %v9827 = vpop.f32.mrf.mxu0
  %v9828 = vadd.f32 %v9659, %v9827
  %v9829 = vpop.f32.mrf.mxu0
  %v9830 = vadd.f32 %v9661, %v9829
  %9831 = vmatmul.bf16.gmra.mxu0 %v9399
  %v9832 = vpop.f32.mrf.mxu0
  %v9833 = vadd.f32 %v9664, %v9832
  %v9834 = vpop.f32.mrf.mxu0
  %v9835 = vadd.f32 %v9666, %v9834
  %9836 = vmatmul.bf16.gmra.mxu0 %v9401
  %v9837 = vpop.f32.mrf.mxu0
  %v9838 = vadd.f32 %v9669, %v9837
  %v9839 = vpop.f32.mrf.mxu0
  %v9840 = vadd.f32 %v9671, %v9839
  %9841 = vmatmul.bf16.gmra.mxu0 %v9403
  %v9842 = vpop.f32.mrf.mxu0
  %v9843 = vadd.f32 %v9674, %v9842
  %v9844 = vpop.f32.mrf.mxu0
  %v9845 = vadd.f32 %v9676, %v9844
  %9846 = vmatmul.bf16.gmra.mxu0 %v9405
  %v9847 = vpop.f32.mrf.mxu0
  %v9848 = vadd.f32 %v9679, %v9847
  %v9849 = vpop.f32.mrf.mxu0
  %v9850 = vadd.f32 %v9681, %v9849
  %9851 = vmatmul.bf16.gmra.mxu0 %v9407
  %v9852 = vpop.f32.mrf.mxu0
  %v9853 = vadd.f32 %v9684, %v9852
  %v9854 = vpop.f32.mrf.mxu0
  %v9855 = vadd.f32 %v9686, %v9854
  %9856 = vmatmul.bf16.gmra.mxu0 %v9409
  %v9857 = vpop.f32.mrf.mxu0
  %v9858 = vadd.f32 %v9689, %v9857
  %v9859 = vpop.f32.mrf.mxu0
  %v9860 = vadd.f32 %v9691, %v9859
  %9861 = vmatmul.bf16.gmra.mxu0 %v9411
  %v9862 = vpop.f32.mrf.mxu0
  %v9863 = vadd.f32 %v9694, %v9862
  %v9864 = vpop.f32.mrf.mxu0
  %v9865 = vadd.f32 %v9696, %v9864
  %9866 = vmatmul.bf16.gmra.mxu0 %v9413
  %v9867 = vpop.f32.mrf.mxu0
  %v9868 = vadd.f32 %v9699, %v9867
  %v9869 = vpop.f32.mrf.mxu0
  %v9870 = vadd.f32 %v9701, %v9869
  %9871 = vmatmul.bf16.gmra.mxu0 %v9415
  %v9872 = vpop.f32.mrf.mxu0
  %v9873 = vadd.f32 %v9704, %v9872
  %v9874 = vpop.f32.mrf.mxu0
  %v9875 = vadd.f32 %v9706, %v9874
  %9876 = vmatmul.bf16.gmra.mxu0 %v9417
  %v9877 = vpop.f32.mrf.mxu0
  %v9878 = vadd.f32 %v9709, %v9877
  %v9879 = vpop.f32.mrf.mxu0
  %v9880 = vadd.f32 %v9711, %v9879
  %9881 = vmatmul.bf16.gmra.mxu0 %v9419
  %v9882 = vpop.f32.mrf.mxu0
  %v9883 = vadd.f32 %v9714, %v9882
  %v9884 = vpop.f32.mrf.mxu0
  %v9885 = vadd.f32 %v9716, %v9884
  %9886 = vmatmul.bf16.gmra.mxu0 %v9421
  %v9887 = vpop.f32.mrf.mxu0
  %v9888 = vadd.f32 %v9719, %v9887
  %v9889 = vpop.f32.mrf.mxu0
  %v9890 = vadd.f32 %v9721, %v9889
  %9891 = vdwg.mxu0
  %v9892 = vmul.f32 %v9733, 0.2
  %v9893 = vmul.f32 %v9735, 0.2
  %v9894 = vmul.f32 %v9738, 0.2
  %v9895 = vmul.f32 %v9740, 0.2
  %v9896 = vmul.f32 %v9743, 0.2
  %v9897 = vmul.f32 %v9745, 0.2
  %v9898 = vmul.f32 %v9748, 0.2
  %v9899 = vmul.f32 %v9750, 0.2
  %v9900 = vmul.f32 %v9753, 0.2
  %v9901 = vmul.f32 %v9755, 0.2
  %v9902 = vmul.f32 %v9758, 0.2
  %v9903 = vmul.f32 %v9760, 0.2
  %v9904 = vmul.f32 %v9763, 0.2
  %v9905 = vmul.f32 %v9765, 0.2
  %v9906 = vmul.f32 %v9768, 0.2
  %v9907 = vmul.f32 %v9770, 0.2
  %v9908 = vmul.f32 %v9773, 0.2
  %v9909 = vmul.f32 %v9775, 0.2
  %v9910 = vmul.f32 %v9778, 0.2
  %v9911 = vmul.f32 %v9780, 0.2
  %v9912 = vmul.f32 %v9783, 0.2
  %v9913 = vmul.f32 %v9785, 0.2
  %v9914 = vmul.f32 %v9788, 0.2
  %v9915 = vmul.f32 %v9790, 0.2
  %v9916 = vmul.f32 %v9793, 0.2
  %v9917 = vmul.f32 %v9795, 0.2
  %v9918 = vmul.f32 %v9798, 0.2
  %v9919 = vmul.f32 %v9800, 0.2
  %v9920 = vmul.f32 %v9803, 0.2
  %v9921 = vmul.f32 %v9805, 0.2
  %v9922 = vmul.f32 %v9808, 0.2
  %v9923 = vmul.f32 %v9810, 0.2
  %v9924 = vmul.f32 %v9813, 0.2
  %v9925 = vmul.f32 %v9815, 0.2
  %v9926 = vmul.f32 %v9818, 0.2
  %v9927 = vmul.f32 %v9820, 0.2
  %v9928 = vmul.f32 %v9823, 0.2
  %v9929 = vmul.f32 %v9825, 0.2
  %v9930 = vmul.f32 %v9828, 0.2
  %v9931 = vmul.f32 %v9830, 0.2
  %v9932 = vmul.f32 %v9833, 0.2
  %v9933 = vmul.f32 %v9835, 0.2
  %v9934 = vmul.f32 %v9838, 0.2
  %v9935 = vmul.f32 %v9840, 0.2
  %v9936 = vmul.f32 %v9843, 0.2
  %v9937 = vmul.f32 %v9845, 0.2
  %v9938 = vmul.f32 %v9848, 0.2
  %v9939 = vmul.f32 %v9850, 0.2
  %v9940 = vmul.f32 %v9853, 0.2
  %v9941 = vmul.f32 %v9855, 0.2
  %v9942 = vmul.f32 %v9858, 0.2
  %v9943 = vmul.f32 %v9860, 0.2
  %v9944 = vmul.f32 %v9863, 0.2
  %v9945 = vmul.f32 %v9865, 0.2
  %v9946 = vmul.f32 %v9868, 0.2
  %v9947 = vmul.f32 %v9870, 0.2
  %v9948 = vmul.f32 %v9873, 0.2
  %v9949 = vmul.f32 %v9875, 0.2
  %v9950 = vmul.f32 %v9878, 0.2
  %v9951 = vmul.f32 %v9880, 0.2
  %v9952 = vmul.f32 %v9883, 0.2
  %v9953 = vmul.f32 %v9885, 0.2
  %v9954 = vmul.f32 %v9888, 0.2
  %v9955 = vmul.f32 %v9890, 0.2
  %v9956 = vmax.f32 %v9733, %v9892
  %v9957 = vmax.f32 %v9735, %v9893
  %v9958 = vmax.f32 %v9738, %v9894
  %v9959 = vmax.f32 %v9740, %v9895
  %v9960 = vmax.f32 %v9743, %v9896
  %v9961 = vmax.f32 %v9745, %v9897
  %v9962 = vmax.f32 %v9748, %v9898
  %v9963 = vmax.f32 %v9750, %v9899
  %v9964 = vmax.f32 %v9753, %v9900
  %v9965 = vmax.f32 %v9755, %v9901
  %v9966 = vmax.f32 %v9758, %v9902
  %v9967 = vmax.f32 %v9760, %v9903
  %v9968 = vmax.f32 %v9763, %v9904
  %v9969 = vmax.f32 %v9765, %v9905
  %v9970 = vmax.f32 %v9768, %v9906
  %v9971 = vmax.f32 %v9770, %v9907
  %v9972 = vmax.f32 %v9773, %v9908
  %v9973 = vmax.f32 %v9775, %v9909
  %v9974 = vmax.f32 %v9778, %v9910
  %v9975 = vmax.f32 %v9780, %v9911
  %v9976 = vmax.f32 %v9783, %v9912
  %v9977 = vmax.f32 %v9785, %v9913
  %v9978 = vmax.f32 %v9788, %v9914
  %v9979 = vmax.f32 %v9790, %v9915
  %v9980 = vmax.f32 %v9793, %v9916
  %v9981 = vmax.f32 %v9795, %v9917
  %v9982 = vmax.f32 %v9798, %v9918
  %v9983 = vmax.f32 %v9800, %v9919
  %v9984 = vmax.f32 %v9803, %v9920
  %v9985 = vmax.f32 %v9805, %v9921
  %v9986 = vmax.f32 %v9808, %v9922
  %v9987 = vmax.f32 %v9810, %v9923
  %v9988 = vmax.f32 %v9813, %v9924
  %v9989 = vmax.f32 %v9815, %v9925
  %v9990 = vmax.f32 %v9818, %v9926
  %v9991 = vmax.f32 %v9820, %v9927
  %v9992 = vmax.f32 %v9823, %v9928
  %v9993 = vmax.f32 %v9825, %v9929
  %v9994 = vmax.f32 %v9828, %v9930
  %v9995 = vmax.f32 %v9830, %v9931
  %v9996 = vmax.f32 %v9833, %v9932
  %v9997 = vmax.f32 %v9835, %v9933
  %v9998 = vmax.f32 %v9838, %v9934
  %v9999 = vmax.f32 %v9840, %v9935
  %v10000 = vmax.f32 %v9843, %v9936
  %v10001 = vmax.f32 %v9845, %v9937
  %v10002 = vmax.f32 %v9848, %v9938
  %v10003 = vmax.f32 %v9850, %v9939
  %v10004 = vmax.f32 %v9853, %v9940
  %v10005 = vmax.f32 %v9855, %v9941
  %v10006 = vmax.f32 %v9858, %v9942
  %v10007 = vmax.f32 %v9860, %v9943
  %v10008 = vmax.f32 %v9863, %v9944
  %v10009 = vmax.f32 %v9865, %v9945
  %v10010 = vmax.f32 %v9868, %v9946
  %v10011 = vmax.f32 %v9870, %v9947
  %v10012 = vmax.f32 %v9873, %v9948
  %v10013 = vmax.f32 %v9875, %v9949
  %v10014 = vmax.f32 %v9878, %v9950
  %v10015 = vmax.f32 %v9880, %v9951
  %v10016 = vmax.f32 %v9883, %v9952
  %v10017 = vmax.f32 %v9885, %v9953
  %v10018 = vmax.f32 %v9888, %v9954
  %v10019 = vmax.f32 %v9890, %v9955
  %v10020 = vpack.c.bf16 %v9957, %v9956
  %v10021 = vpack.c.bf16 %v9959, %v9958
  %v10022 = vpack.c.bf16 %v9961, %v9960
  %v10023 = vpack.c.bf16 %v9963, %v9962
  %v10024 = vpack.c.bf16 %v9965, %v9964
  %v10025 = vpack.c.bf16 %v9967, %v9966
  %v10026 = vpack.c.bf16 %v9969, %v9968
  %v10027 = vpack.c.bf16 %v9971, %v9970
  %v10028 = vpack.c.bf16 %v9973, %v9972
  %v10029 = vpack.c.bf16 %v9975, %v9974
  %v10030 = vpack.c.bf16 %v9977, %v9976
  %v10031 = vpack.c.bf16 %v9979, %v9978
  %v10032 = vpack.c.bf16 %v9981, %v9980
  %v10033 = vpack.c.bf16 %v9983, %v9982
  %v10034 = vpack.c.bf16 %v9985, %v9984
  %v10035 = vpack.c.bf16 %v9987, %v9986
  %v10036 = vpack.c.bf16 %v9989, %v9988
  %v10037 = vpack.c.bf16 %v9991, %v9990
  %v10038 = vpack.c.bf16 %v9993, %v9992
  %v10039 = vpack.c.bf16 %v9995, %v9994
  %v10040 = vpack.c.bf16 %v9997, %v9996
  %v10041 = vpack.c.bf16 %v9999, %v9998
  %v10042 = vpack.c.bf16 %v10001, %v10000
  %v10043 = vpack.c.bf16 %v10003, %v10002
  %v10044 = vpack.c.bf16 %v10005, %v10004
  %v10045 = vpack.c.bf16 %v10007, %v10006
  %v10046 = vpack.c.bf16 %v10009, %v10008
  %v10047 = vpack.c.bf16 %v10011, %v10010
  %v10048 = vpack.c.bf16 %v10013, %v10012
  %v10049 = vpack.c.bf16 %v10015, %v10014
  %v10050 = vpack.c.bf16 %v10017, %v10016
  %v10051 = vpack.c.bf16 %v10019, %v10018
  %v10052 = vld [vmem:[%s7] sm:$0xf]
  %v10053 = vld [vmem:[%s7 + $0x4] sm:$0xf]
  %v10054 = vld [vmem:[%s7 + $0x8] sm:$0xf]
  %v10055 = vld [vmem:[%s7 + $0xc] sm:$0xf]
  %v10056 = vld [vmem:[%s7 + $0x10] sm:$0xf]
  %v10057 = vld [vmem:[%s7 + $0x14] sm:$0xf]
  %v10058 = vld [vmem:[%s7 + $0x18] sm:$0xf]
  %v10059 = vld [vmem:[%s7 + $0x1c] sm:$0xf]
  %v10060 = vld [vmem:[%s7 + $0x20] sm:$0xf]
  %v10061 = vld [vmem:[%s7 + $0x24] sm:$0xf]
  %v10062 = vld [vmem:[%s7 + $0x28] sm:$0xf]
  %v10063 = vld [vmem:[%s7 + $0x2c] sm:$0xf]
  %v10064 = vld [vmem:[%s7 + $0x30] sm:$0xf]
  %v10065 = vld [vmem:[%s7 + $0x34] sm:$0xf]
  %v10066 = vld [vmem:[%s7 + $0x38] sm:$0xf]
  %v10067 = vld [vmem:[%s7 + $0x3c] sm:$0xf]
  %v10068 = vld [vmem:[%s8] sm:$0x1]
  %v10070 = vperm.slane %v10068, 0
  %v10088 = vunpack.c.l.b16 %v10052
  %v10089 = vunpack.c.l.b16 %v10053
  %v10090 = vunpack.c.l.b16 %v10054
  %v10091 = vunpack.c.l.b16 %v10055
  %v10092 = vunpack.c.l.b16 %v10056
  %v10093 = vunpack.c.l.b16 %v10057
  %v10094 = vunpack.c.l.b16 %v10058
  %v10095 = vunpack.c.l.b16 %v10059
  %v10096 = vunpack.c.l.b16 %v10060
  %v10097 = vunpack.c.l.b16 %v10061
  %v10098 = vunpack.c.l.b16 %v10062
  %v10099 = vunpack.c.l.b16 %v10063
  %v10100 = vunpack.c.l.b16 %v10064
  %v10101 = vunpack.c.l.b16 %v10065
  %v10102 = vunpack.c.l.b16 %v10066
  %v10103 = vunpack.c.l.b16 %v10067
  %v10104 = vpack.c.b16 %v10089, %v10088
  %v10105 = vpack.c.b16 %v10091, %v10090
  %v10106 = vpack.c.b16 %v10093, %v10092
  %v10107 = vpack.c.b16 %v10095, %v10094
  %v10108 = vpack.c.b16 %v10097, %v10096
  %v10109 = vpack.c.b16 %v10099, %v10098
  %v10110 = vpack.c.b16 %v10101, %v10100
  %v10111 = vpack.c.b16 %v10103, %v10102
  %10120 = vmatpush.bf16.msra.mxu0 %v10111
  %10121 = vmatpush.bf16.msra.mxu0 %v10110
  %10122 = vmatpush.bf16.msra.mxu0 %v10109
  %10123 = vmatpush.bf16.msra.mxu0 %v10108
  %10124 = vmatpush.bf16.msra.mxu0 %v10107
  %10125 = vmatpush.bf16.msra.mxu0 %v10106
  %10126 = vmatpush.bf16.msra.mxu0 %v10105
  %10127 = vmatpush.bf16.msra.mxu0 %v10104
  %10128 = vmatmul.bf16.gmra.mxu0 %v10020
  %v10129 = vpop.f32.mrf.mxu0
  %v10130 = vadd.f32 %v10070, %v10129
  %v10131 = vpop.f32.mrf.mxu0
  %v10132 = vadd.f32 %v10070, %v10131
  %10133 = vmatmul.bf16.gmra.mxu0 %v10021
  %v10134 = vpop.f32.mrf.mxu0
  %v10135 = vadd.f32 %v10070, %v10134
  %v10136 = vpop.f32.mrf.mxu0
  %v10137 = vadd.f32 %v10070, %v10136
  %10138 = vmatmul.bf16.gmra.mxu0 %v10022
  %v10139 = vpop.f32.mrf.mxu0
  %v10140 = vadd.f32 %v10070, %v10139
  %v10141 = vpop.f32.mrf.mxu0
  %v10142 = vadd.f32 %v10070, %v10141
  %10143 = vmatmul.bf16.gmra.mxu0 %v10023
  %v10144 = vpop.f32.mrf.mxu0
  %v10145 = vadd.f32 %v10070, %v10144
  %v10146 = vpop.f32.mrf.mxu0
  %v10147 = vadd.f32 %v10070, %v10146
  %10148 = vmatmul.bf16.gmra.mxu0 %v10024
  %v10149 = vpop.f32.mrf.mxu0
  %v10150 = vadd.f32 %v10070, %v10149
  %v10151 = vpop.f32.mrf.mxu0
  %v10152 = vadd.f32 %v10070, %v10151
  %10153 = vmatmul.bf16.gmra.mxu0 %v10025
  %v10154 = vpop.f32.mrf.mxu0
  %v10155 = vadd.f32 %v10070, %v10154
  %v10156 = vpop.f32.mrf.mxu0
  %v10157 = vadd.f32 %v10070, %v10156
  %10158 = vmatmul.bf16.gmra.mxu0 %v10026
  %v10159 = vpop.f32.mrf.mxu0
  %v10160 = vadd.f32 %v10070, %v10159
  %v10161 = vpop.f32.mrf.mxu0
  %v10162 = vadd.f32 %v10070, %v10161
  %10163 = vmatmul.bf16.gmra.mxu0 %v10027
  %v10164 = vpop.f32.mrf.mxu0
  %v10165 = vadd.f32 %v10070, %v10164
  %v10166 = vpop.f32.mrf.mxu0
  %v10167 = vadd.f32 %v10070, %v10166
  %10168 = vmatmul.bf16.gmra.mxu0 %v10028
  %v10169 = vpop.f32.mrf.mxu0
  %v10170 = vadd.f32 %v10070, %v10169
  %v10171 = vpop.f32.mrf.mxu0
  %v10172 = vadd.f32 %v10070, %v10171
  %10173 = vmatmul.bf16.gmra.mxu0 %v10029
  %v10174 = vpop.f32.mrf.mxu0
  %v10175 = vadd.f32 %v10070, %v10174
  %v10176 = vpop.f32.mrf.mxu0
  %v10177 = vadd.f32 %v10070, %v10176
  %10178 = vmatmul.bf16.gmra.mxu0 %v10030
  %v10179 = vpop.f32.mrf.mxu0
  %v10180 = vadd.f32 %v10070, %v10179
  %v10181 = vpop.f32.mrf.mxu0
  %v10182 = vadd.f32 %v10070, %v10181
  %10183 = vmatmul.bf16.gmra.mxu0 %v10031
  %v10184 = vpop.f32.mrf.mxu0
  %v10185 = vadd.f32 %v10070, %v10184
  %v10186 = vpop.f32.mrf.mxu0
  %v10187 = vadd.f32 %v10070, %v10186
  %10188 = vmatmul.bf16.gmra.mxu0 %v10032
  %v10189 = vpop.f32.mrf.mxu0
  %v10190 = vadd.f32 %v10070, %v10189
  %v10191 = vpop.f32.mrf.mxu0
  %v10192 = vadd.f32 %v10070, %v10191
  %10193 = vmatmul.bf16.gmra.mxu0 %v10033
  %v10194 = vpop.f32.mrf.mxu0
  %v10195 = vadd.f32 %v10070, %v10194
  %v10196 = vpop.f32.mrf.mxu0
  %v10197 = vadd.f32 %v10070, %v10196
  %10198 = vmatmul.bf16.gmra.mxu0 %v10034
  %v10199 = vpop.f32.mrf.mxu0
  %v10200 = vadd.f32 %v10070, %v10199
  %v10201 = vpop.f32.mrf.mxu0
  %v10202 = vadd.f32 %v10070, %v10201
  %10203 = vmatmul.bf16.gmra.mxu0 %v10035
  %v10204 = vpop.f32.mrf.mxu0
  %v10205 = vadd.f32 %v10070, %v10204
  %v10206 = vpop.f32.mrf.mxu0
  %v10207 = vadd.f32 %v10070, %v10206
  %10208 = vmatmul.bf16.gmra.mxu0 %v10036
  %v10209 = vpop.f32.mrf.mxu0
  %v10210 = vadd.f32 %v10070, %v10209
  %v10211 = vpop.f32.mrf.mxu0
  %v10212 = vadd.f32 %v10070, %v10211
  %10213 = vmatmul.bf16.gmra.mxu0 %v10037
  %v10214 = vpop.f32.mrf.mxu0
  %v10215 = vadd.f32 %v10070, %v10214
  %v10216 = vpop.f32.mrf.mxu0
  %v10217 = vadd.f32 %v10070, %v10216
  %10218 = vmatmul.bf16.gmra.mxu0 %v10038
  %v10219 = vpop.f32.mrf.mxu0
  %v10220 = vadd.f32 %v10070, %v10219
  %v10221 = vpop.f32.mrf.mxu0
  %v10222 = vadd.f32 %v10070, %v10221
  %10223 = vmatmul.bf16.gmra.mxu0 %v10039
  %v10224 = vpop.f32.mrf.mxu0
  %v10225 = vadd.f32 %v10070, %v10224
  %v10226 = vpop.f32.mrf.mxu0
  %v10227 = vadd.f32 %v10070, %v10226
  %10228 = vmatmul.bf16.gmra.mxu0 %v10040
  %v10229 = vpop.f32.mrf.mxu0
  %v10230 = vadd.f32 %v10070, %v10229
  %v10231 = vpop.f32.mrf.mxu0
  %v10232 = vadd.f32 %v10070, %v10231
  %10233 = vmatmul.bf16.gmra.mxu0 %v10041
  %v10234 = vpop.f32.mrf.mxu0
  %v10235 = vadd.f32 %v10070, %v10234
  %v10236 = vpop.f32.mrf.mxu0
  %v10237 = vadd.f32 %v10070, %v10236
  %10238 = vmatmul.bf16.gmra.mxu0 %v10042
  %v10239 = vpop.f32.mrf.mxu0
  %v10240 = vadd.f32 %v10070, %v10239
  %v10241 = vpop.f32.mrf.mxu0
  %v10242 = vadd.f32 %v10070, %v10241
  %10243 = vmatmul.bf16.gmra.mxu0 %v10043
  %v10244 = vpop.f32.mrf.mxu0
  %v10245 = vadd.f32 %v10070, %v10244
  %v10246 = vpop.f32.mrf.mxu0
  %v10247 = vadd.f32 %v10070, %v10246
  %10248 = vmatmul.bf16.gmra.mxu0 %v10044
  %v10249 = vpop.f32.mrf.mxu0
  %v10250 = vadd.f32 %v10070, %v10249
  %v10251 = vpop.f32.mrf.mxu0
  %v10252 = vadd.f32 %v10070, %v10251
  %10253 = vmatmul.bf16.gmra.mxu0 %v10045
  %v10254 = vpop.f32.mrf.mxu0
  %v10255 = vadd.f32 %v10070, %v10254
  %v10256 = vpop.f32.mrf.mxu0
  %v10257 = vadd.f32 %v10070, %v10256
  %10258 = vmatmul.bf16.gmra.mxu0 %v10046
  %v10259 = vpop.f32.mrf.mxu0
  %v10260 = vadd.f32 %v10070, %v10259
  %v10261 = vpop.f32.mrf.mxu0
  %v10262 = vadd.f32 %v10070, %v10261
  %10263 = vmatmul.bf16.gmra.mxu0 %v10047
  %v10264 = vpop.f32.mrf.mxu0
  %v10265 = vadd.f32 %v10070, %v10264
  %v10266 = vpop.f32.mrf.mxu0
  %v10267 = vadd.f32 %v10070, %v10266
  %10268 = vmatmul.bf16.gmra.mxu0 %v10048
  %v10269 = vpop.f32.mrf.mxu0
  %v10270 = vadd.f32 %v10070, %v10269
  %v10271 = vpop.f32.mrf.mxu0
  %v10272 = vadd.f32 %v10070, %v10271
  %10273 = vmatmul.bf16.gmra.mxu0 %v10049
  %v10274 = vpop.f32.mrf.mxu0
  %v10275 = vadd.f32 %v10070, %v10274
  %v10276 = vpop.f32.mrf.mxu0
  %v10277 = vadd.f32 %v10070, %v10276
  %10278 = vmatmul.bf16.gmra.mxu0 %v10050
  %v10279 = vpop.f32.mrf.mxu0
  %v10280 = vadd.f32 %v10070, %v10279
  %v10281 = vpop.f32.mrf.mxu0
  %v10282 = vadd.f32 %v10070, %v10281
  %10283 = vmatmul.bf16.gmra.mxu0 %v10051
  %v10284 = vpop.f32.mrf.mxu0
  %v10285 = vadd.f32 %v10070, %v10284
  %v10286 = vpop.f32.mrf.mxu0
  %v10287 = vadd.f32 %v10070, %v10286
  %10288 = vdwg.mxu0
  %10289 = vst [vmem:[%s9] sm:$0xff] %v10130
  %10290 = vst [vmem:[%s9 + $0x8] sm:$0xff] %v10132
  %10291 = vst [vmem:[%s9 + $0x10] sm:$0xff] %v10135
  %10292 = vst [vmem:[%s9 + $0x18] sm:$0xff] %v10137
  %10293 = vst [vmem:[%s9 + $0x20] sm:$0xff] %v10140
  %10294 = vst [vmem:[%s9 + $0x28] sm:$0xff] %v10142
  %10295 = vst [vmem:[%s9 + $0x30] sm:$0xff] %v10145
  %10296 = vst [vmem:[%s9 + $0x38] sm:$0xff] %v10147
  %10297 = vst [vmem:[%s9 + $0x40] sm:$0xff] %v10150
  %10298 = vst [vmem:[%s9 + $0x48] sm:$0xff] %v10152
  %10299 = vst [vmem:[%s9 + $0x50] sm:$0xff] %v10155
  %10300 = vst [vmem:[%s9 + $0x58] sm:$0xff] %v10157
  %10301 = vst [vmem:[%s9 + $0x60] sm:$0xff] %v10160
  %10302 = vst [vmem:[%s9 + $0x68] sm:$0xff] %v10162
  %10303 = vst [vmem:[%s9 + $0x70] sm:$0xff] %v10165
  %10304 = vst [vmem:[%s9 + $0x78] sm:$0xff] %v10167
  %10305 = vst [vmem:[%s9 + $0x80] sm:$0xff] %v10170
  %10306 = vst [vmem:[%s9 + $0x88] sm:$0xff] %v10172
  %10307 = vst [vmem:[%s9 + $0x90] sm:$0xff] %v10175
  %10308 = vst [vmem:[%s9 + $0x98] sm:$0xff] %v10177
  %10309 = vst [vmem:[%s9 + $0xa0] sm:$0xff] %v10180
  %10310 = vst [vmem:[%s9 + $0xa8] sm:$0xff] %v10182
  %10311 = vst [vmem:[%s9 + $0xb0] sm:$0xff] %v10185
  %10312 = vst [vmem:[%s9 + $0xb8] sm:$0xff] %v10187
  %10313 = vst [vmem:[%s9 + $0xc0] sm:$0xff] %v10190
  %10314 = vst [vmem:[%s9 + $0xc8] sm:$0xff] %v10192
  %10315 = vst [vmem:[%s9 + $0xd0] sm:$0xff] %v10195
  %10316 = vst [vmem:[%s9 + $0xd8] sm:$0xff] %v10197
  %10317 = vst [vmem:[%s9 + $0xe0] sm:$0xff] %v10200
  %10318 = vst [vmem:[%s9 + $0xe8] sm:$0xff] %v10202
  %10319 = vst [vmem:[%s9 + $0xf0] sm:$0xff] %v10205
  %10320 = vst [vmem:[%s9 + $0xf8] sm:$0xff] %v10207
  %10321 = vst [vmem:[%s9 + $0x100] sm:$0xff] %v10210
  %10322 = vst [vmem:[%s9 + $0x108] sm:$0xff] %v10212
  %10323 = vst [vmem:[%s9 + $0x110] sm:$0xff] %v10215
  %10324 = vst [vmem:[%s9 + $0x118] sm:$0xff] %v10217
  %10325 = vst [vmem:[%s9 + $0x120] sm:$0xff] %v10220
  %10326 = vst [vmem:[%s9 + $0x128] sm:$0xff] %v10222
  %10327 = vst [vmem:[%s9 + $0x130] sm:$0xff] %v10225
  %10328 = vst [vmem:[%s9 + $0x138] sm:$0xff] %v10227
  %10329 = vst [vmem:[%s9 + $0x140] sm:$0xff] %v10230
  %10330 = vst [vmem:[%s9 + $0x148] sm:$0xff] %v10232
  %10331 = vst [vmem:[%s9 + $0x150] sm:$0xff] %v10235
  %10332 = vst [vmem:[%s9 + $0x158] sm:$0xff] %v10237
  %10333 = vst [vmem:[%s9 + $0x160] sm:$0xff] %v10240
  %10334 = vst [vmem:[%s9 + $0x168] sm:$0xff] %v10242
  %10335 = vst [vmem:[%s9 + $0x170] sm:$0xff] %v10245
  %10336 = vst [vmem:[%s9 + $0x178] sm:$0xff] %v10247
  %10337 = vst [vmem:[%s9 + $0x180] sm:$0xff] %v10250
  %10338 = vst [vmem:[%s9 + $0x188] sm:$0xff] %v10252
  %10339 = vst [vmem:[%s9 + $0x190] sm:$0xff] %v10255
  %10340 = vst [vmem:[%s9 + $0x198] sm:$0xff] %v10257
  %10341 = vst [vmem:[%s9 + $0x1a0] sm:$0xff] %v10260
  %10342 = vst [vmem:[%s9 + $0x1a8] sm:$0xff] %v10262
  %10343 = vst [vmem:[%s9 + $0x1b0] sm:$0xff] %v10265
  %10344 = vst [vmem:[%s9 + $0x1b8] sm:$0xff] %v10267
  %10345 = vst [vmem:[%s9 + $0x1c0] sm:$0xff] %v10270
  %10346 = vst [vmem:[%s9 + $0x1c8] sm:$0xff] %v10272
  %10347 = vst [vmem:[%s9 + $0x1d0] sm:$0xff] %v10275
  %10348 = vst [vmem:[%s9 + $0x1d8] sm:$0xff] %v10277
  %10349 = vst [vmem:[%s9 + $0x1e0] sm:$0xff] %v10280
  %10350 = vst [vmem:[%s9 + $0x1e8] sm:$0xff] %v10282
  %10351 = vst [vmem:[%s9 + $0x1f0] sm:$0xff] %v10285
  %10352 = vst [vmem:[%s9 + $0x1f8] sm:$0xff] %v10287
  // Predicated region
  $region38: #{discriminator_forward.1} parent=0 // pred_check
    _
  $region39: #{discriminator_forward.1} parent=0 // pred_check_branch
    %10354 = sbr.rel (0) target = $region41
  $region40: #{discriminator_forward.1} parent=0 // pred_region
    _
  $region41: #{discriminator_forward.1} parent=0 // pred_fallthru
    _
  // Predicated region
  $region42: #{discriminator_forward.1} parent=0 // pred_check
    _
  $region43: #{discriminator_forward.1} parent=0 // pred_check_branch
    %10356 = sbr.rel (0) target = $region45
  $region44: #{discriminator_forward.1} parent=0 // pred_region
    _
  $region45: #{discriminator_forward.1} parent=0 // pred_fallthru
    _

</llo_original>
